<compile_context>
chip_gen: v6e
topology: v6e:2x2x1
jax: 0.10.0
libtpu: 0.0.40
codegen_flags: <defaults>
</compile_context>

<pallas_src>
import functools

import jax
import jax.numpy as jnp
from jax.experimental import pallas as pl
from jax.experimental.pallas import tpu as pltpu


def _round_up(x, m):
    return (x + m - 1) // m * m


# ---------------------------------------------------------------------------
# Kernel 1: fused bidirectional LSTM layer recurrence.
#
# Grid = (2,) over direction (0 = forward, 1 = backward), marked "parallel".
# The whole time axis is resident in VMEM; the time loop is an unrolled
# fori_loop inside the body.  Gate order follows PyTorch: [i, f, g, o], each
# gate occupying a full 128-lane (Hp) span.
# ---------------------------------------------------------------------------
def _bilstm_layer_kernel(g_ref, whh_ref, out_ref, h_scr, c_scr):
    d = pl.program_id(0)                     # 0 = forward, 1 = backward
    T = g_ref.shape[0]
    Hp = h_scr.shape[-1]

    h_scr[...] = jnp.zeros_like(h_scr)
    c_scr[...] = jnp.zeros_like(c_scr)

    def step(t, carry):
        tt = jnp.where(d == 0, t, T - 1 - t)
        # Input projection + bias were precomputed for all timesteps; only the
        # h-dependent (Bp, Hp) x (Hp, 4Hp) matmul stays in the serial loop.
        gates = g_ref[tt] + jnp.dot(h_scr[...], whh_ref[0],
                                    preferred_element_type=jnp.float32)
        i = jax.nn.sigmoid(gates[:, 0 * Hp:1 * Hp])
        f = jax.nn.sigmoid(gates[:, 1 * Hp:2 * Hp])
        g = jnp.tanh(gates[:, 2 * Hp:3 * Hp])
        o = jax.nn.sigmoid(gates[:, 3 * Hp:4 * Hp])
        c = f * c_scr[...] + i * g
        h = o * jnp.tanh(c)
        c_scr[...] = c
        h_scr[...] = h
        out_ref[tt] = h
        return carry

    jax.lax.fori_loop(0, T, step, 0, unroll=True)


def bilstm_layer(G, whh):
    """G: (T, Bp, 8*Hp) precomputed input gates for both directions.
    whh: (2, Hp, 4*Hp). Returns (T, Bp, 2*Hp) with [fwd | bwd] halves."""
    T, Bp, _ = G.shape
    Hp = whh.shape[1]
    return pl.pallas_call(
        _bilstm_layer_kernel,
        out_shape=jax.ShapeDtypeStruct((T, Bp, 2 * Hp), jnp.float32),
        grid=(2,),
        in_specs=[
            pl.BlockSpec((T, Bp, 4 * Hp), lambda d: (0, 0, d)),
            pl.BlockSpec((1, Hp, 4 * Hp), lambda d: (d, 0, 0)),
        ],
        out_specs=pl.BlockSpec((T, Bp, Hp), lambda d: (0, 0, d)),
        scratch_shapes=[
            pltpu.VMEM((Bp, Hp), jnp.float32),
            pltpu.VMEM((Bp, Hp), jnp.float32),
        ],
        compiler_params=pltpu.CompilerParams(
            dimension_semantics=("parallel",)),
    )(G, whh)


# ---------------------------------------------------------------------------
# Kernel 2: full-block matmul + bias (used for the per-layer input projection
# and for the final fully-connected layer).  All operands are pre-padded to
# (8, 128) granularity, so stores are lane-dense.
# ---------------------------------------------------------------------------
def _matmul_bias_kernel(x_ref, w_ref, b_ref, o_ref):
    o_ref[...] = (
        jnp.dot(x_ref[...], w_ref[...], preferred_element_type=jnp.float32)
        + b_ref[...]
    ).astype(o_ref.dtype)


def matmul_bias(x2d, w, b):
    """x2d: (N, K) @ w: (K, M) + b: (1, M) -> (N, M)."""
    N = x2d.shape[0]
    M = w.shape[1]
    return pl.pallas_call(
        _matmul_bias_kernel,
        out_shape=jax.ShapeDtypeStruct((N, M), jnp.float32),
    )(x2d, w, b)


# ---------------------------------------------------------------------------
# Parameter construction (deterministic, mimics nn.init.normal_(std=0.1),
# padding_idx row zeroed, max_norm=1.0 renorm applied at lookup time).
# ---------------------------------------------------------------------------
def init_params(key, input_size, hidden_size, num_classes, padtok_idx,
                num_layers=2, embedding_size=100):
    def normal(k, shape):
        return 0.1 * jax.random.normal(k, shape, dtype=jnp.float32)

    keys = iter(jax.random.split(key, 64))
    params = {}

    emb = normal(next(keys), (input_size, embedding_size))
    emb = emb.at[padtok_idx].set(0.0)
    params["embedding"] = emb

    lstm = []
    for layer in range(num_layers):
        in_dim = embedding_size if layer == 0 else 2 * hidden_size
        layer_p = []
        for _direction in range(2):  # forward, reverse
            layer_p.append(dict(
                w_ih=normal(next(keys), (4 * hidden_size, in_dim)),
                w_hh=normal(next(keys), (4 * hidden_size, hidden_size)),
                b_ih=normal(next(keys), (4 * hidden_size,)),
                b_hh=normal(next(keys), (4 * hidden_size,)),
            ))
        lstm.append(layer_p)
    params["lstm"] = lstm

    # Module spec uses nn.Linear(hidden_size * num_layers, num_classes); the
    # bidirectional LSTM output width is 2*hidden_size, identical for the
    # module's default num_layers == 2.
    fc_in = 2 * hidden_size
    params["fc_w"] = normal(next(keys), (num_classes, fc_in))
    params["fc_b"] = normal(next(keys), (num_classes,))
    return params


# -------------------- one-time padding / layout preparation -----------------
def _pad_gate_cols(m, H, Hp):
    """(rows, 4H) -> (rows, 4Hp): gate k columns land at [k*Hp, k*Hp+H)."""
    out = jnp.zeros((m.shape[0], 4 * Hp), m.dtype)
    for k in range(4):
        out = out.at[:, k * Hp:k * Hp + H].set(m[:, k * H:(k + 1) * H])
    return out


def _pad_row_blocks(m, blocks):
    """Scatter row blocks of m into zero-padded block positions.
    blocks: list of (orig_rows, padded_rows)."""
    out = jnp.zeros((sum(p for _, p in blocks), m.shape[1]), m.dtype)
    ro = po = 0
    for o, p in blocks:
        out = out.at[po:po + o].set(m[ro:ro + o])
        ro += o
        po += p
    return out


def _pad_cols(m, cols):
    out = jnp.zeros((m.shape[0], cols), m.dtype)
    return out.at[:, :m.shape[1]].set(m)


def prepare_params(params, hidden_size, embedding_size, num_classes):
    """Done once, outside the traced forward: transposes, bias sums, zero
    padding of H->Hp (128 lanes), E->E_pad, C->C_pad, and packing of the two
    directions into single projection / recurrence weight tensors."""
    H = hidden_size
    Hp = _round_up(H, 128)
    E_pad = _round_up(embedding_size, 128)
    C_pad = _round_up(num_classes, 128)

    prep = {"embedding": params["embedding"].astype(jnp.float32)}
    layers = []
    for li, layer_p in enumerate(params["lstm"]):
        if li == 0:
            in_blocks = [(embedding_size, E_pad)]
        else:
            in_blocks = [(H, Hp), (H, Hp)]           # [fwd_h | bwd_h] layout
        w_proj_parts, b_proj_parts, whh_parts = [], [], []
        for dir_p in layer_p:
            wih = _pad_row_blocks(
                _pad_gate_cols(dir_p["w_ih"].T, H, Hp), in_blocks)
            whh = _pad_row_blocks(
                _pad_gate_cols(dir_p["w_hh"].T, H, Hp), [(H, Hp)])
            bias = _pad_gate_cols(
                (dir_p["b_ih"] + dir_p["b_hh"]).reshape(1, 4 * H), H, Hp)
            w_proj_parts.append(wih)
            b_proj_parts.append(bias)
            whh_parts.append(whh)
        layers.append({
            "w_proj": jnp.concatenate(w_proj_parts, axis=1).astype(jnp.float32),
            "b_proj": jnp.concatenate(b_proj_parts, axis=1).astype(jnp.float32),
            "whh": jnp.stack(whh_parts, axis=0).astype(jnp.float32),
        })
    prep["lstm"] = layers

    fc_w_p = _pad_row_blocks(params["fc_w"].T, [(H, Hp), (H, Hp)])  # (2Hp, C)
    prep["fc_w"] = _pad_cols(fc_w_p, C_pad).astype(jnp.float32)     # (2Hp, Cp)
    prep["fc_b"] = _pad_cols(params["fc_b"].reshape(1, -1),
                             C_pad).astype(jnp.float32)             # (1, Cp)

    cfg = dict(Hp=Hp, E_pad=E_pad, C_pad=C_pad, C=num_classes,
               E=embedding_size)
    return prep, cfg


def embedding_lookup(table, ids, max_norm=1.0):
    # nn.Embedding(max_norm=1.0): rows whose L2 norm exceeds max_norm are
    # renormalized to max_norm.  Renorm only the gathered rows (same values
    # as renorming the whole table, far less work).
    rows = jnp.take(table, ids, axis=0)                    # (T, B, E)
    norms = jnp.sqrt(jnp.sum(rows * rows, axis=-1, keepdims=True))
    scale = jnp.where(norms > max_norm, max_norm / (norms + 1e-7), 1.0)
    return rows * scale


def bilstmcrf_forward(prep, sentence, *, cfg):
    """sentence: (T, B) int32 token ids -> (T, B, num_classes) float32."""
    T, B = sentence.shape
    Hp, E_pad, C_pad, C, E = (cfg["Hp"], cfg["E_pad"], cfg["C_pad"],
                              cfg["C"], cfg["E"])
    Bp = _round_up(max(B, 1), 8)

    emb = embedding_lookup(prep["embedding"], sentence)    # (T, B, E)
    # emb_dropout(p=0) -> identity.  Zero-pad to (T, Bp, E_pad) once.
    x = jnp.zeros((T, Bp, E_pad), jnp.float32).at[:, :B, :E].set(emb)

    for layer in prep["lstm"]:
        # One MXU-friendly matmul for all timesteps & both directions.
        xin = x.reshape(T * Bp, x.shape[-1])
        G = matmul_bias(xin, layer["w_proj"], layer["b_proj"])   # (T*Bp, 8Hp)
        G = G.reshape(T, Bp, 8 * Hp)
        x = bilstm_layer(G, layer["whh"])                        # (T, Bp, 2Hp)

    # fully_dropout(p=0) -> identity.  Lane-dense final projection.
    out = matmul_bias(x.reshape(T * Bp, 2 * Hp), prep["fc_w"], prep["fc_b"])
    return out.reshape(T, Bp, C_pad)[:, :B, :C]


# ---------------------------------------------------------------------------
# Pure-JAX reference (for a correctness check of the Pallas kernels).
# ---------------------------------------------------------------------------
def _lstm_dir_ref(x, p, hidden, reverse):
    T, B, _ = x.shape
    xs = x[::-1] if reverse else x

    def step(carry, x_t):
        h, c = carry
        gates = x_t @ p["w_ih"].T + h @ p["w_hh"].T + p["b_ih"] + p["b_hh"]
        i, f, g, o = jnp.split(gates, 4, axis=-1)
        i, f, o = jax.nn.sigmoid(i), jax.nn.sigmoid(f), jax.nn.sigmoid(o)
        g = jnp.tanh(g)
        c = f * c + i * g
        h = o * jnp.tanh(c)
        return (h, c), h

    init = (jnp.zeros((B, hidden), jnp.float32),
            jnp.zeros((B, hidden), jnp.float32))
    _, hs = jax.lax.scan(step, init, xs)
    return hs[::-1] if reverse else hs


def forward_ref(params, sentence, hidden_size):
    x = embedding_lookup(params["embedding"], sentence)
    for layer_p in params["lstm"]:
        fwd = _lstm_dir_ref(x, layer_p[0], hidden_size, False)
        bwd = _lstm_dir_ref(x, layer_p[1], hidden_size, True)
        x = jnp.concatenate([fwd, bwd], axis=-1)
    return x @ params["fc_w"].T + params["fc_b"]


if __name__ == "__main__":
    # Small shapes consistent with the module.
    input_size = 50        # vocab
    hidden_size = 32
    num_classes = 5
    padtok_idx = 0
    num_layers = 2
    embedding_size = 100
    T, B = 8, 2            # (seq_len, batch), time-major

    key = jax.random.PRNGKey(0)
    pkey, skey = jax.random.split(key)
    params = init_params(pkey, input_size, hidden_size, num_classes,
                         padtok_idx, num_layers, embedding_size)
    sentence = jax.random.randint(skey, (T, B), 0, input_size, dtype=jnp.int32)

    prep, cfg = prepare_params(params, hidden_size, embedding_size,
                               num_classes)
    fwd = jax.jit(functools.partial(bilstmcrf_forward, cfg=cfg))
    out = jax.block_until_ready(fwd(prep, sentence))
    assert out.shape == (T, B, num_classes), out.shape

    ref = forward_ref(params, sentence, hidden_size)
    err = float(jnp.max(jnp.abs(out - ref)))
    assert jnp.allclose(out, ref, atol=1e-3, rtol=1e-3), err

    print("KERNEL_OK")
</pallas_src>

<mosaic_0001>
module attributes {stable_mosaic.version = 11 : i64} {
  func.func @_matmul_bias_kernel(%arg0: memref<64x128xf32, #tpu.memory_space<vmem>>, %arg1: memref<128x1024xf32, #tpu.memory_space<vmem>>, %arg2: memref<1x1024xf32, #tpu.memory_space<vmem>>, %arg3: memref<64x1024xf32, #tpu.memory_space<vmem>>) attributes {dimension_semantics = [], scalar_prefetch = 0 : i64, scratch_operands = 0 : i64, tpu.core_type = #tpu.core_type<tc>} {
    %c0 = arith.constant 0 : index
    %c0_0 = arith.constant 0 : index
    %0 = vector.load %arg0[%c0, %c0_0] : memref<64x128xf32, #tpu.memory_space<vmem>>, vector<64x128xf32>
    %c0_1 = arith.constant 0 : index
    %c0_2 = arith.constant 0 : index
    %1 = vector.load %arg1[%c0_1, %c0_2] : memref<128x1024xf32, #tpu.memory_space<vmem>>, vector<128x1024xf32>
    %cst = arith.constant dense<0.000000e+00> : vector<64x1024xf32>
    %2 = tpu.matmul %0, %1, %cst {dimension_numbers = #tpu.dot_dimension_numbers<[1], [0], [0], [1], [0, 0, 1, 1], [], []>} : vector<64x128xf32>, vector<128x1024xf32>, vector<64x1024xf32> -> vector<64x1024xf32>
    %c0_3 = arith.constant 0 : index
    %c0_4 = arith.constant 0 : index
    %3 = vector.load %arg2[%c0_3, %c0_4] : memref<1x1024xf32, #tpu.memory_space<vmem>>, vector<1x1024xf32>
    %4 = vector.broadcast %3 : vector<1x1024xf32> to vector<64x1024xf32>
    %5 = arith.addf %2, %4 : vector<64x1024xf32>
    %c0_5 = arith.constant 0 : index
    %c0_6 = arith.constant 0 : index
    %6 = vector.load %arg3[%c0_5, %c0_6] : memref<64x1024xf32, #tpu.memory_space<vmem>>, vector<64x1024xf32>
    tpu.vector_store %arg3[%c0_5, %c0_6], %5 {strides = array<i32>} : memref<64x1024xf32, #tpu.memory_space<vmem>>, vector<64x1024xf32>,
    return
  }
}

module attributes {stable_mosaic.version = 11 : i64} {
  func.func @_bilstm_layer_kernel(%arg0: i32, %arg1: memref<8x8x512xf32, #tpu.memory_space<vmem>>, %arg2: memref<1x128x512xf32, #tpu.memory_space<vmem>>, %arg3: memref<8x8x128xf32, #tpu.memory_space<vmem>>, %arg4: memref<8x128xf32, #tpu.memory_space<vmem>>, %arg5: memref<8x128xf32, #tpu.memory_space<vmem>>) attributes {dimension_semantics = [#tpu.dimension_semantics<parallel>], iteration_bounds = array<i64: 2>, scalar_prefetch = 0 : i64, scratch_operands = 2 : i64, tpu.core_type = #tpu.core_type<tc>, window_params = [{transform_indices = @transform_0, window_bounds = array<i64: 8, 8, 512>}, {transform_indices = @transform_1, window_bounds = array<i64: 1, 128, 512>}, {transform_indices = @transform_2, window_bounds = array<i64: 8, 8, 128>}]} {
    %cst = arith.constant 0.000000e+00 : f32
    %0 = vector.broadcast %cst : f32 to vector<8x128xf32>
    %c0 = arith.constant 0 : index
    %c0_0 = arith.constant 0 : index
    %1 = vector.load %arg4[%c0, %c0_0] : memref<8x128xf32, #tpu.memory_space<vmem>>, vector<8x128xf32>
    tpu.vector_store %arg4[%c0, %c0_0], %0 {strides = array<i32>} : memref<8x128xf32, #tpu.memory_space<vmem>>, vector<8x128xf32>,
    %cst_1 = arith.constant 0.000000e+00 : f32
    %2 = vector.broadcast %cst_1 : f32 to vector<8x128xf32>
    %c0_2 = arith.constant 0 : index
    %c0_3 = arith.constant 0 : index
    %3 = vector.load %arg5[%c0_2, %c0_3] : memref<8x128xf32, #tpu.memory_space<vmem>>, vector<8x128xf32>
    tpu.vector_store %arg5[%c0_2, %c0_3], %2 {strides = array<i32>} : memref<8x128xf32, #tpu.memory_space<vmem>>, vector<8x128xf32>,
    %c0_i32 = arith.constant 0 : i32
    %c0_i32_4 = arith.constant 0 : i32
    %4 = arith.cmpi eq, %arg0, %c0_i32_4 : i32
    %c7_i32 = arith.constant 7 : i32
    %5 = arith.subi %c7_i32, %c0_i32 : i32
    %6 = arith.select %4, %c0_i32, %5 : i32
    %7 = arith.index_cast %6 : i32 to index
    %c0_5 = arith.constant 0 : index
    %c0_6 = arith.constant 0 : index
    %8 = vector.load %arg1[%7, %c0_5, %c0_6] : memref<8x8x512xf32, #tpu.memory_space<vmem>>, vector<1x8x512xf32>
    %9 = vector.shape_cast %8 : vector<1x8x512xf32> to vector<8x512xf32>
    %c0_7 = arith.constant 0 : index
    %c0_8 = arith.constant 0 : index
    %10 = vector.load %arg4[%c0_7, %c0_8] : memref<8x128xf32, #tpu.memory_space<vmem>>, vector<8x128xf32>
    %c0_9 = arith.constant 0 : index
    %c0_10 = arith.constant 0 : index
    %c0_11 = arith.constant 0 : index
    %11 = vector.load %arg2[%c0_9, %c0_10, %c0_11] : memref<1x128x512xf32, #tpu.memory_space<vmem>>, vector<1x128x512xf32>
    %12 = vector.shape_cast %11 : vector<1x128x512xf32> to vector<128x512xf32>
    %cst_12 = arith.constant dense<0.000000e+00> : vector<8x512xf32>
    %13 = tpu.matmul %10, %12, %cst_12 {dimension_numbers = #tpu.dot_dimension_numbers<[1], [0], [0], [1], [0, 0, 1, 1], [], []>} : vector<8x128xf32>, vector<128x512xf32>, vector<8x512xf32> -> vector<8x512xf32>
    %14 = arith.addf %9, %13 : vector<8x512xf32>
    %15 = vector.extract_strided_slice %14 {offsets = [0, 0], sizes = [8, 128], strides = [1, 1]} : vector<8x512xf32> to vector<8x128xf32>
    %16 = arith.negf %15 : vector<8x128xf32>
    %17 = math.exp %16 : vector<8x128xf32>
    %cst_13 = arith.constant 1.000000e+00 : f32
    %18 = vector.broadcast %cst_13 : f32 to vector<8x128xf32>
    %19 = arith.addf %18, %17 : vector<8x128xf32>
    %20 = arith.divf %18, %19 : vector<8x128xf32>
    %21 = vector.extract_strided_slice %14 {offsets = [0, 128], sizes = [8, 128], strides = [1, 1]} : vector<8x512xf32> to vector<8x128xf32>
    %22 = arith.negf %21 : vector<8x128xf32>
    %23 = math.exp %22 : vector<8x128xf32>
    %cst_14 = arith.constant 1.000000e+00 : f32
    %24 = vector.broadcast %cst_14 : f32 to vector<8x128xf32>
    %25 = arith.addf %24, %23 : vector<8x128xf32>
    %26 = arith.divf %24, %25 : vector<8x128xf32>
    %27 = vector.extract_strided_slice %14 {offsets = [0, 256], sizes = [8, 128], strides = [1, 1]} : vector<8x512xf32> to vector<8x128xf32>
    %28 = math.tanh %27 : vector<8x128xf32>
    %29 = vector.extract_strided_slice %14 {offsets = [0, 384], sizes = [8, 128], strides = [1, 1]} : vector<8x512xf32> to vector<8x128xf32>
    %30 = arith.negf %29 : vector<8x128xf32>
    %31 = math.exp %30 : vector<8x128xf32>
    %cst_15 = arith.constant 1.000000e+00 : f32
    %32 = vector.broadcast %cst_15 : f32 to vector<8x128xf32>
    %33 = arith.addf %32, %31 : vector<8x128xf32>
    %34 = arith.divf %32, %33 : vector<8x128xf32>
    %c0_16 = arith.constant 0 : index
    %c0_17 = arith.constant 0 : index
    %35 = vector.load %arg5[%c0_16, %c0_17] : memref<8x128xf32, #tpu.memory_space<vmem>>, vector<8x128xf32>
    %36 = arith.mulf %26, %35 : vector<8x128xf32>
    %37 = arith.mulf %20, %28 : vector<8x128xf32>
    %38 = arith.addf %36, %37 : vector<8x128xf32>
    %39 = math.tanh %38 : vector<8x128xf32>
    %40 = arith.mulf %34, %39 : vector<8x128xf32>
    %c0_18 = arith.constant 0 : index
    %c0_19 = arith.constant 0 : index
    %41 = vector.load %arg5[%c0_18, %c0_19] : memref<8x128xf32, #tpu.memory_space<vmem>>, vector<8x128xf32>
    tpu.vector_store %arg5[%c0_18, %c0_19], %38 {strides = array<i32>} : memref<8x128xf32, #tpu.memory_space<vmem>>, vector<8x128xf32>,
    %c0_20 = arith.constant 0 : index
    %c0_21 = arith.constant 0 : index
    %42 = vector.load %arg4[%c0_20, %c0_21] : memref<8x128xf32, #tpu.memory_space<vmem>>, vector<8x128xf32>
    tpu.vector_store %arg4[%c0_20, %c0_21], %40 {strides = array<i32>} : memref<8x128xf32, #tpu.memory_space<vmem>>, vector<8x128xf32>,
    %43 = arith.index_cast %6 : i32 to index
    %c0_22 = arith.constant 0 : index
    %c0_23 = arith.constant 0 : index
    %44 = vector.load %arg3[%43, %c0_22, %c0_23] : memref<8x8x128xf32, #tpu.memory_space<vmem>>, vector<1x8x128xf32>
    %45 = vector.shape_cast %44 : vector<1x8x128xf32> to vector<8x128xf32>
    %46 = vector.shape_cast %40 : vector<8x128xf32> to vector<1x8x128xf32>
    tpu.vector_store %arg3[%43, %c0_22, %c0_23], %46 {strides = array<i32>} : memref<8x8x128xf32, #tpu.memory_space<vmem>>, vector<1x8x128xf32>,
    %c1_i32 = arith.constant 1 : i32
    %c0_i32_24 = arith.constant 0 : i32
    %47 = arith.cmpi eq, %arg0, %c0_i32_24 : i32
    %c7_i32_25 = arith.constant 7 : i32
    %48 = arith.subi %c7_i32_25, %c1_i32 : i32
    %49 = arith.select %47, %c1_i32, %48 : i32
    %50 = arith.index_cast %49 : i32 to index
    %c0_26 = arith.constant 0 : index
    %c0_27 = arith.constant 0 : index
    %51 = vector.load %arg1[%50, %c0_26, %c0_27] : memref<8x8x512xf32, #tpu.memory_space<vmem>>, vector<1x8x512xf32>
    %52 = vector.shape_cast %51 : vector<1x8x512xf32> to vector<8x512xf32>
    %c0_28 = arith.constant 0 : index
    %c0_29 = arith.constant 0 : index
    %53 = vector.load %arg4[%c0_28, %c0_29] : memref<8x128xf32, #tpu.memory_space<vmem>>, vector<8x128xf32>
    %c0_30 = arith.constant 0 : index
    %c0_31 = arith.constant 0 : index
    %c0_32 = arith.constant 0 : index
    %54 = vector.load %arg2[%c0_30, %c0_31, %c0_32] : memref<1x128x512xf32, #tpu.memory_space<vmem>>, vector<1x128x512xf32>
    %55 = vector.shape_cast %54 : vector<1x128x512xf32> to vector<128x512xf32>
    %cst_33 = arith.constant dense<0.000000e+00> : vector<8x512xf32>
    %56 = tpu.matmul %53, %55, %cst_33 {dimension_numbers = #tpu.dot_dimension_numbers<[1], [0], [0], [1], [0, 0, 1, 1], [], []>} : vector<8x128xf32>, vector<128x512xf32>, vector<8x512xf32> -> vector<8x512xf32>
    %57 = arith.addf %52, %56 : vector<8x512xf32>
    %58 = vector.extract_strided_slice %57 {offsets = [0, 0], sizes = [8, 128], strides = [1, 1]} : vector<8x512xf32> to vector<8x128xf32>
    %59 = arith.negf %58 : vector<8x128xf32>
    %60 = math.exp %59 : vector<8x128xf32>
    %cst_34 = arith.constant 1.000000e+00 : f32
    %61 = vector.broadcast %cst_34 : f32 to vector<8x128xf32>
    %62 = arith.addf %61, %60 : vector<8x128xf32>
    %63 = arith.divf %61, %62 : vector<8x128xf32>
    %64 = vector.extract_strided_slice %57 {offsets = [0, 128], sizes = [8, 128], strides = [1, 1]} : vector<8x512xf32> to vector<8x128xf32>
    %65 = arith.negf %64 : vector<8x128xf32>
    %66 = math.exp %65 : vector<8x128xf32>
    %cst_35 = arith.constant 1.000000e+00 : f32
    %67 = vector.broadcast %cst_35 : f32 to vector<8x128xf32>
    %68 = arith.addf %67, %66 : vector<8x128xf32>
    %69 = arith.divf %67, %68 : vector<8x128xf32>
    %70 = vector.extract_strided_slice %57 {offsets = [0, 256], sizes = [8, 128], strides = [1, 1]} : vector<8x512xf32> to vector<8x128xf32>
    %71 = math.tanh %70 : vector<8x128xf32>
    %72 = vector.extract_strided_slice %57 {offsets = [0, 384], sizes = [8, 128], strides = [1, 1]} : vector<8x512xf32> to vector<8x128xf32>
    %73 = arith.negf %72 : vector<8x128xf32>
    %74 = math.exp %73 : vector<8x128xf32>
    %cst_36 = arith.constant 1.000000e+00 : f32
    %75 = vector.broadcast %cst_36 : f32 to vector<8x128xf32>
    %76 = arith.addf %75, %74 : vector<8x128xf32>
    %77 = arith.divf %75, %76 : vector<8x128xf32>
    %c0_37 = arith.constant 0 : index
    %c0_38 = arith.constant 0 : index
    %78 = vector.load %arg5[%c0_37, %c0_38] : memref<8x128xf32, #tpu.memory_space<vmem>>, vector<8x128xf32>
    %79 = arith.mulf %69, %78 : vector<8x128xf32>
    %80 = arith.mulf %63, %71 : vector<8x128xf32>
    %81 = arith.addf %79, %80 : vector<8x128xf32>
    %82 = math.tanh %81 : vector<8x128xf32>
    %83 = arith.mulf %77, %82 : vector<8x128xf32>
    %c0_39 = arith.constant 0 : index
    %c0_40 = arith.constant 0 : index
    %84 = vector.load %arg5[%c0_39, %c0_40] : memref<8x128xf32, #tpu.memory_space<vmem>>, vector<8x128xf32>
    tpu.vector_store %arg5[%c0_39, %c0_40], %81 {strides = array<i32>} : memref<8x128xf32, #tpu.memory_space<vmem>>, vector<8x128xf32>,
    %c0_41 = arith.constant 0 : index
    %c0_42 = arith.constant 0 : index
    %85 = vector.load %arg4[%c0_41, %c0_42] : memref<8x128xf32, #tpu.memory_space<vmem>>, vector<8x128xf32>
    tpu.vector_store %arg4[%c0_41, %c0_42], %83 {strides = array<i32>} : memref<8x128xf32, #tpu.memory_space<vmem>>, vector<8x128xf32>,
    %86 = arith.index_cast %49 : i32 to index
    %c0_43 = arith.constant 0 : index
    %c0_44 = arith.constant 0 : index
    %87 = vector.load %arg3[%86, %c0_43, %c0_44] : memref<8x8x128xf32, #tpu.memory_space<vmem>>, vector<1x8x128xf32>
    %88 = vector.shape_cast %87 : vector<1x8x128xf32> to vector<8x128xf32>
    %89 = vector.shape_cast %83 : vector<8x128xf32> to vector<1x8x128xf32>
    tpu.vector_store %arg3[%86, %c0_43, %c0_44], %89 {strides = array<i32>} : memref<8x8x128xf32, #tpu.memory_space<vmem>>, vector<1x8x128xf32>,
    %c2_i32 = arith.constant 2 : i32
    %c0_i32_45 = arith.constant 0 : i32
    %90 = arith.cmpi eq, %arg0, %c0_i32_45 : i32
    %c7_i32_46 = arith.constant 7 : i32
    %91 = arith.subi %c7_i32_46, %c2_i32 : i32
    %92 = arith.select %90, %c2_i32, %91 : i32
    %93 = arith.index_cast %92 : i32 to index
    %c0_47 = arith.constant 0 : index
    %c0_48 = arith.constant 0 : index
    %94 = vector.load %arg1[%93, %c0_47, %c0_48] : memref<8x8x512xf32, #tpu.memory_space<vmem>>, vector<1x8x512xf32>
    %95 = vector.shape_cast %94 : vector<1x8x512xf32> to vector<8x512xf32>
    %c0_49 = arith.constant 0 : index
    %c0_50 = arith.constant 0 : index
    %96 = vector.load %arg4[%c0_49, %c0_50] : memref<8x128xf32, #tpu.memory_space<vmem>>, vector<8x128xf32>
    %c0_51 = arith.constant 0 : index
    %c0_52 = arith.constant 0 : index
    %c0_53 = arith.constant 0 : index
    %97 = vector.load %arg2[%c0_51, %c0_52, %c0_53] : memref<1x128x512xf32, #tpu.memory_space<vmem>>, vector<1x128x512xf32>
    %98 = vector.shape_cast %97 : vector<1x128x512xf32> to vector<128x512xf32>
    %cst_54 = arith.constant dense<0.000000e+00> : vector<8x512xf32>
    %99 = tpu.matmul %96, %98, %cst_54 {dimension_numbers = #tpu.dot_dimension_numbers<[1], [0], [0], [1], [0, 0, 1, 1], [], []>} : vector<8x128xf32>, vector<128x512xf32>, vector<8x512xf32> -> vector<8x512xf32>
    %100 = arith.addf %95, %99 : vector<8x512xf32>
    %101 = vector.extract_strided_slice %100 {offsets = [0, 0], sizes = [8, 128], strides = [1, 1]} : vector<8x512xf32> to vector<8x128xf32>
    %102 = arith.negf %101 : vector<8x128xf32>
    %103 = math.exp %102 : vector<8x128xf32>
    %cst_55 = arith.constant 1.000000e+00 : f32
    %104 = vector.broadcast %cst_55 : f32 to vector<8x128xf32>
    %105 = arith.addf %104, %103 : vector<8x128xf32>
    %106 = arith.divf %104, %105 : vector<8x128xf32>
    %107 = vector.extract_strided_slice %100 {offsets = [0, 128], sizes = [8, 128], strides = [1, 1]} : vector<8x512xf32> to vector<8x128xf32>
    %108 = arith.negf %107 : vector<8x128xf32>
    %109 = math.exp %108 : vector<8x128xf32>
    %cst_56 = arith.constant 1.000000e+00 : f32
    %110 = vector.broadcast %cst_56 : f32 to vector<8x128xf32>
    %111 = arith.addf %110, %109 : vector<8x128xf32>
    %112 = arith.divf %110, %111 : vector<8x128xf32>
    %113 = vector.extract_strided_slice %100 {offsets = [0, 256], sizes = [8, 128], strides = [1, 1]} : vector<8x512xf32> to vector<8x128xf32>
    %114 = math.tanh %113 : vector<8x128xf32>
    %115 = vector.extract_strided_slice %100 {offsets = [0, 384], sizes = [8, 128], strides = [1, 1]} : vector<8x512xf32> to vector<8x128xf32>
    %116 = arith.negf %115 : vector<8x128xf32>
    %117 = math.exp %116 : vector<8x128xf32>
    %cst_57 = arith.constant 1.000000e+00 : f32
    %118 = vector.broadcast %cst_57 : f32 to vector<8x128xf32>
    %119 = arith.addf %118, %117 : vector<8x128xf32>
    %120 = arith.divf %118, %119 : vector<8x128xf32>
    %c0_58 = arith.constant 0 : index
    %c0_59 = arith.constant 0 : index
    %121 = vector.load %arg5[%c0_58, %c0_59] : memref<8x128xf32, #tpu.memory_space<vmem>>, vector<8x128xf32>
    %122 = arith.mulf %112, %121 : vector<8x128xf32>
    %123 = arith.mulf %106, %114 : vector<8x128xf32>
    %124 = arith.addf %122, %123 : vector<8x128xf32>
    %125 = math.tanh %124 : vector<8x128xf32>
    %126 = arith.mulf %120, %125 : vector<8x128xf32>
    %c0_60 = arith.constant 0 : index
    %c0_61 = arith.constant 0 : index
    %127 = vector.load %arg5[%c0_60, %c0_61] : memref<8x128xf32, #tpu.memory_space<vmem>>, vector<8x128xf32>
    tpu.vector_store %arg5[%c0_60, %c0_61], %124 {strides = array<i32>} : memref<8x128xf32, #tpu.memory_space<vmem>>, vector<8x128xf32>,
    %c0_62 = arith.constant 0 : index
    %c0_63 = arith.constant 0 : index
    %128 = vector.load %arg4[%c0_62, %c0_63] : memref<8x128xf32, #tpu.memory_space<vmem>>, vector<8x128xf32>
    tpu.vector_store %arg4[%c0_62, %c0_63], %126 {strides = array<i32>} : memref<8x128xf32, #tpu.memory_space<vmem>>, vector<8x128xf32>,
    %129 = arith.index_cast %92 : i32 to index
    %c0_64 = arith.constant 0 : index
    %c0_65 = arith.constant 0 : index
    %130 = vector.load %arg3[%129, %c0_64, %c0_65] : memref<8x8x128xf32, #tpu.memory_space<vmem>>, vector<1x8x128xf32>
    %131 = vector.shape_cast %130 : vector<1x8x128xf32> to vector<8x128xf32>
    %132 = vector.shape_cast %126 : vector<8x128xf32> to vector<1x8x128xf32>
    tpu.vector_store %arg3[%129, %c0_64, %c0_65], %132 {strides = array<i32>} : memref<8x8x128xf32, #tpu.memory_space<vmem>>, vector<1x8x128xf32>,
    %c3_i32 = arith.constant 3 : i32
    %c0_i32_66 = arith.constant 0 : i32
    %133 = arith.cmpi eq, %arg0, %c0_i32_66 : i32
    %c7_i32_67 = arith.constant 7 : i32
    %134 = arith.subi %c7_i32_67, %c3_i32 : i32
    %135 = arith.select %133, %c3_i32, %134 : i32
    %136 = arith.index_cast %135 : i32 to index
    %c0_68 = arith.constant 0 : index
    %c0_69 = arith.constant 0 : index
    %137 = vector.load %arg1[%136, %c0_68, %c0_69] : memref<8x8x512xf32, #tpu.memory_space<vmem>>, vector<1x8x512xf32>
    %138 = vector.shape_cast %137 : vector<1x8x512xf32> to vector<8x512xf32>
    %c0_70 = arith.constant 0 : index
    %c0_71 = arith.constant 0 : index
    %139 = vector.load %arg4[%c0_70, %c0_71] : memref<8x128xf32, #tpu.memory_space<vmem>>, vector<8x128xf32>
    %c0_72 = arith.constant 0 : index
    %c0_73 = arith.constant 0 : index
    %c0_74 = arith.constant 0 : index
    %140 = vector.load %arg2[%c0_72, %c0_73, %c0_74] : memref<1x128x512xf32, #tpu.memory_space<vmem>>, vector<1x128x512xf32>
    %141 = vector.shape_cast %140 : vector<1x128x512xf32> to vector<128x512xf32>
    %cst_75 = arith.constant dense<0.000000e+00> : vector<8x512xf32>
    %142 = tpu.matmul %139, %141, %cst_75 {dimension_numbers = #tpu.dot_dimension_numbers<[1], [0], [0], [1], [0, 0, 1, 1], [], []>} : vector<8x128xf32>, vector<128x512xf32>, vector<8x512xf32> -> vector<8x512xf32>
    %143 = arith.addf %138, %142 : vector<8x512xf32>
    %144 = vector.extract_strided_slice %143 {offsets = [0, 0], sizes = [8, 128], strides = [1, 1]} : vector<8x512xf32> to vector<8x128xf32>
    %145 = arith.negf %144 : vector<8x128xf32>
    %146 = math.exp %145 : vector<8x128xf32>
    %cst_76 = arith.constant 1.000000e+00 : f32
    %147 = vector.broadcast %cst_76 : f32 to vector<8x128xf32>
    %148 = arith.addf %147, %146 : vector<8x128xf32>
    %149 = arith.divf %147, %148 : vector<8x128xf32>
    %150 = vector.extract_strided_slice %143 {offsets = [0, 128], sizes = [8, 128], strides = [1, 1]} : vector<8x512xf32> to vector<8x128xf32>
    %151 = arith.negf %150 : vector<8x128xf32>
    %152 = math.exp %151 : vector<8x128xf32>
    %cst_77 = arith.constant 1.000000e+00 : f32
    %153 = vector.broadcast %cst_77 : f32 to vector<8x128xf32>
    %154 = arith.addf %153, %152 : vector<8x128xf32>
    %155 = arith.divf %153, %154 : vector<8x128xf32>
    %156 = vector.extract_strided_slice %143 {offsets = [0, 256], sizes = [8, 128], strides = [1, 1]} : vector<8x512xf32> to vector<8x128xf32>
    %157 = math.tanh %156 : vector<8x128xf32>
    %158 = vector.extract_strided_slice %143 {offsets = [0, 384], sizes = [8, 128], strides = [1, 1]} : vector<8x512xf32> to vector<8x128xf32>
    %159 = arith.negf %158 : vector<8x128xf32>
    %160 = math.exp %159 : vector<8x128xf32>
    %cst_78 = arith.constant 1.000000e+00 : f32
    %161 = vector.broadcast %cst_78 : f32 to vector<8x128xf32>
    %162 = arith.addf %161, %160 : vector<8x128xf32>
    %163 = arith.divf %161, %162 : vector<8x128xf32>
    %c0_79 = arith.constant 0 : index
    %c0_80 = arith.constant 0 : index
    %164 = vector.load %arg5[%c0_79, %c0_80] : memref<8x128xf32, #tpu.memory_space<vmem>>, vector<8x128xf32>
    %165 = arith.mulf %155, %164 : vector<8x128xf32>
    %166 = arith.mulf %149, %157 : vector<8x128xf32>
    %167 = arith.addf %165, %166 : vector<8x128xf32>
    %168 = math.tanh %167 : vector<8x128xf32>
    %169 = arith.mulf %163, %168 : vector<8x128xf32>
    %c0_81 = arith.constant 0 : index
    %c0_82 = arith.constant 0 : index
    %170 = vector.load %arg5[%c0_81, %c0_82] : memref<8x128xf32, #tpu.memory_space<vmem>>, vector<8x128xf32>
    tpu.vector_store %arg5[%c0_81, %c0_82], %167 {strides = array<i32>} : memref<8x128xf32, #tpu.memory_space<vmem>>, vector<8x128xf32>,
    %c0_83 = arith.constant 0 : index
    %c0_84 = arith.constant 0 : index
    %171 = vector.load %arg4[%c0_83, %c0_84] : memref<8x128xf32, #tpu.memory_space<vmem>>, vector<8x128xf32>
    tpu.vector_store %arg4[%c0_83, %c0_84], %169 {strides = array<i32>} : memref<8x128xf32, #tpu.memory_space<vmem>>, vector<8x128xf32>,
    %172 = arith.index_cast %135 : i32 to index
    %c0_85 = arith.constant 0 : index
    %c0_86 = arith.constant 0 : index
    %173 = vector.load %arg3[%172, %c0_85, %c0_86] : memref<8x8x128xf32, #tpu.memory_space<vmem>>, vector<1x8x128xf32>
    %174 = vector.shape_cast %173 : vector<1x8x128xf32> to vector<8x128xf32>
    %175 = vector.shape_cast %169 : vector<8x128xf32> to vector<1x8x128xf32>
    tpu.vector_store %arg3[%172, %c0_85, %c0_86], %175 {strides = array<i32>} : memref<8x8x128xf32, #tpu.memory_space<vmem>>, vector<1x8x128xf32>,
    %c4_i32 = arith.constant 4 : i32
    %c0_i32_87 = arith.constant 0 : i32
    %176 = arith.cmpi eq, %arg0, %c0_i32_87 : i32
    %c7_i32_88 = arith.constant 7 : i32
    %177 = arith.subi %c7_i32_88, %c4_i32 : i32
    %178 = arith.select %176, %c4_i32, %177 : i32
    %179 = arith.index_cast %178 : i32 to index
    %c0_89 = arith.constant 0 : index
    %c0_90 = arith.constant 0 : index
    %180 = vector.load %arg1[%179, %c0_89, %c0_90] : memref<8x8x512xf32, #tpu.memory_space<vmem>>, vector<1x8x512xf32>
    %181 = vector.shape_cast %180 : vector<1x8x512xf32> to vector<8x512xf32>
    %c0_91 = arith.constant 0 : index
    %c0_92 = arith.constant 0 : index
    %182 = vector.load %arg4[%c0_91, %c0_92] : memref<8x128xf32, #tpu.memory_space<vmem>>, vector<8x128xf32>
    %c0_93 = arith.constant 0 : index
    %c0_94 = arith.constant 0 : index
    %c0_95 = arith.constant 0 : index
    %183 = vector.load %arg2[%c0_93, %c0_94, %c0_95] : memref<1x128x512xf32, #tpu.memory_space<vmem>>, vector<1x128x512xf32>
    %184 = vector.shape_cast %183 : vector<1x128x512xf32> to vector<128x512xf32>
    %cst_96 = arith.constant dense<0.000000e+00> : vector<8x512xf32>
    %185 = tpu.matmul %182, %184, %cst_96 {dimension_numbers = #tpu.dot_dimension_numbers<[1], [0], [0], [1], [0, 0, 1, 1], [], []>} : vector<8x128xf32>, vector<128x512xf32>, vector<8x512xf32> -> vector<8x512xf32>
    %186 = arith.addf %181, %185 : vector<8x512xf32>
    %187 = vector.extract_strided_slice %186 {offsets = [0, 0], sizes = [8, 128], strides = [1, 1]} : vector<8x512xf32> to vector<8x128xf32>
    %188 = arith.negf %187 : vector<8x128xf32>
    %189 = math.exp %188 : vector<8x128xf32>
    %cst_97 = arith.constant 1.000000e+00 : f32
    %190 = vector.broadcast %cst_97 : f32 to vector<8x128xf32>
    %191 = arith.addf %190, %189 : vector<8x128xf32>
    %192 = arith.divf %190, %191 : vector<8x128xf32>
    %193 = vector.extract_strided_slice %186 {offsets = [0, 128], sizes = [8, 128], strides = [1, 1]} : vector<8x512xf32> to vector<8x128xf32>
    %194 = arith.negf %193 : vector<8x128xf32>
    %195 = math.exp %194 : vector<8x128xf32>
    %cst_98 = arith.constant 1.000000e+00 : f32
    %196 = vector.broadcast %cst_98 : f32 to vector<8x128xf32>
    %197 = arith.addf %196, %195 : vector<8x128xf32>
    %198 = arith.divf %196, %197 : vector<8x128xf32>
    %199 = vector.extract_strided_slice %186 {offsets = [0, 256], sizes = [8, 128], strides = [1, 1]} : vector<8x512xf32> to vector<8x128xf32>
    %200 = math.tanh %199 : vector<8x128xf32>
    %201 = vector.extract_strided_slice %186 {offsets = [0, 384], sizes = [8, 128], strides = [1, 1]} : vector<8x512xf32> to vector<8x128xf32>
    %202 = arith.negf %201 : vector<8x128xf32>
    %203 = math.exp %202 : vector<8x128xf32>
    %cst_99 = arith.constant 1.000000e+00 : f32
    %204 = vector.broadcast %cst_99 : f32 to vector<8x128xf32>
    %205 = arith.addf %204, %203 : vector<8x128xf32>
    %206 = arith.divf %204, %205 : vector<8x128xf32>
    %c0_100 = arith.constant 0 : index
    %c0_101 = arith.constant 0 : index
    %207 = vector.load %arg5[%c0_100, %c0_101] : memref<8x128xf32, #tpu.memory_space<vmem>>, vector<8x128xf32>
    %208 = arith.mulf %198, %207 : vector<8x128xf32>
    %209 = arith.mulf %192, %200 : vector<8x128xf32>
    %210 = arith.addf %208, %209 : vector<8x128xf32>
    %211 = math.tanh %210 : vector<8x128xf32>
    %212 = arith.mulf %206, %211 : vector<8x128xf32>
    %c0_102 = arith.constant 0 : index
    %c0_103 = arith.constant 0 : index
    %213 = vector.load %arg5[%c0_102, %c0_103] : memref<8x128xf32, #tpu.memory_space<vmem>>, vector<8x128xf32>
    tpu.vector_store %arg5[%c0_102, %c0_103], %210 {strides = array<i32>} : memref<8x128xf32, #tpu.memory_space<vmem>>, vector<8x128xf32>,
    %c0_104 = arith.constant 0 : index
    %c0_105 = arith.constant 0 : index
    %214 = vector.load %arg4[%c0_104, %c0_105] : memref<8x128xf32, #tpu.memory_space<vmem>>, vector<8x128xf32>
    tpu.vector_store %arg4[%c0_104, %c0_105], %212 {strides = array<i32>} : memref<8x128xf32, #tpu.memory_space<vmem>>, vector<8x128xf32>,
    %215 = arith.index_cast %178 : i32 to index
    %c0_106 = arith.constant 0 : index
    %c0_107 = arith.constant 0 : index
    %216 = vector.load %arg3[%215, %c0_106, %c0_107] : memref<8x8x128xf32, #tpu.memory_space<vmem>>, vector<1x8x128xf32>
    %217 = vector.shape_cast %216 : vector<1x8x128xf32> to vector<8x128xf32>
    %218 = vector.shape_cast %212 : vector<8x128xf32> to vector<1x8x128xf32>
    tpu.vector_store %arg3[%215, %c0_106, %c0_107], %218 {strides = array<i32>} : memref<8x8x128xf32, #tpu.memory_space<vmem>>, vector<1x8x128xf32>,
    %c5_i32 = arith.constant 5 : i32
    %c0_i32_108 = arith.constant 0 : i32
    %219 = arith.cmpi eq, %arg0, %c0_i32_108 : i32
    %c7_i32_109 = arith.constant 7 : i32
    %220 = arith.subi %c7_i32_109, %c5_i32 : i32
    %221 = arith.select %219, %c5_i32, %220 : i32
    %222 = arith.index_cast %221 : i32 to index
    %c0_110 = arith.constant 0 : index
    %c0_111 = arith.constant 0 : index
    %223 = vector.load %arg1[%222, %c0_110, %c0_111] : memref<8x8x512xf32, #tpu.memory_space<vmem>>, vector<1x8x512xf32>
    %224 = vector.shape_cast %223 : vector<1x8x512xf32> to vector<8x512xf32>
    %c0_112 = arith.constant 0 : index
    %c0_113 = arith.constant 0 : index
    %225 = vector.load %arg4[%c0_112, %c0_113] : memref<8x128xf32, #tpu.memory_space<vmem>>, vector<8x128xf32>
    %c0_114 = arith.constant 0 : index
    %c0_115 = arith.constant 0 : index
    %c0_116 = arith.constant 0 : index
    %226 = vector.load %arg2[%c0_114, %c0_115, %c0_116] : memref<1x128x512xf32, #tpu.memory_space<vmem>>, vector<1x128x512xf32>
    %227 = vector.shape_cast %226 : vector<1x128x512xf32> to vector<128x512xf32>
    %cst_117 = arith.constant dense<0.000000e+00> : vector<8x512xf32>
    %228 = tpu.matmul %225, %227, %cst_117 {dimension_numbers = #tpu.dot_dimension_numbers<[1], [0], [0], [1], [0, 0, 1, 1], [], []>} : vector<8x128xf32>, vector<128x512xf32>, vector<8x512xf32> -> vector<8x512xf32>
    %229 = arith.addf %224, %228 : vector<8x512xf32>
    %230 = vector.extract_strided_slice %229 {offsets = [0, 0], sizes = [8, 128], strides = [1, 1]} : vector<8x512xf32> to vector<8x128xf32>
    %231 = arith.negf %230 : vector<8x128xf32>
    %232 = math.exp %231 : vector<8x128xf32>
    %cst_118 = arith.constant 1.000000e+00 : f32
    %233 = vector.broadcast %cst_118 : f32 to vector<8x128xf32>
    %234 = arith.addf %233, %232 : vector<8x128xf32>
    %235 = arith.divf %233, %234 : vector<8x128xf32>
    %236 = vector.extract_strided_slice %229 {offsets = [0, 128], sizes = [8, 128], strides = [1, 1]} : vector<8x512xf32> to vector<8x128xf32>
    %237 = arith.negf %236 : vector<8x128xf32>
    %238 = math.exp %237 : vector<8x128xf32>
    %cst_119 = arith.constant 1.000000e+00 : f32
    %239 = vector.broadcast %cst_119 : f32 to vector<8x128xf32>
    %240 = arith.addf %239, %238 : vector<8x128xf32>
    %241 = arith.divf %239, %240 : vector<8x128xf32>
    %242 = vector.extract_strided_slice %229 {offsets = [0, 256], sizes = [8, 128], strides = [1, 1]} : vector<8x512xf32> to vector<8x128xf32>
    %243 = math.tanh %242 : vector<8x128xf32>
    %244 = vector.extract_strided_slice %229 {offsets = [0, 384], sizes = [8, 128], strides = [1, 1]} : vector<8x512xf32> to vector<8x128xf32>
    %245 = arith.negf %244 : vector<8x128xf32>
    %246 = math.exp %245 : vector<8x128xf32>
    %cst_120 = arith.constant 1.000000e+00 : f32
    %247 = vector.broadcast %cst_120 : f32 to vector<8x128xf32>
    %248 = arith.addf %247, %246 : vector<8x128xf32>
    %249 = arith.divf %247, %248 : vector<8x128xf32>
    %c0_121 = arith.constant 0 : index
    %c0_122 = arith.constant 0 : index
    %250 = vector.load %arg5[%c0_121, %c0_122] : memref<8x128xf32, #tpu.memory_space<vmem>>, vector<8x128xf32>
    %251 = arith.mulf %241, %250 : vector<8x128xf32>
    %252 = arith.mulf %235, %243 : vector<8x128xf32>
    %253 = arith.addf %251, %252 : vector<8x128xf32>
    %254 = math.tanh %253 : vector<8x128xf32>
    %255 = arith.mulf %249, %254 : vector<8x128xf32>
    %c0_123 = arith.constant 0 : index
    %c0_124 = arith.constant 0 : index
    %256 = vector.load %arg5[%c0_123, %c0_124] : memref<8x128xf32, #tpu.memory_space<vmem>>, vector<8x128xf32>
    tpu.vector_store %arg5[%c0_123, %c0_124], %253 {strides = array<i32>} : memref<8x128xf32, #tpu.memory_space<vmem>>, vector<8x128xf32>,
    %c0_125 = arith.constant 0 : index
    %c0_126 = arith.constant 0 : index
    %257 = vector.load %arg4[%c0_125, %c0_126] : memref<8x128xf32, #tpu.memory_space<vmem>>, vector<8x128xf32>
    tpu.vector_store %arg4[%c0_125, %c0_126], %255 {strides = array<i32>} : memref<8x128xf32, #tpu.memory_space<vmem>>, vector<8x128xf32>,
    %258 = arith.index_cast %221 : i32 to index
    %c0_127 = arith.constant 0 : index
    %c0_128 = arith.constant 0 : index
    %259 = vector.load %arg3[%258, %c0_127, %c0_128] : memref<8x8x128xf32, #tpu.memory_space<vmem>>, vector<1x8x128xf32>
    %260 = vector.shape_cast %259 : vector<1x8x128xf32> to vector<8x128xf32>
    %261 = vector.shape_cast %255 : vector<8x128xf32> to vector<1x8x128xf32>
    tpu.vector_store %arg3[%258, %c0_127, %c0_128], %261 {strides = array<i32>} : memref<8x8x128xf32, #tpu.memory_space<vmem>>, vector<1x8x128xf32>,
    %c6_i32 = arith.constant 6 : i32
    %c0_i32_129 = arith.constant 0 : i32
    %262 = arith.cmpi eq, %arg0, %c0_i32_129 : i32
    %c7_i32_130 = arith.constant 7 : i32
    %263 = arith.subi %c7_i32_130, %c6_i32 : i32
    %264 = arith.select %262, %c6_i32, %263 : i32
    %265 = arith.index_cast %264 : i32 to index
    %c0_131 = arith.constant 0 : index
    %c0_132 = arith.constant 0 : index
    %266 = vector.load %arg1[%265, %c0_131, %c0_132] : memref<8x8x512xf32, #tpu.memory_space<vmem>>, vector<1x8x512xf32>
    %267 = vector.shape_cast %266 : vector<1x8x512xf32> to vector<8x512xf32>
    %c0_133 = arith.constant 0 : index
    %c0_134 = arith.constant 0 : index
    %268 = vector.load %arg4[%c0_133, %c0_134] : memref<8x128xf32, #tpu.memory_space<vmem>>, vector<8x128xf32>
    %c0_135 = arith.constant 0 : index
    %c0_136 = arith.constant 0 : index
    %c0_137 = arith.constant 0 : index
    %269 = vector.load %arg2[%c0_135, %c0_136, %c0_137] : memref<1x128x512xf32, #tpu.memory_space<vmem>>, vector<1x128x512xf32>
    %270 = vector.shape_cast %269 : vector<1x128x512xf32> to vector<128x512xf32>
    %cst_138 = arith.constant dense<0.000000e+00> : vector<8x512xf32>
    %271 = tpu.matmul %268, %270, %cst_138 {dimension_numbers = #tpu.dot_dimension_numbers<[1], [0], [0], [1], [0, 0, 1, 1], [], []>} : vector<8x128xf32>, vector<128x512xf32>, vector<8x512xf32> -> vector<8x512xf32>
    %272 = arith.addf %267, %271 : vector<8x512xf32>
    %273 = vector.extract_strided_slice %272 {offsets = [0, 0], sizes = [8, 128], strides = [1, 1]} : vector<8x512xf32> to vector<8x128xf32>
    %274 = arith.negf %273 : vector<8x128xf32>
    %275 = math.exp %274 : vector<8x128xf32>
    %cst_139 = arith.constant 1.000000e+00 : f32
    %276 = vector.broadcast %cst_139 : f32 to vector<8x128xf32>
    %277 = arith.addf %276, %275 : vector<8x128xf32>
    %278 = arith.divf %276, %277 : vector<8x128xf32>
    %279 = vector.extract_strided_slice %272 {offsets = [0, 128], sizes = [8, 128], strides = [1, 1]} : vector<8x512xf32> to vector<8x128xf32>
    %280 = arith.negf %279 : vector<8x128xf32>
    %281 = math.exp %280 : vector<8x128xf32>
    %cst_140 = arith.constant 1.000000e+00 : f32
    %282 = vector.broadcast %cst_140 : f32 to vector<8x128xf32>
    %283 = arith.addf %282, %281 : vector<8x128xf32>
    %284 = arith.divf %282, %283 : vector<8x128xf32>
    %285 = vector.extract_strided_slice %272 {offsets = [0, 256], sizes = [8, 128], strides = [1, 1]} : vector<8x512xf32> to vector<8x128xf32>
    %286 = math.tanh %285 : vector<8x128xf32>
    %287 = vector.extract_strided_slice %272 {offsets = [0, 384], sizes = [8, 128], strides = [1, 1]} : vector<8x512xf32> to vector<8x128xf32>
    %288 = arith.negf %287 : vector<8x128xf32>
    %289 = math.exp %288 : vector<8x128xf32>
    %cst_141 = arith.constant 1.000000e+00 : f32
    %290 = vector.broadcast %cst_141 : f32 to vector<8x128xf32>
    %291 = arith.addf %290, %289 : vector<8x128xf32>
    %292 = arith.divf %290, %291 : vector<8x128xf32>
    %c0_142 = arith.constant 0 : index
    %c0_143 = arith.constant 0 : index
    %293 = vector.load %arg5[%c0_142, %c0_143] : memref<8x128xf32, #tpu.memory_space<vmem>>, vector<8x128xf32>
    %294 = arith.mulf %284, %293 : vector<8x128xf32>
    %295 = arith.mulf %278, %286 : vector<8x128xf32>
    %296 = arith.addf %294, %295 : vector<8x128xf32>
    %297 = math.tanh %296 : vector<8x128xf32>
    %298 = arith.mulf %292, %297 : vector<8x128xf32>
    %c0_144 = arith.constant 0 : index
    %c0_145 = arith.constant 0 : index
    %299 = vector.load %arg5[%c0_144, %c0_145] : memref<8x128xf32, #tpu.memory_space<vmem>>, vector<8x128xf32>
    tpu.vector_store %arg5[%c0_144, %c0_145], %296 {strides = array<i32>} : memref<8x128xf32, #tpu.memory_space<vmem>>, vector<8x128xf32>,
    %c0_146 = arith.constant 0 : index
    %c0_147 = arith.constant 0 : index
    %300 = vector.load %arg4[%c0_146, %c0_147] : memref<8x128xf32, #tpu.memory_space<vmem>>, vector<8x128xf32>
    tpu.vector_store %arg4[%c0_146, %c0_147], %298 {strides = array<i32>} : memref<8x128xf32, #tpu.memory_space<vmem>>, vector<8x128xf32>,
    %301 = arith.index_cast %264 : i32 to index
    %c0_148 = arith.constant 0 : index
    %c0_149 = arith.constant 0 : index
    %302 = vector.load %arg3[%301, %c0_148, %c0_149] : memref<8x8x128xf32, #tpu.memory_space<vmem>>, vector<1x8x128xf32>
    %303 = vector.shape_cast %302 : vector<1x8x128xf32> to vector<8x128xf32>
    %304 = vector.shape_cast %298 : vector<8x128xf32> to vector<1x8x128xf32>
    tpu.vector_store %arg3[%301, %c0_148, %c0_149], %304 {strides = array<i32>} : memref<8x8x128xf32, #tpu.memory_space<vmem>>, vector<1x8x128xf32>,
    %c7_i32_150 = arith.constant 7 : i32
    %c0_i32_151 = arith.constant 0 : i32
    %305 = arith.cmpi eq, %arg0, %c0_i32_151 : i32
    %c7_i32_152 = arith.constant 7 : i32
    %306 = arith.subi %c7_i32_152, %c7_i32_150 : i32
    %307 = arith.select %305, %c7_i32_150, %306 : i32
    %308 = arith.index_cast %307 : i32 to index
    %c0_153 = arith.constant 0 : index
    %c0_154 = arith.constant 0 : index
    %309 = vector.load %arg1[%308, %c0_153, %c0_154] : memref<8x8x512xf32, #tpu.memory_space<vmem>>, vector<1x8x512xf32>
    %310 = vector.shape_cast %309 : vector<1x8x512xf32> to vector<8x512xf32>
    %c0_155 = arith.constant 0 : index
    %c0_156 = arith.constant 0 : index
    %311 = vector.load %arg4[%c0_155, %c0_156] : memref<8x128xf32, #tpu.memory_space<vmem>>, vector<8x128xf32>
    %c0_157 = arith.constant 0 : index
    %c0_158 = arith.constant 0 : index
    %c0_159 = arith.constant 0 : index
    %312 = vector.load %arg2[%c0_157, %c0_158, %c0_159] : memref<1x128x512xf32, #tpu.memory_space<vmem>>, vector<1x128x512xf32>
    %313 = vector.shape_cast %312 : vector<1x128x512xf32> to vector<128x512xf32>
    %cst_160 = arith.constant dense<0.000000e+00> : vector<8x512xf32>
    %314 = tpu.matmul %311, %313, %cst_160 {dimension_numbers = #tpu.dot_dimension_numbers<[1], [0], [0], [1], [0, 0, 1, 1], [], []>} : vector<8x128xf32>, vector<128x512xf32>, vector<8x512xf32> -> vector<8x512xf32>
    %315 = arith.addf %310, %314 : vector<8x512xf32>
    %316 = vector.extract_strided_slice %315 {offsets = [0, 0], sizes = [8, 128], strides = [1, 1]} : vector<8x512xf32> to vector<8x128xf32>
    %317 = arith.negf %316 : vector<8x128xf32>
    %318 = math.exp %317 : vector<8x128xf32>
    %cst_161 = arith.constant 1.000000e+00 : f32
    %319 = vector.broadcast %cst_161 : f32 to vector<8x128xf32>
    %320 = arith.addf %319, %318 : vector<8x128xf32>
    %321 = arith.divf %319, %320 : vector<8x128xf32>
    %322 = vector.extract_strided_slice %315 {offsets = [0, 128], sizes = [8, 128], strides = [1, 1]} : vector<8x512xf32> to vector<8x128xf32>
    %323 = arith.negf %322 : vector<8x128xf32>
    %324 = math.exp %323 : vector<8x128xf32>
    %cst_162 = arith.constant 1.000000e+00 : f32
    %325 = vector.broadcast %cst_162 : f32 to vector<8x128xf32>
    %326 = arith.addf %325, %324 : vector<8x128xf32>
    %327 = arith.divf %325, %326 : vector<8x128xf32>
    %328 = vector.extract_strided_slice %315 {offsets = [0, 256], sizes = [8, 128], strides = [1, 1]} : vector<8x512xf32> to vector<8x128xf32>
    %329 = math.tanh %328 : vector<8x128xf32>
    %330 = vector.extract_strided_slice %315 {offsets = [0, 384], sizes = [8, 128], strides = [1, 1]} : vector<8x512xf32> to vector<8x128xf32>
    %331 = arith.negf %330 : vector<8x128xf32>
    %332 = math.exp %331 : vector<8x128xf32>
    %cst_163 = arith.constant 1.000000e+00 : f32
    %333 = vector.broadcast %cst_163 : f32 to vector<8x128xf32>
    %334 = arith.addf %333, %332 : vector<8x128xf32>
    %335 = arith.divf %333, %334 : vector<8x128xf32>
    %c0_164 = arith.constant 0 : index
    %c0_165 = arith.constant 0 : index
    %336 = vector.load %arg5[%c0_164, %c0_165] : memref<8x128xf32, #tpu.memory_space<vmem>>, vector<8x128xf32>
    %337 = arith.mulf %327, %336 : vector<8x128xf32>
    %338 = arith.mulf %321, %329 : vector<8x128xf32>
    %339 = arith.addf %337, %338 : vector<8x128xf32>
    %340 = math.tanh %339 : vector<8x128xf32>
    %341 = arith.mulf %335, %340 : vector<8x128xf32>
    %c0_166 = arith.constant 0 : index
    %c0_167 = arith.constant 0 : index
    %342 = vector.load %arg5[%c0_166, %c0_167] : memref<8x128xf32, #tpu.memory_space<vmem>>, vector<8x128xf32>
    tpu.vector_store %arg5[%c0_166, %c0_167], %339 {strides = array<i32>} : memref<8x128xf32, #tpu.memory_space<vmem>>, vector<8x128xf32>,
    %c0_168 = arith.constant 0 : index
    %c0_169 = arith.constant 0 : index
    %343 = vector.load %arg4[%c0_168, %c0_169] : memref<8x128xf32, #tpu.memory_space<vmem>>, vector<8x128xf32>
    tpu.vector_store %arg4[%c0_168, %c0_169], %341 {strides = array<i32>} : memref<8x128xf32, #tpu.memory_space<vmem>>, vector<8x128xf32>,
    %344 = arith.index_cast %307 : i32 to index
    %c0_170 = arith.constant 0 : index
    %c0_171 = arith.constant 0 : index
    %345 = vector.load %arg3[%344, %c0_170, %c0_171] : memref<8x8x128xf32, #tpu.memory_space<vmem>>, vector<1x8x128xf32>
    %346 = vector.shape_cast %345 : vector<1x8x128xf32> to vector<8x128xf32>
    %347 = vector.shape_cast %341 : vector<8x128xf32> to vector<1x8x128xf32>
    tpu.vector_store %arg3[%344, %c0_170, %c0_171], %347 {strides = array<i32>} : memref<8x8x128xf32, #tpu.memory_space<vmem>>, vector<1x8x128xf32>,
    %c8_i32 = arith.constant 8 : i32
    return
  }
  func.func @transform_0(%arg0: i32) -> (i32, i32, i32) {
    %c0_i32 = arith.constant 0 : i32
    %c0_i32_0 = arith.constant 0 : i32
    %c0_i32_1 = arith.constant 0 : i32
    return %c0_i32, %c0_i32_0, %arg0 : i32, i32, i32
  }
  func.func @transform_1(%arg0: i32) -> (i32, i32, i32) {
    %c0_i32 = arith.constant 0 : i32
    %c0_i32_0 = arith.constant 0 : i32
    %c0_i32_1 = arith.constant 0 : i32
    return %arg0, %c0_i32, %c0_i32_0 : i32, i32, i32
  }
  func.func @transform_2(%arg0: i32) -> (i32, i32, i32) {
    %c0_i32 = arith.constant 0 : i32
    %c0_i32_0 = arith.constant 0 : i32
    %c0_i32_1 = arith.constant 0 : i32
    return %c0_i32, %c0_i32_0, %arg0 : i32, i32, i32
  }
}

module attributes {stable_mosaic.version = 11 : i64} {
  func.func @_matmul_bias_kernel(%arg0: memref<64x256xf32, #tpu.memory_space<vmem>>, %arg1: memref<256x1024xf32, #tpu.memory_space<vmem>>, %arg2: memref<1x1024xf32, #tpu.memory_space<vmem>>, %arg3: memref<64x1024xf32, #tpu.memory_space<vmem>>) attributes {dimension_semantics = [], scalar_prefetch = 0 : i64, scratch_operands = 0 : i64, tpu.core_type = #tpu.core_type<tc>} {
    %c0 = arith.constant 0 : index
    %c0_0 = arith.constant 0 : index
    %0 = vector.load %arg0[%c0, %c0_0] : memref<64x256xf32, #tpu.memory_space<vmem>>, vector<64x256xf32>
    %c0_1 = arith.constant 0 : index
    %c0_2 = arith.constant 0 : index
    %1 = vector.load %arg1[%c0_1, %c0_2] : memref<256x1024xf32, #tpu.memory_space<vmem>>, vector<256x1024xf32>
    %cst = arith.constant dense<0.000000e+00> : vector<64x1024xf32>
    %2 = tpu.matmul %0, %1, %cst {dimension_numbers = #tpu.dot_dimension_numbers<[1], [0], [0], [1], [0, 0, 1, 1], [], []>} : vector<64x256xf32>, vector<256x1024xf32>, vector<64x1024xf32> -> vector<64x1024xf32>
    %c0_3 = arith.constant 0 : index
    %c0_4 = arith.constant 0 : index
    %3 = vector.load %arg2[%c0_3, %c0_4] : memref<1x1024xf32, #tpu.memory_space<vmem>>, vector<1x1024xf32>
    %4 = vector.broadcast %3 : vector<1x1024xf32> to vector<64x1024xf32>
    %5 = arith.addf %2, %4 : vector<64x1024xf32>
    %c0_5 = arith.constant 0 : index
    %c0_6 = arith.constant 0 : index
    %6 = vector.load %arg3[%c0_5, %c0_6] : memref<64x1024xf32, #tpu.memory_space<vmem>>, vector<64x1024xf32>
    tpu.vector_store %arg3[%c0_5, %c0_6], %5 {strides = array<i32>} : memref<64x1024xf32, #tpu.memory_space<vmem>>, vector<64x1024xf32>,
    return
  }
}

module attributes {stable_mosaic.version = 11 : i64} {
  func.func @_bilstm_layer_kernel(%arg0: i32, %arg1: memref<8x8x512xf32, #tpu.memory_space<vmem>>, %arg2: memref<1x128x512xf32, #tpu.memory_space<vmem>>, %arg3: memref<8x8x128xf32, #tpu.memory_space<vmem>>, %arg4: memref<8x128xf32, #tpu.memory_space<vmem>>, %arg5: memref<8x128xf32, #tpu.memory_space<vmem>>) attributes {dimension_semantics = [#tpu.dimension_semantics<parallel>], iteration_bounds = array<i64: 2>, scalar_prefetch = 0 : i64, scratch_operands = 2 : i64, tpu.core_type = #tpu.core_type<tc>, window_params = [{transform_indices = @transform_0, window_bounds = array<i64: 8, 8, 512>}, {transform_indices = @transform_1, window_bounds = array<i64: 1, 128, 512>}, {transform_indices = @transform_2, window_bounds = array<i64: 8, 8, 128>}]} {
    %cst = arith.constant 0.000000e+00 : f32
    %0 = vector.broadcast %cst : f32 to vector<8x128xf32>
    %c0 = arith.constant 0 : index
    %c0_0 = arith.constant 0 : index
    %1 = vector.load %arg4[%c0, %c0_0] : memref<8x128xf32, #tpu.memory_space<vmem>>, vector<8x128xf32>
    tpu.vector_store %arg4[%c0, %c0_0], %0 {strides = array<i32>} : memref<8x128xf32, #tpu.memory_space<vmem>>, vector<8x128xf32>,
    %cst_1 = arith.constant 0.000000e+00 : f32
    %2 = vector.broadcast %cst_1 : f32 to vector<8x128xf32>
    %c0_2 = arith.constant 0 : index
    %c0_3 = arith.constant 0 : index
    %3 = vector.load %arg5[%c0_2, %c0_3] : memref<8x128xf32, #tpu.memory_space<vmem>>, vector<8x128xf32>
    tpu.vector_store %arg5[%c0_2, %c0_3], %2 {strides = array<i32>} : memref<8x128xf32, #tpu.memory_space<vmem>>, vector<8x128xf32>,
    %c0_i32 = arith.constant 0 : i32
    %c0_i32_4 = arith.constant 0 : i32
    %4 = arith.cmpi eq, %arg0, %c0_i32_4 : i32
    %c7_i32 = arith.constant 7 : i32
    %5 = arith.subi %c7_i32, %c0_i32 : i32
    %6 = arith.select %4, %c0_i32, %5 : i32
    %7 = arith.index_cast %6 : i32 to index
    %c0_5 = arith.constant 0 : index
    %c0_6 = arith.constant 0 : index
    %8 = vector.load %arg1[%7, %c0_5, %c0_6] : memref<8x8x512xf32, #tpu.memory_space<vmem>>, vector<1x8x512xf32>
    %9 = vector.shape_cast %8 : vector<1x8x512xf32> to vector<8x512xf32>
    %c0_7 = arith.constant 0 : index
    %c0_8 = arith.constant 0 : index
    %10 = vector.load %arg4[%c0_7, %c0_8] : memref<8x128xf32, #tpu.memory_space<vmem>>, vector<8x128xf32>
    %c0_9 = arith.constant 0 : index
    %c0_10 = arith.constant 0 : index
    %c0_11 = arith.constant 0 : index
    %11 = vector.load %arg2[%c0_9, %c0_10, %c0_11] : memref<1x128x512xf32, #tpu.memory_space<vmem>>, vector<1x128x512xf32>
    %12 = vector.shape_cast %11 : vector<1x128x512xf32> to vector<128x512xf32>
    %cst_12 = arith.constant dense<0.000000e+00> : vector<8x512xf32>
    %13 = tpu.matmul %10, %12, %cst_12 {dimension_numbers = #tpu.dot_dimension_numbers<[1], [0], [0], [1], [0, 0, 1, 1], [], []>} : vector<8x128xf32>, vector<128x512xf32>, vector<8x512xf32> -> vector<8x512xf32>
    %14 = arith.addf %9, %13 : vector<8x512xf32>
    %15 = vector.extract_strided_slice %14 {offsets = [0, 0], sizes = [8, 128], strides = [1, 1]} : vector<8x512xf32> to vector<8x128xf32>
    %16 = arith.negf %15 : vector<8x128xf32>
    %17 = math.exp %16 : vector<8x128xf32>
    %cst_13 = arith.constant 1.000000e+00 : f32
    %18 = vector.broadcast %cst_13 : f32 to vector<8x128xf32>
    %19 = arith.addf %18, %17 : vector<8x128xf32>
    %20 = arith.divf %18, %19 : vector<8x128xf32>
    %21 = vector.extract_strided_slice %14 {offsets = [0, 128], sizes = [8, 128], strides = [1, 1]} : vector<8x512xf32> to vector<8x128xf32>
    %22 = arith.negf %21 : vector<8x128xf32>
    %23 = math.exp %22 : vector<8x128xf32>
    %cst_14 = arith.constant 1.000000e+00 : f32
    %24 = vector.broadcast %cst_14 : f32 to vector<8x128xf32>
    %25 = arith.addf %24, %23 : vector<8x128xf32>
    %26 = arith.divf %24, %25 : vector<8x128xf32>
    %27 = vector.extract_strided_slice %14 {offsets = [0, 256], sizes = [8, 128], strides = [1, 1]} : vector<8x512xf32> to vector<8x128xf32>
    %28 = math.tanh %27 : vector<8x128xf32>
    %29 = vector.extract_strided_slice %14 {offsets = [0, 384], sizes = [8, 128], strides = [1, 1]} : vector<8x512xf32> to vector<8x128xf32>
    %30 = arith.negf %29 : vector<8x128xf32>
    %31 = math.exp %30 : vector<8x128xf32>
    %cst_15 = arith.constant 1.000000e+00 : f32
    %32 = vector.broadcast %cst_15 : f32 to vector<8x128xf32>
    %33 = arith.addf %32, %31 : vector<8x128xf32>
    %34 = arith.divf %32, %33 : vector<8x128xf32>
    %c0_16 = arith.constant 0 : index
    %c0_17 = arith.constant 0 : index
    %35 = vector.load %arg5[%c0_16, %c0_17] : memref<8x128xf32, #tpu.memory_space<vmem>>, vector<8x128xf32>
    %36 = arith.mulf %26, %35 : vector<8x128xf32>
    %37 = arith.mulf %20, %28 : vector<8x128xf32>
    %38 = arith.addf %36, %37 : vector<8x128xf32>
    %39 = math.tanh %38 : vector<8x128xf32>
    %40 = arith.mulf %34, %39 : vector<8x128xf32>
    %c0_18 = arith.constant 0 : index
    %c0_19 = arith.constant 0 : index
    %41 = vector.load %arg5[%c0_18, %c0_19] : memref<8x128xf32, #tpu.memory_space<vmem>>, vector<8x128xf32>
    tpu.vector_store %arg5[%c0_18, %c0_19], %38 {strides = array<i32>} : memref<8x128xf32, #tpu.memory_space<vmem>>, vector<8x128xf32>,
    %c0_20 = arith.constant 0 : index
    %c0_21 = arith.constant 0 : index
    %42 = vector.load %arg4[%c0_20, %c0_21] : memref<8x128xf32, #tpu.memory_space<vmem>>, vector<8x128xf32>
    tpu.vector_store %arg4[%c0_20, %c0_21], %40 {strides = array<i32>} : memref<8x128xf32, #tpu.memory_space<vmem>>, vector<8x128xf32>,
    %43 = arith.index_cast %6 : i32 to index
    %c0_22 = arith.constant 0 : index
    %c0_23 = arith.constant 0 : index
    %44 = vector.load %arg3[%43, %c0_22, %c0_23] : memref<8x8x128xf32, #tpu.memory_space<vmem>>, vector<1x8x128xf32>
    %45 = vector.shape_cast %44 : vector<1x8x128xf32> to vector<8x128xf32>
    %46 = vector.shape_cast %40 : vector<8x128xf32> to vector<1x8x128xf32>
    tpu.vector_store %arg3[%43, %c0_22, %c0_23], %46 {strides = array<i32>} : memref<8x8x128xf32, #tpu.memory_space<vmem>>, vector<1x8x128xf32>,
    %c1_i32 = arith.constant 1 : i32
    %c0_i32_24 = arith.constant 0 : i32
    %47 = arith.cmpi eq, %arg0, %c0_i32_24 : i32
    %c7_i32_25 = arith.constant 7 : i32
    %48 = arith.subi %c7_i32_25, %c1_i32 : i32
    %49 = arith.select %47, %c1_i32, %48 : i32
    %50 = arith.index_cast %49 : i32 to index
    %c0_26 = arith.constant 0 : index
    %c0_27 = arith.constant 0 : index
    %51 = vector.load %arg1[%50, %c0_26, %c0_27] : memref<8x8x512xf32, #tpu.memory_space<vmem>>, vector<1x8x512xf32>
    %52 = vector.shape_cast %51 : vector<1x8x512xf32> to vector<8x512xf32>
    %c0_28 = arith.constant 0 : index
    %c0_29 = arith.constant 0 : index
    %53 = vector.load %arg4[%c0_28, %c0_29] : memref<8x128xf32, #tpu.memory_space<vmem>>, vector<8x128xf32>
    %c0_30 = arith.constant 0 : index
    %c0_31 = arith.constant 0 : index
    %c0_32 = arith.constant 0 : index
    %54 = vector.load %arg2[%c0_30, %c0_31, %c0_32] : memref<1x128x512xf32, #tpu.memory_space<vmem>>, vector<1x128x512xf32>
    %55 = vector.shape_cast %54 : vector<1x128x512xf32> to vector<128x512xf32>
    %cst_33 = arith.constant dense<0.000000e+00> : vector<8x512xf32>
    %56 = tpu.matmul %53, %55, %cst_33 {dimension_numbers = #tpu.dot_dimension_numbers<[1], [0], [0], [1], [0, 0, 1, 1], [], []>} : vector<8x128xf32>, vector<128x512xf32>, vector<8x512xf32> -> vector<8x512xf32>
    %57 = arith.addf %52, %56 : vector<8x512xf32>
    %58 = vector.extract_strided_slice %57 {offsets = [0, 0], sizes = [8, 128], strides = [1, 1]} : vector<8x512xf32> to vector<8x128xf32>
    %59 = arith.negf %58 : vector<8x128xf32>
    %60 = math.exp %59 : vector<8x128xf32>
    %cst_34 = arith.constant 1.000000e+00 : f32
    %61 = vector.broadcast %cst_34 : f32 to vector<8x128xf32>
    %62 = arith.addf %61, %60 : vector<8x128xf32>
    %63 = arith.divf %61, %62 : vector<8x128xf32>
    %64 = vector.extract_strided_slice %57 {offsets = [0, 128], sizes = [8, 128], strides = [1, 1]} : vector<8x512xf32> to vector<8x128xf32>
    %65 = arith.negf %64 : vector<8x128xf32>
    %66 = math.exp %65 : vector<8x128xf32>
    %cst_35 = arith.constant 1.000000e+00 : f32
    %67 = vector.broadcast %cst_35 : f32 to vector<8x128xf32>
    %68 = arith.addf %67, %66 : vector<8x128xf32>
    %69 = arith.divf %67, %68 : vector<8x128xf32>
    %70 = vector.extract_strided_slice %57 {offsets = [0, 256], sizes = [8, 128], strides = [1, 1]} : vector<8x512xf32> to vector<8x128xf32>
    %71 = math.tanh %70 : vector<8x128xf32>
    %72 = vector.extract_strided_slice %57 {offsets = [0, 384], sizes = [8, 128], strides = [1, 1]} : vector<8x512xf32> to vector<8x128xf32>
    %73 = arith.negf %72 : vector<8x128xf32>
    %74 = math.exp %73 : vector<8x128xf32>
    %cst_36 = arith.constant 1.000000e+00 : f32
    %75 = vector.broadcast %cst_36 : f32 to vector<8x128xf32>
    %76 = arith.addf %75, %74 : vector<8x128xf32>
    %77 = arith.divf %75, %76 : vector<8x128xf32>
    %c0_37 = arith.constant 0 : index
    %c0_38 = arith.constant 0 : index
    %78 = vector.load %arg5[%c0_37, %c0_38] : memref<8x128xf32, #tpu.memory_space<vmem>>, vector<8x128xf32>
    %79 = arith.mulf %69, %78 : vector<8x128xf32>
    %80 = arith.mulf %63, %71 : vector<8x128xf32>
    %81 = arith.addf %79, %80 : vector<8x128xf32>
    %82 = math.tanh %81 : vector<8x128xf32>
    %83 = arith.mulf %77, %82 : vector<8x128xf32>
    %c0_39 = arith.constant 0 : index
    %c0_40 = arith.constant 0 : index
    %84 = vector.load %arg5[%c0_39, %c0_40] : memref<8x128xf32, #tpu.memory_space<vmem>>, vector<8x128xf32>
    tpu.vector_store %arg5[%c0_39, %c0_40], %81 {strides = array<i32>} : memref<8x128xf32, #tpu.memory_space<vmem>>, vector<8x128xf32>,
    %c0_41 = arith.constant 0 : index
    %c0_42 = arith.constant 0 : index
    %85 = vector.load %arg4[%c0_41, %c0_42] : memref<8x128xf32, #tpu.memory_space<vmem>>, vector<8x128xf32>
    tpu.vector_store %arg4[%c0_41, %c0_42], %83 {strides = array<i32>} : memref<8x128xf32, #tpu.memory_space<vmem>>, vector<8x128xf32>,
    %86 = arith.index_cast %49 : i32 to index
    %c0_43 = arith.constant 0 : index
    %c0_44 = arith.constant 0 : index
    %87 = vector.load %arg3[%86, %c0_43, %c0_44] : memref<8x8x128xf32, #tpu.memory_space<vmem>>, vector<1x8x128xf32>
    %88 = vector.shape_cast %87 : vector<1x8x128xf32> to vector<8x128xf32>
    %89 = vector.shape_cast %83 : vector<8x128xf32> to vector<1x8x128xf32>
    tpu.vector_store %arg3[%86, %c0_43, %c0_44], %89 {strides = array<i32>} : memref<8x8x128xf32, #tpu.memory_space<vmem>>, vector<1x8x128xf32>,
    %c2_i32 = arith.constant 2 : i32
    %c0_i32_45 = arith.constant 0 : i32
    %90 = arith.cmpi eq, %arg0, %c0_i32_45 : i32
    %c7_i32_46 = arith.constant 7 : i32
    %91 = arith.subi %c7_i32_46, %c2_i32 : i32
    %92 = arith.select %90, %c2_i32, %91 : i32
    %93 = arith.index_cast %92 : i32 to index
    %c0_47 = arith.constant 0 : index
    %c0_48 = arith.constant 0 : index
    %94 = vector.load %arg1[%93, %c0_47, %c0_48] : memref<8x8x512xf32, #tpu.memory_space<vmem>>, vector<1x8x512xf32>
    %95 = vector.shape_cast %94 : vector<1x8x512xf32> to vector<8x512xf32>
    %c0_49 = arith.constant 0 : index
    %c0_50 = arith.constant 0 : index
    %96 = vector.load %arg4[%c0_49, %c0_50] : memref<8x128xf32, #tpu.memory_space<vmem>>, vector<8x128xf32>
    %c0_51 = arith.constant 0 : index
    %c0_52 = arith.constant 0 : index
    %c0_53 = arith.constant 0 : index
    %97 = vector.load %arg2[%c0_51, %c0_52, %c0_53] : memref<1x128x512xf32, #tpu.memory_space<vmem>>, vector<1x128x512xf32>
    %98 = vector.shape_cast %97 : vector<1x128x512xf32> to vector<128x512xf32>
    %cst_54 = arith.constant dense<0.000000e+00> : vector<8x512xf32>
    %99 = tpu.matmul %96, %98, %cst_54 {dimension_numbers = #tpu.dot_dimension_numbers<[1], [0], [0], [1], [0, 0, 1, 1], [], []>} : vector<8x128xf32>, vector<128x512xf32>, vector<8x512xf32> -> vector<8x512xf32>
    %100 = arith.addf %95, %99 : vector<8x512xf32>
    %101 = vector.extract_strided_slice %100 {offsets = [0, 0], sizes = [8, 128], strides = [1, 1]} : vector<8x512xf32> to vector<8x128xf32>
    %102 = arith.negf %101 : vector<8x128xf32>
    %103 = math.exp %102 : vector<8x128xf32>
    %cst_55 = arith.constant 1.000000e+00 : f32
    %104 = vector.broadcast %cst_55 : f32 to vector<8x128xf32>
    %105 = arith.addf %104, %103 : vector<8x128xf32>
    %106 = arith.divf %104, %105 : vector<8x128xf32>
    %107 = vector.extract_strided_slice %100 {offsets = [0, 128], sizes = [8, 128], strides = [1, 1]} : vector<8x512xf32> to vector<8x128xf32>
    %108 = arith.negf %107 : vector<8x128xf32>
    %109 = math.exp %108 : vector<8x128xf32>
    %cst_56 = arith.constant 1.000000e+00 : f32
    %110 = vector.broadcast %cst_56 : f32 to vector<8x128xf32>
    %111 = arith.addf %110, %109 : vector<8x128xf32>
    %112 = arith.divf %110, %111 : vector<8x128xf32>
    %113 = vector.extract_strided_slice %100 {offsets = [0, 256], sizes = [8, 128], strides = [1, 1]} : vector<8x512xf32> to vector<8x128xf32>
    %114 = math.tanh %113 : vector<8x128xf32>
    %115 = vector.extract_strided_slice %100 {offsets = [0, 384], sizes = [8, 128], strides = [1, 1]} : vector<8x512xf32> to vector<8x128xf32>
    %116 = arith.negf %115 : vector<8x128xf32>
    %117 = math.exp %116 : vector<8x128xf32>
    %cst_57 = arith.constant 1.000000e+00 : f32
    %118 = vector.broadcast %cst_57 : f32 to vector<8x128xf32>
    %119 = arith.addf %118, %117 : vector<8x128xf32>
    %120 = arith.divf %118, %119 : vector<8x128xf32>
    %c0_58 = arith.constant 0 : index
    %c0_59 = arith.constant 0 : index
    %121 = vector.load %arg5[%c0_58, %c0_59] : memref<8x128xf32, #tpu.memory_space<vmem>>, vector<8x128xf32>
    %122 = arith.mulf %112, %121 : vector<8x128xf32>
    %123 = arith.mulf %106, %114 : vector<8x128xf32>
    %124 = arith.addf %122, %123 : vector<8x128xf32>
    %125 = math.tanh %124 : vector<8x128xf32>
    %126 = arith.mulf %120, %125 : vector<8x128xf32>
    %c0_60 = arith.constant 0 : index
    %c0_61 = arith.constant 0 : index
    %127 = vector.load %arg5[%c0_60, %c0_61] : memref<8x128xf32, #tpu.memory_space<vmem>>, vector<8x128xf32>
    tpu.vector_store %arg5[%c0_60, %c0_61], %124 {strides = array<i32>} : memref<8x128xf32, #tpu.memory_space<vmem>>, vector<8x128xf32>,
    %c0_62 = arith.constant 0 : index
    %c0_63 = arith.constant 0 : index
    %128 = vector.load %arg4[%c0_62, %c0_63] : memref<8x128xf32, #tpu.memory_space<vmem>>, vector<8x128xf32>
    tpu.vector_store %arg4[%c0_62, %c0_63], %126 {strides = array<i32>} : memref<8x128xf32, #tpu.memory_space<vmem>>, vector<8x128xf32>,
    %129 = arith.index_cast %92 : i32 to index
    %c0_64 = arith.constant 0 : index
    %c0_65 = arith.constant 0 : index
    %130 = vector.load %arg3[%129, %c0_64, %c0_65] : memref<8x8x128xf32, #tpu.memory_space<vmem>>, vector<1x8x128xf32>
    %131 = vector.shape_cast %130 : vector<1x8x128xf32> to vector<8x128xf32>
    %132 = vector.shape_cast %126 : vector<8x128xf32> to vector<1x8x128xf32>
    tpu.vector_store %arg3[%129, %c0_64, %c0_65], %132 {strides = array<i32>} : memref<8x8x128xf32, #tpu.memory_space<vmem>>, vector<1x8x128xf32>,
    %c3_i32 = arith.constant 3 : i32
    %c0_i32_66 = arith.constant 0 : i32
    %133 = arith.cmpi eq, %arg0, %c0_i32_66 : i32
    %c7_i32_67 = arith.constant 7 : i32
    %134 = arith.subi %c7_i32_67, %c3_i32 : i32
    %135 = arith.select %133, %c3_i32, %134 : i32
    %136 = arith.index_cast %135 : i32 to index
    %c0_68 = arith.constant 0 : index
    %c0_69 = arith.constant 0 : index
    %137 = vector.load %arg1[%136, %c0_68, %c0_69] : memref<8x8x512xf32, #tpu.memory_space<vmem>>, vector<1x8x512xf32>
    %138 = vector.shape_cast %137 : vector<1x8x512xf32> to vector<8x512xf32>
    %c0_70 = arith.constant 0 : index
    %c0_71 = arith.constant 0 : index
    %139 = vector.load %arg4[%c0_70, %c0_71] : memref<8x128xf32, #tpu.memory_space<vmem>>, vector<8x128xf32>
    %c0_72 = arith.constant 0 : index
    %c0_73 = arith.constant 0 : index
    %c0_74 = arith.constant 0 : index
    %140 = vector.load %arg2[%c0_72, %c0_73, %c0_74] : memref<1x128x512xf32, #tpu.memory_space<vmem>>, vector<1x128x512xf32>
    %141 = vector.shape_cast %140 : vector<1x128x512xf32> to vector<128x512xf32>
    %cst_75 = arith.constant dense<0.000000e+00> : vector<8x512xf32>
    %142 = tpu.matmul %139, %141, %cst_75 {dimension_numbers = #tpu.dot_dimension_numbers<[1], [0], [0], [1], [0, 0, 1, 1], [], []>} : vector<8x128xf32>, vector<128x512xf32>, vector<8x512xf32> -> vector<8x512xf32>
    %143 = arith.addf %138, %142 : vector<8x512xf32>
    %144 = vector.extract_strided_slice %143 {offsets = [0, 0], sizes = [8, 128], strides = [1, 1]} : vector<8x512xf32> to vector<8x128xf32>
    %145 = arith.negf %144 : vector<8x128xf32>
    %146 = math.exp %145 : vector<8x128xf32>
    %cst_76 = arith.constant 1.000000e+00 : f32
    %147 = vector.broadcast %cst_76 : f32 to vector<8x128xf32>
    %148 = arith.addf %147, %146 : vector<8x128xf32>
    %149 = arith.divf %147, %148 : vector<8x128xf32>
    %150 = vector.extract_strided_slice %143 {offsets = [0, 128], sizes = [8, 128], strides = [1, 1]} : vector<8x512xf32> to vector<8x128xf32>
    %151 = arith.negf %150 : vector<8x128xf32>
    %152 = math.exp %151 : vector<8x128xf32>
    %cst_77 = arith.constant 1.000000e+00 : f32
    %153 = vector.broadcast %cst_77 : f32 to vector<8x128xf32>
    %154 = arith.addf %153, %152 : vector<8x128xf32>
    %155 = arith.divf %153, %154 : vector<8x128xf32>
    %156 = vector.extract_strided_slice %143 {offsets = [0, 256], sizes = [8, 128], strides = [1, 1]} : vector<8x512xf32> to vector<8x128xf32>
    %157 = math.tanh %156 : vector<8x128xf32>
    %158 = vector.extract_strided_slice %143 {offsets = [0, 384], sizes = [8, 128], strides = [1, 1]} : vector<8x512xf32> to vector<8x128xf32>
    %159 = arith.negf %158 : vector<8x128xf32>
    %160 = math.exp %159 : vector<8x128xf32>
    %cst_78 = arith.constant 1.000000e+00 : f32
    %161 = vector.broadcast %cst_78 : f32 to vector<8x128xf32>
    %162 = arith.addf %161, %160 : vector<8x128xf32>
    %163 = arith.divf %161, %162 : vector<8x128xf32>
    %c0_79 = arith.constant 0 : index
    %c0_80 = arith.constant 0 : index
    %164 = vector.load %arg5[%c0_79, %c0_80] : memref<8x128xf32, #tpu.memory_space<vmem>>, vector<8x128xf32>
    %165 = arith.mulf %155, %164 : vector<8x128xf32>
    %166 = arith.mulf %149, %157 : vector<8x128xf32>
    %167 = arith.addf %165, %166 : vector<8x128xf32>
    %168 = math.tanh %167 : vector<8x128xf32>
    %169 = arith.mulf %163, %168 : vector<8x128xf32>
    %c0_81 = arith.constant 0 : index
    %c0_82 = arith.constant 0 : index
    %170 = vector.load %arg5[%c0_81, %c0_82] : memref<8x128xf32, #tpu.memory_space<vmem>>, vector<8x128xf32>
    tpu.vector_store %arg5[%c0_81, %c0_82], %167 {strides = array<i32>} : memref<8x128xf32, #tpu.memory_space<vmem>>, vector<8x128xf32>,
    %c0_83 = arith.constant 0 : index
    %c0_84 = arith.constant 0 : index
    %171 = vector.load %arg4[%c0_83, %c0_84] : memref<8x128xf32, #tpu.memory_space<vmem>>, vector<8x128xf32>
    tpu.vector_store %arg4[%c0_83, %c0_84], %169 {strides = array<i32>} : memref<8x128xf32, #tpu.memory_space<vmem>>, vector<8x128xf32>,
    %172 = arith.index_cast %135 : i32 to index
    %c0_85 = arith.constant 0 : index
    %c0_86 = arith.constant 0 : index
    %173 = vector.load %arg3[%172, %c0_85, %c0_86] : memref<8x8x128xf32, #tpu.memory_space<vmem>>, vector<1x8x128xf32>
    %174 = vector.shape_cast %173 : vector<1x8x128xf32> to vector<8x128xf32>
    %175 = vector.shape_cast %169 : vector<8x128xf32> to vector<1x8x128xf32>
    tpu.vector_store %arg3[%172, %c0_85, %c0_86], %175 {strides = array<i32>} : memref<8x8x128xf32, #tpu.memory_space<vmem>>, vector<1x8x128xf32>,
    %c4_i32 = arith.constant 4 : i32
    %c0_i32_87 = arith.constant 0 : i32
    %176 = arith.cmpi eq, %arg0, %c0_i32_87 : i32
    %c7_i32_88 = arith.constant 7 : i32
    %177 = arith.subi %c7_i32_88, %c4_i32 : i32
    %178 = arith.select %176, %c4_i32, %177 : i32
    %179 = arith.index_cast %178 : i32 to index
    %c0_89 = arith.constant 0 : index
    %c0_90 = arith.constant 0 : index
    %180 = vector.load %arg1[%179, %c0_89, %c0_90] : memref<8x8x512xf32, #tpu.memory_space<vmem>>, vector<1x8x512xf32>
    %181 = vector.shape_cast %180 : vector<1x8x512xf32> to vector<8x512xf32>
    %c0_91 = arith.constant 0 : index
    %c0_92 = arith.constant 0 : index
    %182 = vector.load %arg4[%c0_91, %c0_92] : memref<8x128xf32, #tpu.memory_space<vmem>>, vector<8x128xf32>
    %c0_93 = arith.constant 0 : index
    %c0_94 = arith.constant 0 : index
    %c0_95 = arith.constant 0 : index
    %183 = vector.load %arg2[%c0_93, %c0_94, %c0_95] : memref<1x128x512xf32, #tpu.memory_space<vmem>>, vector<1x128x512xf32>
    %184 = vector.shape_cast %183 : vector<1x128x512xf32> to vector<128x512xf32>
    %cst_96 = arith.constant dense<0.000000e+00> : vector<8x512xf32>
    %185 = tpu.matmul %182, %184, %cst_96 {dimension_numbers = #tpu.dot_dimension_numbers<[1], [0], [0], [1], [0, 0, 1, 1], [], []>} : vector<8x128xf32>, vector<128x512xf32>, vector<8x512xf32> -> vector<8x512xf32>
    %186 = arith.addf %181, %185 : vector<8x512xf32>
    %187 = vector.extract_strided_slice %186 {offsets = [0, 0], sizes = [8, 128], strides = [1, 1]} : vector<8x512xf32> to vector<8x128xf32>
    %188 = arith.negf %187 : vector<8x128xf32>
    %189 = math.exp %188 : vector<8x128xf32>
    %cst_97 = arith.constant 1.000000e+00 : f32
    %190 = vector.broadcast %cst_97 : f32 to vector<8x128xf32>
    %191 = arith.addf %190, %189 : vector<8x128xf32>
    %192 = arith.divf %190, %191 : vector<8x128xf32>
    %193 = vector.extract_strided_slice %186 {offsets = [0, 128], sizes = [8, 128], strides = [1, 1]} : vector<8x512xf32> to vector<8x128xf32>
    %194 = arith.negf %193 : vector<8x128xf32>
    %195 = math.exp %194 : vector<8x128xf32>
    %cst_98 = arith.constant 1.000000e+00 : f32
    %196 = vector.broadcast %cst_98 : f32 to vector<8x128xf32>
    %197 = arith.addf %196, %195 : vector<8x128xf32>
    %198 = arith.divf %196, %197 : vector<8x128xf32>
    %199 = vector.extract_strided_slice %186 {offsets = [0, 256], sizes = [8, 128], strides = [1, 1]} : vector<8x512xf32> to vector<8x128xf32>
    %200 = math.tanh %199 : vector<8x128xf32>
    %201 = vector.extract_strided_slice %186 {offsets = [0, 384], sizes = [8, 128], strides = [1, 1]} : vector<8x512xf32> to vector<8x128xf32>
    %202 = arith.negf %201 : vector<8x128xf32>
    %203 = math.exp %202 : vector<8x128xf32>
    %cst_99 = arith.constant 1.000000e+00 : f32
    %204 = vector.broadcast %cst_99 : f32 to vector<8x128xf32>
    %205 = arith.addf %204, %203 : vector<8x128xf32>
    %206 = arith.divf %204, %205 : vector<8x128xf32>
    %c0_100 = arith.constant 0 : index
    %c0_101 = arith.constant 0 : index
    %207 = vector.load %arg5[%c0_100, %c0_101] : memref<8x128xf32, #tpu.memory_space<vmem>>, vector<8x128xf32>
    %208 = arith.mulf %198, %207 : vector<8x128xf32>
    %209 = arith.mulf %192, %200 : vector<8x128xf32>
    %210 = arith.addf %208, %209 : vector<8x128xf32>
    %211 = math.tanh %210 : vector<8x128xf32>
    %212 = arith.mulf %206, %211 : vector<8x128xf32>
    %c0_102 = arith.constant 0 : index
    %c0_103 = arith.constant 0 : index
    %213 = vector.load %arg5[%c0_102, %c0_103] : memref<8x128xf32, #tpu.memory_space<vmem>>, vector<8x128xf32>
    tpu.vector_store %arg5[%c0_102, %c0_103], %210 {strides = array<i32>} : memref<8x128xf32, #tpu.memory_space<vmem>>, vector<8x128xf32>,
    %c0_104 = arith.constant 0 : index
    %c0_105 = arith.constant 0 : index
    %214 = vector.load %arg4[%c0_104, %c0_105] : memref<8x128xf32, #tpu.memory_space<vmem>>, vector<8x128xf32>
    tpu.vector_store %arg4[%c0_104, %c0_105], %212 {strides = array<i32>} : memref<8x128xf32, #tpu.memory_space<vmem>>, vector<8x128xf32>,
    %215 = arith.index_cast %178 : i32 to index
    %c0_106 = arith.constant 0 : index
    %c0_107 = arith.constant 0 : index
    %216 = vector.load %arg3[%215, %c0_106, %c0_107] : memref<8x8x128xf32, #tpu.memory_space<vmem>>, vector<1x8x128xf32>
    %217 = vector.shape_cast %216 : vector<1x8x128xf32> to vector<8x128xf32>
    %218 = vector.shape_cast %212 : vector<8x128xf32> to vector<1x8x128xf32>
    tpu.vector_store %arg3[%215, %c0_106, %c0_107], %218 {strides = array<i32>} : memref<8x8x128xf32, #tpu.memory_space<vmem>>, vector<1x8x128xf32>,
    %c5_i32 = arith.constant 5 : i32
    %c0_i32_108 = arith.constant 0 : i32
    %219 = arith.cmpi eq, %arg0, %c0_i32_108 : i32
    %c7_i32_109 = arith.constant 7 : i32
    %220 = arith.subi %c7_i32_109, %c5_i32 : i32
    %221 = arith.select %219, %c5_i32, %220 : i32
    %222 = arith.index_cast %221 : i32 to index
    %c0_110 = arith.constant 0 : index
    %c0_111 = arith.constant 0 : index
    %223 = vector.load %arg1[%222, %c0_110, %c0_111] : memref<8x8x512xf32, #tpu.memory_space<vmem>>, vector<1x8x512xf32>
    %224 = vector.shape_cast %223 : vector<1x8x512xf32> to vector<8x512xf32>
    %c0_112 = arith.constant 0 : index
    %c0_113 = arith.constant 0 : index
    %225 = vector.load %arg4[%c0_112, %c0_113] : memref<8x128xf32, #tpu.memory_space<vmem>>, vector<8x128xf32>
    %c0_114 = arith.constant 0 : index
    %c0_115 = arith.constant 0 : index
    %c0_116 = arith.constant 0 : index
    %226 = vector.load %arg2[%c0_114, %c0_115, %c0_116] : memref<1x128x512xf32, #tpu.memory_space<vmem>>, vector<1x128x512xf32>
    %227 = vector.shape_cast %226 : vector<1x128x512xf32> to vector<128x512xf32>
    %cst_117 = arith.constant dense<0.000000e+00> : vector<8x512xf32>
    %228 = tpu.matmul %225, %227, %cst_117 {dimension_numbers = #tpu.dot_dimension_numbers<[1], [0], [0], [1], [0, 0, 1, 1], [], []>} : vector<8x128xf32>, vector<128x512xf32>, vector<8x512xf32> -> vector<8x512xf32>
    %229 = arith.addf %224, %228 : vector<8x512xf32>
    %230 = vector.extract_strided_slice %229 {offsets = [0, 0], sizes = [8, 128], strides = [1, 1]} : vector<8x512xf32> to vector<8x128xf32>
    %231 = arith.negf %230 : vector<8x128xf32>
    %232 = math.exp %231 : vector<8x128xf32>
    %cst_118 = arith.constant 1.000000e+00 : f32
    %233 = vector.broadcast %cst_118 : f32 to vector<8x128xf32>
    %234 = arith.addf %233, %232 : vector<8x128xf32>
    %235 = arith.divf %233, %234 : vector<8x128xf32>
    %236 = vector.extract_strided_slice %229 {offsets = [0, 128], sizes = [8, 128], strides = [1, 1]} : vector<8x512xf32> to vector<8x128xf32>
    %237 = arith.negf %236 : vector<8x128xf32>
    %238 = math.exp %237 : vector<8x128xf32>
    %cst_119 = arith.constant 1.000000e+00 : f32
    %239 = vector.broadcast %cst_119 : f32 to vector<8x128xf32>
    %240 = arith.addf %239, %238 : vector<8x128xf32>
    %241 = arith.divf %239, %240 : vector<8x128xf32>
    %242 = vector.extract_strided_slice %229 {offsets = [0, 256], sizes = [8, 128], strides = [1, 1]} : vector<8x512xf32> to vector<8x128xf32>
    %243 = math.tanh %242 : vector<8x128xf32>
    %244 = vector.extract_strided_slice %229 {offsets = [0, 384], sizes = [8, 128], strides = [1, 1]} : vector<8x512xf32> to vector<8x128xf32>
    %245 = arith.negf %244 : vector<8x128xf32>
    %246 = math.exp %245 : vector<8x128xf32>
    %cst_120 = arith.constant 1.000000e+00 : f32
    %247 = vector.broadcast %cst_120 : f32 to vector<8x128xf32>
    %248 = arith.addf %247, %246 : vector<8x128xf32>
    %249 = arith.divf %247, %248 : vector<8x128xf32>
    %c0_121 = arith.constant 0 : index
    %c0_122 = arith.constant 0 : index
    %250 = vector.load %arg5[%c0_121, %c0_122] : memref<8x128xf32, #tpu.memory_space<vmem>>, vector<8x128xf32>
    %251 = arith.mulf %241, %250 : vector<8x128xf32>
    %252 = arith.mulf %235, %243 : vector<8x128xf32>
    %253 = arith.addf %251, %252 : vector<8x128xf32>
    %254 = math.tanh %253 : vector<8x128xf32>
    %255 = arith.mulf %249, %254 : vector<8x128xf32>
    %c0_123 = arith.constant 0 : index
    %c0_124 = arith.constant 0 : index
    %256 = vector.load %arg5[%c0_123, %c0_124] : memref<8x128xf32, #tpu.memory_space<vmem>>, vector<8x128xf32>
    tpu.vector_store %arg5[%c0_123, %c0_124], %253 {strides = array<i32>} : memref<8x128xf32, #tpu.memory_space<vmem>>, vector<8x128xf32>,
    %c0_125 = arith.constant 0 : index
    %c0_126 = arith.constant 0 : index
    %257 = vector.load %arg4[%c0_125, %c0_126] : memref<8x128xf32, #tpu.memory_space<vmem>>, vector<8x128xf32>
    tpu.vector_store %arg4[%c0_125, %c0_126], %255 {strides = array<i32>} : memref<8x128xf32, #tpu.memory_space<vmem>>, vector<8x128xf32>,
    %258 = arith.index_cast %221 : i32 to index
    %c0_127 = arith.constant 0 : index
    %c0_128 = arith.constant 0 : index
    %259 = vector.load %arg3[%258, %c0_127, %c0_128] : memref<8x8x128xf32, #tpu.memory_space<vmem>>, vector<1x8x128xf32>
    %260 = vector.shape_cast %259 : vector<1x8x128xf32> to vector<8x128xf32>
    %261 = vector.shape_cast %255 : vector<8x128xf32> to vector<1x8x128xf32>
    tpu.vector_store %arg3[%258, %c0_127, %c0_128], %261 {strides = array<i32>} : memref<8x8x128xf32, #tpu.memory_space<vmem>>, vector<1x8x128xf32>,
    %c6_i32 = arith.constant 6 : i32
    %c0_i32_129 = arith.constant 0 : i32
    %262 = arith.cmpi eq, %arg0, %c0_i32_129 : i32
    %c7_i32_130 = arith.constant 7 : i32
    %263 = arith.subi %c7_i32_130, %c6_i32 : i32
    %264 = arith.select %262, %c6_i32, %263 : i32
    %265 = arith.index_cast %264 : i32 to index
    %c0_131 = arith.constant 0 : index
    %c0_132 = arith.constant 0 : index
    %266 = vector.load %arg1[%265, %c0_131, %c0_132] : memref<8x8x512xf32, #tpu.memory_space<vmem>>, vector<1x8x512xf32>
    %267 = vector.shape_cast %266 : vector<1x8x512xf32> to vector<8x512xf32>
    %c0_133 = arith.constant 0 : index
    %c0_134 = arith.constant 0 : index
    %268 = vector.load %arg4[%c0_133, %c0_134] : memref<8x128xf32, #tpu.memory_space<vmem>>, vector<8x128xf32>
    %c0_135 = arith.constant 0 : index
    %c0_136 = arith.constant 0 : index
    %c0_137 = arith.constant 0 : index
    %269 = vector.load %arg2[%c0_135, %c0_136, %c0_137] : memref<1x128x512xf32, #tpu.memory_space<vmem>>, vector<1x128x512xf32>
    %270 = vector.shape_cast %269 : vector<1x128x512xf32> to vector<128x512xf32>
    %cst_138 = arith.constant dense<0.000000e+00> : vector<8x512xf32>
    %271 = tpu.matmul %268, %270, %cst_138 {dimension_numbers = #tpu.dot_dimension_numbers<[1], [0], [0], [1], [0, 0, 1, 1], [], []>} : vector<8x128xf32>, vector<128x512xf32>, vector<8x512xf32> -> vector<8x512xf32>
    %272 = arith.addf %267, %271 : vector<8x512xf32>
    %273 = vector.extract_strided_slice %272 {offsets = [0, 0], sizes = [8, 128], strides = [1, 1]} : vector<8x512xf32> to vector<8x128xf32>
    %274 = arith.negf %273 : vector<8x128xf32>
    %275 = math.exp %274 : vector<8x128xf32>
    %cst_139 = arith.constant 1.000000e+00 : f32
    %276 = vector.broadcast %cst_139 : f32 to vector<8x128xf32>
    %277 = arith.addf %276, %275 : vector<8x128xf32>
    %278 = arith.divf %276, %277 : vector<8x128xf32>
    %279 = vector.extract_strided_slice %272 {offsets = [0, 128], sizes = [8, 128], strides = [1, 1]} : vector<8x512xf32> to vector<8x128xf32>
    %280 = arith.negf %279 : vector<8x128xf32>
    %281 = math.exp %280 : vector<8x128xf32>
    %cst_140 = arith.constant 1.000000e+00 : f32
    %282 = vector.broadcast %cst_140 : f32 to vector<8x128xf32>
    %283 = arith.addf %282, %281 : vector<8x128xf32>
    %284 = arith.divf %282, %283 : vector<8x128xf32>
    %285 = vector.extract_strided_slice %272 {offsets = [0, 256], sizes = [8, 128], strides = [1, 1]} : vector<8x512xf32> to vector<8x128xf32>
    %286 = math.tanh %285 : vector<8x128xf32>
    %287 = vector.extract_strided_slice %272 {offsets = [0, 384], sizes = [8, 128], strides = [1, 1]} : vector<8x512xf32> to vector<8x128xf32>
    %288 = arith.negf %287 : vector<8x128xf32>
    %289 = math.exp %288 : vector<8x128xf32>
    %cst_141 = arith.constant 1.000000e+00 : f32
    %290 = vector.broadcast %cst_141 : f32 to vector<8x128xf32>
    %291 = arith.addf %290, %289 : vector<8x128xf32>
    %292 = arith.divf %290, %291 : vector<8x128xf32>
    %c0_142 = arith.constant 0 : index
    %c0_143 = arith.constant 0 : index
    %293 = vector.load %arg5[%c0_142, %c0_143] : memref<8x128xf32, #tpu.memory_space<vmem>>, vector<8x128xf32>
    %294 = arith.mulf %284, %293 : vector<8x128xf32>
    %295 = arith.mulf %278, %286 : vector<8x128xf32>
    %296 = arith.addf %294, %295 : vector<8x128xf32>
    %297 = math.tanh %296 : vector<8x128xf32>
    %298 = arith.mulf %292, %297 : vector<8x128xf32>
    %c0_144 = arith.constant 0 : index
    %c0_145 = arith.constant 0 : index
    %299 = vector.load %arg5[%c0_144, %c0_145] : memref<8x128xf32, #tpu.memory_space<vmem>>, vector<8x128xf32>
    tpu.vector_store %arg5[%c0_144, %c0_145], %296 {strides = array<i32>} : memref<8x128xf32, #tpu.memory_space<vmem>>, vector<8x128xf32>,
    %c0_146 = arith.constant 0 : index
    %c0_147 = arith.constant 0 : index
    %300 = vector.load %arg4[%c0_146, %c0_147] : memref<8x128xf32, #tpu.memory_space<vmem>>, vector<8x128xf32>
    tpu.vector_store %arg4[%c0_146, %c0_147], %298 {strides = array<i32>} : memref<8x128xf32, #tpu.memory_space<vmem>>, vector<8x128xf32>,
    %301 = arith.index_cast %264 : i32 to index
    %c0_148 = arith.constant 0 : index
    %c0_149 = arith.constant 0 : index
    %302 = vector.load %arg3[%301, %c0_148, %c0_149] : memref<8x8x128xf32, #tpu.memory_space<vmem>>, vector<1x8x128xf32>
    %303 = vector.shape_cast %302 : vector<1x8x128xf32> to vector<8x128xf32>
    %304 = vector.shape_cast %298 : vector<8x128xf32> to vector<1x8x128xf32>
    tpu.vector_store %arg3[%301, %c0_148, %c0_149], %304 {strides = array<i32>} : memref<8x8x128xf32, #tpu.memory_space<vmem>>, vector<1x8x128xf32>,
    %c7_i32_150 = arith.constant 7 : i32
    %c0_i32_151 = arith.constant 0 : i32
    %305 = arith.cmpi eq, %arg0, %c0_i32_151 : i32
    %c7_i32_152 = arith.constant 7 : i32
    %306 = arith.subi %c7_i32_152, %c7_i32_150 : i32
    %307 = arith.select %305, %c7_i32_150, %306 : i32
    %308 = arith.index_cast %307 : i32 to index
    %c0_153 = arith.constant 0 : index
    %c0_154 = arith.constant 0 : index
    %309 = vector.load %arg1[%308, %c0_153, %c0_154] : memref<8x8x512xf32, #tpu.memory_space<vmem>>, vector<1x8x512xf32>
    %310 = vector.shape_cast %309 : vector<1x8x512xf32> to vector<8x512xf32>
    %c0_155 = arith.constant 0 : index
    %c0_156 = arith.constant 0 : index
    %311 = vector.load %arg4[%c0_155, %c0_156] : memref<8x128xf32, #tpu.memory_space<vmem>>, vector<8x128xf32>
    %c0_157 = arith.constant 0 : index
    %c0_158 = arith.constant 0 : index
    %c0_159 = arith.constant 0 : index
    %312 = vector.load %arg2[%c0_157, %c0_158, %c0_159] : memref<1x128x512xf32, #tpu.memory_space<vmem>>, vector<1x128x512xf32>
    %313 = vector.shape_cast %312 : vector<1x128x512xf32> to vector<128x512xf32>
    %cst_160 = arith.constant dense<0.000000e+00> : vector<8x512xf32>
    %314 = tpu.matmul %311, %313, %cst_160 {dimension_numbers = #tpu.dot_dimension_numbers<[1], [0], [0], [1], [0, 0, 1, 1], [], []>} : vector<8x128xf32>, vector<128x512xf32>, vector<8x512xf32> -> vector<8x512xf32>
    %315 = arith.addf %310, %314 : vector<8x512xf32>
    %316 = vector.extract_strided_slice %315 {offsets = [0, 0], sizes = [8, 128], strides = [1, 1]} : vector<8x512xf32> to vector<8x128xf32>
    %317 = arith.negf %316 : vector<8x128xf32>
    %318 = math.exp %317 : vector<8x128xf32>
    %cst_161 = arith.constant 1.000000e+00 : f32
    %319 = vector.broadcast %cst_161 : f32 to vector<8x128xf32>
    %320 = arith.addf %319, %318 : vector<8x128xf32>
    %321 = arith.divf %319, %320 : vector<8x128xf32>
    %322 = vector.extract_strided_slice %315 {offsets = [0, 128], sizes = [8, 128], strides = [1, 1]} : vector<8x512xf32> to vector<8x128xf32>
    %323 = arith.negf %322 : vector<8x128xf32>
    %324 = math.exp %323 : vector<8x128xf32>
    %cst_162 = arith.constant 1.000000e+00 : f32
    %325 = vector.broadcast %cst_162 : f32 to vector<8x128xf32>
    %326 = arith.addf %325, %324 : vector<8x128xf32>
    %327 = arith.divf %325, %326 : vector<8x128xf32>
    %328 = vector.extract_strided_slice %315 {offsets = [0, 256], sizes = [8, 128], strides = [1, 1]} : vector<8x512xf32> to vector<8x128xf32>
    %329 = math.tanh %328 : vector<8x128xf32>
    %330 = vector.extract_strided_slice %315 {offsets = [0, 384], sizes = [8, 128], strides = [1, 1]} : vector<8x512xf32> to vector<8x128xf32>
    %331 = arith.negf %330 : vector<8x128xf32>
    %332 = math.exp %331 : vector<8x128xf32>
    %cst_163 = arith.constant 1.000000e+00 : f32
    %333 = vector.broadcast %cst_163 : f32 to vector<8x128xf32>
    %334 = arith.addf %333, %332 : vector<8x128xf32>
    %335 = arith.divf %333, %334 : vector<8x128xf32>
    %c0_164 = arith.constant 0 : index
    %c0_165 = arith.constant 0 : index
    %336 = vector.load %arg5[%c0_164, %c0_165] : memref<8x128xf32, #tpu.memory_space<vmem>>, vector<8x128xf32>
    %337 = arith.mulf %327, %336 : vector<8x128xf32>
    %338 = arith.mulf %321, %329 : vector<8x128xf32>
    %339 = arith.addf %337, %338 : vector<8x128xf32>
    %340 = math.tanh %339 : vector<8x128xf32>
    %341 = arith.mulf %335, %340 : vector<8x128xf32>
    %c0_166 = arith.constant 0 : index
    %c0_167 = arith.constant 0 : index
    %342 = vector.load %arg5[%c0_166, %c0_167] : memref<8x128xf32, #tpu.memory_space<vmem>>, vector<8x128xf32>
    tpu.vector_store %arg5[%c0_166, %c0_167], %339 {strides = array<i32>} : memref<8x128xf32, #tpu.memory_space<vmem>>, vector<8x128xf32>,
    %c0_168 = arith.constant 0 : index
    %c0_169 = arith.constant 0 : index
    %343 = vector.load %arg4[%c0_168, %c0_169] : memref<8x128xf32, #tpu.memory_space<vmem>>, vector<8x128xf32>
    tpu.vector_store %arg4[%c0_168, %c0_169], %341 {strides = array<i32>} : memref<8x128xf32, #tpu.memory_space<vmem>>, vector<8x128xf32>,
    %344 = arith.index_cast %307 : i32 to index
    %c0_170 = arith.constant 0 : index
    %c0_171 = arith.constant 0 : index
    %345 = vector.load %arg3[%344, %c0_170, %c0_171] : memref<8x8x128xf32, #tpu.memory_space<vmem>>, vector<1x8x128xf32>
    %346 = vector.shape_cast %345 : vector<1x8x128xf32> to vector<8x128xf32>
    %347 = vector.shape_cast %341 : vector<8x128xf32> to vector<1x8x128xf32>
    tpu.vector_store %arg3[%344, %c0_170, %c0_171], %347 {strides = array<i32>} : memref<8x8x128xf32, #tpu.memory_space<vmem>>, vector<1x8x128xf32>,
    %c8_i32 = arith.constant 8 : i32
    return
  }
  func.func @transform_0(%arg0: i32) -> (i32, i32, i32) {
    %c0_i32 = arith.constant 0 : i32
    %c0_i32_0 = arith.constant 0 : i32
    %c0_i32_1 = arith.constant 0 : i32
    return %c0_i32, %c0_i32_0, %arg0 : i32, i32, i32
  }
  func.func @transform_1(%arg0: i32) -> (i32, i32, i32) {
    %c0_i32 = arith.constant 0 : i32
    %c0_i32_0 = arith.constant 0 : i32
    %c0_i32_1 = arith.constant 0 : i32
    return %arg0, %c0_i32, %c0_i32_0 : i32, i32, i32
  }
  func.func @transform_2(%arg0: i32) -> (i32, i32, i32) {
    %c0_i32 = arith.constant 0 : i32
    %c0_i32_0 = arith.constant 0 : i32
    %c0_i32_1 = arith.constant 0 : i32
    return %c0_i32, %c0_i32_0, %arg0 : i32, i32, i32
  }
}

module attributes {stable_mosaic.version = 11 : i64} {
  func.func @_matmul_bias_kernel(%arg0: memref<64x256xf32, #tpu.memory_space<vmem>>, %arg1: memref<256x128xf32, #tpu.memory_space<vmem>>, %arg2: memref<1x128xf32, #tpu.memory_space<vmem>>, %arg3: memref<64x128xf32, #tpu.memory_space<vmem>>) attributes {dimension_semantics = [], scalar_prefetch = 0 : i64, scratch_operands = 0 : i64, tpu.core_type = #tpu.core_type<tc>} {
    %c0 = arith.constant 0 : index
    %c0_0 = arith.constant 0 : index
    %0 = vector.load %arg0[%c0, %c0_0] : memref<64x256xf32, #tpu.memory_space<vmem>>, vector<64x256xf32>
    %c0_1 = arith.constant 0 : index
    %c0_2 = arith.constant 0 : index
    %1 = vector.load %arg1[%c0_1, %c0_2] : memref<256x128xf32, #tpu.memory_space<vmem>>, vector<256x128xf32>
    %cst = arith.constant dense<0.000000e+00> : vector<64x128xf32>
    %2 = tpu.matmul %0, %1, %cst {dimension_numbers = #tpu.dot_dimension_numbers<[1], [0], [0], [1], [0, 0, 1, 1], [], []>} : vector<64x256xf32>, vector<256x128xf32>, vector<64x128xf32> -> vector<64x128xf32>
    %c0_3 = arith.constant 0 : index
    %c0_4 = arith.constant 0 : index
    %3 = vector.load %arg2[%c0_3, %c0_4] : memref<1x128xf32, #tpu.memory_space<vmem>>, vector<1x128xf32>
    %4 = vector.broadcast %3 : vector<1x128xf32> to vector<64x128xf32>
    %5 = arith.addf %2, %4 : vector<64x128xf32>
    %c0_5 = arith.constant 0 : index
    %c0_6 = arith.constant 0 : index
    %6 = vector.load %arg3[%c0_5, %c0_6] : memref<64x128xf32, #tpu.memory_space<vmem>>, vector<64x128xf32>
    tpu.vector_store %arg3[%c0_5, %c0_6], %5 {strides = array<i32>} : memref<64x128xf32, #tpu.memory_space<vmem>>, vector<64x128xf32>,
    return
  }
}

</mosaic_0001>

<llo_original>
// kernel: bilstmcrf_forward.5
$region0: #{bilstmcrf_forward.5}
  #allocation0 [shape = 'u32[]', space=smem, size = 0x4, offset = 0x4, fixed_abs, tag = 'smem constant byte address 0x4 - core index']
  #allocation1 [shape = 'u32[144,128]{1,0:T(1,128)}', space=vmem, size = 0x12000, scoped, tag = 'internal scratch']
  %s0 = inlined_call_operand.vmem [shape: f32[64,128], index: 0, kind: input, shape index: {}]
  %s1 = inlined_call_operand.hbm [shape: f32[128,1024], index: 1, kind: input, shape index: {}]
  %s2 = inlined_call_operand.hbm [shape: f32[1,1024], index: 2, kind: input, shape index: {}]
  %s3 = inlined_call_operand.vmem [shape: f32[64,1024], index: 3, kind: output, shape index: {}]
  %s4 = sld [smem:[#allocation0]]
  $region30: #{bilstmcrf_forward.5} parent=0
    _
  %s6 = ssub.s32 1, %s4
  %s7 = scalar_select 0, %s6, %s4
  $region1: #{bilstmcrf_forward.5} parent=0
    #allocation2 [shape = 'u8[524288]{0}', space=vmem, size = 0x80000, scoped, tag = 'input window, operand 1, single buffered']
    #allocation3 [shape = 's32[1]{0}', space=sflag, size = 0x4, scoped, tag = 'scoped memory for bilstmcrf_forward.5']
    #allocation4 [shape = 'u8[4096]{0}', space=vmem, size = 0x1000, scoped, tag = 'input window, operand 2, single buffered']
    #allocation5 [shape = 's32[1]{0}', space=sflag, size = 0x4, scoped, tag = 'scoped memory for bilstmcrf_forward.5']
    %8 = vsyncpa [#allocation3], 0
    %9 = vsyncpa [#allocation5], 0
    // Predicated region
    $region2: #{bilstmcrf_forward.5} parent=1 // pred_check
      _
    $region3: #{bilstmcrf_forward.5} parent=1 // pred_check_branch
      %11 = sbr.rel (0) target = $region5
    $region4: #{bilstmcrf_forward.5} parent=1 // pred_region
      _
    $region5: #{bilstmcrf_forward.5} parent=1 // pred_fallthru
      _
    // Predicated region
    $region6: #{bilstmcrf_forward.5} parent=1 // pred_check
      _
    $region7: #{bilstmcrf_forward.5} parent=1 // pred_check_branch
      %13 = sbr.rel (0) target = $region9
    $region8: #{bilstmcrf_forward.5} parent=1 // pred_region
      %s15 = ssub.s32 16384, 16384
      %16 = vsyncadd [#allocation3], %s15
      %s17 = sshll.u32 [#allocation2], 4
      %s18 = int_to_ptr.vmem [resolvable:$true] %s17
      %23 = dma.hbm_to_vmem [thread:$0]  %s1, 16384, %s18, [#allocation3], 1024, 1024, 64
    $region9: #{bilstmcrf_forward.5} parent=1 // pred_fallthru
      _
    // Predicated region
    $region10: #{bilstmcrf_forward.5} parent=1 // pred_check
      _
    $region11: #{bilstmcrf_forward.5} parent=1 // pred_check_branch
      %25 = sbr.rel (0) target = $region13
    $region12: #{bilstmcrf_forward.5} parent=1 // pred_region
      %s27 = ssub.s32 128, 128
      %28 = vsyncadd [#allocation5], %s27
      %s30 = sshll.u32 [#allocation4], 4
      %s31 = int_to_ptr.vmem [resolvable:$true] %s30
      %33 = dma.hbm_to_vmem [thread:$0]  %s2, 128, %s31, [#allocation5]
    $region13: #{bilstmcrf_forward.5} parent=1 // pred_fallthru
      _
    // Predicated region
    $region14: #{bilstmcrf_forward.5} parent=1 // pred_check
      _
    $region15: #{bilstmcrf_forward.5} parent=1 // pred_check_branch
      %35 = sbr.rel (0) target = $region17
    $region16: #{bilstmcrf_forward.5} parent=1 // pred_region
      %36 = dma.done [#allocation3], 16384
    $region17: #{bilstmcrf_forward.5} parent=1 // pred_fallthru
      _
    // Predicated region
    $region18: #{bilstmcrf_forward.5} parent=1 // pred_check
      _
    $region19: #{bilstmcrf_forward.5} parent=1 // pred_check_branch
      %38 = sbr.rel (0) target = $region21
    $region20: #{bilstmcrf_forward.5} parent=1 // pred_region
      %39 = dma.done [#allocation5], 128
    $region21: #{bilstmcrf_forward.5} parent=1 // pred_fallthru
      _
    %v40 = vld [vmem:[%s0] sm:$0xff]
    %v41 = vld [vmem:[%s0 + $0x8] sm:$0xff]
    %v42 = vld [vmem:[%s0 + $0x10] sm:$0xff]
    %v43 = vld [vmem:[%s0 + $0x18] sm:$0xff]
    %v44 = vld [vmem:[%s0 + $0x20] sm:$0xff]
    %v45 = vld [vmem:[%s0 + $0x28] sm:$0xff]
    %v46 = vld [vmem:[%s0 + $0x30] sm:$0xff]
    %v47 = vld [vmem:[%s0 + $0x38] sm:$0xff]
    %v48 = vld [vmem:[#allocation2] sm:$0xff]
    %v49 = vld [vmem:[#allocation2 + $0x8] sm:$0xff]
    %v50 = vld [vmem:[#allocation2 + $0x10] sm:$0xff]
    %v51 = vld [vmem:[#allocation2 + $0x18] sm:$0xff]
    %v52 = vld [vmem:[#allocation2 + $0x20] sm:$0xff]
    %v53 = vld [vmem:[#allocation2 + $0x28] sm:$0xff]
    %v54 = vld [vmem:[#allocation2 + $0x30] sm:$0xff]
    %v55 = vld [vmem:[#allocation2 + $0x38] sm:$0xff]
    %v56 = vld [vmem:[#allocation2 + $0x40] sm:$0xff]
    %v57 = vld [vmem:[#allocation2 + $0x48] sm:$0xff]
    %v58 = vld [vmem:[#allocation2 + $0x50] sm:$0xff]
    %v59 = vld [vmem:[#allocation2 + $0x58] sm:$0xff]
    %v60 = vld [vmem:[#allocation2 + $0x60] sm:$0xff]
    %v61 = vld [vmem:[#allocation2 + $0x68] sm:$0xff]
    %v62 = vld [vmem:[#allocation2 + $0x70] sm:$0xff]
    %v63 = vld [vmem:[#allocation2 + $0x78] sm:$0xff]
    %v64 = vld [vmem:[#allocation2 + $0x80] sm:$0xff]
    %v65 = vld [vmem:[#allocation2 + $0x88] sm:$0xff]
    %v66 = vld [vmem:[#allocation2 + $0x90] sm:$0xff]
    %v67 = vld [vmem:[#allocation2 + $0x98] sm:$0xff]
    %v68 = vld [vmem:[#allocation2 + $0xa0] sm:$0xff]
    %v69 = vld [vmem:[#allocation2 + $0xa8] sm:$0xff]
    %v70 = vld [vmem:[#allocation2 + $0xb0] sm:$0xff]
    %v71 = vld [vmem:[#allocation2 + $0xb8] sm:$0xff]
    %v72 = vld [vmem:[#allocation2 + $0xc0] sm:$0xff]
    %v73 = vld [vmem:[#allocation2 + $0xc8] sm:$0xff]
    %v74 = vld [vmem:[#allocation2 + $0xd0] sm:$0xff]
    %v75 = vld [vmem:[#allocation2 + $0xd8] sm:$0xff]
    %v76 = vld [vmem:[#allocation2 + $0xe0] sm:$0xff]
    %v77 = vld [vmem:[#allocation2 + $0xe8] sm:$0xff]
    %v78 = vld [vmem:[#allocation2 + $0xf0] sm:$0xff]
    %v79 = vld [vmem:[#allocation2 + $0xf8] sm:$0xff]
    %v80 = vld [vmem:[#allocation2 + $0x100] sm:$0xff]
    %v81 = vld [vmem:[#allocation2 + $0x108] sm:$0xff]
    %v82 = vld [vmem:[#allocation2 + $0x110] sm:$0xff]
    %v83 = vld [vmem:[#allocation2 + $0x118] sm:$0xff]
    %v84 = vld [vmem:[#allocation2 + $0x120] sm:$0xff]
    %v85 = vld [vmem:[#allocation2 + $0x128] sm:$0xff]
    %v86 = vld [vmem:[#allocation2 + $0x130] sm:$0xff]
    %v87 = vld [vmem:[#allocation2 + $0x138] sm:$0xff]
    %v88 = vld [vmem:[#allocation2 + $0x140] sm:$0xff]
    %v89 = vld [vmem:[#allocation2 + $0x148] sm:$0xff]
    %v90 = vld [vmem:[#allocation2 + $0x150] sm:$0xff]
    %v91 = vld [vmem:[#allocation2 + $0x158] sm:$0xff]
    %v92 = vld [vmem:[#allocation2 + $0x160] sm:$0xff]
    %v93 = vld [vmem:[#allocation2 + $0x168] sm:$0xff]
    %v94 = vld [vmem:[#allocation2 + $0x170] sm:$0xff]
    %v95 = vld [vmem:[#allocation2 + $0x178] sm:$0xff]
    %v96 = vld [vmem:[#allocation2 + $0x180] sm:$0xff]
    %v97 = vld [vmem:[#allocation2 + $0x188] sm:$0xff]
    %v98 = vld [vmem:[#allocation2 + $0x190] sm:$0xff]
    %v99 = vld [vmem:[#allocation2 + $0x198] sm:$0xff]
    %v100 = vld [vmem:[#allocation2 + $0x1a0] sm:$0xff]
    %v101 = vld [vmem:[#allocation2 + $0x1a8] sm:$0xff]
    %v102 = vld [vmem:[#allocation2 + $0x1b0] sm:$0xff]
    %v103 = vld [vmem:[#allocation2 + $0x1b8] sm:$0xff]
    %v104 = vld [vmem:[#allocation2 + $0x1c0] sm:$0xff]
    %v105 = vld [vmem:[#allocation2 + $0x1c8] sm:$0xff]
    %v106 = vld [vmem:[#allocation2 + $0x1d0] sm:$0xff]
    %v107 = vld [vmem:[#allocation2 + $0x1d8] sm:$0xff]
    %v108 = vld [vmem:[#allocation2 + $0x1e0] sm:$0xff]
    %v109 = vld [vmem:[#allocation2 + $0x1e8] sm:$0xff]
    %v110 = vld [vmem:[#allocation2 + $0x1f0] sm:$0xff]
    %v111 = vld [vmem:[#allocation2 + $0x1f8] sm:$0xff]
    %v112 = vld [vmem:[#allocation2 + $0x200] sm:$0xff]
    %v113 = vld [vmem:[#allocation2 + $0x208] sm:$0xff]
    %v114 = vld [vmem:[#allocation2 + $0x210] sm:$0xff]
    %v115 = vld [vmem:[#allocation2 + $0x218] sm:$0xff]
    %v116 = vld [vmem:[#allocation2 + $0x220] sm:$0xff]
    %v117 = vld [vmem:[#allocation2 + $0x228] sm:$0xff]
    %v118 = vld [vmem:[#allocation2 + $0x230] sm:$0xff]
    %v119 = vld [vmem:[#allocation2 + $0x238] sm:$0xff]
    %v120 = vld [vmem:[#allocation2 + $0x240] sm:$0xff]
    %v121 = vld [vmem:[#allocation2 + $0x248] sm:$0xff]
    %v122 = vld [vmem:[#allocation2 + $0x250] sm:$0xff]
    %v123 = vld [vmem:[#allocation2 + $0x258] sm:$0xff]
    %v124 = vld [vmem:[#allocation2 + $0x260] sm:$0xff]
    %v125 = vld [vmem:[#allocation2 + $0x268] sm:$0xff]
    %v126 = vld [vmem:[#allocation2 + $0x270] sm:$0xff]
    %v127 = vld [vmem:[#allocation2 + $0x278] sm:$0xff]
    %v128 = vld [vmem:[#allocation2 + $0x280] sm:$0xff]
    %v129 = vld [vmem:[#allocation2 + $0x288] sm:$0xff]
    %v130 = vld [vmem:[#allocation2 + $0x290] sm:$0xff]
    %v131 = vld [vmem:[#allocation2 + $0x298] sm:$0xff]
    %v132 = vld [vmem:[#allocation2 + $0x2a0] sm:$0xff]
    %v133 = vld [vmem:[#allocation2 + $0x2a8] sm:$0xff]
    %v134 = vld [vmem:[#allocation2 + $0x2b0] sm:$0xff]
    %v135 = vld [vmem:[#allocation2 + $0x2b8] sm:$0xff]
    %v136 = vld [vmem:[#allocation2 + $0x2c0] sm:$0xff]
    %v137 = vld [vmem:[#allocation2 + $0x2c8] sm:$0xff]
    %v138 = vld [vmem:[#allocation2 + $0x2d0] sm:$0xff]
    %v139 = vld [vmem:[#allocation2 + $0x2d8] sm:$0xff]
    %v140 = vld [vmem:[#allocation2 + $0x2e0] sm:$0xff]
    %v141 = vld [vmem:[#allocation2 + $0x2e8] sm:$0xff]
    %v142 = vld [vmem:[#allocation2 + $0x2f0] sm:$0xff]
    %v143 = vld [vmem:[#allocation2 + $0x2f8] sm:$0xff]
    %v144 = vld [vmem:[#allocation2 + $0x300] sm:$0xff]
    %v145 = vld [vmem:[#allocation2 + $0x308] sm:$0xff]
    %v146 = vld [vmem:[#allocation2 + $0x310] sm:$0xff]
    %v147 = vld [vmem:[#allocation2 + $0x318] sm:$0xff]
    %v148 = vld [vmem:[#allocation2 + $0x320] sm:$0xff]
    %v149 = vld [vmem:[#allocation2 + $0x328] sm:$0xff]
    %v150 = vld [vmem:[#allocation2 + $0x330] sm:$0xff]
    %v151 = vld [vmem:[#allocation2 + $0x338] sm:$0xff]
    %v152 = vld [vmem:[#allocation2 + $0x340] sm:$0xff]
    %v153 = vld [vmem:[#allocation2 + $0x348] sm:$0xff]
    %v154 = vld [vmem:[#allocation2 + $0x350] sm:$0xff]
    %v155 = vld [vmem:[#allocation2 + $0x358] sm:$0xff]
    %v156 = vld [vmem:[#allocation2 + $0x360] sm:$0xff]
    %v157 = vld [vmem:[#allocation2 + $0x368] sm:$0xff]
    %v158 = vld [vmem:[#allocation2 + $0x370] sm:$0xff]
    %v159 = vld [vmem:[#allocation2 + $0x378] sm:$0xff]
    %v160 = vld [vmem:[#allocation2 + $0x380] sm:$0xff]
    %v161 = vld [vmem:[#allocation2 + $0x388] sm:$0xff]
    %v162 = vld [vmem:[#allocation2 + $0x390] sm:$0xff]
    %v163 = vld [vmem:[#allocation2 + $0x398] sm:$0xff]
    %v164 = vld [vmem:[#allocation2 + $0x3a0] sm:$0xff]
    %v165 = vld [vmem:[#allocation2 + $0x3a8] sm:$0xff]
    %v166 = vld [vmem:[#allocation2 + $0x3b0] sm:$0xff]
    %v167 = vld [vmem:[#allocation2 + $0x3b8] sm:$0xff]
    %v168 = vld [vmem:[#allocation2 + $0x3c0] sm:$0xff]
    %v169 = vld [vmem:[#allocation2 + $0x3c8] sm:$0xff]
    %v170 = vld [vmem:[#allocation2 + $0x3d0] sm:$0xff]
    %v171 = vld [vmem:[#allocation2 + $0x3d8] sm:$0xff]
    %v172 = vld [vmem:[#allocation2 + $0x3e0] sm:$0xff]
    %v173 = vld [vmem:[#allocation2 + $0x3e8] sm:$0xff]
    %v174 = vld [vmem:[#allocation2 + $0x3f0] sm:$0xff]
    %v175 = vld [vmem:[#allocation2 + $0x3f8] sm:$0xff]
    %v176 = vld [vmem:[#allocation4] sm:$0xff]
    %v178 = vlaneseq
    %v179 = vshrl.u32 %v178, 7
    %v180 = vsub.s32 0, %v179
    %v181 = vrot.slane %v176, %v180
    %v182 = vlaneseq
    %v183 = vshrl.u32 %v182, 7
    %v184 = vsub.s32 1, %v183
    %v185 = vrot.slane %v176, %v184
    %v186 = vlaneseq
    %v187 = vshrl.u32 %v186, 7
    %v188 = vsub.s32 2, %v187
    %v189 = vrot.slane %v176, %v188
    %v190 = vlaneseq
    %v191 = vshrl.u32 %v190, 7
    %v192 = vsub.s32 3, %v191
    %v193 = vrot.slane %v176, %v192
    %v194 = vlaneseq
    %v195 = vshrl.u32 %v194, 7
    %v196 = vsub.s32 4, %v195
    %v197 = vrot.slane %v176, %v196
    %v198 = vlaneseq
    %v199 = vshrl.u32 %v198, 7
    %v200 = vsub.s32 5, %v199
    %v201 = vrot.slane %v176, %v200
    %v202 = vlaneseq
    %v203 = vshrl.u32 %v202, 7
    %v204 = vsub.s32 6, %v203
    %v205 = vrot.slane %v176, %v204
    %v206 = vlaneseq
    %v207 = vshrl.u32 %v206, 7
    %v208 = vsub.s32 7, %v207
    %v209 = vrot.slane %v176, %v208
    %218 = vmatprep.subr.mxu0 %v169
    %219 = vmatpush1.msra.mxu0 %v168
    %220 = vmatprep.subr.mxu0 %v161
    %221 = vmatpush1.msra.mxu0 %v160
    %222 = vmatprep.subr.mxu0 %v153
    %223 = vmatpush1.msra.mxu0 %v152
    %224 = vmatprep.subr.mxu0 %v145
    %225 = vmatpush1.msra.mxu0 %v144
    %226 = vmatprep.subr.mxu0 %v137
    %227 = vmatpush1.msra.mxu0 %v136
    %228 = vmatprep.subr.mxu0 %v129
    %229 = vmatpush1.msra.mxu0 %v128
    %230 = vmatprep.subr.mxu0 %v121
    %231 = vmatpush1.msra.mxu0 %v120
    %232 = vmatprep.subr.mxu0 %v113
    %233 = vmatpush1.msra.mxu0 %v112
    %234 = vmatprep.subr.mxu0 %v105
    %235 = vmatpush1.msra.mxu0 %v104
    %236 = vmatprep.subr.mxu0 %v97
    %237 = vmatpush1.msra.mxu0 %v96
    %238 = vmatprep.subr.mxu0 %v89
    %239 = vmatpush1.msra.mxu0 %v88
    %240 = vmatprep.subr.mxu0 %v81
    %241 = vmatpush1.msra.mxu0 %v80
    %242 = vmatprep.subr.mxu0 %v73
    %243 = vmatpush1.msra.mxu0 %v72
    %244 = vmatprep.subr.mxu0 %v65
    %245 = vmatpush1.msra.mxu0 %v64
    %246 = vmatprep.subr.mxu0 %v57
    %247 = vmatpush1.msra.mxu0 %v56
    %248 = vmatprep.subr.mxu0 %v49
    %249 = vmatpush1.msra.mxu0 %v48
    %250 = vmatprep.subr.mxu0 0.0
    %251 = vmatpush2.msra.mxu0 0.0
    %252 = vmatprep.subr.mxu0 0.0
    %253 = vmatpush2.msra.mxu0 0.0
    %254 = vmatprep.subr.mxu0 0.0
    %255 = vmatpush2.msra.mxu0 0.0
    %256 = vmatprep.subr.mxu0 0.0
    %257 = vmatpush2.msra.mxu0 0.0
    %258 = vmatprep.subr.mxu0 0.0
    %259 = vmatpush2.msra.mxu0 0.0
    %260 = vmatprep.subr.mxu0 0.0
    %261 = vmatpush2.msra.mxu0 0.0
    %262 = vmatprep.subr.mxu0 0.0
    %263 = vmatpush2.msra.mxu0 0.0
    %264 = vmatprep.subr.mxu0 0.0
    %265 = vmatpush2.msra.mxu0 0.0
    %266 = vmatprep.subr.mxu0 0.0
    %267 = vmatpush2.msra.mxu0 0.0
    %268 = vmatprep.subr.mxu0 0.0
    %269 = vmatpush2.msra.mxu0 0.0
    %270 = vmatprep.subr.mxu0 0.0
    %271 = vmatpush2.msra.mxu0 0.0
    %272 = vmatprep.subr.mxu0 0.0
    %273 = vmatpush2.msra.mxu0 0.0
    %274 = vmatprep.subr.mxu0 0.0
    %275 = vmatpush2.msra.mxu0 0.0
    %276 = vmatprep.subr.mxu0 0.0
    %277 = vmatpush2.msra.mxu0 0.0
    %278 = vmatprep.subr.mxu0 0.0
    %279 = vmatpush2.msra.mxu0 0.0
    %280 = vmatprep.subr.mxu0 0.0
    %281 = vmatpush2.msra.mxu0 0.0
    %282 = vmatprep.mubr.f32.mxu0 0.0
    %283 = vmatmul.mubr.f32.gmra.mxu0 %v40
    %v284 = vpop.f32.mrf.mxu0
    %v285 = vadd.f32 %v181, %v284
    %v286 = vpop.f32.mrf.mxu0
    %v287 = vadd.f32 %v185, %v286
    %288 = vmatprep.mubr.f32.mxu0 0.0
    %289 = vmatmul.mubr.f32.gmra.mxu0 %v41
    %v290 = vpop.f32.mrf.mxu0
    %v291 = vadd.f32 %v181, %v290
    %v292 = vpop.f32.mrf.mxu0
    %v293 = vadd.f32 %v185, %v292
    %294 = vmatprep.mubr.f32.mxu0 0.0
    %295 = vmatmul.mubr.f32.gmra.mxu0 %v42
    %v296 = vpop.f32.mrf.mxu0
    %v297 = vadd.f32 %v181, %v296
    %v298 = vpop.f32.mrf.mxu0
    %v299 = vadd.f32 %v185, %v298
    %300 = vmatprep.mubr.f32.mxu0 0.0
    %301 = vmatmul.mubr.f32.gmra.mxu0 %v43
    %v302 = vpop.f32.mrf.mxu0
    %v303 = vadd.f32 %v181, %v302
    %v304 = vpop.f32.mrf.mxu0
    %v305 = vadd.f32 %v185, %v304
    %306 = vmatprep.mubr.f32.mxu0 0.0
    %307 = vmatmul.mubr.f32.gmra.mxu0 %v44
    %v308 = vpop.f32.mrf.mxu0
    %v309 = vadd.f32 %v181, %v308
    %v310 = vpop.f32.mrf.mxu0
    %v311 = vadd.f32 %v185, %v310
    %312 = vmatprep.mubr.f32.mxu0 0.0
    %313 = vmatmul.mubr.f32.gmra.mxu0 %v45
    %v314 = vpop.f32.mrf.mxu0
    %v315 = vadd.f32 %v181, %v314
    %v316 = vpop.f32.mrf.mxu0
    %v317 = vadd.f32 %v185, %v316
    %318 = vmatprep.mubr.f32.mxu0 0.0
    %319 = vmatmul.mubr.f32.gmra.mxu0 %v46
    %v320 = vpop.f32.mrf.mxu0
    %v321 = vadd.f32 %v181, %v320
    %v322 = vpop.f32.mrf.mxu0
    %v323 = vadd.f32 %v185, %v322
    %324 = vmatprep.mubr.f32.mxu0 0.0
    %325 = vmatmul.mubr.f32.gmra.mxu0 %v47
    %v326 = vpop.f32.mrf.mxu0
    %v327 = vadd.f32 %v181, %v326
    %v328 = vpop.f32.mrf.mxu0
    %v329 = vadd.f32 %v185, %v328
    %330 = vdwg.mxu0
    %331 = vmatprep.subr.mxu0 %v171
    %332 = vmatpush1.msra.mxu0 %v170
    %333 = vmatprep.subr.mxu0 %v163
    %334 = vmatpush1.msra.mxu0 %v162
    %335 = vmatprep.subr.mxu0 %v155
    %336 = vmatpush1.msra.mxu0 %v154
    %337 = vmatprep.subr.mxu0 %v147
    %338 = vmatpush1.msra.mxu0 %v146
    %339 = vmatprep.subr.mxu0 %v139
    %340 = vmatpush1.msra.mxu0 %v138
    %341 = vmatprep.subr.mxu0 %v131
    %342 = vmatpush1.msra.mxu0 %v130
    %343 = vmatprep.subr.mxu0 %v123
    %344 = vmatpush1.msra.mxu0 %v122
    %345 = vmatprep.subr.mxu0 %v115
    %346 = vmatpush1.msra.mxu0 %v114
    %347 = vmatprep.subr.mxu0 %v107
    %348 = vmatpush1.msra.mxu0 %v106
    %349 = vmatprep.subr.mxu0 %v99
    %350 = vmatpush1.msra.mxu0 %v98
    %351 = vmatprep.subr.mxu0 %v91
    %352 = vmatpush1.msra.mxu0 %v90
    %353 = vmatprep.subr.mxu0 %v83
    %354 = vmatpush1.msra.mxu0 %v82
    %355 = vmatprep.subr.mxu0 %v75
    %356 = vmatpush1.msra.mxu0 %v74
    %357 = vmatprep.subr.mxu0 %v67
    %358 = vmatpush1.msra.mxu0 %v66
    %359 = vmatprep.subr.mxu0 %v59
    %360 = vmatpush1.msra.mxu0 %v58
    %361 = vmatprep.subr.mxu0 %v51
    %362 = vmatpush1.msra.mxu0 %v50
    %363 = vmatprep.subr.mxu0 0.0
    %364 = vmatpush2.msra.mxu0 0.0
    %365 = vmatprep.subr.mxu0 0.0
    %366 = vmatpush2.msra.mxu0 0.0
    %367 = vmatprep.subr.mxu0 0.0
    %368 = vmatpush2.msra.mxu0 0.0
    %369 = vmatprep.subr.mxu0 0.0
    %370 = vmatpush2.msra.mxu0 0.0
    %371 = vmatprep.subr.mxu0 0.0
    %372 = vmatpush2.msra.mxu0 0.0
    %373 = vmatprep.subr.mxu0 0.0
    %374 = vmatpush2.msra.mxu0 0.0
    %375 = vmatprep.subr.mxu0 0.0
    %376 = vmatpush2.msra.mxu0 0.0
    %377 = vmatprep.subr.mxu0 0.0
    %378 = vmatpush2.msra.mxu0 0.0
    %379 = vmatprep.subr.mxu0 0.0
    %380 = vmatpush2.msra.mxu0 0.0
    %381 = vmatprep.subr.mxu0 0.0
    %382 = vmatpush2.msra.mxu0 0.0
    %383 = vmatprep.subr.mxu0 0.0
    %384 = vmatpush2.msra.mxu0 0.0
    %385 = vmatprep.subr.mxu0 0.0
    %386 = vmatpush2.msra.mxu0 0.0
    %387 = vmatprep.subr.mxu0 0.0
    %388 = vmatpush2.msra.mxu0 0.0
    %389 = vmatprep.subr.mxu0 0.0
    %390 = vmatpush2.msra.mxu0 0.0
    %391 = vmatprep.subr.mxu0 0.0
    %392 = vmatpush2.msra.mxu0 0.0
    %393 = vmatprep.subr.mxu0 0.0
    %394 = vmatpush2.msra.mxu0 0.0
    %395 = vmatprep.mubr.f32.mxu0 0.0
    %396 = vmatmul.mubr.f32.gmra.mxu0 %v40
    %v397 = vpop.f32.mrf.mxu0
    %v398 = vadd.f32 %v189, %v397
    %v399 = vpop.f32.mrf.mxu0
    %v400 = vadd.f32 %v193, %v399
    %401 = vmatprep.mubr.f32.mxu0 0.0
    %402 = vmatmul.mubr.f32.gmra.mxu0 %v41
    %v403 = vpop.f32.mrf.mxu0
    %v404 = vadd.f32 %v189, %v403
    %v405 = vpop.f32.mrf.mxu0
    %v406 = vadd.f32 %v193, %v405
    %407 = vmatprep.mubr.f32.mxu0 0.0
    %408 = vmatmul.mubr.f32.gmra.mxu0 %v42
    %v409 = vpop.f32.mrf.mxu0
    %v410 = vadd.f32 %v189, %v409
    %v411 = vpop.f32.mrf.mxu0
    %v412 = vadd.f32 %v193, %v411
    %413 = vmatprep.mubr.f32.mxu0 0.0
    %414 = vmatmul.mubr.f32.gmra.mxu0 %v43
    %v415 = vpop.f32.mrf.mxu0
    %v416 = vadd.f32 %v189, %v415
    %v417 = vpop.f32.mrf.mxu0
    %v418 = vadd.f32 %v193, %v417
    %419 = vmatprep.mubr.f32.mxu0 0.0
    %420 = vmatmul.mubr.f32.gmra.mxu0 %v44
    %v421 = vpop.f32.mrf.mxu0
    %v422 = vadd.f32 %v189, %v421
    %v423 = vpop.f32.mrf.mxu0
    %v424 = vadd.f32 %v193, %v423
    %425 = vmatprep.mubr.f32.mxu0 0.0
    %426 = vmatmul.mubr.f32.gmra.mxu0 %v45
    %v427 = vpop.f32.mrf.mxu0
    %v428 = vadd.f32 %v189, %v427
    %v429 = vpop.f32.mrf.mxu0
    %v430 = vadd.f32 %v193, %v429
    %431 = vmatprep.mubr.f32.mxu0 0.0
    %432 = vmatmul.mubr.f32.gmra.mxu0 %v46
    %v433 = vpop.f32.mrf.mxu0
    %v434 = vadd.f32 %v189, %v433
    %v435 = vpop.f32.mrf.mxu0
    %v436 = vadd.f32 %v193, %v435
    %437 = vmatprep.mubr.f32.mxu0 0.0
    %438 = vmatmul.mubr.f32.gmra.mxu0 %v47
    %v439 = vpop.f32.mrf.mxu0
    %v440 = vadd.f32 %v189, %v439
    %v441 = vpop.f32.mrf.mxu0
    %v442 = vadd.f32 %v193, %v441
    %443 = vdwg.mxu0
    %444 = vmatprep.subr.mxu0 %v173
    %445 = vmatpush1.msra.mxu0 %v172
    %446 = vmatprep.subr.mxu0 %v165
    %447 = vmatpush1.msra.mxu0 %v164
    %448 = vmatprep.subr.mxu0 %v157
    %449 = vmatpush1.msra.mxu0 %v156
    %450 = vmatprep.subr.mxu0 %v149
    %451 = vmatpush1.msra.mxu0 %v148
    %452 = vmatprep.subr.mxu0 %v141
    %453 = vmatpush1.msra.mxu0 %v140
    %454 = vmatprep.subr.mxu0 %v133
    %455 = vmatpush1.msra.mxu0 %v132
    %456 = vmatprep.subr.mxu0 %v125
    %457 = vmatpush1.msra.mxu0 %v124
    %458 = vmatprep.subr.mxu0 %v117
    %459 = vmatpush1.msra.mxu0 %v116
    %460 = vmatprep.subr.mxu0 %v109
    %461 = vmatpush1.msra.mxu0 %v108
    %462 = vmatprep.subr.mxu0 %v101
    %463 = vmatpush1.msra.mxu0 %v100
    %464 = vmatprep.subr.mxu0 %v93
    %465 = vmatpush1.msra.mxu0 %v92
    %466 = vmatprep.subr.mxu0 %v85
    %467 = vmatpush1.msra.mxu0 %v84
    %468 = vmatprep.subr.mxu0 %v77
    %469 = vmatpush1.msra.mxu0 %v76
    %470 = vmatprep.subr.mxu0 %v69
    %471 = vmatpush1.msra.mxu0 %v68
    %472 = vmatprep.subr.mxu0 %v61
    %473 = vmatpush1.msra.mxu0 %v60
    %474 = vmatprep.subr.mxu0 %v53
    %475 = vmatpush1.msra.mxu0 %v52
    %476 = vmatprep.subr.mxu0 0.0
    %477 = vmatpush2.msra.mxu0 0.0
    %478 = vmatprep.subr.mxu0 0.0
    %479 = vmatpush2.msra.mxu0 0.0
    %480 = vmatprep.subr.mxu0 0.0
    %481 = vmatpush2.msra.mxu0 0.0
    %482 = vmatprep.subr.mxu0 0.0
    %483 = vmatpush2.msra.mxu0 0.0
    %484 = vmatprep.subr.mxu0 0.0
    %485 = vmatpush2.msra.mxu0 0.0
    %486 = vmatprep.subr.mxu0 0.0
    %487 = vmatpush2.msra.mxu0 0.0
    %488 = vmatprep.subr.mxu0 0.0
    %489 = vmatpush2.msra.mxu0 0.0
    %490 = vmatprep.subr.mxu0 0.0
    %491 = vmatpush2.msra.mxu0 0.0
    %492 = vmatprep.subr.mxu0 0.0
    %493 = vmatpush2.msra.mxu0 0.0
    %494 = vmatprep.subr.mxu0 0.0
    %495 = vmatpush2.msra.mxu0 0.0
    %496 = vmatprep.subr.mxu0 0.0
    %497 = vmatpush2.msra.mxu0 0.0
    %498 = vmatprep.subr.mxu0 0.0
    %499 = vmatpush2.msra.mxu0 0.0
    %500 = vmatprep.subr.mxu0 0.0
    %501 = vmatpush2.msra.mxu0 0.0
    %502 = vmatprep.subr.mxu0 0.0
    %503 = vmatpush2.msra.mxu0 0.0
    %504 = vmatprep.subr.mxu0 0.0
    %505 = vmatpush2.msra.mxu0 0.0
    %506 = vmatprep.subr.mxu0 0.0
    %507 = vmatpush2.msra.mxu0 0.0
    %508 = vmatprep.mubr.f32.mxu0 0.0
    %509 = vmatmul.mubr.f32.gmra.mxu0 %v40
    %v510 = vpop.f32.mrf.mxu0
    %v511 = vadd.f32 %v197, %v510
    %v512 = vpop.f32.mrf.mxu0
    %v513 = vadd.f32 %v201, %v512
    %514 = vmatprep.mubr.f32.mxu0 0.0
    %515 = vmatmul.mubr.f32.gmra.mxu0 %v41
    %v516 = vpop.f32.mrf.mxu0
    %v517 = vadd.f32 %v197, %v516
    %v518 = vpop.f32.mrf.mxu0
    %v519 = vadd.f32 %v201, %v518
    %520 = vmatprep.mubr.f32.mxu0 0.0
    %521 = vmatmul.mubr.f32.gmra.mxu0 %v42
    %v522 = vpop.f32.mrf.mxu0
    %v523 = vadd.f32 %v197, %v522
    %v524 = vpop.f32.mrf.mxu0
    %v525 = vadd.f32 %v201, %v524
    %526 = vmatprep.mubr.f32.mxu0 0.0
    %527 = vmatmul.mubr.f32.gmra.mxu0 %v43
    %v528 = vpop.f32.mrf.mxu0
    %v529 = vadd.f32 %v197, %v528
    %v530 = vpop.f32.mrf.mxu0
    %v531 = vadd.f32 %v201, %v530
    %532 = vmatprep.mubr.f32.mxu0 0.0
    %533 = vmatmul.mubr.f32.gmra.mxu0 %v44
    %v534 = vpop.f32.mrf.mxu0
    %v535 = vadd.f32 %v197, %v534
    %v536 = vpop.f32.mrf.mxu0
    %v537 = vadd.f32 %v201, %v536
    %538 = vmatprep.mubr.f32.mxu0 0.0
    %539 = vmatmul.mubr.f32.gmra.mxu0 %v45
    %v540 = vpop.f32.mrf.mxu0
    %v541 = vadd.f32 %v197, %v540
    %v542 = vpop.f32.mrf.mxu0
    %v543 = vadd.f32 %v201, %v542
    %544 = vmatprep.mubr.f32.mxu0 0.0
    %545 = vmatmul.mubr.f32.gmra.mxu0 %v46
    %v546 = vpop.f32.mrf.mxu0
    %v547 = vadd.f32 %v197, %v546
    %v548 = vpop.f32.mrf.mxu0
    %v549 = vadd.f32 %v201, %v548
    %550 = vmatprep.mubr.f32.mxu0 0.0
    %551 = vmatmul.mubr.f32.gmra.mxu0 %v47
    %v552 = vpop.f32.mrf.mxu0
    %v553 = vadd.f32 %v197, %v552
    %v554 = vpop.f32.mrf.mxu0
    %v555 = vadd.f32 %v201, %v554
    %556 = vdwg.mxu0
    %557 = vmatprep.subr.mxu0 %v175
    %558 = vmatpush1.msra.mxu0 %v174
    %559 = vmatprep.subr.mxu0 %v167
    %560 = vmatpush1.msra.mxu0 %v166
    %561 = vmatprep.subr.mxu0 %v159
    %562 = vmatpush1.msra.mxu0 %v158
    %563 = vmatprep.subr.mxu0 %v151
    %564 = vmatpush1.msra.mxu0 %v150
    %565 = vmatprep.subr.mxu0 %v143
    %566 = vmatpush1.msra.mxu0 %v142
    %567 = vmatprep.subr.mxu0 %v135
    %568 = vmatpush1.msra.mxu0 %v134
    %569 = vmatprep.subr.mxu0 %v127
    %570 = vmatpush1.msra.mxu0 %v126
    %571 = vmatprep.subr.mxu0 %v119
    %572 = vmatpush1.msra.mxu0 %v118
    %573 = vmatprep.subr.mxu0 %v111
    %574 = vmatpush1.msra.mxu0 %v110
    %575 = vmatprep.subr.mxu0 %v103
    %576 = vmatpush1.msra.mxu0 %v102
    %577 = vmatprep.subr.mxu0 %v95
    %578 = vmatpush1.msra.mxu0 %v94
    %579 = vmatprep.subr.mxu0 %v87
    %580 = vmatpush1.msra.mxu0 %v86
    %581 = vmatprep.subr.mxu0 %v79
    %582 = vmatpush1.msra.mxu0 %v78
    %583 = vmatprep.subr.mxu0 %v71
    %584 = vmatpush1.msra.mxu0 %v70
    %585 = vmatprep.subr.mxu0 %v63
    %586 = vmatpush1.msra.mxu0 %v62
    %587 = vmatprep.subr.mxu0 %v55
    %588 = vmatpush1.msra.mxu0 %v54
    %589 = vmatprep.subr.mxu0 0.0
    %590 = vmatpush2.msra.mxu0 0.0
    %591 = vmatprep.subr.mxu0 0.0
    %592 = vmatpush2.msra.mxu0 0.0
    %593 = vmatprep.subr.mxu0 0.0
    %594 = vmatpush2.msra.mxu0 0.0
    %595 = vmatprep.subr.mxu0 0.0
    %596 = vmatpush2.msra.mxu0 0.0
    %597 = vmatprep.subr.mxu0 0.0
    %598 = vmatpush2.msra.mxu0 0.0
    %599 = vmatprep.subr.mxu0 0.0
    %600 = vmatpush2.msra.mxu0 0.0
    %601 = vmatprep.subr.mxu0 0.0
    %602 = vmatpush2.msra.mxu0 0.0
    %603 = vmatprep.subr.mxu0 0.0
    %604 = vmatpush2.msra.mxu0 0.0
    %605 = vmatprep.subr.mxu0 0.0
    %606 = vmatpush2.msra.mxu0 0.0
    %607 = vmatprep.subr.mxu0 0.0
    %608 = vmatpush2.msra.mxu0 0.0
    %609 = vmatprep.subr.mxu0 0.0
    %610 = vmatpush2.msra.mxu0 0.0
    %611 = vmatprep.subr.mxu0 0.0
    %612 = vmatpush2.msra.mxu0 0.0
    %613 = vmatprep.subr.mxu0 0.0
    %614 = vmatpush2.msra.mxu0 0.0
    %615 = vmatprep.subr.mxu0 0.0
    %616 = vmatpush2.msra.mxu0 0.0
    %617 = vmatprep.subr.mxu0 0.0
    %618 = vmatpush2.msra.mxu0 0.0
    %619 = vmatprep.subr.mxu0 0.0
    %620 = vmatpush2.msra.mxu0 0.0
    %621 = vmatprep.mubr.f32.mxu0 0.0
    %622 = vmatmul.mubr.f32.gmra.mxu0 %v40
    %v623 = vpop.f32.mrf.mxu0
    %v624 = vadd.f32 %v205, %v623
    %v625 = vpop.f32.mrf.mxu0
    %v626 = vadd.f32 %v209, %v625
    %627 = vmatprep.mubr.f32.mxu0 0.0
    %628 = vmatmul.mubr.f32.gmra.mxu0 %v41
    %v629 = vpop.f32.mrf.mxu0
    %v630 = vadd.f32 %v205, %v629
    %v631 = vpop.f32.mrf.mxu0
    %v632 = vadd.f32 %v209, %v631
    %633 = vmatprep.mubr.f32.mxu0 0.0
    %634 = vmatmul.mubr.f32.gmra.mxu0 %v42
    %v635 = vpop.f32.mrf.mxu0
    %v636 = vadd.f32 %v205, %v635
    %v637 = vpop.f32.mrf.mxu0
    %v638 = vadd.f32 %v209, %v637
    %639 = vmatprep.mubr.f32.mxu0 0.0
    %640 = vmatmul.mubr.f32.gmra.mxu0 %v43
    %v641 = vpop.f32.mrf.mxu0
    %v642 = vadd.f32 %v205, %v641
    %v643 = vpop.f32.mrf.mxu0
    %v644 = vadd.f32 %v209, %v643
    %645 = vmatprep.mubr.f32.mxu0 0.0
    %646 = vmatmul.mubr.f32.gmra.mxu0 %v44
    %v647 = vpop.f32.mrf.mxu0
    %v648 = vadd.f32 %v205, %v647
    %v649 = vpop.f32.mrf.mxu0
    %v650 = vadd.f32 %v209, %v649
    %651 = vmatprep.mubr.f32.mxu0 0.0
    %652 = vmatmul.mubr.f32.gmra.mxu0 %v45
    %v653 = vpop.f32.mrf.mxu0
    %v654 = vadd.f32 %v205, %v653
    %v655 = vpop.f32.mrf.mxu0
    %v656 = vadd.f32 %v209, %v655
    %657 = vmatprep.mubr.f32.mxu0 0.0
    %658 = vmatmul.mubr.f32.gmra.mxu0 %v46
    %v659 = vpop.f32.mrf.mxu0
    %v660 = vadd.f32 %v205, %v659
    %v661 = vpop.f32.mrf.mxu0
    %v662 = vadd.f32 %v209, %v661
    %663 = vmatprep.mubr.f32.mxu0 0.0
    %664 = vmatmul.mubr.f32.gmra.mxu0 %v47
    %v665 = vpop.f32.mrf.mxu0
    %v666 = vadd.f32 %v205, %v665
    %v667 = vpop.f32.mrf.mxu0
    %v668 = vadd.f32 %v209, %v667
    %669 = vdwg.mxu0
    %670 = vst [vmem:[%s3] sm:$0xff] %v285
    %671 = vst [vmem:[%s3 + $0x8] sm:$0xff] %v287
    %672 = vst [vmem:[%s3 + $0x10] sm:$0xff] %v398
    %673 = vst [vmem:[%s3 + $0x18] sm:$0xff] %v400
    %674 = vst [vmem:[%s3 + $0x20] sm:$0xff] %v511
    %675 = vst [vmem:[%s3 + $0x28] sm:$0xff] %v513
    %676 = vst [vmem:[%s3 + $0x30] sm:$0xff] %v624
    %677 = vst [vmem:[%s3 + $0x38] sm:$0xff] %v626
    %678 = vst [vmem:[%s3 + $0x40] sm:$0xff] %v291
    %679 = vst [vmem:[%s3 + $0x48] sm:$0xff] %v293
    %680 = vst [vmem:[%s3 + $0x50] sm:$0xff] %v404
    %681 = vst [vmem:[%s3 + $0x58] sm:$0xff] %v406
    %682 = vst [vmem:[%s3 + $0x60] sm:$0xff] %v517
    %683 = vst [vmem:[%s3 + $0x68] sm:$0xff] %v519
    %684 = vst [vmem:[%s3 + $0x70] sm:$0xff] %v630
    %685 = vst [vmem:[%s3 + $0x78] sm:$0xff] %v632
    %686 = vst [vmem:[%s3 + $0x80] sm:$0xff] %v297
    %687 = vst [vmem:[%s3 + $0x88] sm:$0xff] %v299
    %688 = vst [vmem:[%s3 + $0x90] sm:$0xff] %v410
    %689 = vst [vmem:[%s3 + $0x98] sm:$0xff] %v412
    %690 = vst [vmem:[%s3 + $0xa0] sm:$0xff] %v523
    %691 = vst [vmem:[%s3 + $0xa8] sm:$0xff] %v525
    %692 = vst [vmem:[%s3 + $0xb0] sm:$0xff] %v636
    %693 = vst [vmem:[%s3 + $0xb8] sm:$0xff] %v638
    %694 = vst [vmem:[%s3 + $0xc0] sm:$0xff] %v303
    %695 = vst [vmem:[%s3 + $0xc8] sm:$0xff] %v305
    %696 = vst [vmem:[%s3 + $0xd0] sm:$0xff] %v416
    %697 = vst [vmem:[%s3 + $0xd8] sm:$0xff] %v418
    %698 = vst [vmem:[%s3 + $0xe0] sm:$0xff] %v529
    %699 = vst [vmem:[%s3 + $0xe8] sm:$0xff] %v531
    %700 = vst [vmem:[%s3 + $0xf0] sm:$0xff] %v642
    %701 = vst [vmem:[%s3 + $0xf8] sm:$0xff] %v644
    %702 = vst [vmem:[%s3 + $0x100] sm:$0xff] %v309
    %703 = vst [vmem:[%s3 + $0x108] sm:$0xff] %v311
    %704 = vst [vmem:[%s3 + $0x110] sm:$0xff] %v422
    %705 = vst [vmem:[%s3 + $0x118] sm:$0xff] %v424
    %706 = vst [vmem:[%s3 + $0x120] sm:$0xff] %v535
    %707 = vst [vmem:[%s3 + $0x128] sm:$0xff] %v537
    %708 = vst [vmem:[%s3 + $0x130] sm:$0xff] %v648
    %709 = vst [vmem:[%s3 + $0x138] sm:$0xff] %v650
    %710 = vst [vmem:[%s3 + $0x140] sm:$0xff] %v315
    %711 = vst [vmem:[%s3 + $0x148] sm:$0xff] %v317
    %712 = vst [vmem:[%s3 + $0x150] sm:$0xff] %v428
    %713 = vst [vmem:[%s3 + $0x158] sm:$0xff] %v430
    %714 = vst [vmem:[%s3 + $0x160] sm:$0xff] %v541
    %715 = vst [vmem:[%s3 + $0x168] sm:$0xff] %v543
    %716 = vst [vmem:[%s3 + $0x170] sm:$0xff] %v654
    %717 = vst [vmem:[%s3 + $0x178] sm:$0xff] %v656
    %718 = vst [vmem:[%s3 + $0x180] sm:$0xff] %v321
    %719 = vst [vmem:[%s3 + $0x188] sm:$0xff] %v323
    %720 = vst [vmem:[%s3 + $0x190] sm:$0xff] %v434
    %721 = vst [vmem:[%s3 + $0x198] sm:$0xff] %v436
    %722 = vst [vmem:[%s3 + $0x1a0] sm:$0xff] %v547
    %723 = vst [vmem:[%s3 + $0x1a8] sm:$0xff] %v549
    %724 = vst [vmem:[%s3 + $0x1b0] sm:$0xff] %v660
    %725 = vst [vmem:[%s3 + $0x1b8] sm:$0xff] %v662
    %726 = vst [vmem:[%s3 + $0x1c0] sm:$0xff] %v327
    %727 = vst [vmem:[%s3 + $0x1c8] sm:$0xff] %v329
    %728 = vst [vmem:[%s3 + $0x1d0] sm:$0xff] %v440
    %729 = vst [vmem:[%s3 + $0x1d8] sm:$0xff] %v442
    %730 = vst [vmem:[%s3 + $0x1e0] sm:$0xff] %v553
    %731 = vst [vmem:[%s3 + $0x1e8] sm:$0xff] %v555
    %732 = vst [vmem:[%s3 + $0x1f0] sm:$0xff] %v666
    %733 = vst [vmem:[%s3 + $0x1f8] sm:$0xff] %v668
    // Predicated region
    $region22: #{bilstmcrf_forward.5} parent=1 // pred_check
      _
    $region23: #{bilstmcrf_forward.5} parent=1 // pred_check_branch
      %735 = sbr.rel (0) target = $region25
    $region24: #{bilstmcrf_forward.5} parent=1 // pred_region
      _
    $region25: #{bilstmcrf_forward.5} parent=1 // pred_fallthru
      _
    // Predicated region
    $region26: #{bilstmcrf_forward.5} parent=1 // pred_check
      _
    $region27: #{bilstmcrf_forward.5} parent=1 // pred_check_branch
      %737 = sbr.rel (0) target = $region29
    $region28: #{bilstmcrf_forward.5} parent=1 // pred_region
      _
    $region29: #{bilstmcrf_forward.5} parent=1 // pred_fallthru
      _
    %738 = vsyncpa [#allocation3], 1
    %739 = vsyncpa [#allocation5], 1

// kernel: bilstmcrf_forward.7
$region0: #{bilstmcrf_forward.7}
  #allocation0 [shape = 'u32[]', space=smem, size = 0x4, offset = 0x4, fixed_abs, tag = 'smem constant byte address 0x4 - core index']
  #allocation1 [shape = 'u32[144,128]{1,0:T(1,128)}', space=vmem, size = 0x12000, scoped, tag = 'internal scratch']
  %s0 = inlined_call_operand.vmem [shape: f32[64,256], index: 0, kind: input, shape index: {}]
  %s1 = inlined_call_operand.vmem [shape: f32[256,1024], index: 1, kind: input, shape index: {}]
  %s2 = inlined_call_operand.vmem [shape: f32[1,1024], index: 2, kind: input, shape index: {}]
  %s3 = inlined_call_operand.vmem [shape: f32[64,1024], index: 3, kind: output, shape index: {}]
  %s4 = sld [smem:[#allocation0]]
  $region22: #{bilstmcrf_forward.7} parent=0
    _
  %s6 = ssub.s32 1, %s4
  %s7 = scalar_select 0, %s6, %s4
  // Predicated region
  $region2: #{bilstmcrf_forward.7} parent=0 // pred_check
    _
  $region3: #{bilstmcrf_forward.7} parent=0 // pred_check_branch
    %9 = sbr.rel (0) target = $region5
  $region4: #{bilstmcrf_forward.7} parent=0 // pred_region
    _
  $region5: #{bilstmcrf_forward.7} parent=0 // pred_fallthru
    _
  // Predicated region
  $region6: #{bilstmcrf_forward.7} parent=0 // pred_check
    _
  $region7: #{bilstmcrf_forward.7} parent=0 // pred_check_branch
    %11 = sbr.rel (0) target = $region9
  $region8: #{bilstmcrf_forward.7} parent=0 // pred_region
    _
  $region9: #{bilstmcrf_forward.7} parent=0 // pred_fallthru
    _
  // Predicated region
  $region10: #{bilstmcrf_forward.7} parent=0 // pred_check
    _
  $region11: #{bilstmcrf_forward.7} parent=0 // pred_check_branch
    %13 = sbr.rel (0) target = $region13
  $region12: #{bilstmcrf_forward.7} parent=0 // pred_region
    _
  $region13: #{bilstmcrf_forward.7} parent=0 // pred_fallthru
    _
  %v14 = vld [vmem:[%s0] sm:$0xff]
  %v15 = vld [vmem:[%s0 + $0x8] sm:$0xff]
  %v16 = vld [vmem:[%s0 + $0x10] sm:$0xff]
  %v17 = vld [vmem:[%s0 + $0x18] sm:$0xff]
  %v18 = vld [vmem:[%s0 + $0x20] sm:$0xff]
  %v19 = vld [vmem:[%s0 + $0x28] sm:$0xff]
  %v20 = vld [vmem:[%s0 + $0x30] sm:$0xff]
  %v21 = vld [vmem:[%s0 + $0x38] sm:$0xff]
  %v22 = vld [vmem:[%s0 + $0x40] sm:$0xff]
  %v23 = vld [vmem:[%s0 + $0x48] sm:$0xff]
  %v24 = vld [vmem:[%s0 + $0x50] sm:$0xff]
  %v25 = vld [vmem:[%s0 + $0x58] sm:$0xff]
  %v26 = vld [vmem:[%s0 + $0x60] sm:$0xff]
  %v27 = vld [vmem:[%s0 + $0x68] sm:$0xff]
  %v28 = vld [vmem:[%s0 + $0x70] sm:$0xff]
  %v29 = vld [vmem:[%s0 + $0x78] sm:$0xff]
  %v30 = vld [vmem:[%s1] sm:$0xff]
  %v31 = vld [vmem:[%s1 + $0x8] sm:$0xff]
  %v32 = vld [vmem:[%s1 + $0x10] sm:$0xff]
  %v33 = vld [vmem:[%s1 + $0x18] sm:$0xff]
  %v34 = vld [vmem:[%s1 + $0x20] sm:$0xff]
  %v35 = vld [vmem:[%s1 + $0x28] sm:$0xff]
  %v36 = vld [vmem:[%s1 + $0x30] sm:$0xff]
  %v37 = vld [vmem:[%s1 + $0x38] sm:$0xff]
  %v38 = vld [vmem:[%s1 + $0x40] sm:$0xff]
  %v39 = vld [vmem:[%s1 + $0x48] sm:$0xff]
  %v40 = vld [vmem:[%s1 + $0x50] sm:$0xff]
  %v41 = vld [vmem:[%s1 + $0x58] sm:$0xff]
  %v42 = vld [vmem:[%s1 + $0x60] sm:$0xff]
  %v43 = vld [vmem:[%s1 + $0x68] sm:$0xff]
  %v44 = vld [vmem:[%s1 + $0x70] sm:$0xff]
  %v45 = vld [vmem:[%s1 + $0x78] sm:$0xff]
  %v46 = vld [vmem:[%s1 + $0x80] sm:$0xff]
  %v47 = vld [vmem:[%s1 + $0x88] sm:$0xff]
  %v48 = vld [vmem:[%s1 + $0x90] sm:$0xff]
  %v49 = vld [vmem:[%s1 + $0x98] sm:$0xff]
  %v50 = vld [vmem:[%s1 + $0xa0] sm:$0xff]
  %v51 = vld [vmem:[%s1 + $0xa8] sm:$0xff]
  %v52 = vld [vmem:[%s1 + $0xb0] sm:$0xff]
  %v53 = vld [vmem:[%s1 + $0xb8] sm:$0xff]
  %v54 = vld [vmem:[%s1 + $0xc0] sm:$0xff]
  %v55 = vld [vmem:[%s1 + $0xc8] sm:$0xff]
  %v56 = vld [vmem:[%s1 + $0xd0] sm:$0xff]
  %v57 = vld [vmem:[%s1 + $0xd8] sm:$0xff]
  %v58 = vld [vmem:[%s1 + $0xe0] sm:$0xff]
  %v59 = vld [vmem:[%s1 + $0xe8] sm:$0xff]
  %v60 = vld [vmem:[%s1 + $0xf0] sm:$0xff]
  %v61 = vld [vmem:[%s1 + $0xf8] sm:$0xff]
  %v62 = vld [vmem:[%s1 + $0x100] sm:$0xff]
  %v63 = vld [vmem:[%s1 + $0x108] sm:$0xff]
  %v64 = vld [vmem:[%s1 + $0x110] sm:$0xff]
  %v65 = vld [vmem:[%s1 + $0x118] sm:$0xff]
  %v66 = vld [vmem:[%s1 + $0x120] sm:$0xff]
  %v67 = vld [vmem:[%s1 + $0x128] sm:$0xff]
  %v68 = vld [vmem:[%s1 + $0x130] sm:$0xff]
  %v69 = vld [vmem:[%s1 + $0x138] sm:$0xff]
  %v70 = vld [vmem:[%s1 + $0x140] sm:$0xff]
  %v71 = vld [vmem:[%s1 + $0x148] sm:$0xff]
  %v72 = vld [vmem:[%s1 + $0x150] sm:$0xff]
  %v73 = vld [vmem:[%s1 + $0x158] sm:$0xff]
  %v74 = vld [vmem:[%s1 + $0x160] sm:$0xff]
  %v75 = vld [vmem:[%s1 + $0x168] sm:$0xff]
  %v76 = vld [vmem:[%s1 + $0x170] sm:$0xff]
  %v77 = vld [vmem:[%s1 + $0x178] sm:$0xff]
  %v78 = vld [vmem:[%s1 + $0x180] sm:$0xff]
  %v79 = vld [vmem:[%s1 + $0x188] sm:$0xff]
  %v80 = vld [vmem:[%s1 + $0x190] sm:$0xff]
  %v81 = vld [vmem:[%s1 + $0x198] sm:$0xff]
  %v82 = vld [vmem:[%s1 + $0x1a0] sm:$0xff]
  %v83 = vld [vmem:[%s1 + $0x1a8] sm:$0xff]
  %v84 = vld [vmem:[%s1 + $0x1b0] sm:$0xff]
  %v85 = vld [vmem:[%s1 + $0x1b8] sm:$0xff]
  %v86 = vld [vmem:[%s1 + $0x1c0] sm:$0xff]
  %v87 = vld [vmem:[%s1 + $0x1c8] sm:$0xff]
  %v88 = vld [vmem:[%s1 + $0x1d0] sm:$0xff]
  %v89 = vld [vmem:[%s1 + $0x1d8] sm:$0xff]
  %v90 = vld [vmem:[%s1 + $0x1e0] sm:$0xff]
  %v91 = vld [vmem:[%s1 + $0x1e8] sm:$0xff]
  %v92 = vld [vmem:[%s1 + $0x1f0] sm:$0xff]
  %v93 = vld [vmem:[%s1 + $0x1f8] sm:$0xff]
  %v94 = vld [vmem:[%s1 + $0x200] sm:$0xff]
  %v95 = vld [vmem:[%s1 + $0x208] sm:$0xff]
  %v96 = vld [vmem:[%s1 + $0x210] sm:$0xff]
  %v97 = vld [vmem:[%s1 + $0x218] sm:$0xff]
  %v98 = vld [vmem:[%s1 + $0x220] sm:$0xff]
  %v99 = vld [vmem:[%s1 + $0x228] sm:$0xff]
  %v100 = vld [vmem:[%s1 + $0x230] sm:$0xff]
  %v101 = vld [vmem:[%s1 + $0x238] sm:$0xff]
  %v102 = vld [vmem:[%s1 + $0x240] sm:$0xff]
  %v103 = vld [vmem:[%s1 + $0x248] sm:$0xff]
  %v104 = vld [vmem:[%s1 + $0x250] sm:$0xff]
  %v105 = vld [vmem:[%s1 + $0x258] sm:$0xff]
  %v106 = vld [vmem:[%s1 + $0x260] sm:$0xff]
  %v107 = vld [vmem:[%s1 + $0x268] sm:$0xff]
  %v108 = vld [vmem:[%s1 + $0x270] sm:$0xff]
  %v109 = vld [vmem:[%s1 + $0x278] sm:$0xff]
  %v110 = vld [vmem:[%s1 + $0x280] sm:$0xff]
  %v111 = vld [vmem:[%s1 + $0x288] sm:$0xff]
  %v112 = vld [vmem:[%s1 + $0x290] sm:$0xff]
  %v113 = vld [vmem:[%s1 + $0x298] sm:$0xff]
  %v114 = vld [vmem:[%s1 + $0x2a0] sm:$0xff]
  %v115 = vld [vmem:[%s1 + $0x2a8] sm:$0xff]
  %v116 = vld [vmem:[%s1 + $0x2b0] sm:$0xff]
  %v117 = vld [vmem:[%s1 + $0x2b8] sm:$0xff]
  %v118 = vld [vmem:[%s1 + $0x2c0] sm:$0xff]
  %v119 = vld [vmem:[%s1 + $0x2c8] sm:$0xff]
  %v120 = vld [vmem:[%s1 + $0x2d0] sm:$0xff]
  %v121 = vld [vmem:[%s1 + $0x2d8] sm:$0xff]
  %v122 = vld [vmem:[%s1 + $0x2e0] sm:$0xff]
  %v123 = vld [vmem:[%s1 + $0x2e8] sm:$0xff]
  %v124 = vld [vmem:[%s1 + $0x2f0] sm:$0xff]
  %v125 = vld [vmem:[%s1 + $0x2f8] sm:$0xff]
  %v126 = vld [vmem:[%s1 + $0x300] sm:$0xff]
  %v127 = vld [vmem:[%s1 + $0x308] sm:$0xff]
  %v128 = vld [vmem:[%s1 + $0x310] sm:$0xff]
  %v129 = vld [vmem:[%s1 + $0x318] sm:$0xff]
  %v130 = vld [vmem:[%s1 + $0x320] sm:$0xff]
  %v131 = vld [vmem:[%s1 + $0x328] sm:$0xff]
  %v132 = vld [vmem:[%s1 + $0x330] sm:$0xff]
  %v133 = vld [vmem:[%s1 + $0x338] sm:$0xff]
  %v134 = vld [vmem:[%s1 + $0x340] sm:$0xff]
  %v135 = vld [vmem:[%s1 + $0x348] sm:$0xff]
  %v136 = vld [vmem:[%s1 + $0x350] sm:$0xff]
  %v137 = vld [vmem:[%s1 + $0x358] sm:$0xff]
  %v138 = vld [vmem:[%s1 + $0x360] sm:$0xff]
  %v139 = vld [vmem:[%s1 + $0x368] sm:$0xff]
  %v140 = vld [vmem:[%s1 + $0x370] sm:$0xff]
  %v141 = vld [vmem:[%s1 + $0x378] sm:$0xff]
  %v142 = vld [vmem:[%s1 + $0x380] sm:$0xff]
  %v143 = vld [vmem:[%s1 + $0x388] sm:$0xff]
  %v144 = vld [vmem:[%s1 + $0x390] sm:$0xff]
  %v145 = vld [vmem:[%s1 + $0x398] sm:$0xff]
  %v146 = vld [vmem:[%s1 + $0x3a0] sm:$0xff]
  %v147 = vld [vmem:[%s1 + $0x3a8] sm:$0xff]
  %v148 = vld [vmem:[%s1 + $0x3b0] sm:$0xff]
  %v149 = vld [vmem:[%s1 + $0x3b8] sm:$0xff]
  %v150 = vld [vmem:[%s1 + $0x3c0] sm:$0xff]
  %v151 = vld [vmem:[%s1 + $0x3c8] sm:$0xff]
  %v152 = vld [vmem:[%s1 + $0x3d0] sm:$0xff]
  %v153 = vld [vmem:[%s1 + $0x3d8] sm:$0xff]
  %v154 = vld [vmem:[%s1 + $0x3e0] sm:$0xff]
  %v155 = vld [vmem:[%s1 + $0x3e8] sm:$0xff]
  %v156 = vld [vmem:[%s1 + $0x3f0] sm:$0xff]
  %v157 = vld [vmem:[%s1 + $0x3f8] sm:$0xff]
  %v158 = vld [vmem:[%s1 + $0x400] sm:$0xff]
  %v159 = vld [vmem:[%s1 + $0x408] sm:$0xff]
  %v160 = vld [vmem:[%s1 + $0x410] sm:$0xff]
  %v161 = vld [vmem:[%s1 + $0x418] sm:$0xff]
  %v162 = vld [vmem:[%s1 + $0x420] sm:$0xff]
  %v163 = vld [vmem:[%s1 + $0x428] sm:$0xff]
  %v164 = vld [vmem:[%s1 + $0x430] sm:$0xff]
  %v165 = vld [vmem:[%s1 + $0x438] sm:$0xff]
  %v166 = vld [vmem:[%s1 + $0x440] sm:$0xff]
  %v167 = vld [vmem:[%s1 + $0x448] sm:$0xff]
  %v168 = vld [vmem:[%s1 + $0x450] sm:$0xff]
  %v169 = vld [vmem:[%s1 + $0x458] sm:$0xff]
  %v170 = vld [vmem:[%s1 + $0x460] sm:$0xff]
  %v171 = vld [vmem:[%s1 + $0x468] sm:$0xff]
  %v172 = vld [vmem:[%s1 + $0x470] sm:$0xff]
  %v173 = vld [vmem:[%s1 + $0x478] sm:$0xff]
  %v174 = vld [vmem:[%s1 + $0x480] sm:$0xff]
  %v175 = vld [vmem:[%s1 + $0x488] sm:$0xff]
  %v176 = vld [vmem:[%s1 + $0x490] sm:$0xff]
  %v177 = vld [vmem:[%s1 + $0x498] sm:$0xff]
  %v178 = vld [vmem:[%s1 + $0x4a0] sm:$0xff]
  %v179 = vld [vmem:[%s1 + $0x4a8] sm:$0xff]
  %v180 = vld [vmem:[%s1 + $0x4b0] sm:$0xff]
  %v181 = vld [vmem:[%s1 + $0x4b8] sm:$0xff]
  %v182 = vld [vmem:[%s1 + $0x4c0] sm:$0xff]
  %v183 = vld [vmem:[%s1 + $0x4c8] sm:$0xff]
  %v184 = vld [vmem:[%s1 + $0x4d0] sm:$0xff]
  %v185 = vld [vmem:[%s1 + $0x4d8] sm:$0xff]
  %v186 = vld [vmem:[%s1 + $0x4e0] sm:$0xff]
  %v187 = vld [vmem:[%s1 + $0x4e8] sm:$0xff]
  %v188 = vld [vmem:[%s1 + $0x4f0] sm:$0xff]
  %v189 = vld [vmem:[%s1 + $0x4f8] sm:$0xff]
  %v190 = vld [vmem:[%s1 + $0x500] sm:$0xff]
  %v191 = vld [vmem:[%s1 + $0x508] sm:$0xff]
  %v192 = vld [vmem:[%s1 + $0x510] sm:$0xff]
  %v193 = vld [vmem:[%s1 + $0x518] sm:$0xff]
  %v194 = vld [vmem:[%s1 + $0x520] sm:$0xff]
  %v195 = vld [vmem:[%s1 + $0x528] sm:$0xff]
  %v196 = vld [vmem:[%s1 + $0x530] sm:$0xff]
  %v197 = vld [vmem:[%s1 + $0x538] sm:$0xff]
  %v198 = vld [vmem:[%s1 + $0x540] sm:$0xff]
  %v199 = vld [vmem:[%s1 + $0x548] sm:$0xff]
  %v200 = vld [vmem:[%s1 + $0x550] sm:$0xff]
  %v201 = vld [vmem:[%s1 + $0x558] sm:$0xff]
  %v202 = vld [vmem:[%s1 + $0x560] sm:$0xff]
  %v203 = vld [vmem:[%s1 + $0x568] sm:$0xff]
  %v204 = vld [vmem:[%s1 + $0x570] sm:$0xff]
  %v205 = vld [vmem:[%s1 + $0x578] sm:$0xff]
  %v206 = vld [vmem:[%s1 + $0x580] sm:$0xff]
  %v207 = vld [vmem:[%s1 + $0x588] sm:$0xff]
  %v208 = vld [vmem:[%s1 + $0x590] sm:$0xff]
  %v209 = vld [vmem:[%s1 + $0x598] sm:$0xff]
  %v210 = vld [vmem:[%s1 + $0x5a0] sm:$0xff]
  %v211 = vld [vmem:[%s1 + $0x5a8] sm:$0xff]
  %v212 = vld [vmem:[%s1 + $0x5b0] sm:$0xff]
  %v213 = vld [vmem:[%s1 + $0x5b8] sm:$0xff]
  %v214 = vld [vmem:[%s1 + $0x5c0] sm:$0xff]
  %v215 = vld [vmem:[%s1 + $0x5c8] sm:$0xff]
  %v216 = vld [vmem:[%s1 + $0x5d0] sm:$0xff]
  %v217 = vld [vmem:[%s1 + $0x5d8] sm:$0xff]
  %v218 = vld [vmem:[%s1 + $0x5e0] sm:$0xff]
  %v219 = vld [vmem:[%s1 + $0x5e8] sm:$0xff]
  %v220 = vld [vmem:[%s1 + $0x5f0] sm:$0xff]
  %v221 = vld [vmem:[%s1 + $0x5f8] sm:$0xff]
  %v222 = vld [vmem:[%s1 + $0x600] sm:$0xff]
  %v223 = vld [vmem:[%s1 + $0x608] sm:$0xff]
  %v224 = vld [vmem:[%s1 + $0x610] sm:$0xff]
  %v225 = vld [vmem:[%s1 + $0x618] sm:$0xff]
  %v226 = vld [vmem:[%s1 + $0x620] sm:$0xff]
  %v227 = vld [vmem:[%s1 + $0x628] sm:$0xff]
  %v228 = vld [vmem:[%s1 + $0x630] sm:$0xff]
  %v229 = vld [vmem:[%s1 + $0x638] sm:$0xff]
  %v230 = vld [vmem:[%s1 + $0x640] sm:$0xff]
  %v231 = vld [vmem:[%s1 + $0x648] sm:$0xff]
  %v232 = vld [vmem:[%s1 + $0x650] sm:$0xff]
  %v233 = vld [vmem:[%s1 + $0x658] sm:$0xff]
  %v234 = vld [vmem:[%s1 + $0x660] sm:$0xff]
  %v235 = vld [vmem:[%s1 + $0x668] sm:$0xff]
  %v236 = vld [vmem:[%s1 + $0x670] sm:$0xff]
  %v237 = vld [vmem:[%s1 + $0x678] sm:$0xff]
  %v238 = vld [vmem:[%s1 + $0x680] sm:$0xff]
  %v239 = vld [vmem:[%s1 + $0x688] sm:$0xff]
  %v240 = vld [vmem:[%s1 + $0x690] sm:$0xff]
  %v241 = vld [vmem:[%s1 + $0x698] sm:$0xff]
  %v242 = vld [vmem:[%s1 + $0x6a0] sm:$0xff]
  %v243 = vld [vmem:[%s1 + $0x6a8] sm:$0xff]
  %v244 = vld [vmem:[%s1 + $0x6b0] sm:$0xff]
  %v245 = vld [vmem:[%s1 + $0x6b8] sm:$0xff]
  %v246 = vld [vmem:[%s1 + $0x6c0] sm:$0xff]
  %v247 = vld [vmem:[%s1 + $0x6c8] sm:$0xff]
  %v248 = vld [vmem:[%s1 + $0x6d0] sm:$0xff]
  %v249 = vld [vmem:[%s1 + $0x6d8] sm:$0xff]
  %v250 = vld [vmem:[%s1 + $0x6e0] sm:$0xff]
  %v251 = vld [vmem:[%s1 + $0x6e8] sm:$0xff]
  %v252 = vld [vmem:[%s1 + $0x6f0] sm:$0xff]
  %v253 = vld [vmem:[%s1 + $0x6f8] sm:$0xff]
  %v254 = vld [vmem:[%s1 + $0x700] sm:$0xff]
  %v255 = vld [vmem:[%s1 + $0x708] sm:$0xff]
  %v256 = vld [vmem:[%s1 + $0x710] sm:$0xff]
  %v257 = vld [vmem:[%s1 + $0x718] sm:$0xff]
  %v258 = vld [vmem:[%s1 + $0x720] sm:$0xff]
  %v259 = vld [vmem:[%s1 + $0x728] sm:$0xff]
  %v260 = vld [vmem:[%s1 + $0x730] sm:$0xff]
  %v261 = vld [vmem:[%s1 + $0x738] sm:$0xff]
  %v262 = vld [vmem:[%s1 + $0x740] sm:$0xff]
  %v263 = vld [vmem:[%s1 + $0x748] sm:$0xff]
  %v264 = vld [vmem:[%s1 + $0x750] sm:$0xff]
  %v265 = vld [vmem:[%s1 + $0x758] sm:$0xff]
  %v266 = vld [vmem:[%s1 + $0x760] sm:$0xff]
  %v267 = vld [vmem:[%s1 + $0x768] sm:$0xff]
  %v268 = vld [vmem:[%s1 + $0x770] sm:$0xff]
  %v269 = vld [vmem:[%s1 + $0x778] sm:$0xff]
  %v270 = vld [vmem:[%s1 + $0x780] sm:$0xff]
  %v271 = vld [vmem:[%s1 + $0x788] sm:$0xff]
  %v272 = vld [vmem:[%s1 + $0x790] sm:$0xff]
  %v273 = vld [vmem:[%s1 + $0x798] sm:$0xff]
  %v274 = vld [vmem:[%s1 + $0x7a0] sm:$0xff]
  %v275 = vld [vmem:[%s1 + $0x7a8] sm:$0xff]
  %v276 = vld [vmem:[%s1 + $0x7b0] sm:$0xff]
  %v277 = vld [vmem:[%s1 + $0x7b8] sm:$0xff]
  %v278 = vld [vmem:[%s1 + $0x7c0] sm:$0xff]
  %v279 = vld [vmem:[%s1 + $0x7c8] sm:$0xff]
  %v280 = vld [vmem:[%s1 + $0x7d0] sm:$0xff]
  %v281 = vld [vmem:[%s1 + $0x7d8] sm:$0xff]
  %v282 = vld [vmem:[%s1 + $0x7e0] sm:$0xff]
  %v283 = vld [vmem:[%s1 + $0x7e8] sm:$0xff]
  %v284 = vld [vmem:[%s1 + $0x7f0] sm:$0xff]
  %v285 = vld [vmem:[%s1 + $0x7f8] sm:$0xff]
  %v286 = vld [vmem:[%s2] sm:$0xff]
  %v288 = vlaneseq
  %v289 = vshrl.u32 %v288, 7
  %v290 = vsub.s32 0, %v289
  %v291 = vrot.slane %v286, %v290
  %v292 = vlaneseq
  %v293 = vshrl.u32 %v292, 7
  %v294 = vsub.s32 1, %v293
  %v295 = vrot.slane %v286, %v294
  %v296 = vlaneseq
  %v297 = vshrl.u32 %v296, 7
  %v298 = vsub.s32 2, %v297
  %v299 = vrot.slane %v286, %v298
  %v300 = vlaneseq
  %v301 = vshrl.u32 %v300, 7
  %v302 = vsub.s32 3, %v301
  %v303 = vrot.slane %v286, %v302
  %v304 = vlaneseq
  %v305 = vshrl.u32 %v304, 7
  %v306 = vsub.s32 4, %v305
  %v307 = vrot.slane %v286, %v306
  %v308 = vlaneseq
  %v309 = vshrl.u32 %v308, 7
  %v310 = vsub.s32 5, %v309
  %v311 = vrot.slane %v286, %v310
  %v312 = vlaneseq
  %v313 = vshrl.u32 %v312, 7
  %v314 = vsub.s32 6, %v313
  %v315 = vrot.slane %v286, %v314
  %v316 = vlaneseq
  %v317 = vshrl.u32 %v316, 7
  %v318 = vsub.s32 7, %v317
  %v319 = vrot.slane %v286, %v318
  %328 = vmatprep.subr.mxu0 %v151
  %329 = vmatpush1.msra.mxu0 %v150
  %330 = vmatprep.subr.mxu0 %v143
  %331 = vmatpush1.msra.mxu0 %v142
  %332 = vmatprep.subr.mxu0 %v135
  %333 = vmatpush1.msra.mxu0 %v134
  %334 = vmatprep.subr.mxu0 %v127
  %335 = vmatpush1.msra.mxu0 %v126
  %336 = vmatprep.subr.mxu0 %v119
  %337 = vmatpush1.msra.mxu0 %v118
  %338 = vmatprep.subr.mxu0 %v111
  %339 = vmatpush1.msra.mxu0 %v110
  %340 = vmatprep.subr.mxu0 %v103
  %341 = vmatpush1.msra.mxu0 %v102
  %342 = vmatprep.subr.mxu0 %v95
  %343 = vmatpush1.msra.mxu0 %v94
  %344 = vmatprep.subr.mxu0 %v87
  %345 = vmatpush1.msra.mxu0 %v86
  %346 = vmatprep.subr.mxu0 %v79
  %347 = vmatpush1.msra.mxu0 %v78
  %348 = vmatprep.subr.mxu0 %v71
  %349 = vmatpush1.msra.mxu0 %v70
  %350 = vmatprep.subr.mxu0 %v63
  %351 = vmatpush1.msra.mxu0 %v62
  %352 = vmatprep.subr.mxu0 %v55
  %353 = vmatpush1.msra.mxu0 %v54
  %354 = vmatprep.subr.mxu0 %v47
  %355 = vmatpush1.msra.mxu0 %v46
  %356 = vmatprep.subr.mxu0 %v39
  %357 = vmatpush1.msra.mxu0 %v38
  %358 = vmatprep.subr.mxu0 %v31
  %359 = vmatpush1.msra.mxu0 %v30
  %360 = vmatprep.subr.mxu0 %v279
  %361 = vmatpush2.msra.mxu0 %v278
  %362 = vmatprep.subr.mxu0 %v271
  %363 = vmatpush2.msra.mxu0 %v270
  %364 = vmatprep.subr.mxu0 %v263
  %365 = vmatpush2.msra.mxu0 %v262
  %366 = vmatprep.subr.mxu0 %v255
  %367 = vmatpush2.msra.mxu0 %v254
  %368 = vmatprep.subr.mxu0 %v247
  %369 = vmatpush2.msra.mxu0 %v246
  %370 = vmatprep.subr.mxu0 %v239
  %371 = vmatpush2.msra.mxu0 %v238
  %372 = vmatprep.subr.mxu0 %v231
  %373 = vmatpush2.msra.mxu0 %v230
  %374 = vmatprep.subr.mxu0 %v223
  %375 = vmatpush2.msra.mxu0 %v222
  %376 = vmatprep.subr.mxu0 %v215
  %377 = vmatpush2.msra.mxu0 %v214
  %378 = vmatprep.subr.mxu0 %v207
  %379 = vmatpush2.msra.mxu0 %v206
  %380 = vmatprep.subr.mxu0 %v199
  %381 = vmatpush2.msra.mxu0 %v198
  %382 = vmatprep.subr.mxu0 %v191
  %383 = vmatpush2.msra.mxu0 %v190
  %384 = vmatprep.subr.mxu0 %v183
  %385 = vmatpush2.msra.mxu0 %v182
  %386 = vmatprep.subr.mxu0 %v175
  %387 = vmatpush2.msra.mxu0 %v174
  %388 = vmatprep.subr.mxu0 %v167
  %389 = vmatpush2.msra.mxu0 %v166
  %390 = vmatprep.subr.mxu0 %v159
  %391 = vmatpush2.msra.mxu0 %v158
  %392 = vmatprep.mubr.f32.mxu0 %v15
  %393 = vmatmul.mubr.f32.gmra.mxu0 %v14
  %v394 = vpop.f32.mrf.mxu0
  %v395 = vadd.f32 %v291, %v394
  %v396 = vpop.f32.mrf.mxu0
  %v397 = vadd.f32 %v295, %v396
  %398 = vmatprep.mubr.f32.mxu0 %v17
  %399 = vmatmul.mubr.f32.gmra.mxu0 %v16
  %v400 = vpop.f32.mrf.mxu0
  %v401 = vadd.f32 %v291, %v400
  %v402 = vpop.f32.mrf.mxu0
  %v403 = vadd.f32 %v295, %v402
  %404 = vmatprep.mubr.f32.mxu0 %v19
  %405 = vmatmul.mubr.f32.gmra.mxu0 %v18
  %v406 = vpop.f32.mrf.mxu0
  %v407 = vadd.f32 %v291, %v406
  %v408 = vpop.f32.mrf.mxu0
  %v409 = vadd.f32 %v295, %v408
  %410 = vmatprep.mubr.f32.mxu0 %v21
  %411 = vmatmul.mubr.f32.gmra.mxu0 %v20
  %v412 = vpop.f32.mrf.mxu0
  %v413 = vadd.f32 %v291, %v412
  %v414 = vpop.f32.mrf.mxu0
  %v415 = vadd.f32 %v295, %v414
  %416 = vmatprep.mubr.f32.mxu0 %v23
  %417 = vmatmul.mubr.f32.gmra.mxu0 %v22
  %v418 = vpop.f32.mrf.mxu0
  %v419 = vadd.f32 %v291, %v418
  %v420 = vpop.f32.mrf.mxu0
  %v421 = vadd.f32 %v295, %v420
  %422 = vmatprep.mubr.f32.mxu0 %v25
  %423 = vmatmul.mubr.f32.gmra.mxu0 %v24
  %v424 = vpop.f32.mrf.mxu0
  %v425 = vadd.f32 %v291, %v424
  %v426 = vpop.f32.mrf.mxu0
  %v427 = vadd.f32 %v295, %v426
  %428 = vmatprep.mubr.f32.mxu0 %v27
  %429 = vmatmul.mubr.f32.gmra.mxu0 %v26
  %v430 = vpop.f32.mrf.mxu0
  %v431 = vadd.f32 %v291, %v430
  %v432 = vpop.f32.mrf.mxu0
  %v433 = vadd.f32 %v295, %v432
  %434 = vmatprep.mubr.f32.mxu0 %v29
  %435 = vmatmul.mubr.f32.gmra.mxu0 %v28
  %v436 = vpop.f32.mrf.mxu0
  %v437 = vadd.f32 %v291, %v436
  %v438 = vpop.f32.mrf.mxu0
  %v439 = vadd.f32 %v295, %v438
  %440 = vdwg.mxu0
  %441 = vmatprep.subr.mxu0 %v153
  %442 = vmatpush1.msra.mxu0 %v152
  %443 = vmatprep.subr.mxu0 %v145
  %444 = vmatpush1.msra.mxu0 %v144
  %445 = vmatprep.subr.mxu0 %v137
  %446 = vmatpush1.msra.mxu0 %v136
  %447 = vmatprep.subr.mxu0 %v129
  %448 = vmatpush1.msra.mxu0 %v128
  %449 = vmatprep.subr.mxu0 %v121
  %450 = vmatpush1.msra.mxu0 %v120
  %451 = vmatprep.subr.mxu0 %v113
  %452 = vmatpush1.msra.mxu0 %v112
  %453 = vmatprep.subr.mxu0 %v105
  %454 = vmatpush1.msra.mxu0 %v104
  %455 = vmatprep.subr.mxu0 %v97
  %456 = vmatpush1.msra.mxu0 %v96
  %457 = vmatprep.subr.mxu0 %v89
  %458 = vmatpush1.msra.mxu0 %v88
  %459 = vmatprep.subr.mxu0 %v81
  %460 = vmatpush1.msra.mxu0 %v80
  %461 = vmatprep.subr.mxu0 %v73
  %462 = vmatpush1.msra.mxu0 %v72
  %463 = vmatprep.subr.mxu0 %v65
  %464 = vmatpush1.msra.mxu0 %v64
  %465 = vmatprep.subr.mxu0 %v57
  %466 = vmatpush1.msra.mxu0 %v56
  %467 = vmatprep.subr.mxu0 %v49
  %468 = vmatpush1.msra.mxu0 %v48
  %469 = vmatprep.subr.mxu0 %v41
  %470 = vmatpush1.msra.mxu0 %v40
  %471 = vmatprep.subr.mxu0 %v33
  %472 = vmatpush1.msra.mxu0 %v32
  %473 = vmatprep.subr.mxu0 %v281
  %474 = vmatpush2.msra.mxu0 %v280
  %475 = vmatprep.subr.mxu0 %v273
  %476 = vmatpush2.msra.mxu0 %v272
  %477 = vmatprep.subr.mxu0 %v265
  %478 = vmatpush2.msra.mxu0 %v264
  %479 = vmatprep.subr.mxu0 %v257
  %480 = vmatpush2.msra.mxu0 %v256
  %481 = vmatprep.subr.mxu0 %v249
  %482 = vmatpush2.msra.mxu0 %v248
  %483 = vmatprep.subr.mxu0 %v241
  %484 = vmatpush2.msra.mxu0 %v240
  %485 = vmatprep.subr.mxu0 %v233
  %486 = vmatpush2.msra.mxu0 %v232
  %487 = vmatprep.subr.mxu0 %v225
  %488 = vmatpush2.msra.mxu0 %v224
  %489 = vmatprep.subr.mxu0 %v217
  %490 = vmatpush2.msra.mxu0 %v216
  %491 = vmatprep.subr.mxu0 %v209
  %492 = vmatpush2.msra.mxu0 %v208
  %493 = vmatprep.subr.mxu0 %v201
  %494 = vmatpush2.msra.mxu0 %v200
  %495 = vmatprep.subr.mxu0 %v193
  %496 = vmatpush2.msra.mxu0 %v192
  %497 = vmatprep.subr.mxu0 %v185
  %498 = vmatpush2.msra.mxu0 %v184
  %499 = vmatprep.subr.mxu0 %v177
  %500 = vmatpush2.msra.mxu0 %v176
  %501 = vmatprep.subr.mxu0 %v169
  %502 = vmatpush2.msra.mxu0 %v168
  %503 = vmatprep.subr.mxu0 %v161
  %504 = vmatpush2.msra.mxu0 %v160
  %505 = vmatprep.mubr.f32.mxu0 %v15
  %506 = vmatmul.mubr.f32.gmra.mxu0 %v14
  %v507 = vpop.f32.mrf.mxu0
  %v508 = vadd.f32 %v299, %v507
  %v509 = vpop.f32.mrf.mxu0
  %v510 = vadd.f32 %v303, %v509
  %511 = vmatprep.mubr.f32.mxu0 %v17
  %512 = vmatmul.mubr.f32.gmra.mxu0 %v16
  %v513 = vpop.f32.mrf.mxu0
  %v514 = vadd.f32 %v299, %v513
  %v515 = vpop.f32.mrf.mxu0
  %v516 = vadd.f32 %v303, %v515
  %517 = vmatprep.mubr.f32.mxu0 %v19
  %518 = vmatmul.mubr.f32.gmra.mxu0 %v18
  %v519 = vpop.f32.mrf.mxu0
  %v520 = vadd.f32 %v299, %v519
  %v521 = vpop.f32.mrf.mxu0
  %v522 = vadd.f32 %v303, %v521
  %523 = vmatprep.mubr.f32.mxu0 %v21
  %524 = vmatmul.mubr.f32.gmra.mxu0 %v20
  %v525 = vpop.f32.mrf.mxu0
  %v526 = vadd.f32 %v299, %v525
  %v527 = vpop.f32.mrf.mxu0
  %v528 = vadd.f32 %v303, %v527
  %529 = vmatprep.mubr.f32.mxu0 %v23
  %530 = vmatmul.mubr.f32.gmra.mxu0 %v22
  %v531 = vpop.f32.mrf.mxu0
  %v532 = vadd.f32 %v299, %v531
  %v533 = vpop.f32.mrf.mxu0
  %v534 = vadd.f32 %v303, %v533
  %535 = vmatprep.mubr.f32.mxu0 %v25
  %536 = vmatmul.mubr.f32.gmra.mxu0 %v24
  %v537 = vpop.f32.mrf.mxu0
  %v538 = vadd.f32 %v299, %v537
  %v539 = vpop.f32.mrf.mxu0
  %v540 = vadd.f32 %v303, %v539
  %541 = vmatprep.mubr.f32.mxu0 %v27
  %542 = vmatmul.mubr.f32.gmra.mxu0 %v26
  %v543 = vpop.f32.mrf.mxu0
  %v544 = vadd.f32 %v299, %v543
  %v545 = vpop.f32.mrf.mxu0
  %v546 = vadd.f32 %v303, %v545
  %547 = vmatprep.mubr.f32.mxu0 %v29
  %548 = vmatmul.mubr.f32.gmra.mxu0 %v28
  %v549 = vpop.f32.mrf.mxu0
  %v550 = vadd.f32 %v299, %v549
  %v551 = vpop.f32.mrf.mxu0
  %v552 = vadd.f32 %v303, %v551
  %553 = vdwg.mxu0
  %554 = vmatprep.subr.mxu0 %v155
  %555 = vmatpush1.msra.mxu0 %v154
  %556 = vmatprep.subr.mxu0 %v147
  %557 = vmatpush1.msra.mxu0 %v146
  %558 = vmatprep.subr.mxu0 %v139
  %559 = vmatpush1.msra.mxu0 %v138
  %560 = vmatprep.subr.mxu0 %v131
  %561 = vmatpush1.msra.mxu0 %v130
  %562 = vmatprep.subr.mxu0 %v123
  %563 = vmatpush1.msra.mxu0 %v122
  %564 = vmatprep.subr.mxu0 %v115
  %565 = vmatpush1.msra.mxu0 %v114
  %566 = vmatprep.subr.mxu0 %v107
  %567 = vmatpush1.msra.mxu0 %v106
  %568 = vmatprep.subr.mxu0 %v99
  %569 = vmatpush1.msra.mxu0 %v98
  %570 = vmatprep.subr.mxu0 %v91
  %571 = vmatpush1.msra.mxu0 %v90
  %572 = vmatprep.subr.mxu0 %v83
  %573 = vmatpush1.msra.mxu0 %v82
  %574 = vmatprep.subr.mxu0 %v75
  %575 = vmatpush1.msra.mxu0 %v74
  %576 = vmatprep.subr.mxu0 %v67
  %577 = vmatpush1.msra.mxu0 %v66
  %578 = vmatprep.subr.mxu0 %v59
  %579 = vmatpush1.msra.mxu0 %v58
  %580 = vmatprep.subr.mxu0 %v51
  %581 = vmatpush1.msra.mxu0 %v50
  %582 = vmatprep.subr.mxu0 %v43
  %583 = vmatpush1.msra.mxu0 %v42
  %584 = vmatprep.subr.mxu0 %v35
  %585 = vmatpush1.msra.mxu0 %v34
  %586 = vmatprep.subr.mxu0 %v283
  %587 = vmatpush2.msra.mxu0 %v282
  %588 = vmatprep.subr.mxu0 %v275
  %589 = vmatpush2.msra.mxu0 %v274
  %590 = vmatprep.subr.mxu0 %v267
  %591 = vmatpush2.msra.mxu0 %v266
  %592 = vmatprep.subr.mxu0 %v259
  %593 = vmatpush2.msra.mxu0 %v258
  %594 = vmatprep.subr.mxu0 %v251
  %595 = vmatpush2.msra.mxu0 %v250
  %596 = vmatprep.subr.mxu0 %v243
  %597 = vmatpush2.msra.mxu0 %v242
  %598 = vmatprep.subr.mxu0 %v235
  %599 = vmatpush2.msra.mxu0 %v234
  %600 = vmatprep.subr.mxu0 %v227
  %601 = vmatpush2.msra.mxu0 %v226
  %602 = vmatprep.subr.mxu0 %v219
  %603 = vmatpush2.msra.mxu0 %v218
  %604 = vmatprep.subr.mxu0 %v211
  %605 = vmatpush2.msra.mxu0 %v210
  %606 = vmatprep.subr.mxu0 %v203
  %607 = vmatpush2.msra.mxu0 %v202
  %608 = vmatprep.subr.mxu0 %v195
  %609 = vmatpush2.msra.mxu0 %v194
  %610 = vmatprep.subr.mxu0 %v187
  %611 = vmatpush2.msra.mxu0 %v186
  %612 = vmatprep.subr.mxu0 %v179
  %613 = vmatpush2.msra.mxu0 %v178
  %614 = vmatprep.subr.mxu0 %v171
  %615 = vmatpush2.msra.mxu0 %v170
  %616 = vmatprep.subr.mxu0 %v163
  %617 = vmatpush2.msra.mxu0 %v162
  %618 = vmatprep.mubr.f32.mxu0 %v15
  %619 = vmatmul.mubr.f32.gmra.mxu0 %v14
  %v620 = vpop.f32.mrf.mxu0
  %v621 = vadd.f32 %v307, %v620
  %v622 = vpop.f32.mrf.mxu0
  %v623 = vadd.f32 %v311, %v622
  %624 = vmatprep.mubr.f32.mxu0 %v17
  %625 = vmatmul.mubr.f32.gmra.mxu0 %v16
  %v626 = vpop.f32.mrf.mxu0
  %v627 = vadd.f32 %v307, %v626
  %v628 = vpop.f32.mrf.mxu0
  %v629 = vadd.f32 %v311, %v628
  %630 = vmatprep.mubr.f32.mxu0 %v19
  %631 = vmatmul.mubr.f32.gmra.mxu0 %v18
  %v632 = vpop.f32.mrf.mxu0
  %v633 = vadd.f32 %v307, %v632
  %v634 = vpop.f32.mrf.mxu0
  %v635 = vadd.f32 %v311, %v634
  %636 = vmatprep.mubr.f32.mxu0 %v21
  %637 = vmatmul.mubr.f32.gmra.mxu0 %v20
  %v638 = vpop.f32.mrf.mxu0
  %v639 = vadd.f32 %v307, %v638
  %v640 = vpop.f32.mrf.mxu0
  %v641 = vadd.f32 %v311, %v640
  %642 = vmatprep.mubr.f32.mxu0 %v23
  %643 = vmatmul.mubr.f32.gmra.mxu0 %v22
  %v644 = vpop.f32.mrf.mxu0
  %v645 = vadd.f32 %v307, %v644
  %v646 = vpop.f32.mrf.mxu0
  %v647 = vadd.f32 %v311, %v646
  %648 = vmatprep.mubr.f32.mxu0 %v25
  %649 = vmatmul.mubr.f32.gmra.mxu0 %v24
  %v650 = vpop.f32.mrf.mxu0
  %v651 = vadd.f32 %v307, %v650
  %v652 = vpop.f32.mrf.mxu0
  %v653 = vadd.f32 %v311, %v652
  %654 = vmatprep.mubr.f32.mxu0 %v27
  %655 = vmatmul.mubr.f32.gmra.mxu0 %v26
  %v656 = vpop.f32.mrf.mxu0
  %v657 = vadd.f32 %v307, %v656
  %v658 = vpop.f32.mrf.mxu0
  %v659 = vadd.f32 %v311, %v658
  %660 = vmatprep.mubr.f32.mxu0 %v29
  %661 = vmatmul.mubr.f32.gmra.mxu0 %v28
  %v662 = vpop.f32.mrf.mxu0
  %v663 = vadd.f32 %v307, %v662
  %v664 = vpop.f32.mrf.mxu0
  %v665 = vadd.f32 %v311, %v664
  %666 = vdwg.mxu0
  %667 = vmatprep.subr.mxu0 %v157
  %668 = vmatpush1.msra.mxu0 %v156
  %669 = vmatprep.subr.mxu0 %v149
  %670 = vmatpush1.msra.mxu0 %v148
  %671 = vmatprep.subr.mxu0 %v141
  %672 = vmatpush1.msra.mxu0 %v140
  %673 = vmatprep.subr.mxu0 %v133
  %674 = vmatpush1.msra.mxu0 %v132
  %675 = vmatprep.subr.mxu0 %v125
  %676 = vmatpush1.msra.mxu0 %v124
  %677 = vmatprep.subr.mxu0 %v117
  %678 = vmatpush1.msra.mxu0 %v116
  %679 = vmatprep.subr.mxu0 %v109
  %680 = vmatpush1.msra.mxu0 %v108
  %681 = vmatprep.subr.mxu0 %v101
  %682 = vmatpush1.msra.mxu0 %v100
  %683 = vmatprep.subr.mxu0 %v93
  %684 = vmatpush1.msra.mxu0 %v92
  %685 = vmatprep.subr.mxu0 %v85
  %686 = vmatpush1.msra.mxu0 %v84
  %687 = vmatprep.subr.mxu0 %v77
  %688 = vmatpush1.msra.mxu0 %v76
  %689 = vmatprep.subr.mxu0 %v69
  %690 = vmatpush1.msra.mxu0 %v68
  %691 = vmatprep.subr.mxu0 %v61
  %692 = vmatpush1.msra.mxu0 %v60
  %693 = vmatprep.subr.mxu0 %v53
  %694 = vmatpush1.msra.mxu0 %v52
  %695 = vmatprep.subr.mxu0 %v45
  %696 = vmatpush1.msra.mxu0 %v44
  %697 = vmatprep.subr.mxu0 %v37
  %698 = vmatpush1.msra.mxu0 %v36
  %699 = vmatprep.subr.mxu0 %v285
  %700 = vmatpush2.msra.mxu0 %v284
  %701 = vmatprep.subr.mxu0 %v277
  %702 = vmatpush2.msra.mxu0 %v276
  %703 = vmatprep.subr.mxu0 %v269
  %704 = vmatpush2.msra.mxu0 %v268
  %705 = vmatprep.subr.mxu0 %v261
  %706 = vmatpush2.msra.mxu0 %v260
  %707 = vmatprep.subr.mxu0 %v253
  %708 = vmatpush2.msra.mxu0 %v252
  %709 = vmatprep.subr.mxu0 %v245
  %710 = vmatpush2.msra.mxu0 %v244
  %711 = vmatprep.subr.mxu0 %v237
  %712 = vmatpush2.msra.mxu0 %v236
  %713 = vmatprep.subr.mxu0 %v229
  %714 = vmatpush2.msra.mxu0 %v228
  %715 = vmatprep.subr.mxu0 %v221
  %716 = vmatpush2.msra.mxu0 %v220
  %717 = vmatprep.subr.mxu0 %v213
  %718 = vmatpush2.msra.mxu0 %v212
  %719 = vmatprep.subr.mxu0 %v205
  %720 = vmatpush2.msra.mxu0 %v204
  %721 = vmatprep.subr.mxu0 %v197
  %722 = vmatpush2.msra.mxu0 %v196
  %723 = vmatprep.subr.mxu0 %v189
  %724 = vmatpush2.msra.mxu0 %v188
  %725 = vmatprep.subr.mxu0 %v181
  %726 = vmatpush2.msra.mxu0 %v180
  %727 = vmatprep.subr.mxu0 %v173
  %728 = vmatpush2.msra.mxu0 %v172
  %729 = vmatprep.subr.mxu0 %v165
  %730 = vmatpush2.msra.mxu0 %v164
  %731 = vmatprep.mubr.f32.mxu0 %v15
  %732 = vmatmul.mubr.f32.gmra.mxu0 %v14
  %v733 = vpop.f32.mrf.mxu0
  %v734 = vadd.f32 %v315, %v733
  %v735 = vpop.f32.mrf.mxu0
  %v736 = vadd.f32 %v319, %v735
  %737 = vmatprep.mubr.f32.mxu0 %v17
  %738 = vmatmul.mubr.f32.gmra.mxu0 %v16
  %v739 = vpop.f32.mrf.mxu0
  %v740 = vadd.f32 %v315, %v739
  %v741 = vpop.f32.mrf.mxu0
  %v742 = vadd.f32 %v319, %v741
  %743 = vmatprep.mubr.f32.mxu0 %v19
  %744 = vmatmul.mubr.f32.gmra.mxu0 %v18
  %v745 = vpop.f32.mrf.mxu0
  %v746 = vadd.f32 %v315, %v745
  %v747 = vpop.f32.mrf.mxu0
  %v748 = vadd.f32 %v319, %v747
  %749 = vmatprep.mubr.f32.mxu0 %v21
  %750 = vmatmul.mubr.f32.gmra.mxu0 %v20
  %v751 = vpop.f32.mrf.mxu0
  %v752 = vadd.f32 %v315, %v751
  %v753 = vpop.f32.mrf.mxu0
  %v754 = vadd.f32 %v319, %v753
  %755 = vmatprep.mubr.f32.mxu0 %v23
  %756 = vmatmul.mubr.f32.gmra.mxu0 %v22
  %v757 = vpop.f32.mrf.mxu0
  %v758 = vadd.f32 %v315, %v757
  %v759 = vpop.f32.mrf.mxu0
  %v760 = vadd.f32 %v319, %v759
  %761 = vmatprep.mubr.f32.mxu0 %v25
  %762 = vmatmul.mubr.f32.gmra.mxu0 %v24
  %v763 = vpop.f32.mrf.mxu0
  %v764 = vadd.f32 %v315, %v763
  %v765 = vpop.f32.mrf.mxu0
  %v766 = vadd.f32 %v319, %v765
  %767 = vmatprep.mubr.f32.mxu0 %v27
  %768 = vmatmul.mubr.f32.gmra.mxu0 %v26
  %v769 = vpop.f32.mrf.mxu0
  %v770 = vadd.f32 %v315, %v769
  %v771 = vpop.f32.mrf.mxu0
  %v772 = vadd.f32 %v319, %v771
  %773 = vmatprep.mubr.f32.mxu0 %v29
  %774 = vmatmul.mubr.f32.gmra.mxu0 %v28
  %v775 = vpop.f32.mrf.mxu0
  %v776 = vadd.f32 %v315, %v775
  %v777 = vpop.f32.mrf.mxu0
  %v778 = vadd.f32 %v319, %v777
  %779 = vdwg.mxu0
  %780 = vst [vmem:[%s3] sm:$0xff] %v395
  %781 = vst [vmem:[%s3 + $0x8] sm:$0xff] %v397
  %782 = vst [vmem:[%s3 + $0x10] sm:$0xff] %v508
  %783 = vst [vmem:[%s3 + $0x18] sm:$0xff] %v510
  %784 = vst [vmem:[%s3 + $0x20] sm:$0xff] %v621
  %785 = vst [vmem:[%s3 + $0x28] sm:$0xff] %v623
  %786 = vst [vmem:[%s3 + $0x30] sm:$0xff] %v734
  %787 = vst [vmem:[%s3 + $0x38] sm:$0xff] %v736
  %788 = vst [vmem:[%s3 + $0x40] sm:$0xff] %v401
  %789 = vst [vmem:[%s3 + $0x48] sm:$0xff] %v403
  %790 = vst [vmem:[%s3 + $0x50] sm:$0xff] %v514
  %791 = vst [vmem:[%s3 + $0x58] sm:$0xff] %v516
  %792 = vst [vmem:[%s3 + $0x60] sm:$0xff] %v627
  %793 = vst [vmem:[%s3 + $0x68] sm:$0xff] %v629
  %794 = vst [vmem:[%s3 + $0x70] sm:$0xff] %v740
  %795 = vst [vmem:[%s3 + $0x78] sm:$0xff] %v742
  %796 = vst [vmem:[%s3 + $0x80] sm:$0xff] %v407
  %797 = vst [vmem:[%s3 + $0x88] sm:$0xff] %v409
  %798 = vst [vmem:[%s3 + $0x90] sm:$0xff] %v520
  %799 = vst [vmem:[%s3 + $0x98] sm:$0xff] %v522
  %800 = vst [vmem:[%s3 + $0xa0] sm:$0xff] %v633
  %801 = vst [vmem:[%s3 + $0xa8] sm:$0xff] %v635
  %802 = vst [vmem:[%s3 + $0xb0] sm:$0xff] %v746
  %803 = vst [vmem:[%s3 + $0xb8] sm:$0xff] %v748
  %804 = vst [vmem:[%s3 + $0xc0] sm:$0xff] %v413
  %805 = vst [vmem:[%s3 + $0xc8] sm:$0xff] %v415
  %806 = vst [vmem:[%s3 + $0xd0] sm:$0xff] %v526
  %807 = vst [vmem:[%s3 + $0xd8] sm:$0xff] %v528
  %808 = vst [vmem:[%s3 + $0xe0] sm:$0xff] %v639
  %809 = vst [vmem:[%s3 + $0xe8] sm:$0xff] %v641
  %810 = vst [vmem:[%s3 + $0xf0] sm:$0xff] %v752
  %811 = vst [vmem:[%s3 + $0xf8] sm:$0xff] %v754
  %812 = vst [vmem:[%s3 + $0x100] sm:$0xff] %v419
  %813 = vst [vmem:[%s3 + $0x108] sm:$0xff] %v421
  %814 = vst [vmem:[%s3 + $0x110] sm:$0xff] %v532
  %815 = vst [vmem:[%s3 + $0x118] sm:$0xff] %v534
  %816 = vst [vmem:[%s3 + $0x120] sm:$0xff] %v645
  %817 = vst [vmem:[%s3 + $0x128] sm:$0xff] %v647
  %818 = vst [vmem:[%s3 + $0x130] sm:$0xff] %v758
  %819 = vst [vmem:[%s3 + $0x138] sm:$0xff] %v760
  %820 = vst [vmem:[%s3 + $0x140] sm:$0xff] %v425
  %821 = vst [vmem:[%s3 + $0x148] sm:$0xff] %v427
  %822 = vst [vmem:[%s3 + $0x150] sm:$0xff] %v538
  %823 = vst [vmem:[%s3 + $0x158] sm:$0xff] %v540
  %824 = vst [vmem:[%s3 + $0x160] sm:$0xff] %v651
  %825 = vst [vmem:[%s3 + $0x168] sm:$0xff] %v653
  %826 = vst [vmem:[%s3 + $0x170] sm:$0xff] %v764
  %827 = vst [vmem:[%s3 + $0x178] sm:$0xff] %v766
  %828 = vst [vmem:[%s3 + $0x180] sm:$0xff] %v431
  %829 = vst [vmem:[%s3 + $0x188] sm:$0xff] %v433
  %830 = vst [vmem:[%s3 + $0x190] sm:$0xff] %v544
  %831 = vst [vmem:[%s3 + $0x198] sm:$0xff] %v546
  %832 = vst [vmem:[%s3 + $0x1a0] sm:$0xff] %v657
  %833 = vst [vmem:[%s3 + $0x1a8] sm:$0xff] %v659
  %834 = vst [vmem:[%s3 + $0x1b0] sm:$0xff] %v770
  %835 = vst [vmem:[%s3 + $0x1b8] sm:$0xff] %v772
  %836 = vst [vmem:[%s3 + $0x1c0] sm:$0xff] %v437
  %837 = vst [vmem:[%s3 + $0x1c8] sm:$0xff] %v439
  %838 = vst [vmem:[%s3 + $0x1d0] sm:$0xff] %v550
  %839 = vst [vmem:[%s3 + $0x1d8] sm:$0xff] %v552
  %840 = vst [vmem:[%s3 + $0x1e0] sm:$0xff] %v663
  %841 = vst [vmem:[%s3 + $0x1e8] sm:$0xff] %v665
  %842 = vst [vmem:[%s3 + $0x1f0] sm:$0xff] %v776
  %843 = vst [vmem:[%s3 + $0x1f8] sm:$0xff] %v778
  // Predicated region
  $region14: #{bilstmcrf_forward.7} parent=0 // pred_check
    _
  $region15: #{bilstmcrf_forward.7} parent=0 // pred_check_branch
    %845 = sbr.rel (0) target = $region17
  $region16: #{bilstmcrf_forward.7} parent=0 // pred_region
    _
  $region17: #{bilstmcrf_forward.7} parent=0 // pred_fallthru
    _
  // Predicated region
  $region18: #{bilstmcrf_forward.7} parent=0 // pred_check
    _
  $region19: #{bilstmcrf_forward.7} parent=0 // pred_check_branch
    %847 = sbr.rel (0) target = $region21
  $region20: #{bilstmcrf_forward.7} parent=0 // pred_region
    _
  $region21: #{bilstmcrf_forward.7} parent=0 // pred_fallthru
    _

// kernel: bilstmcrf_forward.9
$region0: #{bilstmcrf_forward.9}
  #allocation0 [shape = 'u32[]', space=smem, size = 0x4, offset = 0x4, fixed_abs, tag = 'smem constant byte address 0x4 - core index']
  #allocation1 [shape = 'u32[144,128]{1,0:T(1,128)}', space=vmem, size = 0x12000, scoped, tag = 'internal scratch']
  %s0 = inlined_call_operand.vmem [shape: f32[64,256], index: 0, kind: input, shape index: {}]
  %s1 = inlined_call_operand.vmem [shape: f32[256,128], index: 1, kind: input, shape index: {}]
  %s2 = inlined_call_operand.vmem [shape: f32[1,128], index: 2, kind: input, shape index: {}]
  %s3 = inlined_call_operand.vmem [shape: f32[64,128], index: 3, kind: output, shape index: {}]
  %s4 = sld [smem:[#allocation0]]
  $region22: #{bilstmcrf_forward.9} parent=0
    _
  %s6 = ssub.s32 1, %s4
  %s7 = scalar_select 0, %s6, %s4
  // Predicated region
  $region2: #{bilstmcrf_forward.9} parent=0 // pred_check
    _
  $region3: #{bilstmcrf_forward.9} parent=0 // pred_check_branch
    %9 = sbr.rel (0) target = $region5
  $region4: #{bilstmcrf_forward.9} parent=0 // pred_region
    _
  $region5: #{bilstmcrf_forward.9} parent=0 // pred_fallthru
    _
  // Predicated region
  $region6: #{bilstmcrf_forward.9} parent=0 // pred_check
    _
  $region7: #{bilstmcrf_forward.9} parent=0 // pred_check_branch
    %11 = sbr.rel (0) target = $region9
  $region8: #{bilstmcrf_forward.9} parent=0 // pred_region
    _
  $region9: #{bilstmcrf_forward.9} parent=0 // pred_fallthru
    _
  // Predicated region
  $region10: #{bilstmcrf_forward.9} parent=0 // pred_check
    _
  $region11: #{bilstmcrf_forward.9} parent=0 // pred_check_branch
    %13 = sbr.rel (0) target = $region13
  $region12: #{bilstmcrf_forward.9} parent=0 // pred_region
    _
  $region13: #{bilstmcrf_forward.9} parent=0 // pred_fallthru
    _
  %v14 = vld [vmem:[%s0] sm:$0xff]
  %v15 = vld [vmem:[%s0 + $0x8] sm:$0xff]
  %v16 = vld [vmem:[%s0 + $0x10] sm:$0xff]
  %v17 = vld [vmem:[%s0 + $0x18] sm:$0xff]
  %v18 = vld [vmem:[%s0 + $0x20] sm:$0xff]
  %v19 = vld [vmem:[%s0 + $0x28] sm:$0xff]
  %v20 = vld [vmem:[%s0 + $0x30] sm:$0xff]
  %v21 = vld [vmem:[%s0 + $0x38] sm:$0xff]
  %v22 = vld [vmem:[%s0 + $0x40] sm:$0xff]
  %v23 = vld [vmem:[%s0 + $0x48] sm:$0xff]
  %v24 = vld [vmem:[%s0 + $0x50] sm:$0xff]
  %v25 = vld [vmem:[%s0 + $0x58] sm:$0xff]
  %v26 = vld [vmem:[%s0 + $0x60] sm:$0xff]
  %v27 = vld [vmem:[%s0 + $0x68] sm:$0xff]
  %v28 = vld [vmem:[%s0 + $0x70] sm:$0xff]
  %v29 = vld [vmem:[%s0 + $0x78] sm:$0xff]
  %v30 = vld [vmem:[%s1] sm:$0xff]
  %v31 = vld [vmem:[%s1 + $0x8] sm:$0xff]
  %v32 = vld [vmem:[%s1 + $0x10] sm:$0xff]
  %v33 = vld [vmem:[%s1 + $0x18] sm:$0xff]
  %v34 = vld [vmem:[%s1 + $0x20] sm:$0xff]
  %v35 = vld [vmem:[%s1 + $0x28] sm:$0xff]
  %v36 = vld [vmem:[%s1 + $0x30] sm:$0xff]
  %v37 = vld [vmem:[%s1 + $0x38] sm:$0xff]
  %v38 = vld [vmem:[%s1 + $0x40] sm:$0xff]
  %v39 = vld [vmem:[%s1 + $0x48] sm:$0xff]
  %v40 = vld [vmem:[%s1 + $0x50] sm:$0xff]
  %v41 = vld [vmem:[%s1 + $0x58] sm:$0xff]
  %v42 = vld [vmem:[%s1 + $0x60] sm:$0xff]
  %v43 = vld [vmem:[%s1 + $0x68] sm:$0xff]
  %v44 = vld [vmem:[%s1 + $0x70] sm:$0xff]
  %v45 = vld [vmem:[%s1 + $0x78] sm:$0xff]
  %v46 = vld [vmem:[%s1 + $0x80] sm:$0xff]
  %v47 = vld [vmem:[%s1 + $0x88] sm:$0xff]
  %v48 = vld [vmem:[%s1 + $0x90] sm:$0xff]
  %v49 = vld [vmem:[%s1 + $0x98] sm:$0xff]
  %v50 = vld [vmem:[%s1 + $0xa0] sm:$0xff]
  %v51 = vld [vmem:[%s1 + $0xa8] sm:$0xff]
  %v52 = vld [vmem:[%s1 + $0xb0] sm:$0xff]
  %v53 = vld [vmem:[%s1 + $0xb8] sm:$0xff]
  %v54 = vld [vmem:[%s1 + $0xc0] sm:$0xff]
  %v55 = vld [vmem:[%s1 + $0xc8] sm:$0xff]
  %v56 = vld [vmem:[%s1 + $0xd0] sm:$0xff]
  %v57 = vld [vmem:[%s1 + $0xd8] sm:$0xff]
  %v58 = vld [vmem:[%s1 + $0xe0] sm:$0xff]
  %v59 = vld [vmem:[%s1 + $0xe8] sm:$0xff]
  %v60 = vld [vmem:[%s1 + $0xf0] sm:$0xff]
  %v61 = vld [vmem:[%s1 + $0xf8] sm:$0xff]
  %v62 = vld [vmem:[%s2] sm:$0x1]
  %v64 = vlaneseq
  %v65 = vshrl.u32 %v64, 7
  %v66 = vsub.s32 0, %v65
  %v67 = vrot.slane %v62, %v66
  %69 = vmatprep.subr.mxu0 0.0
  %70 = vmatpush1.msra.mxu0 %v45
  %71 = vmatprep.subr.mxu0 0.0
  %72 = vmatpush1.msra.mxu0 %v44
  %73 = vmatprep.subr.mxu0 0.0
  %74 = vmatpush1.msra.mxu0 %v43
  %75 = vmatprep.subr.mxu0 0.0
  %76 = vmatpush1.msra.mxu0 %v42
  %77 = vmatprep.subr.mxu0 0.0
  %78 = vmatpush1.msra.mxu0 %v41
  %79 = vmatprep.subr.mxu0 0.0
  %80 = vmatpush1.msra.mxu0 %v40
  %81 = vmatprep.subr.mxu0 0.0
  %82 = vmatpush1.msra.mxu0 %v39
  %83 = vmatprep.subr.mxu0 0.0
  %84 = vmatpush1.msra.mxu0 %v38
  %85 = vmatprep.subr.mxu0 0.0
  %86 = vmatpush1.msra.mxu0 %v37
  %87 = vmatprep.subr.mxu0 0.0
  %88 = vmatpush1.msra.mxu0 %v36
  %89 = vmatprep.subr.mxu0 0.0
  %90 = vmatpush1.msra.mxu0 %v35
  %91 = vmatprep.subr.mxu0 0.0
  %92 = vmatpush1.msra.mxu0 %v34
  %93 = vmatprep.subr.mxu0 0.0
  %94 = vmatpush1.msra.mxu0 %v33
  %95 = vmatprep.subr.mxu0 0.0
  %96 = vmatpush1.msra.mxu0 %v32
  %97 = vmatprep.subr.mxu0 0.0
  %98 = vmatpush1.msra.mxu0 %v31
  %99 = vmatprep.subr.mxu0 0.0
  %100 = vmatpush1.msra.mxu0 %v30
  %101 = vmatprep.subr.mxu0 0.0
  %102 = vmatpush2.msra.mxu0 %v61
  %103 = vmatprep.subr.mxu0 0.0
  %104 = vmatpush2.msra.mxu0 %v60
  %105 = vmatprep.subr.mxu0 0.0
  %106 = vmatpush2.msra.mxu0 %v59
  %107 = vmatprep.subr.mxu0 0.0
  %108 = vmatpush2.msra.mxu0 %v58
  %109 = vmatprep.subr.mxu0 0.0
  %110 = vmatpush2.msra.mxu0 %v57
  %111 = vmatprep.subr.mxu0 0.0
  %112 = vmatpush2.msra.mxu0 %v56
  %113 = vmatprep.subr.mxu0 0.0
  %114 = vmatpush2.msra.mxu0 %v55
  %115 = vmatprep.subr.mxu0 0.0
  %116 = vmatpush2.msra.mxu0 %v54
  %117 = vmatprep.subr.mxu0 0.0
  %118 = vmatpush2.msra.mxu0 %v53
  %119 = vmatprep.subr.mxu0 0.0
  %120 = vmatpush2.msra.mxu0 %v52
  %121 = vmatprep.subr.mxu0 0.0
  %122 = vmatpush2.msra.mxu0 %v51
  %123 = vmatprep.subr.mxu0 0.0
  %124 = vmatpush2.msra.mxu0 %v50
  %125 = vmatprep.subr.mxu0 0.0
  %126 = vmatpush2.msra.mxu0 %v49
  %127 = vmatprep.subr.mxu0 0.0
  %128 = vmatpush2.msra.mxu0 %v48
  %129 = vmatprep.subr.mxu0 0.0
  %130 = vmatpush2.msra.mxu0 %v47
  %131 = vmatprep.subr.mxu0 0.0
  %132 = vmatpush2.msra.mxu0 %v46
  %133 = vmatprep.mubr.f32.mxu0 %v15
  %134 = vmatmul.mubr.f32.gmra.mxu0 %v14
  %v135 = vpop.f32.mrf.mxu0
  %v136 = vadd.f32 %v67, %v135
  %v137 = vpop.f32.mrf.mxu0
  %138 = vmatprep.mubr.f32.mxu0 %v17
  %139 = vmatmul.mubr.f32.gmra.mxu0 %v16
  %v140 = vpop.f32.mrf.mxu0
  %v141 = vadd.f32 %v67, %v140
  %v142 = vpop.f32.mrf.mxu0
  %143 = vmatprep.mubr.f32.mxu0 %v19
  %144 = vmatmul.mubr.f32.gmra.mxu0 %v18
  %v145 = vpop.f32.mrf.mxu0
  %v146 = vadd.f32 %v67, %v145
  %v147 = vpop.f32.mrf.mxu0
  %148 = vmatprep.mubr.f32.mxu0 %v21
  %149 = vmatmul.mubr.f32.gmra.mxu0 %v20
  %v150 = vpop.f32.mrf.mxu0
  %v151 = vadd.f32 %v67, %v150
  %v152 = vpop.f32.mrf.mxu0
  %153 = vmatprep.mubr.f32.mxu0 %v23
  %154 = vmatmul.mubr.f32.gmra.mxu0 %v22
  %v155 = vpop.f32.mrf.mxu0
  %v156 = vadd.f32 %v67, %v155
  %v157 = vpop.f32.mrf.mxu0
  %158 = vmatprep.mubr.f32.mxu0 %v25
  %159 = vmatmul.mubr.f32.gmra.mxu0 %v24
  %v160 = vpop.f32.mrf.mxu0
  %v161 = vadd.f32 %v67, %v160
  %v162 = vpop.f32.mrf.mxu0
  %163 = vmatprep.mubr.f32.mxu0 %v27
  %164 = vmatmul.mubr.f32.gmra.mxu0 %v26
  %v165 = vpop.f32.mrf.mxu0
  %v166 = vadd.f32 %v67, %v165
  %v167 = vpop.f32.mrf.mxu0
  %168 = vmatprep.mubr.f32.mxu0 %v29
  %169 = vmatmul.mubr.f32.gmra.mxu0 %v28
  %v170 = vpop.f32.mrf.mxu0
  %v171 = vadd.f32 %v67, %v170
  %v172 = vpop.f32.mrf.mxu0
  %173 = vdwg.mxu0
  %174 = vst [vmem:[%s3] sm:$0xff] %v136
  %175 = vst [vmem:[%s3 + $0x8] sm:$0xff] %v141
  %176 = vst [vmem:[%s3 + $0x10] sm:$0xff] %v146
  %177 = vst [vmem:[%s3 + $0x18] sm:$0xff] %v151
  %178 = vst [vmem:[%s3 + $0x20] sm:$0xff] %v156
  %179 = vst [vmem:[%s3 + $0x28] sm:$0xff] %v161
  %180 = vst [vmem:[%s3 + $0x30] sm:$0xff] %v166
  %181 = vst [vmem:[%s3 + $0x38] sm:$0xff] %v171
  // Predicated region
  $region14: #{bilstmcrf_forward.9} parent=0 // pred_check
    _
  $region15: #{bilstmcrf_forward.9} parent=0 // pred_check_branch
    %183 = sbr.rel (0) target = $region17
  $region16: #{bilstmcrf_forward.9} parent=0 // pred_region
    _
  $region17: #{bilstmcrf_forward.9} parent=0 // pred_fallthru
    _
  // Predicated region
  $region18: #{bilstmcrf_forward.9} parent=0 // pred_check
    _
  $region19: #{bilstmcrf_forward.9} parent=0 // pred_check_branch
    %185 = sbr.rel (0) target = $region21
  $region20: #{bilstmcrf_forward.9} parent=0 // pred_region
    _
  $region21: #{bilstmcrf_forward.9} parent=0 // pred_fallthru
    _

// kernel: bilstmcrf_forward.6
$region0: #{bilstmcrf_forward.6}
  #allocation0 [shape = 'u32[]', space=smem, size = 0x4, offset = 0x4, fixed_abs, tag = 'smem constant byte address 0x4 - core index']
  #allocation1 [shape = 'u32[144,128]{1,0:T(1,128)}', space=vmem, size = 0x12000, scoped, tag = 'internal scratch']
  #allocation2 [shape = 'f32[8,128]{1,0:T(8,128)}', space=vmem, size = 0x1000, scoped, tag = 'scratch operand']
  #allocation3 [shape = 'f32[8,128]{1,0:T(8,128)}', space=vmem, size = 0x1000, scoped, tag = 'scratch operand']
  %s0 = inlined_call_operand.vmem [shape: f32[8,8,1024], index: 0, kind: input, shape index: {}]
  %s1 = inlined_call_operand.hbm [shape: f32[2,128,512], index: 1, kind: input, shape index: {}]
  %s2 = inlined_call_operand.vmem [shape: f32[8,8,256], index: 2, kind: output, shape index: {}]
  %s3 = sld [smem:[#allocation0]]
  $region102: #{bilstmcrf_forward.6} parent=0
    _
  %s5 = ssub.s32 1, %s3
  %s6 = scalar_select 0, %s5, %s3
  $region1: #{bilstmcrf_forward.6} parent=0
    #allocation4 [shape = 'u8[262144]{0}', space=vmem, size = 0x40000, scoped, tag = 'input window, operand 0']
    #allocation5 [shape = 'u8[524288]{0}', space=vmem, size = 0x80000, scoped, tag = 'input window, operand 1']
    #allocation6 [shape = 's32[2]{0}', space=sflag, size = 0x8, scoped, tag = 'scoped memory for bilstmcrf_forward.6']
    #allocation7 [shape = 'u8[65536]{0}', space=vmem, size = 0x10000, scoped, tag = 'output window, operand 0']
    %7 = vsyncpa [#allocation6], 0
    %s8 = scalar_lea.sflag [#allocation6], 1
    %9 = vsyncpa %s8, 0
    loop: start=0, step=1, limit=4
    $region2: #{bilstmcrf_forward.6} parent=1 // loop_pre_header
      _
    $region3: #{bilstmcrf_forward.6} parent=1 // loop_header
      %s11 = sphi 0, %s15
      %p12 = scmp.ge.s32.totalorder %s11, 4
      %s21 = sphi 0, %s23
      %s24 = sphi 0, %s21
      %s25 = sphi 0, %s24
      %s41 = sphi 0, %s25
      %s47 = sphi 0, %s49
      %s50 = sphi 0, %s47
      %s51 = sphi 0, %s50
      %s67 = sphi 0, %s51
      %s73 = sphi 0, %s75
      %s76 = sphi 0, %s73
      %s77 = sphi 0, %s76
      %s93 = sphi 0, %s77
    $region4: #{bilstmcrf_forward.6} parent=1 // loop_header_branch
      %14 = sbr.rel (%p12) target = $region8
    $region5: #{bilstmcrf_forward.6} parent=1 // loop_body
      %s16 = ssub.s32 %s11, 1
      %s17 = ssub.s32 %s11, 2
      %s18 = sadd.s32 %s11, 1
      %s19 = ssub.s32 %s11, %s18
      %p20 = scmp.eq.s32.totalorder %s19, 0
      %s22 = sadd.s32 %s21, 1
      %s23 = scalar_select %p20, %s21, %s22
      %p26 = pneg %p20
      %p27 = scmp.eq.s32.totalorder %s11, 1
      %p28 = por %p26, %p27
      %p29 = scmp.ne.s32.totalorder %s21, %s24
      %p30 = scmp.eq.s32.totalorder %s11, 0
      %p31 = por %p29, %p30
      %p32 = scmp.ne.s32.totalorder %s21, %s24
      %p33 = scmp.eq.s32.totalorder %s16, 1
      %p34 = por %p32, %p33
      %p35 = scmp.ne.s32.totalorder %s24, %s25
      %p36 = scmp.eq.s32.totalorder %s16, 0
      %p37 = por %p35, %p36
      %p38 = scmp.ne.s32.totalorder %s24, %s25
      %p39 = scmp.eq.s32.totalorder %s17, 1
      %p40 = por %p38, %p39
      %p42 = scmp.ne.s32.totalorder %s25, %s41
      %p43 = scmp.eq.s32.totalorder %s17, 0
      %p44 = por %p42, %p43
      %s45 = ssub.s32 %s11, %s18
      %p46 = scmp.eq.s32.totalorder %s45, 0
      %s48 = sadd.s32 %s47, 1
      %s49 = scalar_select %p46, %s47, %s48
      %p52 = pneg %p46
      %p53 = scmp.eq.s32.totalorder %s11, 1
      %p54 = por %p52, %p53
      %p55 = scmp.ne.s32.totalorder %s47, %s50
      %p56 = scmp.eq.s32.totalorder %s11, 0
      %p57 = por %p55, %p56
      %p58 = scmp.ne.s32.totalorder %s47, %s50
      %p59 = scmp.eq.s32.totalorder %s16, 1
      %p60 = por %p58, %p59
      %p61 = scmp.ne.s32.totalorder %s50, %s51
      %p62 = scmp.eq.s32.totalorder %s16, 0
      %p63 = por %p61, %p62
      %p64 = scmp.ne.s32.totalorder %s50, %s51
      %p65 = scmp.eq.s32.totalorder %s17, 1
      %p66 = por %p64, %p65
      %p68 = scmp.ne.s32.totalorder %s51, %s67
      %p69 = scmp.eq.s32.totalorder %s17, 0
      %p70 = por %p68, %p69
      %s71 = ssub.s32 %s11, %s18
      %p72 = scmp.eq.s32.totalorder %s71, 0
      %s74 = sadd.s32 %s73, 1
      %s75 = scalar_select %p72, %s73, %s74
      %p78 = pneg %p72
      %p79 = scmp.eq.s32.totalorder %s11, 1
      %p80 = por %p78, %p79
      %p81 = scmp.ne.s32.totalorder %s73, %s76
      %p82 = scmp.eq.s32.totalorder %s11, 0
      %p83 = por %p81, %p82
      %p84 = scmp.ne.s32.totalorder %s73, %s76
      %p85 = scmp.eq.s32.totalorder %s16, 1
      %p86 = por %p84, %p85
      %p87 = scmp.ne.s32.totalorder %s76, %s77
      %p88 = scmp.eq.s32.totalorder %s16, 0
      %p89 = por %p87, %p88
      %p90 = scmp.ne.s32.totalorder %s76, %s77
      %p91 = scmp.eq.s32.totalorder %s17, 1
      %p92 = por %p90, %p91
      %p94 = scmp.ne.s32.totalorder %s77, %s93
      %p95 = scmp.eq.s32.totalorder %s17, 0
      %p96 = por %p94, %p95
      %p97 = scmp.le.s32.totalorder 1, %s11
      %p98 = scmp.lt.s32.totalorder %s11, 3
      %p99 = pnand %p97, %p98
      %p100 = pneg %p99
      // Predicated region
      $region9: #{bilstmcrf_forward.6} parent=5 // pred_check
        _
      $region10: #{bilstmcrf_forward.6} parent=5 // pred_check_branch
        %102 = sbr.rel (%p99) target = $region12
      $region11: #{bilstmcrf_forward.6} parent=5 // pred_region
        %s103 = ssub.s32 %s11, 1
      $region12: #{bilstmcrf_forward.6} parent=5 // pred_fallthru
        _
      %p104 = scmp.lt.s32.totalorder %s11, 2
      // Predicated region
      $region13: #{bilstmcrf_forward.6} parent=5 // pred_check
        %p105 = pneg %p104
      $region14: #{bilstmcrf_forward.6} parent=5 // pred_check_branch
        %107 = sbr.rel (%p105) target = $region16
      $region15: #{bilstmcrf_forward.6} parent=5 // pred_region
        // Predicated region
        $region17: #{bilstmcrf_forward.6} parent=15 // pred_check
          %p108 = pneg %p31
        $region18: #{bilstmcrf_forward.6} parent=15 // pred_check_branch
          %110 = sbr.rel (%p108) target = $region20
        $region19: #{bilstmcrf_forward.6} parent=15 // pred_region
          %s111 = sand.u32 %s21, 1
          %s112 = sand.u32 %s21, 1
          %s113 = smul.addr %s112, 256
          %s114 = scalar_lea.vmem [#allocation4], %s113
          %s115 = smul.u32 4, %s11
          %s116 = smul.addr %s115, 8
          %s117 = scalar_lea.vmem %s0, %s116
          // Predicated region
          $region21: #{bilstmcrf_forward.6} parent=19 // pred_check
            _
          $region22: #{bilstmcrf_forward.6} parent=19 // pred_check_branch
            %119 = sbr.rel (0) target = $region24
          $region23: #{bilstmcrf_forward.6} parent=19 // pred_region
            // Predicated region
            $region25: #{bilstmcrf_forward.6} parent=23 // pred_check
              _
            $region26: #{bilstmcrf_forward.6} parent=23 // pred_check_branch
              %121 = sbr.rel (0) target = $region28
            $region27: #{bilstmcrf_forward.6} parent=23 // pred_region
              loop: start=0, step=1, limit=1
              $region29: #{bilstmcrf_forward.6} parent=27 // loop_pre_header
                _
              $region30: #{bilstmcrf_forward.6} parent=27 // loop_header
                %s123 = sphi 0, %s127
                %p124 = scmp.ge.s32.totalorder %s123, 1
                %s128 = sphi %s117, %s117
                %s129 = sphi %s114, %s114
              $region31: #{bilstmcrf_forward.6} parent=27 // loop_header_branch
                %126 = sbr.rel (%p124) target = $region35
              $region32: #{bilstmcrf_forward.6} parent=27 // loop_body
                %v130 = vld [vmem:[%s128] sm:$0xff]
                %131 = vst [vmem:[%s129] sm:$0xff] %v130
                %v132 = vld [vmem:[%s128 + $0x8] sm:$0xff]
                %133 = vst [vmem:[%s129 + $0x8] sm:$0xff] %v132
                %v134 = vld [vmem:[%s128 + $0x10] sm:$0xff]
                %135 = vst [vmem:[%s129 + $0x10] sm:$0xff] %v134
                %v136 = vld [vmem:[%s128 + $0x18] sm:$0xff]
                %137 = vst [vmem:[%s129 + $0x18] sm:$0xff] %v136
                %v138 = vld [vmem:[%s128 + $0x40] sm:$0xff]
                %139 = vst [vmem:[%s129 + $0x20] sm:$0xff] %v138
                %v140 = vld [vmem:[%s128 + $0x48] sm:$0xff]
                %141 = vst [vmem:[%s129 + $0x28] sm:$0xff] %v140
                %v142 = vld [vmem:[%s128 + $0x50] sm:$0xff]
                %143 = vst [vmem:[%s129 + $0x30] sm:$0xff] %v142
                %v144 = vld [vmem:[%s128 + $0x58] sm:$0xff]
                %145 = vst [vmem:[%s129 + $0x38] sm:$0xff] %v144
                %v146 = vld [vmem:[%s128 + $0x80] sm:$0xff]
                %147 = vst [vmem:[%s129 + $0x40] sm:$0xff] %v146
                %v148 = vld [vmem:[%s128 + $0x88] sm:$0xff]
                %149 = vst [vmem:[%s129 + $0x48] sm:$0xff] %v148
                %v150 = vld [vmem:[%s128 + $0x90] sm:$0xff]
                %151 = vst [vmem:[%s129 + $0x50] sm:$0xff] %v150
                %v152 = vld [vmem:[%s128 + $0x98] sm:$0xff]
                %153 = vst [vmem:[%s129 + $0x58] sm:$0xff] %v152
                %v154 = vld [vmem:[%s128 + $0xc0] sm:$0xff]
                %155 = vst [vmem:[%s129 + $0x60] sm:$0xff] %v154
                %v156 = vld [vmem:[%s128 + $0xc8] sm:$0xff]
                %157 = vst [vmem:[%s129 + $0x68] sm:$0xff] %v156
                %v158 = vld [vmem:[%s128 + $0xd0] sm:$0xff]
                %159 = vst [vmem:[%s129 + $0x70] sm:$0xff] %v158
                %v160 = vld [vmem:[%s128 + $0xd8] sm:$0xff]
                %161 = vst [vmem:[%s129 + $0x78] sm:$0xff] %v160
                %v162 = vld [vmem:[%s128 + $0x100] sm:$0xff]
                %163 = vst [vmem:[%s129 + $0x80] sm:$0xff] %v162
                %v164 = vld [vmem:[%s128 + $0x108] sm:$0xff]
                %165 = vst [vmem:[%s129 + $0x88] sm:$0xff] %v164
                %v166 = vld [vmem:[%s128 + $0x110] sm:$0xff]
                %167 = vst [vmem:[%s129 + $0x90] sm:$0xff] %v166
                %v168 = vld [vmem:[%s128 + $0x118] sm:$0xff]
                %169 = vst [vmem:[%s129 + $0x98] sm:$0xff] %v168
                %v170 = vld [vmem:[%s128 + $0x140] sm:$0xff]
                %171 = vst [vmem:[%s129 + $0xa0] sm:$0xff] %v170
                %v172 = vld [vmem:[%s128 + $0x148] sm:$0xff]
                %173 = vst [vmem:[%s129 + $0xa8] sm:$0xff] %v172
                %v174 = vld [vmem:[%s128 + $0x150] sm:$0xff]
                %175 = vst [vmem:[%s129 + $0xb0] sm:$0xff] %v174
                %v176 = vld [vmem:[%s128 + $0x158] sm:$0xff]
                %177 = vst [vmem:[%s129 + $0xb8] sm:$0xff] %v176
                %v178 = vld [vmem:[%s128 + $0x180] sm:$0xff]
                %179 = vst [vmem:[%s129 + $0xc0] sm:$0xff] %v178
                %v180 = vld [vmem:[%s128 + $0x188] sm:$0xff]
                %181 = vst [vmem:[%s129 + $0xc8] sm:$0xff] %v180
                %v182 = vld [vmem:[%s128 + $0x190] sm:$0xff]
                %183 = vst [vmem:[%s129 + $0xd0] sm:$0xff] %v182
                %v184 = vld [vmem:[%s128 + $0x198] sm:$0xff]
                %185 = vst [vmem:[%s129 + $0xd8] sm:$0xff] %v184
                %v186 = vld [vmem:[%s128 + $0x1c0] sm:$0xff]
                %187 = vst [vmem:[%s129 + $0xe0] sm:$0xff] %v186
                %v188 = vld [vmem:[%s128 + $0x1c8] sm:$0xff]
                %189 = vst [vmem:[%s129 + $0xe8] sm:$0xff] %v188
                %v190 = vld [vmem:[%s128 + $0x1d0] sm:$0xff]
                %191 = vst [vmem:[%s129 + $0xf0] sm:$0xff] %v190
                %v192 = vld [vmem:[%s128 + $0x1d8] sm:$0xff]
                %193 = vst [vmem:[%s129 + $0xf8] sm:$0xff] %v192
              $region33: #{bilstmcrf_forward.6} parent=27 // loop_footer
                %s127 = sadd.s32 1, %s123
              $region34: #{bilstmcrf_forward.6} parent=27 // loop_footer_branch
                %122 = sbr.rel target = $region30
              $region35: #{bilstmcrf_forward.6} parent=27 // loop_exit
                _
            $region28: #{bilstmcrf_forward.6} parent=23 // pred_fallthru
              _
            // Predicated region
            $region36: #{bilstmcrf_forward.6} parent=23 // pred_check
              _
            $region37: #{bilstmcrf_forward.6} parent=23 // pred_check_branch
              %195 = sbr.rel target = $region39
            $region38: #{bilstmcrf_forward.6} parent=23 // pred_region
              _
            $region39: #{bilstmcrf_forward.6} parent=23 // pred_fallthru
              _
          $region24: #{bilstmcrf_forward.6} parent=19 // pred_fallthru
            _
          %196 = vnop
        $region20: #{bilstmcrf_forward.6} parent=15 // pred_fallthru
          _
        // Predicated region
        $region40: #{bilstmcrf_forward.6} parent=15 // pred_check
          %p197 = pneg %p57
        $region41: #{bilstmcrf_forward.6} parent=15 // pred_check_branch
          %199 = sbr.rel (%p197) target = $region43
        $region42: #{bilstmcrf_forward.6} parent=15 // pred_region
          %s200 = sand.u32 %s47, 1
          %s201 = scalar_lea.sflag [#allocation6], %s200
          %s202 = sand.u32 %s47, 1
          %s203 = smul.addr %s202, 512
          %s204 = scalar_lea.vmem [#allocation5], %s203
          %s206 = ssub.s32 8192, 8192
          %207 = vsyncadd %s201, %s206
          %s208 = smul.addr %s11, 64
          %s209 = smul.addr %s208, 128
          %s210 = scalar_lea.hbm %s1, %s209
          %s211 = sshll.u32 %s204, 4
          %s212 = int_to_ptr.vmem [resolvable:$true] %s211
          %217 = dma.hbm_to_vmem [thread:$0]  %s210, 8192, %s212, %s201, 512, 512, 32
        $region43: #{bilstmcrf_forward.6} parent=15 // pred_fallthru
          _
      $region16: #{bilstmcrf_forward.6} parent=5 // pred_fallthru
        _
      %p218 = scmp.le.s32.totalorder 1, %s11
      %p219 = scmp.lt.s32.totalorder %s11, 3
      %p220 = pnand %p218, %p219
      %p221 = pneg %p220
      // Predicated region
      $region44: #{bilstmcrf_forward.6} parent=5 // pred_check
        _
      $region45: #{bilstmcrf_forward.6} parent=5 // pred_check_branch
        %223 = sbr.rel (%p220) target = $region47
      $region46: #{bilstmcrf_forward.6} parent=5 // pred_region
        %s224 = ssub.s32 %s11, 1
        %s225 = sand.u32 %s24, 1
        %s226 = sand.u32 %s24, 1
        %s227 = smul.addr %s226, 256
        %s228 = scalar_lea.vmem [#allocation4], %s227
        // Predicated region
        $region48: #{bilstmcrf_forward.6} parent=46 // pred_check
          %p229 = pneg %p37
        $region49: #{bilstmcrf_forward.6} parent=46 // pred_check_branch
          %231 = sbr.rel (%p229) target = $region51
        $region50: #{bilstmcrf_forward.6} parent=46 // pred_region
          _
        $region51: #{bilstmcrf_forward.6} parent=46 // pred_fallthru
          _
        %s232 = sand.u32 %s50, 1
        %s233 = scalar_lea.sflag [#allocation6], %s232
        %s234 = sand.u32 %s50, 1
        %s235 = smul.addr %s234, 512
        %s236 = scalar_lea.vmem [#allocation5], %s235
        // Predicated region
        $region52: #{bilstmcrf_forward.6} parent=46 // pred_check
          %p237 = pneg %p63
        $region53: #{bilstmcrf_forward.6} parent=46 // pred_check_branch
          %239 = sbr.rel (%p237) target = $region55
        $region54: #{bilstmcrf_forward.6} parent=46 // pred_region
          %240 = dma.done %s233, 8192
        $region55: #{bilstmcrf_forward.6} parent=46 // pred_fallthru
          _
        %s241 = sand.u32 %s24, 1
        %s242 = sand.u32 %s24, 1
        %s243 = smul.addr %s242, 256
        %s244 = scalar_lea.vmem [#allocation4], %s243
        %p245 = pneg %p37
        %p246 = pneg %p34
        %s247 = sand.u32 %s50, 1
        %s248 = scalar_lea.sflag [#allocation6], %s247
        %s249 = sand.u32 %s50, 1
        %s250 = smul.addr %s249, 512
        %s251 = scalar_lea.vmem [#allocation5], %s250
        %p252 = pneg %p63
        %p253 = pneg %p60
        %p254 = pneg %p89
        %p255 = pneg %p86
        %s256 = sand.u32 %s76, 1
        %s257 = sand.u32 %s76, 1
        %s258 = smul.addr %s257, 64
        %s259 = scalar_lea.vmem [#allocation7], %s258
        %s260 = smul.u32 4, %s16
        %261 = vst [vmem:[#allocation2] sm:$0xff] 0.0
        %262 = vst [vmem:[#allocation3] sm:$0xff] 0.0
        %p263 = scmp.eq.s32.totalorder %s16, 0
        %s264 = scalar_select %p263, 0, 7
        %s265 = smul.u32 %s264, 4
        %s266 = smul.addr %s265, 8
        %s267 = scalar_lea.vmem %s228, %s266 [#allocation4]
        %v268 = vld [vmem:[%s267] sm:$0xff]
        %v269 = vld [vmem:[%s267 + $0x8] sm:$0xff]
        %v270 = vld [vmem:[%s267 + $0x10] sm:$0xff]
        %v271 = vld [vmem:[%s267 + $0x18] sm:$0xff]
        %v272 = vld [vmem:[#allocation2] sm:$0xff]
        %v273 = vld [vmem:[%s236] sm:$0xff]
        %v274 = vld [vmem:[%s236 + $0x8] sm:$0xff]
        %v275 = vld [vmem:[%s236 + $0x10] sm:$0xff]
        %v276 = vld [vmem:[%s236 + $0x18] sm:$0xff]
        %v277 = vld [vmem:[%s236 + $0x20] sm:$0xff]
        %v278 = vld [vmem:[%s236 + $0x28] sm:$0xff]
        %v279 = vld [vmem:[%s236 + $0x30] sm:$0xff]
        %v280 = vld [vmem:[%s236 + $0x38] sm:$0xff]
        %v281 = vld [vmem:[%s236 + $0x40] sm:$0xff]
        %v282 = vld [vmem:[%s236 + $0x48] sm:$0xff]
        %v283 = vld [vmem:[%s236 + $0x50] sm:$0xff]
        %v284 = vld [vmem:[%s236 + $0x58] sm:$0xff]
        %v285 = vld [vmem:[%s236 + $0x60] sm:$0xff]
        %v286 = vld [vmem:[%s236 + $0x68] sm:$0xff]
        %v287 = vld [vmem:[%s236 + $0x70] sm:$0xff]
        %v288 = vld [vmem:[%s236 + $0x78] sm:$0xff]
        %v289 = vld [vmem:[%s236 + $0x80] sm:$0xff]
        %v290 = vld [vmem:[%s236 + $0x88] sm:$0xff]
        %v291 = vld [vmem:[%s236 + $0x90] sm:$0xff]
        %v292 = vld [vmem:[%s236 + $0x98] sm:$0xff]
        %v293 = vld [vmem:[%s236 + $0xa0] sm:$0xff]
        %v294 = vld [vmem:[%s236 + $0xa8] sm:$0xff]
        %v295 = vld [vmem:[%s236 + $0xb0] sm:$0xff]
        %v296 = vld [vmem:[%s236 + $0xb8] sm:$0xff]
        %v297 = vld [vmem:[%s236 + $0xc0] sm:$0xff]
        %v298 = vld [vmem:[%s236 + $0xc8] sm:$0xff]
        %v299 = vld [vmem:[%s236 + $0xd0] sm:$0xff]
        %v300 = vld [vmem:[%s236 + $0xd8] sm:$0xff]
        %v301 = vld [vmem:[%s236 + $0xe0] sm:$0xff]
        %v302 = vld [vmem:[%s236 + $0xe8] sm:$0xff]
        %v303 = vld [vmem:[%s236 + $0xf0] sm:$0xff]
        %v304 = vld [vmem:[%s236 + $0xf8] sm:$0xff]
        %v305 = vld [vmem:[%s236 + $0x100] sm:$0xff]
        %v306 = vld [vmem:[%s236 + $0x108] sm:$0xff]
        %v307 = vld [vmem:[%s236 + $0x110] sm:$0xff]
        %v308 = vld [vmem:[%s236 + $0x118] sm:$0xff]
        %v309 = vld [vmem:[%s236 + $0x120] sm:$0xff]
        %v310 = vld [vmem:[%s236 + $0x128] sm:$0xff]
        %v311 = vld [vmem:[%s236 + $0x130] sm:$0xff]
        %v312 = vld [vmem:[%s236 + $0x138] sm:$0xff]
        %v313 = vld [vmem:[%s236 + $0x140] sm:$0xff]
        %v314 = vld [vmem:[%s236 + $0x148] sm:$0xff]
        %v315 = vld [vmem:[%s236 + $0x150] sm:$0xff]
        %v316 = vld [vmem:[%s236 + $0x158] sm:$0xff]
        %v317 = vld [vmem:[%s236 + $0x160] sm:$0xff]
        %v318 = vld [vmem:[%s236 + $0x168] sm:$0xff]
        %v319 = vld [vmem:[%s236 + $0x170] sm:$0xff]
        %v320 = vld [vmem:[%s236 + $0x178] sm:$0xff]
        %v321 = vld [vmem:[%s236 + $0x180] sm:$0xff]
        %v322 = vld [vmem:[%s236 + $0x188] sm:$0xff]
        %v323 = vld [vmem:[%s236 + $0x190] sm:$0xff]
        %v324 = vld [vmem:[%s236 + $0x198] sm:$0xff]
        %v325 = vld [vmem:[%s236 + $0x1a0] sm:$0xff]
        %v326 = vld [vmem:[%s236 + $0x1a8] sm:$0xff]
        %v327 = vld [vmem:[%s236 + $0x1b0] sm:$0xff]
        %v328 = vld [vmem:[%s236 + $0x1b8] sm:$0xff]
        %v329 = vld [vmem:[%s236 + $0x1c0] sm:$0xff]
        %v330 = vld [vmem:[%s236 + $0x1c8] sm:$0xff]
        %v331 = vld [vmem:[%s236 + $0x1d0] sm:$0xff]
        %v332 = vld [vmem:[%s236 + $0x1d8] sm:$0xff]
        %v333 = vld [vmem:[%s236 + $0x1e0] sm:$0xff]
        %v334 = vld [vmem:[%s236 + $0x1e8] sm:$0xff]
        %v335 = vld [vmem:[%s236 + $0x1f0] sm:$0xff]
        %v336 = vld [vmem:[%s236 + $0x1f8] sm:$0xff]
        %337 = vmatprep.subr.mxu0 %v334
        %338 = vmatpush1.msra.mxu0 %v333
        %339 = vmatprep.subr.mxu0 %v330
        %340 = vmatpush1.msra.mxu0 %v329
        %341 = vmatprep.subr.mxu0 %v326
        %342 = vmatpush1.msra.mxu0 %v325
        %343 = vmatprep.subr.mxu0 %v322
        %344 = vmatpush1.msra.mxu0 %v321
        %345 = vmatprep.subr.mxu0 %v318
        %346 = vmatpush1.msra.mxu0 %v317
        %347 = vmatprep.subr.mxu0 %v314
        %348 = vmatpush1.msra.mxu0 %v313
        %349 = vmatprep.subr.mxu0 %v310
        %350 = vmatpush1.msra.mxu0 %v309
        %351 = vmatprep.subr.mxu0 %v306
        %352 = vmatpush1.msra.mxu0 %v305
        %353 = vmatprep.subr.mxu0 %v302
        %354 = vmatpush1.msra.mxu0 %v301
        %355 = vmatprep.subr.mxu0 %v298
        %356 = vmatpush1.msra.mxu0 %v297
        %357 = vmatprep.subr.mxu0 %v294
        %358 = vmatpush1.msra.mxu0 %v293
        %359 = vmatprep.subr.mxu0 %v290
        %360 = vmatpush1.msra.mxu0 %v289
        %361 = vmatprep.subr.mxu0 %v286
        %362 = vmatpush1.msra.mxu0 %v285
        %363 = vmatprep.subr.mxu0 %v282
        %364 = vmatpush1.msra.mxu0 %v281
        %365 = vmatprep.subr.mxu0 %v278
        %366 = vmatpush1.msra.mxu0 %v277
        %367 = vmatprep.subr.mxu0 %v274
        %368 = vmatpush1.msra.mxu0 %v273
        %369 = vmatprep.subr.mxu0 0.0
        %370 = vmatpush2.msra.mxu0 0.0
        %371 = vmatprep.subr.mxu0 0.0
        %372 = vmatpush2.msra.mxu0 0.0
        %373 = vmatprep.subr.mxu0 0.0
        %374 = vmatpush2.msra.mxu0 0.0
        %375 = vmatprep.subr.mxu0 0.0
        %376 = vmatpush2.msra.mxu0 0.0
        %377 = vmatprep.subr.mxu0 0.0
        %378 = vmatpush2.msra.mxu0 0.0
        %379 = vmatprep.subr.mxu0 0.0
        %380 = vmatpush2.msra.mxu0 0.0
        %381 = vmatprep.subr.mxu0 0.0
        %382 = vmatpush2.msra.mxu0 0.0
        %383 = vmatprep.subr.mxu0 0.0
        %384 = vmatpush2.msra.mxu0 0.0
        %385 = vmatprep.subr.mxu0 0.0
        %386 = vmatpush2.msra.mxu0 0.0
        %387 = vmatprep.subr.mxu0 0.0
        %388 = vmatpush2.msra.mxu0 0.0
        %389 = vmatprep.subr.mxu0 0.0
        %390 = vmatpush2.msra.mxu0 0.0
        %391 = vmatprep.subr.mxu0 0.0
        %392 = vmatpush2.msra.mxu0 0.0
        %393 = vmatprep.subr.mxu0 0.0
        %394 = vmatpush2.msra.mxu0 0.0
        %395 = vmatprep.subr.mxu0 0.0
        %396 = vmatpush2.msra.mxu0 0.0
        %397 = vmatprep.subr.mxu0 0.0
        %398 = vmatpush2.msra.mxu0 0.0
        %399 = vmatprep.subr.mxu0 0.0
        %400 = vmatpush2.msra.mxu0 0.0
        %401 = vmatprep.mubr.f32.mxu0 0.0
        %402 = vmatmul.mubr.f32.gmra.mxu0 %v272
        %v403 = vpop.f32.mrf.mxu0
        %v404 = vadd.f32 0.0, %v403
        %v405 = vpop.f32.mrf.mxu0
        %v406 = vadd.f32 0.0, %v405
        %407 = vdwg.mxu0
        %408 = vmatprep.subr.mxu0 %v336
        %409 = vmatpush1.msra.mxu0 %v335
        %410 = vmatprep.subr.mxu0 %v332
        %411 = vmatpush1.msra.mxu0 %v331
        %412 = vmatprep.subr.mxu0 %v328
        %413 = vmatpush1.msra.mxu0 %v327
        %414 = vmatprep.subr.mxu0 %v324
        %415 = vmatpush1.msra.mxu0 %v323
        %416 = vmatprep.subr.mxu0 %v320
        %417 = vmatpush1.msra.mxu0 %v319
        %418 = vmatprep.subr.mxu0 %v316
        %419 = vmatpush1.msra.mxu0 %v315
        %420 = vmatprep.subr.mxu0 %v312
        %421 = vmatpush1.msra.mxu0 %v311
        %422 = vmatprep.subr.mxu0 %v308
        %423 = vmatpush1.msra.mxu0 %v307
        %424 = vmatprep.subr.mxu0 %v304
        %425 = vmatpush1.msra.mxu0 %v303
        %426 = vmatprep.subr.mxu0 %v300
        %427 = vmatpush1.msra.mxu0 %v299
        %428 = vmatprep.subr.mxu0 %v296
        %429 = vmatpush1.msra.mxu0 %v295
        %430 = vmatprep.subr.mxu0 %v292
        %431 = vmatpush1.msra.mxu0 %v291
        %432 = vmatprep.subr.mxu0 %v288
        %433 = vmatpush1.msra.mxu0 %v287
        %434 = vmatprep.subr.mxu0 %v284
        %435 = vmatpush1.msra.mxu0 %v283
        %436 = vmatprep.subr.mxu0 %v280
        %437 = vmatpush1.msra.mxu0 %v279
        %438 = vmatprep.subr.mxu0 %v276
        %439 = vmatpush1.msra.mxu0 %v275
        %440 = vmatprep.subr.mxu0 0.0
        %441 = vmatpush2.msra.mxu0 0.0
        %442 = vmatprep.subr.mxu0 0.0
        %443 = vmatpush2.msra.mxu0 0.0
        %444 = vmatprep.subr.mxu0 0.0
        %445 = vmatpush2.msra.mxu0 0.0
        %446 = vmatprep.subr.mxu0 0.0
        %447 = vmatpush2.msra.mxu0 0.0
        %448 = vmatprep.subr.mxu0 0.0
        %449 = vmatpush2.msra.mxu0 0.0
        %450 = vmatprep.subr.mxu0 0.0
        %451 = vmatpush2.msra.mxu0 0.0
        %452 = vmatprep.subr.mxu0 0.0
        %453 = vmatpush2.msra.mxu0 0.0
        %454 = vmatprep.subr.mxu0 0.0
        %455 = vmatpush2.msra.mxu0 0.0
        %456 = vmatprep.subr.mxu0 0.0
        %457 = vmatpush2.msra.mxu0 0.0
        %458 = vmatprep.subr.mxu0 0.0
        %459 = vmatpush2.msra.mxu0 0.0
        %460 = vmatprep.subr.mxu0 0.0
        %461 = vmatpush2.msra.mxu0 0.0
        %462 = vmatprep.subr.mxu0 0.0
        %463 = vmatpush2.msra.mxu0 0.0
        %464 = vmatprep.subr.mxu0 0.0
        %465 = vmatpush2.msra.mxu0 0.0
        %466 = vmatprep.subr.mxu0 0.0
        %467 = vmatpush2.msra.mxu0 0.0
        %468 = vmatprep.subr.mxu0 0.0
        %469 = vmatpush2.msra.mxu0 0.0
        %470 = vmatprep.subr.mxu0 0.0
        %471 = vmatpush2.msra.mxu0 0.0
        %472 = vmatprep.mubr.f32.mxu0 0.0
        %473 = vmatmul.mubr.f32.gmra.mxu0 %v272
        %v474 = vpop.f32.mrf.mxu0
        %v475 = vadd.f32 0.0, %v474
        %v476 = vpop.f32.mrf.mxu0
        %v477 = vadd.f32 0.0, %v476
        %478 = vdwg.mxu0
        %v479 = vadd.f32 %v268, %v404
        %v480 = vadd.f32 %v269, %v406
        %v481 = vadd.f32 %v270, %v475
        %v482 = vadd.f32 %v271, %v477
        %v483 = vxor.u32 %v479, 2147483648
        %v484 = vmul.f32 %v483, 1.442695
        %v485 = vpow.pop %v484
        %v486 = vadd.f32 %v485, 1.0
        %v487 = vrcp.pop %v486
        %v488 = vmul.f32 1.0, %v487
        %v489 = vxor.u32 %v480, 2147483648
        %v490 = vmul.f32 %v489, 1.442695
        %v491 = vpow.pop %v490
        %v492 = vadd.f32 %v491, 1.0
        %v493 = vrcp.pop %v492
        %v494 = vmul.f32 1.0, %v493
        %v495 = vtanh.pop %v481
        %v496 = vxor.u32 %v482, 2147483648
        %v497 = vmul.f32 %v496, 1.442695
        %v498 = vpow.pop %v497
        %v499 = vadd.f32 %v498, 1.0
        %v500 = vrcp.pop %v499
        %v501 = vmul.f32 1.0, %v500
        %v502 = vld [vmem:[#allocation3] sm:$0xff]
        %v503 = vmul.f32 %v494, %v502
        %v504 = vmul.f32 %v488, %v495
        %v505 = vadd.f32 %v503, %v504
        %v506 = vtanh.pop %v505
        %v507 = vmul.f32 %v501, %v506
        %508 = vst [vmem:[#allocation3] sm:$0xff] %v505
        %509 = vst [vmem:[#allocation2] sm:$0xff] %v507
        %s510 = smul.u32 %s264, 8
        %s511 = scalar_lea.vmem %s259, %s510 [#allocation7]
        %512 = vst [vmem:[%s511] sm:$0xff] %v507
        %s513 = scalar_select %p263, 1, 6
        %s514 = smul.u32 %s513, 4
        %s515 = smul.addr %s514, 8
        %s516 = scalar_lea.vmem %s228, %s515 [#allocation4]
        %v517 = vld [vmem:[%s516] sm:$0xff]
        %v518 = vld [vmem:[%s516 + $0x8] sm:$0xff]
        %v519 = vld [vmem:[%s516 + $0x10] sm:$0xff]
        %v520 = vld [vmem:[%s516 + $0x18] sm:$0xff]
        %v521 = vld [vmem:[#allocation2] sm:$0xff]
        %v522 = vld [vmem:[%s236] sm:$0xff]
        %v523 = vld [vmem:[%s236 + $0x8] sm:$0xff]
        %v524 = vld [vmem:[%s236 + $0x10] sm:$0xff]
        %v525 = vld [vmem:[%s236 + $0x18] sm:$0xff]
        %v526 = vld [vmem:[%s236 + $0x20] sm:$0xff]
        %v527 = vld [vmem:[%s236 + $0x28] sm:$0xff]
        %v528 = vld [vmem:[%s236 + $0x30] sm:$0xff]
        %v529 = vld [vmem:[%s236 + $0x38] sm:$0xff]
        %v530 = vld [vmem:[%s236 + $0x40] sm:$0xff]
        %v531 = vld [vmem:[%s236 + $0x48] sm:$0xff]
        %v532 = vld [vmem:[%s236 + $0x50] sm:$0xff]
        %v533 = vld [vmem:[%s236 + $0x58] sm:$0xff]
        %v534 = vld [vmem:[%s236 + $0x60] sm:$0xff]
        %v535 = vld [vmem:[%s236 + $0x68] sm:$0xff]
        %v536 = vld [vmem:[%s236 + $0x70] sm:$0xff]
        %v537 = vld [vmem:[%s236 + $0x78] sm:$0xff]
        %v538 = vld [vmem:[%s236 + $0x80] sm:$0xff]
        %v539 = vld [vmem:[%s236 + $0x88] sm:$0xff]
        %v540 = vld [vmem:[%s236 + $0x90] sm:$0xff]
        %v541 = vld [vmem:[%s236 + $0x98] sm:$0xff]
        %v542 = vld [vmem:[%s236 + $0xa0] sm:$0xff]
        %v543 = vld [vmem:[%s236 + $0xa8] sm:$0xff]
        %v544 = vld [vmem:[%s236 + $0xb0] sm:$0xff]
        %v545 = vld [vmem:[%s236 + $0xb8] sm:$0xff]
        %v546 = vld [vmem:[%s236 + $0xc0] sm:$0xff]
        %v547 = vld [vmem:[%s236 + $0xc8] sm:$0xff]
        %v548 = vld [vmem:[%s236 + $0xd0] sm:$0xff]
        %v549 = vld [vmem:[%s236 + $0xd8] sm:$0xff]
        %v550 = vld [vmem:[%s236 + $0xe0] sm:$0xff]
        %v551 = vld [vmem:[%s236 + $0xe8] sm:$0xff]
        %v552 = vld [vmem:[%s236 + $0xf0] sm:$0xff]
        %v553 = vld [vmem:[%s236 + $0xf8] sm:$0xff]
        %v554 = vld [vmem:[%s236 + $0x100] sm:$0xff]
        %v555 = vld [vmem:[%s236 + $0x108] sm:$0xff]
        %v556 = vld [vmem:[%s236 + $0x110] sm:$0xff]
        %v557 = vld [vmem:[%s236 + $0x118] sm:$0xff]
        %v558 = vld [vmem:[%s236 + $0x120] sm:$0xff]
        %v559 = vld [vmem:[%s236 + $0x128] sm:$0xff]
        %v560 = vld [vmem:[%s236 + $0x130] sm:$0xff]
        %v561 = vld [vmem:[%s236 + $0x138] sm:$0xff]
        %v562 = vld [vmem:[%s236 + $0x140] sm:$0xff]
        %v563 = vld [vmem:[%s236 + $0x148] sm:$0xff]
        %v564 = vld [vmem:[%s236 + $0x150] sm:$0xff]
        %v565 = vld [vmem:[%s236 + $0x158] sm:$0xff]
        %v566 = vld [vmem:[%s236 + $0x160] sm:$0xff]
        %v567 = vld [vmem:[%s236 + $0x168] sm:$0xff]
        %v568 = vld [vmem:[%s236 + $0x170] sm:$0xff]
        %v569 = vld [vmem:[%s236 + $0x178] sm:$0xff]
        %v570 = vld [vmem:[%s236 + $0x180] sm:$0xff]
        %v571 = vld [vmem:[%s236 + $0x188] sm:$0xff]
        %v572 = vld [vmem:[%s236 + $0x190] sm:$0xff]
        %v573 = vld [vmem:[%s236 + $0x198] sm:$0xff]
        %v574 = vld [vmem:[%s236 + $0x1a0] sm:$0xff]
        %v575 = vld [vmem:[%s236 + $0x1a8] sm:$0xff]
        %v576 = vld [vmem:[%s236 + $0x1b0] sm:$0xff]
        %v577 = vld [vmem:[%s236 + $0x1b8] sm:$0xff]
        %v578 = vld [vmem:[%s236 + $0x1c0] sm:$0xff]
        %v579 = vld [vmem:[%s236 + $0x1c8] sm:$0xff]
        %v580 = vld [vmem:[%s236 + $0x1d0] sm:$0xff]
        %v581 = vld [vmem:[%s236 + $0x1d8] sm:$0xff]
        %v582 = vld [vmem:[%s236 + $0x1e0] sm:$0xff]
        %v583 = vld [vmem:[%s236 + $0x1e8] sm:$0xff]
        %v584 = vld [vmem:[%s236 + $0x1f0] sm:$0xff]
        %v585 = vld [vmem:[%s236 + $0x1f8] sm:$0xff]
        %586 = vmatprep.subr.mxu0 %v583
        %587 = vmatpush1.msra.mxu0 %v582
        %588 = vmatprep.subr.mxu0 %v579
        %589 = vmatpush1.msra.mxu0 %v578
        %590 = vmatprep.subr.mxu0 %v575
        %591 = vmatpush1.msra.mxu0 %v574
        %592 = vmatprep.subr.mxu0 %v571
        %593 = vmatpush1.msra.mxu0 %v570
        %594 = vmatprep.subr.mxu0 %v567
        %595 = vmatpush1.msra.mxu0 %v566
        %596 = vmatprep.subr.mxu0 %v563
        %597 = vmatpush1.msra.mxu0 %v562
        %598 = vmatprep.subr.mxu0 %v559
        %599 = vmatpush1.msra.mxu0 %v558
        %600 = vmatprep.subr.mxu0 %v555
        %601 = vmatpush1.msra.mxu0 %v554
        %602 = vmatprep.subr.mxu0 %v551
        %603 = vmatpush1.msra.mxu0 %v550
        %604 = vmatprep.subr.mxu0 %v547
        %605 = vmatpush1.msra.mxu0 %v546
        %606 = vmatprep.subr.mxu0 %v543
        %607 = vmatpush1.msra.mxu0 %v542
        %608 = vmatprep.subr.mxu0 %v539
        %609 = vmatpush1.msra.mxu0 %v538
        %610 = vmatprep.subr.mxu0 %v535
        %611 = vmatpush1.msra.mxu0 %v534
        %612 = vmatprep.subr.mxu0 %v531
        %613 = vmatpush1.msra.mxu0 %v530
        %614 = vmatprep.subr.mxu0 %v527
        %615 = vmatpush1.msra.mxu0 %v526
        %616 = vmatprep.subr.mxu0 %v523
        %617 = vmatpush1.msra.mxu0 %v522
        %618 = vmatprep.subr.mxu0 0.0
        %619 = vmatpush2.msra.mxu0 0.0
        %620 = vmatprep.subr.mxu0 0.0
        %621 = vmatpush2.msra.mxu0 0.0
        %622 = vmatprep.subr.mxu0 0.0
        %623 = vmatpush2.msra.mxu0 0.0
        %624 = vmatprep.subr.mxu0 0.0
        %625 = vmatpush2.msra.mxu0 0.0
        %626 = vmatprep.subr.mxu0 0.0
        %627 = vmatpush2.msra.mxu0 0.0
        %628 = vmatprep.subr.mxu0 0.0
        %629 = vmatpush2.msra.mxu0 0.0
        %630 = vmatprep.subr.mxu0 0.0
        %631 = vmatpush2.msra.mxu0 0.0
        %632 = vmatprep.subr.mxu0 0.0
        %633 = vmatpush2.msra.mxu0 0.0
        %634 = vmatprep.subr.mxu0 0.0
        %635 = vmatpush2.msra.mxu0 0.0
        %636 = vmatprep.subr.mxu0 0.0
        %637 = vmatpush2.msra.mxu0 0.0
        %638 = vmatprep.subr.mxu0 0.0
        %639 = vmatpush2.msra.mxu0 0.0
        %640 = vmatprep.subr.mxu0 0.0
        %641 = vmatpush2.msra.mxu0 0.0
        %642 = vmatprep.subr.mxu0 0.0
        %643 = vmatpush2.msra.mxu0 0.0
        %644 = vmatprep.subr.mxu0 0.0
        %645 = vmatpush2.msra.mxu0 0.0
        %646 = vmatprep.subr.mxu0 0.0
        %647 = vmatpush2.msra.mxu0 0.0
        %648 = vmatprep.subr.mxu0 0.0
        %649 = vmatpush2.msra.mxu0 0.0
        %650 = vmatprep.mubr.f32.mxu0 0.0
        %651 = vmatmul.mubr.f32.gmra.mxu0 %v521
        %v652 = vpop.f32.mrf.mxu0
        %v653 = vadd.f32 0.0, %v652
        %v654 = vpop.f32.mrf.mxu0
        %v655 = vadd.f32 0.0, %v654
        %656 = vdwg.mxu0
        %657 = vmatprep.subr.mxu0 %v585
        %658 = vmatpush1.msra.mxu0 %v584
        %659 = vmatprep.subr.mxu0 %v581
        %660 = vmatpush1.msra.mxu0 %v580
        %661 = vmatprep.subr.mxu0 %v577
        %662 = vmatpush1.msra.mxu0 %v576
        %663 = vmatprep.subr.mxu0 %v573
        %664 = vmatpush1.msra.mxu0 %v572
        %665 = vmatprep.subr.mxu0 %v569
        %666 = vmatpush1.msra.mxu0 %v568
        %667 = vmatprep.subr.mxu0 %v565
        %668 = vmatpush1.msra.mxu0 %v564
        %669 = vmatprep.subr.mxu0 %v561
        %670 = vmatpush1.msra.mxu0 %v560
        %671 = vmatprep.subr.mxu0 %v557
        %672 = vmatpush1.msra.mxu0 %v556
        %673 = vmatprep.subr.mxu0 %v553
        %674 = vmatpush1.msra.mxu0 %v552
        %675 = vmatprep.subr.mxu0 %v549
        %676 = vmatpush1.msra.mxu0 %v548
        %677 = vmatprep.subr.mxu0 %v545
        %678 = vmatpush1.msra.mxu0 %v544
        %679 = vmatprep.subr.mxu0 %v541
        %680 = vmatpush1.msra.mxu0 %v540
        %681 = vmatprep.subr.mxu0 %v537
        %682 = vmatpush1.msra.mxu0 %v536
        %683 = vmatprep.subr.mxu0 %v533
        %684 = vmatpush1.msra.mxu0 %v532
        %685 = vmatprep.subr.mxu0 %v529
        %686 = vmatpush1.msra.mxu0 %v528
        %687 = vmatprep.subr.mxu0 %v525
        %688 = vmatpush1.msra.mxu0 %v524
        %689 = vmatprep.subr.mxu0 0.0
        %690 = vmatpush2.msra.mxu0 0.0
        %691 = vmatprep.subr.mxu0 0.0
        %692 = vmatpush2.msra.mxu0 0.0
        %693 = vmatprep.subr.mxu0 0.0
        %694 = vmatpush2.msra.mxu0 0.0
        %695 = vmatprep.subr.mxu0 0.0
        %696 = vmatpush2.msra.mxu0 0.0
        %697 = vmatprep.subr.mxu0 0.0
        %698 = vmatpush2.msra.mxu0 0.0
        %699 = vmatprep.subr.mxu0 0.0
        %700 = vmatpush2.msra.mxu0 0.0
        %701 = vmatprep.subr.mxu0 0.0
        %702 = vmatpush2.msra.mxu0 0.0
        %703 = vmatprep.subr.mxu0 0.0
        %704 = vmatpush2.msra.mxu0 0.0
        %705 = vmatprep.subr.mxu0 0.0
        %706 = vmatpush2.msra.mxu0 0.0
        %707 = vmatprep.subr.mxu0 0.0
        %708 = vmatpush2.msra.mxu0 0.0
        %709 = vmatprep.subr.mxu0 0.0
        %710 = vmatpush2.msra.mxu0 0.0
        %711 = vmatprep.subr.mxu0 0.0
        %712 = vmatpush2.msra.mxu0 0.0
        %713 = vmatprep.subr.mxu0 0.0
        %714 = vmatpush2.msra.mxu0 0.0
        %715 = vmatprep.subr.mxu0 0.0
        %716 = vmatpush2.msra.mxu0 0.0
        %717 = vmatprep.subr.mxu0 0.0
        %718 = vmatpush2.msra.mxu0 0.0
        %719 = vmatprep.subr.mxu0 0.0
        %720 = vmatpush2.msra.mxu0 0.0
        %721 = vmatprep.mubr.f32.mxu0 0.0
        %722 = vmatmul.mubr.f32.gmra.mxu0 %v521
        %v723 = vpop.f32.mrf.mxu0
        %v724 = vadd.f32 0.0, %v723
        %v725 = vpop.f32.mrf.mxu0
        %v726 = vadd.f32 0.0, %v725
        %727 = vdwg.mxu0
        %v728 = vadd.f32 %v517, %v653
        %v729 = vadd.f32 %v518, %v655
        %v730 = vadd.f32 %v519, %v724
        %v731 = vadd.f32 %v520, %v726
        %v732 = vxor.u32 %v728, 2147483648
        %v733 = vmul.f32 %v732, 1.442695
        %v734 = vpow.pop %v733
        %v735 = vadd.f32 %v734, 1.0
        %v736 = vrcp.pop %v735
        %v737 = vmul.f32 1.0, %v736
        %v738 = vxor.u32 %v729, 2147483648
        %v739 = vmul.f32 %v738, 1.442695
        %v740 = vpow.pop %v739
        %v741 = vadd.f32 %v740, 1.0
        %v742 = vrcp.pop %v741
        %v743 = vmul.f32 1.0, %v742
        %v744 = vtanh.pop %v730
        %v745 = vxor.u32 %v731, 2147483648
        %v746 = vmul.f32 %v745, 1.442695
        %v747 = vpow.pop %v746
        %v748 = vadd.f32 %v747, 1.0
        %v749 = vrcp.pop %v748
        %v750 = vmul.f32 1.0, %v749
        %v751 = vld [vmem:[#allocation3] sm:$0xff]
        %v752 = vmul.f32 %v743, %v751
        %v753 = vmul.f32 %v737, %v744
        %v754 = vadd.f32 %v752, %v753
        %v755 = vtanh.pop %v754
        %v756 = vmul.f32 %v750, %v755
        %757 = vst [vmem:[#allocation3] sm:$0xff] %v754
        %758 = vst [vmem:[#allocation2] sm:$0xff] %v756
        %s759 = smul.u32 %s513, 8
        %s760 = scalar_lea.vmem %s259, %s759 [#allocation7]
        %761 = vst [vmem:[%s760] sm:$0xff] %v756
        %s762 = scalar_select %p263, 2, 5
        %s763 = smul.u32 %s762, 4
        %s764 = smul.addr %s763, 8
        %s765 = scalar_lea.vmem %s228, %s764 [#allocation4]
        %v766 = vld [vmem:[%s765] sm:$0xff]
        %v767 = vld [vmem:[%s765 + $0x8] sm:$0xff]
        %v768 = vld [vmem:[%s765 + $0x10] sm:$0xff]
        %v769 = vld [vmem:[%s765 + $0x18] sm:$0xff]
        %v770 = vld [vmem:[#allocation2] sm:$0xff]
        %v771 = vld [vmem:[%s236] sm:$0xff]
        %v772 = vld [vmem:[%s236 + $0x8] sm:$0xff]
        %v773 = vld [vmem:[%s236 + $0x10] sm:$0xff]
        %v774 = vld [vmem:[%s236 + $0x18] sm:$0xff]
        %v775 = vld [vmem:[%s236 + $0x20] sm:$0xff]
        %v776 = vld [vmem:[%s236 + $0x28] sm:$0xff]
        %v777 = vld [vmem:[%s236 + $0x30] sm:$0xff]
        %v778 = vld [vmem:[%s236 + $0x38] sm:$0xff]
        %v779 = vld [vmem:[%s236 + $0x40] sm:$0xff]
        %v780 = vld [vmem:[%s236 + $0x48] sm:$0xff]
        %v781 = vld [vmem:[%s236 + $0x50] sm:$0xff]
        %v782 = vld [vmem:[%s236 + $0x58] sm:$0xff]
        %v783 = vld [vmem:[%s236 + $0x60] sm:$0xff]
        %v784 = vld [vmem:[%s236 + $0x68] sm:$0xff]
        %v785 = vld [vmem:[%s236 + $0x70] sm:$0xff]
        %v786 = vld [vmem:[%s236 + $0x78] sm:$0xff]
        %v787 = vld [vmem:[%s236 + $0x80] sm:$0xff]
        %v788 = vld [vmem:[%s236 + $0x88] sm:$0xff]
        %v789 = vld [vmem:[%s236 + $0x90] sm:$0xff]
        %v790 = vld [vmem:[%s236 + $0x98] sm:$0xff]
        %v791 = vld [vmem:[%s236 + $0xa0] sm:$0xff]
        %v792 = vld [vmem:[%s236 + $0xa8] sm:$0xff]
        %v793 = vld [vmem:[%s236 + $0xb0] sm:$0xff]
        %v794 = vld [vmem:[%s236 + $0xb8] sm:$0xff]
        %v795 = vld [vmem:[%s236 + $0xc0] sm:$0xff]
        %v796 = vld [vmem:[%s236 + $0xc8] sm:$0xff]
        %v797 = vld [vmem:[%s236 + $0xd0] sm:$0xff]
        %v798 = vld [vmem:[%s236 + $0xd8] sm:$0xff]
        %v799 = vld [vmem:[%s236 + $0xe0] sm:$0xff]
        %v800 = vld [vmem:[%s236 + $0xe8] sm:$0xff]
        %v801 = vld [vmem:[%s236 + $0xf0] sm:$0xff]
        %v802 = vld [vmem:[%s236 + $0xf8] sm:$0xff]
        %v803 = vld [vmem:[%s236 + $0x100] sm:$0xff]
        %v804 = vld [vmem:[%s236 + $0x108] sm:$0xff]
        %v805 = vld [vmem:[%s236 + $0x110] sm:$0xff]
        %v806 = vld [vmem:[%s236 + $0x118] sm:$0xff]
        %v807 = vld [vmem:[%s236 + $0x120] sm:$0xff]
        %v808 = vld [vmem:[%s236 + $0x128] sm:$0xff]
        %v809 = vld [vmem:[%s236 + $0x130] sm:$0xff]
        %v810 = vld [vmem:[%s236 + $0x138] sm:$0xff]
        %v811 = vld [vmem:[%s236 + $0x140] sm:$0xff]
        %v812 = vld [vmem:[%s236 + $0x148] sm:$0xff]
        %v813 = vld [vmem:[%s236 + $0x150] sm:$0xff]
        %v814 = vld [vmem:[%s236 + $0x158] sm:$0xff]
        %v815 = vld [vmem:[%s236 + $0x160] sm:$0xff]
        %v816 = vld [vmem:[%s236 + $0x168] sm:$0xff]
        %v817 = vld [vmem:[%s236 + $0x170] sm:$0xff]
        %v818 = vld [vmem:[%s236 + $0x178] sm:$0xff]
        %v819 = vld [vmem:[%s236 + $0x180] sm:$0xff]
        %v820 = vld [vmem:[%s236 + $0x188] sm:$0xff]
        %v821 = vld [vmem:[%s236 + $0x190] sm:$0xff]
        %v822 = vld [vmem:[%s236 + $0x198] sm:$0xff]
        %v823 = vld [vmem:[%s236 + $0x1a0] sm:$0xff]
        %v824 = vld [vmem:[%s236 + $0x1a8] sm:$0xff]
        %v825 = vld [vmem:[%s236 + $0x1b0] sm:$0xff]
        %v826 = vld [vmem:[%s236 + $0x1b8] sm:$0xff]
        %v827 = vld [vmem:[%s236 + $0x1c0] sm:$0xff]
        %v828 = vld [vmem:[%s236 + $0x1c8] sm:$0xff]
        %v829 = vld [vmem:[%s236 + $0x1d0] sm:$0xff]
        %v830 = vld [vmem:[%s236 + $0x1d8] sm:$0xff]
        %v831 = vld [vmem:[%s236 + $0x1e0] sm:$0xff]
        %v832 = vld [vmem:[%s236 + $0x1e8] sm:$0xff]
        %v833 = vld [vmem:[%s236 + $0x1f0] sm:$0xff]
        %v834 = vld [vmem:[%s236 + $0x1f8] sm:$0xff]
        %835 = vmatprep.subr.mxu0 %v832
        %836 = vmatpush1.msra.mxu0 %v831
        %837 = vmatprep.subr.mxu0 %v828
        %838 = vmatpush1.msra.mxu0 %v827
        %839 = vmatprep.subr.mxu0 %v824
        %840 = vmatpush1.msra.mxu0 %v823
        %841 = vmatprep.subr.mxu0 %v820
        %842 = vmatpush1.msra.mxu0 %v819
        %843 = vmatprep.subr.mxu0 %v816
        %844 = vmatpush1.msra.mxu0 %v815
        %845 = vmatprep.subr.mxu0 %v812
        %846 = vmatpush1.msra.mxu0 %v811
        %847 = vmatprep.subr.mxu0 %v808
        %848 = vmatpush1.msra.mxu0 %v807
        %849 = vmatprep.subr.mxu0 %v804
        %850 = vmatpush1.msra.mxu0 %v803
        %851 = vmatprep.subr.mxu0 %v800
        %852 = vmatpush1.msra.mxu0 %v799
        %853 = vmatprep.subr.mxu0 %v796
        %854 = vmatpush1.msra.mxu0 %v795
        %855 = vmatprep.subr.mxu0 %v792
        %856 = vmatpush1.msra.mxu0 %v791
        %857 = vmatprep.subr.mxu0 %v788
        %858 = vmatpush1.msra.mxu0 %v787
        %859 = vmatprep.subr.mxu0 %v784
        %860 = vmatpush1.msra.mxu0 %v783
        %861 = vmatprep.subr.mxu0 %v780
        %862 = vmatpush1.msra.mxu0 %v779
        %863 = vmatprep.subr.mxu0 %v776
        %864 = vmatpush1.msra.mxu0 %v775
        %865 = vmatprep.subr.mxu0 %v772
        %866 = vmatpush1.msra.mxu0 %v771
        %867 = vmatprep.subr.mxu0 0.0
        %868 = vmatpush2.msra.mxu0 0.0
        %869 = vmatprep.subr.mxu0 0.0
        %870 = vmatpush2.msra.mxu0 0.0
        %871 = vmatprep.subr.mxu0 0.0
        %872 = vmatpush2.msra.mxu0 0.0
        %873 = vmatprep.subr.mxu0 0.0
        %874 = vmatpush2.msra.mxu0 0.0
        %875 = vmatprep.subr.mxu0 0.0
        %876 = vmatpush2.msra.mxu0 0.0
        %877 = vmatprep.subr.mxu0 0.0
        %878 = vmatpush2.msra.mxu0 0.0
        %879 = vmatprep.subr.mxu0 0.0
        %880 = vmatpush2.msra.mxu0 0.0
        %881 = vmatprep.subr.mxu0 0.0
        %882 = vmatpush2.msra.mxu0 0.0
        %883 = vmatprep.subr.mxu0 0.0
        %884 = vmatpush2.msra.mxu0 0.0
        %885 = vmatprep.subr.mxu0 0.0
        %886 = vmatpush2.msra.mxu0 0.0
        %887 = vmatprep.subr.mxu0 0.0
        %888 = vmatpush2.msra.mxu0 0.0
        %889 = vmatprep.subr.mxu0 0.0
        %890 = vmatpush2.msra.mxu0 0.0
        %891 = vmatprep.subr.mxu0 0.0
        %892 = vmatpush2.msra.mxu0 0.0
        %893 = vmatprep.subr.mxu0 0.0
        %894 = vmatpush2.msra.mxu0 0.0
        %895 = vmatprep.subr.mxu0 0.0
        %896 = vmatpush2.msra.mxu0 0.0
        %897 = vmatprep.subr.mxu0 0.0
        %898 = vmatpush2.msra.mxu0 0.0
        %899 = vmatprep.mubr.f32.mxu0 0.0
        %900 = vmatmul.mubr.f32.gmra.mxu0 %v770
        %v901 = vpop.f32.mrf.mxu0
        %v902 = vadd.f32 0.0, %v901
        %v903 = vpop.f32.mrf.mxu0
        %v904 = vadd.f32 0.0, %v903
        %905 = vdwg.mxu0
        %906 = vmatprep.subr.mxu0 %v834
        %907 = vmatpush1.msra.mxu0 %v833
        %908 = vmatprep.subr.mxu0 %v830
        %909 = vmatpush1.msra.mxu0 %v829
        %910 = vmatprep.subr.mxu0 %v826
        %911 = vmatpush1.msra.mxu0 %v825
        %912 = vmatprep.subr.mxu0 %v822
        %913 = vmatpush1.msra.mxu0 %v821
        %914 = vmatprep.subr.mxu0 %v818
        %915 = vmatpush1.msra.mxu0 %v817
        %916 = vmatprep.subr.mxu0 %v814
        %917 = vmatpush1.msra.mxu0 %v813
        %918 = vmatprep.subr.mxu0 %v810
        %919 = vmatpush1.msra.mxu0 %v809
        %920 = vmatprep.subr.mxu0 %v806
        %921 = vmatpush1.msra.mxu0 %v805
        %922 = vmatprep.subr.mxu0 %v802
        %923 = vmatpush1.msra.mxu0 %v801
        %924 = vmatprep.subr.mxu0 %v798
        %925 = vmatpush1.msra.mxu0 %v797
        %926 = vmatprep.subr.mxu0 %v794
        %927 = vmatpush1.msra.mxu0 %v793
        %928 = vmatprep.subr.mxu0 %v790
        %929 = vmatpush1.msra.mxu0 %v789
        %930 = vmatprep.subr.mxu0 %v786
        %931 = vmatpush1.msra.mxu0 %v785
        %932 = vmatprep.subr.mxu0 %v782
        %933 = vmatpush1.msra.mxu0 %v781
        %934 = vmatprep.subr.mxu0 %v778
        %935 = vmatpush1.msra.mxu0 %v777
        %936 = vmatprep.subr.mxu0 %v774
        %937 = vmatpush1.msra.mxu0 %v773
        %938 = vmatprep.subr.mxu0 0.0
        %939 = vmatpush2.msra.mxu0 0.0
        %940 = vmatprep.subr.mxu0 0.0
        %941 = vmatpush2.msra.mxu0 0.0
        %942 = vmatprep.subr.mxu0 0.0
        %943 = vmatpush2.msra.mxu0 0.0
        %944 = vmatprep.subr.mxu0 0.0
        %945 = vmatpush2.msra.mxu0 0.0
        %946 = vmatprep.subr.mxu0 0.0
        %947 = vmatpush2.msra.mxu0 0.0
        %948 = vmatprep.subr.mxu0 0.0
        %949 = vmatpush2.msra.mxu0 0.0
        %950 = vmatprep.subr.mxu0 0.0
        %951 = vmatpush2.msra.mxu0 0.0
        %952 = vmatprep.subr.mxu0 0.0
        %953 = vmatpush2.msra.mxu0 0.0
        %954 = vmatprep.subr.mxu0 0.0
        %955 = vmatpush2.msra.mxu0 0.0
        %956 = vmatprep.subr.mxu0 0.0
        %957 = vmatpush2.msra.mxu0 0.0
        %958 = vmatprep.subr.mxu0 0.0
        %959 = vmatpush2.msra.mxu0 0.0
        %960 = vmatprep.subr.mxu0 0.0
        %961 = vmatpush2.msra.mxu0 0.0
        %962 = vmatprep.subr.mxu0 0.0
        %963 = vmatpush2.msra.mxu0 0.0
        %964 = vmatprep.subr.mxu0 0.0
        %965 = vmatpush2.msra.mxu0 0.0
        %966 = vmatprep.subr.mxu0 0.0
        %967 = vmatpush2.msra.mxu0 0.0
        %968 = vmatprep.subr.mxu0 0.0
        %969 = vmatpush2.msra.mxu0 0.0
        %970 = vmatprep.mubr.f32.mxu0 0.0
        %971 = vmatmul.mubr.f32.gmra.mxu0 %v770
        %v972 = vpop.f32.mrf.mxu0
        %v973 = vadd.f32 0.0, %v972
        %v974 = vpop.f32.mrf.mxu0
        %v975 = vadd.f32 0.0, %v974
        %976 = vdwg.mxu0
        %v977 = vadd.f32 %v766, %v902
        %v978 = vadd.f32 %v767, %v904
        %v979 = vadd.f32 %v768, %v973
        %v980 = vadd.f32 %v769, %v975
        %v981 = vxor.u32 %v977, 2147483648
        %v982 = vmul.f32 %v981, 1.442695
        %v983 = vpow.pop %v982
        %v984 = vadd.f32 %v983, 1.0
        %v985 = vrcp.pop %v984
        %v986 = vmul.f32 1.0, %v985
        %v987 = vxor.u32 %v978, 2147483648
        %v988 = vmul.f32 %v987, 1.442695
        %v989 = vpow.pop %v988
        %v990 = vadd.f32 %v989, 1.0
        %v991 = vrcp.pop %v990
        %v992 = vmul.f32 1.0, %v991
        %v993 = vtanh.pop %v979
        %v994 = vxor.u32 %v980, 2147483648
        %v995 = vmul.f32 %v994, 1.442695
        %v996 = vpow.pop %v995
        %v997 = vadd.f32 %v996, 1.0
        %v998 = vrcp.pop %v997
        %v999 = vmul.f32 1.0, %v998
        %v1000 = vld [vmem:[#allocation3] sm:$0xff]
        %v1001 = vmul.f32 %v992, %v1000
        %v1002 = vmul.f32 %v986, %v993
        %v1003 = vadd.f32 %v1001, %v1002
        %v1004 = vtanh.pop %v1003
        %v1005 = vmul.f32 %v999, %v1004
        %1006 = vst [vmem:[#allocation3] sm:$0xff] %v1003
        %1007 = vst [vmem:[#allocation2] sm:$0xff] %v1005
        %s1008 = smul.u32 %s762, 8
        %s1009 = scalar_lea.vmem %s259, %s1008 [#allocation7]
        %1010 = vst [vmem:[%s1009] sm:$0xff] %v1005
        %s1011 = scalar_select %p263, 3, 4
        %s1012 = smul.u32 %s1011, 4
        %s1013 = smul.addr %s1012, 8
        %s1014 = scalar_lea.vmem %s228, %s1013 [#allocation4]
        %v1015 = vld [vmem:[%s1014] sm:$0xff]
        %v1016 = vld [vmem:[%s1014 + $0x8] sm:$0xff]
        %v1017 = vld [vmem:[%s1014 + $0x10] sm:$0xff]
        %v1018 = vld [vmem:[%s1014 + $0x18] sm:$0xff]
        %v1019 = vld [vmem:[#allocation2] sm:$0xff]
        %v1020 = vld [vmem:[%s236] sm:$0xff]
        %v1021 = vld [vmem:[%s236 + $0x8] sm:$0xff]
        %v1022 = vld [vmem:[%s236 + $0x10] sm:$0xff]
        %v1023 = vld [vmem:[%s236 + $0x18] sm:$0xff]
        %v1024 = vld [vmem:[%s236 + $0x20] sm:$0xff]
        %v1025 = vld [vmem:[%s236 + $0x28] sm:$0xff]
        %v1026 = vld [vmem:[%s236 + $0x30] sm:$0xff]
        %v1027 = vld [vmem:[%s236 + $0x38] sm:$0xff]
        %v1028 = vld [vmem:[%s236 + $0x40] sm:$0xff]
        %v1029 = vld [vmem:[%s236 + $0x48] sm:$0xff]
        %v1030 = vld [vmem:[%s236 + $0x50] sm:$0xff]
        %v1031 = vld [vmem:[%s236 + $0x58] sm:$0xff]
        %v1032 = vld [vmem:[%s236 + $0x60] sm:$0xff]
        %v1033 = vld [vmem:[%s236 + $0x68] sm:$0xff]
        %v1034 = vld [vmem:[%s236 + $0x70] sm:$0xff]
        %v1035 = vld [vmem:[%s236 + $0x78] sm:$0xff]
        %v1036 = vld [vmem:[%s236 + $0x80] sm:$0xff]
        %v1037 = vld [vmem:[%s236 + $0x88] sm:$0xff]
        %v1038 = vld [vmem:[%s236 + $0x90] sm:$0xff]
        %v1039 = vld [vmem:[%s236 + $0x98] sm:$0xff]
        %v1040 = vld [vmem:[%s236 + $0xa0] sm:$0xff]
        %v1041 = vld [vmem:[%s236 + $0xa8] sm:$0xff]
        %v1042 = vld [vmem:[%s236 + $0xb0] sm:$0xff]
        %v1043 = vld [vmem:[%s236 + $0xb8] sm:$0xff]
        %v1044 = vld [vmem:[%s236 + $0xc0] sm:$0xff]
        %v1045 = vld [vmem:[%s236 + $0xc8] sm:$0xff]
        %v1046 = vld [vmem:[%s236 + $0xd0] sm:$0xff]
        %v1047 = vld [vmem:[%s236 + $0xd8] sm:$0xff]
        %v1048 = vld [vmem:[%s236 + $0xe0] sm:$0xff]
        %v1049 = vld [vmem:[%s236 + $0xe8] sm:$0xff]
        %v1050 = vld [vmem:[%s236 + $0xf0] sm:$0xff]
        %v1051 = vld [vmem:[%s236 + $0xf8] sm:$0xff]
        %v1052 = vld [vmem:[%s236 + $0x100] sm:$0xff]
        %v1053 = vld [vmem:[%s236 + $0x108] sm:$0xff]
        %v1054 = vld [vmem:[%s236 + $0x110] sm:$0xff]
        %v1055 = vld [vmem:[%s236 + $0x118] sm:$0xff]
        %v1056 = vld [vmem:[%s236 + $0x120] sm:$0xff]
        %v1057 = vld [vmem:[%s236 + $0x128] sm:$0xff]
        %v1058 = vld [vmem:[%s236 + $0x130] sm:$0xff]
        %v1059 = vld [vmem:[%s236 + $0x138] sm:$0xff]
        %v1060 = vld [vmem:[%s236 + $0x140] sm:$0xff]
        %v1061 = vld [vmem:[%s236 + $0x148] sm:$0xff]
        %v1062 = vld [vmem:[%s236 + $0x150] sm:$0xff]
        %v1063 = vld [vmem:[%s236 + $0x158] sm:$0xff]
        %v1064 = vld [vmem:[%s236 + $0x160] sm:$0xff]
        %v1065 = vld [vmem:[%s236 + $0x168] sm:$0xff]
        %v1066 = vld [vmem:[%s236 + $0x170] sm:$0xff]
        %v1067 = vld [vmem:[%s236 + $0x178] sm:$0xff]
        %v1068 = vld [vmem:[%s236 + $0x180] sm:$0xff]
        %v1069 = vld [vmem:[%s236 + $0x188] sm:$0xff]
        %v1070 = vld [vmem:[%s236 + $0x190] sm:$0xff]
        %v1071 = vld [vmem:[%s236 + $0x198] sm:$0xff]
        %v1072 = vld [vmem:[%s236 + $0x1a0] sm:$0xff]
        %v1073 = vld [vmem:[%s236 + $0x1a8] sm:$0xff]
        %v1074 = vld [vmem:[%s236 + $0x1b0] sm:$0xff]
        %v1075 = vld [vmem:[%s236 + $0x1b8] sm:$0xff]
        %v1076 = vld [vmem:[%s236 + $0x1c0] sm:$0xff]
        %v1077 = vld [vmem:[%s236 + $0x1c8] sm:$0xff]
        %v1078 = vld [vmem:[%s236 + $0x1d0] sm:$0xff]
        %v1079 = vld [vmem:[%s236 + $0x1d8] sm:$0xff]
        %v1080 = vld [vmem:[%s236 + $0x1e0] sm:$0xff]
        %v1081 = vld [vmem:[%s236 + $0x1e8] sm:$0xff]
        %v1082 = vld [vmem:[%s236 + $0x1f0] sm:$0xff]
        %v1083 = vld [vmem:[%s236 + $0x1f8] sm:$0xff]
        %1084 = vmatprep.subr.mxu0 %v1081
        %1085 = vmatpush1.msra.mxu0 %v1080
        %1086 = vmatprep.subr.mxu0 %v1077
        %1087 = vmatpush1.msra.mxu0 %v1076
        %1088 = vmatprep.subr.mxu0 %v1073
        %1089 = vmatpush1.msra.mxu0 %v1072
        %1090 = vmatprep.subr.mxu0 %v1069
        %1091 = vmatpush1.msra.mxu0 %v1068
        %1092 = vmatprep.subr.mxu0 %v1065
        %1093 = vmatpush1.msra.mxu0 %v1064
        %1094 = vmatprep.subr.mxu0 %v1061
        %1095 = vmatpush1.msra.mxu0 %v1060
        %1096 = vmatprep.subr.mxu0 %v1057
        %1097 = vmatpush1.msra.mxu0 %v1056
        %1098 = vmatprep.subr.mxu0 %v1053
        %1099 = vmatpush1.msra.mxu0 %v1052
        %1100 = vmatprep.subr.mxu0 %v1049
        %1101 = vmatpush1.msra.mxu0 %v1048
        %1102 = vmatprep.subr.mxu0 %v1045
        %1103 = vmatpush1.msra.mxu0 %v1044
        %1104 = vmatprep.subr.mxu0 %v1041
        %1105 = vmatpush1.msra.mxu0 %v1040
        %1106 = vmatprep.subr.mxu0 %v1037
        %1107 = vmatpush1.msra.mxu0 %v1036
        %1108 = vmatprep.subr.mxu0 %v1033
        %1109 = vmatpush1.msra.mxu0 %v1032
        %1110 = vmatprep.subr.mxu0 %v1029
        %1111 = vmatpush1.msra.mxu0 %v1028
        %1112 = vmatprep.subr.mxu0 %v1025
        %1113 = vmatpush1.msra.mxu0 %v1024
        %1114 = vmatprep.subr.mxu0 %v1021
        %1115 = vmatpush1.msra.mxu0 %v1020
        %1116 = vmatprep.subr.mxu0 0.0
        %1117 = vmatpush2.msra.mxu0 0.0
        %1118 = vmatprep.subr.mxu0 0.0
        %1119 = vmatpush2.msra.mxu0 0.0
        %1120 = vmatprep.subr.mxu0 0.0
        %1121 = vmatpush2.msra.mxu0 0.0
        %1122 = vmatprep.subr.mxu0 0.0
        %1123 = vmatpush2.msra.mxu0 0.0
        %1124 = vmatprep.subr.mxu0 0.0
        %1125 = vmatpush2.msra.mxu0 0.0
        %1126 = vmatprep.subr.mxu0 0.0
        %1127 = vmatpush2.msra.mxu0 0.0
        %1128 = vmatprep.subr.mxu0 0.0
        %1129 = vmatpush2.msra.mxu0 0.0
        %1130 = vmatprep.subr.mxu0 0.0
        %1131 = vmatpush2.msra.mxu0 0.0
        %1132 = vmatprep.subr.mxu0 0.0
        %1133 = vmatpush2.msra.mxu0 0.0
        %1134 = vmatprep.subr.mxu0 0.0
        %1135 = vmatpush2.msra.mxu0 0.0
        %1136 = vmatprep.subr.mxu0 0.0
        %1137 = vmatpush2.msra.mxu0 0.0
        %1138 = vmatprep.subr.mxu0 0.0
        %1139 = vmatpush2.msra.mxu0 0.0
        %1140 = vmatprep.subr.mxu0 0.0
        %1141 = vmatpush2.msra.mxu0 0.0
        %1142 = vmatprep.subr.mxu0 0.0
        %1143 = vmatpush2.msra.mxu0 0.0
        %1144 = vmatprep.subr.mxu0 0.0
        %1145 = vmatpush2.msra.mxu0 0.0
        %1146 = vmatprep.subr.mxu0 0.0
        %1147 = vmatpush2.msra.mxu0 0.0
        %1148 = vmatprep.mubr.f32.mxu0 0.0
        %1149 = vmatmul.mubr.f32.gmra.mxu0 %v1019
        %v1150 = vpop.f32.mrf.mxu0
        %v1151 = vadd.f32 0.0, %v1150
        %v1152 = vpop.f32.mrf.mxu0
        %v1153 = vadd.f32 0.0, %v1152
        %1154 = vdwg.mxu0
        %1155 = vmatprep.subr.mxu0 %v1083
        %1156 = vmatpush1.msra.mxu0 %v1082
        %1157 = vmatprep.subr.mxu0 %v1079
        %1158 = vmatpush1.msra.mxu0 %v1078
        %1159 = vmatprep.subr.mxu0 %v1075
        %1160 = vmatpush1.msra.mxu0 %v1074
        %1161 = vmatprep.subr.mxu0 %v1071
        %1162 = vmatpush1.msra.mxu0 %v1070
        %1163 = vmatprep.subr.mxu0 %v1067
        %1164 = vmatpush1.msra.mxu0 %v1066
        %1165 = vmatprep.subr.mxu0 %v1063
        %1166 = vmatpush1.msra.mxu0 %v1062
        %1167 = vmatprep.subr.mxu0 %v1059
        %1168 = vmatpush1.msra.mxu0 %v1058
        %1169 = vmatprep.subr.mxu0 %v1055
        %1170 = vmatpush1.msra.mxu0 %v1054
        %1171 = vmatprep.subr.mxu0 %v1051
        %1172 = vmatpush1.msra.mxu0 %v1050
        %1173 = vmatprep.subr.mxu0 %v1047
        %1174 = vmatpush1.msra.mxu0 %v1046
        %1175 = vmatprep.subr.mxu0 %v1043
        %1176 = vmatpush1.msra.mxu0 %v1042
        %1177 = vmatprep.subr.mxu0 %v1039
        %1178 = vmatpush1.msra.mxu0 %v1038
        %1179 = vmatprep.subr.mxu0 %v1035
        %1180 = vmatpush1.msra.mxu0 %v1034
        %1181 = vmatprep.subr.mxu0 %v1031
        %1182 = vmatpush1.msra.mxu0 %v1030
        %1183 = vmatprep.subr.mxu0 %v1027
        %1184 = vmatpush1.msra.mxu0 %v1026
        %1185 = vmatprep.subr.mxu0 %v1023
        %1186 = vmatpush1.msra.mxu0 %v1022
        %1187 = vmatprep.subr.mxu0 0.0
        %1188 = vmatpush2.msra.mxu0 0.0
        %1189 = vmatprep.subr.mxu0 0.0
        %1190 = vmatpush2.msra.mxu0 0.0
        %1191 = vmatprep.subr.mxu0 0.0
        %1192 = vmatpush2.msra.mxu0 0.0
        %1193 = vmatprep.subr.mxu0 0.0
        %1194 = vmatpush2.msra.mxu0 0.0
        %1195 = vmatprep.subr.mxu0 0.0
        %1196 = vmatpush2.msra.mxu0 0.0
        %1197 = vmatprep.subr.mxu0 0.0
        %1198 = vmatpush2.msra.mxu0 0.0
        %1199 = vmatprep.subr.mxu0 0.0
        %1200 = vmatpush2.msra.mxu0 0.0
        %1201 = vmatprep.subr.mxu0 0.0
        %1202 = vmatpush2.msra.mxu0 0.0
        %1203 = vmatprep.subr.mxu0 0.0
        %1204 = vmatpush2.msra.mxu0 0.0
        %1205 = vmatprep.subr.mxu0 0.0
        %1206 = vmatpush2.msra.mxu0 0.0
        %1207 = vmatprep.subr.mxu0 0.0
        %1208 = vmatpush2.msra.mxu0 0.0
        %1209 = vmatprep.subr.mxu0 0.0
        %1210 = vmatpush2.msra.mxu0 0.0
        %1211 = vmatprep.subr.mxu0 0.0
        %1212 = vmatpush2.msra.mxu0 0.0
        %1213 = vmatprep.subr.mxu0 0.0
        %1214 = vmatpush2.msra.mxu0 0.0
        %1215 = vmatprep.subr.mxu0 0.0
        %1216 = vmatpush2.msra.mxu0 0.0
        %1217 = vmatprep.subr.mxu0 0.0
        %1218 = vmatpush2.msra.mxu0 0.0
        %1219 = vmatprep.mubr.f32.mxu0 0.0
        %1220 = vmatmul.mubr.f32.gmra.mxu0 %v1019
        %v1221 = vpop.f32.mrf.mxu0
        %v1222 = vadd.f32 0.0, %v1221
        %v1223 = vpop.f32.mrf.mxu0
        %v1224 = vadd.f32 0.0, %v1223
        %1225 = vdwg.mxu0
        %v1226 = vadd.f32 %v1015, %v1151
        %v1227 = vadd.f32 %v1016, %v1153
        %v1228 = vadd.f32 %v1017, %v1222
        %v1229 = vadd.f32 %v1018, %v1224
        %v1230 = vxor.u32 %v1226, 2147483648
        %v1231 = vmul.f32 %v1230, 1.442695
        %v1232 = vpow.pop %v1231
        %v1233 = vadd.f32 %v1232, 1.0
        %v1234 = vrcp.pop %v1233
        %v1235 = vmul.f32 1.0, %v1234
        %v1236 = vxor.u32 %v1227, 2147483648
        %v1237 = vmul.f32 %v1236, 1.442695
        %v1238 = vpow.pop %v1237
        %v1239 = vadd.f32 %v1238, 1.0
        %v1240 = vrcp.pop %v1239
        %v1241 = vmul.f32 1.0, %v1240
        %v1242 = vtanh.pop %v1228
        %v1243 = vxor.u32 %v1229, 2147483648
        %v1244 = vmul.f32 %v1243, 1.442695
        %v1245 = vpow.pop %v1244
        %v1246 = vadd.f32 %v1245, 1.0
        %v1247 = vrcp.pop %v1246
        %v1248 = vmul.f32 1.0, %v1247
        %v1249 = vld [vmem:[#allocation3] sm:$0xff]
        %v1250 = vmul.f32 %v1241, %v1249
        %v1251 = vmul.f32 %v1235, %v1242
        %v1252 = vadd.f32 %v1250, %v1251
        %v1253 = vtanh.pop %v1252
        %v1254 = vmul.f32 %v1248, %v1253
        %1255 = vst [vmem:[#allocation3] sm:$0xff] %v1252
        %1256 = vst [vmem:[#allocation2] sm:$0xff] %v1254
        %s1257 = smul.u32 %s1011, 8
        %s1258 = scalar_lea.vmem %s259, %s1257 [#allocation7]
        %1259 = vst [vmem:[%s1258] sm:$0xff] %v1254
        %s1260 = scalar_select %p263, 4, 3
        %s1261 = smul.u32 %s1260, 4
        %s1262 = smul.addr %s1261, 8
        %s1263 = scalar_lea.vmem %s228, %s1262 [#allocation4]
        %v1264 = vld [vmem:[%s1263] sm:$0xff]
        %v1265 = vld [vmem:[%s1263 + $0x8] sm:$0xff]
        %v1266 = vld [vmem:[%s1263 + $0x10] sm:$0xff]
        %v1267 = vld [vmem:[%s1263 + $0x18] sm:$0xff]
        %v1268 = vld [vmem:[#allocation2] sm:$0xff]
        %v1269 = vld [vmem:[%s236] sm:$0xff]
        %v1270 = vld [vmem:[%s236 + $0x8] sm:$0xff]
        %v1271 = vld [vmem:[%s236 + $0x10] sm:$0xff]
        %v1272 = vld [vmem:[%s236 + $0x18] sm:$0xff]
        %v1273 = vld [vmem:[%s236 + $0x20] sm:$0xff]
        %v1274 = vld [vmem:[%s236 + $0x28] sm:$0xff]
        %v1275 = vld [vmem:[%s236 + $0x30] sm:$0xff]
        %v1276 = vld [vmem:[%s236 + $0x38] sm:$0xff]
        %v1277 = vld [vmem:[%s236 + $0x40] sm:$0xff]
        %v1278 = vld [vmem:[%s236 + $0x48] sm:$0xff]
        %v1279 = vld [vmem:[%s236 + $0x50] sm:$0xff]
        %v1280 = vld [vmem:[%s236 + $0x58] sm:$0xff]
        %v1281 = vld [vmem:[%s236 + $0x60] sm:$0xff]
        %v1282 = vld [vmem:[%s236 + $0x68] sm:$0xff]
        %v1283 = vld [vmem:[%s236 + $0x70] sm:$0xff]
        %v1284 = vld [vmem:[%s236 + $0x78] sm:$0xff]
        %v1285 = vld [vmem:[%s236 + $0x80] sm:$0xff]
        %v1286 = vld [vmem:[%s236 + $0x88] sm:$0xff]
        %v1287 = vld [vmem:[%s236 + $0x90] sm:$0xff]
        %v1288 = vld [vmem:[%s236 + $0x98] sm:$0xff]
        %v1289 = vld [vmem:[%s236 + $0xa0] sm:$0xff]
        %v1290 = vld [vmem:[%s236 + $0xa8] sm:$0xff]
        %v1291 = vld [vmem:[%s236 + $0xb0] sm:$0xff]
        %v1292 = vld [vmem:[%s236 + $0xb8] sm:$0xff]
        %v1293 = vld [vmem:[%s236 + $0xc0] sm:$0xff]
        %v1294 = vld [vmem:[%s236 + $0xc8] sm:$0xff]
        %v1295 = vld [vmem:[%s236 + $0xd0] sm:$0xff]
        %v1296 = vld [vmem:[%s236 + $0xd8] sm:$0xff]
        %v1297 = vld [vmem:[%s236 + $0xe0] sm:$0xff]
        %v1298 = vld [vmem:[%s236 + $0xe8] sm:$0xff]
        %v1299 = vld [vmem:[%s236 + $0xf0] sm:$0xff]
        %v1300 = vld [vmem:[%s236 + $0xf8] sm:$0xff]
        %v1301 = vld [vmem:[%s236 + $0x100] sm:$0xff]
        %v1302 = vld [vmem:[%s236 + $0x108] sm:$0xff]
        %v1303 = vld [vmem:[%s236 + $0x110] sm:$0xff]
        %v1304 = vld [vmem:[%s236 + $0x118] sm:$0xff]
        %v1305 = vld [vmem:[%s236 + $0x120] sm:$0xff]
        %v1306 = vld [vmem:[%s236 + $0x128] sm:$0xff]
        %v1307 = vld [vmem:[%s236 + $0x130] sm:$0xff]
        %v1308 = vld [vmem:[%s236 + $0x138] sm:$0xff]
        %v1309 = vld [vmem:[%s236 + $0x140] sm:$0xff]
        %v1310 = vld [vmem:[%s236 + $0x148] sm:$0xff]
        %v1311 = vld [vmem:[%s236 + $0x150] sm:$0xff]
        %v1312 = vld [vmem:[%s236 + $0x158] sm:$0xff]
        %v1313 = vld [vmem:[%s236 + $0x160] sm:$0xff]
        %v1314 = vld [vmem:[%s236 + $0x168] sm:$0xff]
        %v1315 = vld [vmem:[%s236 + $0x170] sm:$0xff]
        %v1316 = vld [vmem:[%s236 + $0x178] sm:$0xff]
        %v1317 = vld [vmem:[%s236 + $0x180] sm:$0xff]
        %v1318 = vld [vmem:[%s236 + $0x188] sm:$0xff]
        %v1319 = vld [vmem:[%s236 + $0x190] sm:$0xff]
        %v1320 = vld [vmem:[%s236 + $0x198] sm:$0xff]
        %v1321 = vld [vmem:[%s236 + $0x1a0] sm:$0xff]
        %v1322 = vld [vmem:[%s236 + $0x1a8] sm:$0xff]
        %v1323 = vld [vmem:[%s236 + $0x1b0] sm:$0xff]
        %v1324 = vld [vmem:[%s236 + $0x1b8] sm:$0xff]
        %v1325 = vld [vmem:[%s236 + $0x1c0] sm:$0xff]
        %v1326 = vld [vmem:[%s236 + $0x1c8] sm:$0xff]
        %v1327 = vld [vmem:[%s236 + $0x1d0] sm:$0xff]
        %v1328 = vld [vmem:[%s236 + $0x1d8] sm:$0xff]
        %v1329 = vld [vmem:[%s236 + $0x1e0] sm:$0xff]
        %v1330 = vld [vmem:[%s236 + $0x1e8] sm:$0xff]
        %v1331 = vld [vmem:[%s236 + $0x1f0] sm:$0xff]
        %v1332 = vld [vmem:[%s236 + $0x1f8] sm:$0xff]
        %1333 = vmatprep.subr.mxu0 %v1330
        %1334 = vmatpush1.msra.mxu0 %v1329
        %1335 = vmatprep.subr.mxu0 %v1326
        %1336 = vmatpush1.msra.mxu0 %v1325
        %1337 = vmatprep.subr.mxu0 %v1322
        %1338 = vmatpush1.msra.mxu0 %v1321
        %1339 = vmatprep.subr.mxu0 %v1318
        %1340 = vmatpush1.msra.mxu0 %v1317
        %1341 = vmatprep.subr.mxu0 %v1314
        %1342 = vmatpush1.msra.mxu0 %v1313
        %1343 = vmatprep.subr.mxu0 %v1310
        %1344 = vmatpush1.msra.mxu0 %v1309
        %1345 = vmatprep.subr.mxu0 %v1306
        %1346 = vmatpush1.msra.mxu0 %v1305
        %1347 = vmatprep.subr.mxu0 %v1302
        %1348 = vmatpush1.msra.mxu0 %v1301
        %1349 = vmatprep.subr.mxu0 %v1298
        %1350 = vmatpush1.msra.mxu0 %v1297
        %1351 = vmatprep.subr.mxu0 %v1294
        %1352 = vmatpush1.msra.mxu0 %v1293
        %1353 = vmatprep.subr.mxu0 %v1290
        %1354 = vmatpush1.msra.mxu0 %v1289
        %1355 = vmatprep.subr.mxu0 %v1286
        %1356 = vmatpush1.msra.mxu0 %v1285
        %1357 = vmatprep.subr.mxu0 %v1282
        %1358 = vmatpush1.msra.mxu0 %v1281
        %1359 = vmatprep.subr.mxu0 %v1278
        %1360 = vmatpush1.msra.mxu0 %v1277
        %1361 = vmatprep.subr.mxu0 %v1274
        %1362 = vmatpush1.msra.mxu0 %v1273
        %1363 = vmatprep.subr.mxu0 %v1270
        %1364 = vmatpush1.msra.mxu0 %v1269
        %1365 = vmatprep.subr.mxu0 0.0
        %1366 = vmatpush2.msra.mxu0 0.0
        %1367 = vmatprep.subr.mxu0 0.0
        %1368 = vmatpush2.msra.mxu0 0.0
        %1369 = vmatprep.subr.mxu0 0.0
        %1370 = vmatpush2.msra.mxu0 0.0
        %1371 = vmatprep.subr.mxu0 0.0
        %1372 = vmatpush2.msra.mxu0 0.0
        %1373 = vmatprep.subr.mxu0 0.0
        %1374 = vmatpush2.msra.mxu0 0.0
        %1375 = vmatprep.subr.mxu0 0.0
        %1376 = vmatpush2.msra.mxu0 0.0
        %1377 = vmatprep.subr.mxu0 0.0
        %1378 = vmatpush2.msra.mxu0 0.0
        %1379 = vmatprep.subr.mxu0 0.0
        %1380 = vmatpush2.msra.mxu0 0.0
        %1381 = vmatprep.subr.mxu0 0.0
        %1382 = vmatpush2.msra.mxu0 0.0
        %1383 = vmatprep.subr.mxu0 0.0
        %1384 = vmatpush2.msra.mxu0 0.0
        %1385 = vmatprep.subr.mxu0 0.0
        %1386 = vmatpush2.msra.mxu0 0.0
        %1387 = vmatprep.subr.mxu0 0.0
        %1388 = vmatpush2.msra.mxu0 0.0
        %1389 = vmatprep.subr.mxu0 0.0
        %1390 = vmatpush2.msra.mxu0 0.0
        %1391 = vmatprep.subr.mxu0 0.0
        %1392 = vmatpush2.msra.mxu0 0.0
        %1393 = vmatprep.subr.mxu0 0.0
        %1394 = vmatpush2.msra.mxu0 0.0
        %1395 = vmatprep.subr.mxu0 0.0
        %1396 = vmatpush2.msra.mxu0 0.0
        %1397 = vmatprep.mubr.f32.mxu0 0.0
        %1398 = vmatmul.mubr.f32.gmra.mxu0 %v1268
        %v1399 = vpop.f32.mrf.mxu0
        %v1400 = vadd.f32 0.0, %v1399
        %v1401 = vpop.f32.mrf.mxu0
        %v1402 = vadd.f32 0.0, %v1401
        %1403 = vdwg.mxu0
        %1404 = vmatprep.subr.mxu0 %v1332
        %1405 = vmatpush1.msra.mxu0 %v1331
        %1406 = vmatprep.subr.mxu0 %v1328
        %1407 = vmatpush1.msra.mxu0 %v1327
        %1408 = vmatprep.subr.mxu0 %v1324
        %1409 = vmatpush1.msra.mxu0 %v1323
        %1410 = vmatprep.subr.mxu0 %v1320
        %1411 = vmatpush1.msra.mxu0 %v1319
        %1412 = vmatprep.subr.mxu0 %v1316
        %1413 = vmatpush1.msra.mxu0 %v1315
        %1414 = vmatprep.subr.mxu0 %v1312
        %1415 = vmatpush1.msra.mxu0 %v1311
        %1416 = vmatprep.subr.mxu0 %v1308
        %1417 = vmatpush1.msra.mxu0 %v1307
        %1418 = vmatprep.subr.mxu0 %v1304
        %1419 = vmatpush1.msra.mxu0 %v1303
        %1420 = vmatprep.subr.mxu0 %v1300
        %1421 = vmatpush1.msra.mxu0 %v1299
        %1422 = vmatprep.subr.mxu0 %v1296
        %1423 = vmatpush1.msra.mxu0 %v1295
        %1424 = vmatprep.subr.mxu0 %v1292
        %1425 = vmatpush1.msra.mxu0 %v1291
        %1426 = vmatprep.subr.mxu0 %v1288
        %1427 = vmatpush1.msra.mxu0 %v1287
        %1428 = vmatprep.subr.mxu0 %v1284
        %1429 = vmatpush1.msra.mxu0 %v1283
        %1430 = vmatprep.subr.mxu0 %v1280
        %1431 = vmatpush1.msra.mxu0 %v1279
        %1432 = vmatprep.subr.mxu0 %v1276
        %1433 = vmatpush1.msra.mxu0 %v1275
        %1434 = vmatprep.subr.mxu0 %v1272
        %1435 = vmatpush1.msra.mxu0 %v1271
        %1436 = vmatprep.subr.mxu0 0.0
        %1437 = vmatpush2.msra.mxu0 0.0
        %1438 = vmatprep.subr.mxu0 0.0
        %1439 = vmatpush2.msra.mxu0 0.0
        %1440 = vmatprep.subr.mxu0 0.0
        %1441 = vmatpush2.msra.mxu0 0.0
        %1442 = vmatprep.subr.mxu0 0.0
        %1443 = vmatpush2.msra.mxu0 0.0
        %1444 = vmatprep.subr.mxu0 0.0
        %1445 = vmatpush2.msra.mxu0 0.0
        %1446 = vmatprep.subr.mxu0 0.0
        %1447 = vmatpush2.msra.mxu0 0.0
        %1448 = vmatprep.subr.mxu0 0.0
        %1449 = vmatpush2.msra.mxu0 0.0
        %1450 = vmatprep.subr.mxu0 0.0
        %1451 = vmatpush2.msra.mxu0 0.0
        %1452 = vmatprep.subr.mxu0 0.0
        %1453 = vmatpush2.msra.mxu0 0.0
        %1454 = vmatprep.subr.mxu0 0.0
        %1455 = vmatpush2.msra.mxu0 0.0
        %1456 = vmatprep.subr.mxu0 0.0
        %1457 = vmatpush2.msra.mxu0 0.0
        %1458 = vmatprep.subr.mxu0 0.0
        %1459 = vmatpush2.msra.mxu0 0.0
        %1460 = vmatprep.subr.mxu0 0.0
        %1461 = vmatpush2.msra.mxu0 0.0
        %1462 = vmatprep.subr.mxu0 0.0
        %1463 = vmatpush2.msra.mxu0 0.0
        %1464 = vmatprep.subr.mxu0 0.0
        %1465 = vmatpush2.msra.mxu0 0.0
        %1466 = vmatprep.subr.mxu0 0.0
        %1467 = vmatpush2.msra.mxu0 0.0
        %1468 = vmatprep.mubr.f32.mxu0 0.0
        %1469 = vmatmul.mubr.f32.gmra.mxu0 %v1268
        %v1470 = vpop.f32.mrf.mxu0
        %v1471 = vadd.f32 0.0, %v1470
        %v1472 = vpop.f32.mrf.mxu0
        %v1473 = vadd.f32 0.0, %v1472
        %1474 = vdwg.mxu0
        %v1475 = vadd.f32 %v1264, %v1400
        %v1476 = vadd.f32 %v1265, %v1402
        %v1477 = vadd.f32 %v1266, %v1471
        %v1478 = vadd.f32 %v1267, %v1473
        %v1479 = vxor.u32 %v1475, 2147483648
        %v1480 = vmul.f32 %v1479, 1.442695
        %v1481 = vpow.pop %v1480
        %v1482 = vadd.f32 %v1481, 1.0
        %v1483 = vrcp.pop %v1482
        %v1484 = vmul.f32 1.0, %v1483
        %v1485 = vxor.u32 %v1476, 2147483648
        %v1486 = vmul.f32 %v1485, 1.442695
        %v1487 = vpow.pop %v1486
        %v1488 = vadd.f32 %v1487, 1.0
        %v1489 = vrcp.pop %v1488
        %v1490 = vmul.f32 1.0, %v1489
        %v1491 = vtanh.pop %v1477
        %v1492 = vxor.u32 %v1478, 2147483648
        %v1493 = vmul.f32 %v1492, 1.442695
        %v1494 = vpow.pop %v1493
        %v1495 = vadd.f32 %v1494, 1.0
        %v1496 = vrcp.pop %v1495
        %v1497 = vmul.f32 1.0, %v1496
        %v1498 = vld [vmem:[#allocation3] sm:$0xff]
        %v1499 = vmul.f32 %v1490, %v1498
        %v1500 = vmul.f32 %v1484, %v1491
        %v1501 = vadd.f32 %v1499, %v1500
        %v1502 = vtanh.pop %v1501
        %v1503 = vmul.f32 %v1497, %v1502
        %1504 = vst [vmem:[#allocation3] sm:$0xff] %v1501
        %1505 = vst [vmem:[#allocation2] sm:$0xff] %v1503
        %s1506 = smul.u32 %s1260, 8
        %s1507 = scalar_lea.vmem %s259, %s1506 [#allocation7]
        %1508 = vst [vmem:[%s1507] sm:$0xff] %v1503
        %s1509 = scalar_select %p263, 5, 2
        %s1510 = smul.u32 %s1509, 4
        %s1511 = smul.addr %s1510, 8
        %s1512 = scalar_lea.vmem %s228, %s1511 [#allocation4]
        %v1513 = vld [vmem:[%s1512] sm:$0xff]
        %v1514 = vld [vmem:[%s1512 + $0x8] sm:$0xff]
        %v1515 = vld [vmem:[%s1512 + $0x10] sm:$0xff]
        %v1516 = vld [vmem:[%s1512 + $0x18] sm:$0xff]
        %v1517 = vld [vmem:[#allocation2] sm:$0xff]
        %v1518 = vld [vmem:[%s236] sm:$0xff]
        %v1519 = vld [vmem:[%s236 + $0x8] sm:$0xff]
        %v1520 = vld [vmem:[%s236 + $0x10] sm:$0xff]
        %v1521 = vld [vmem:[%s236 + $0x18] sm:$0xff]
        %v1522 = vld [vmem:[%s236 + $0x20] sm:$0xff]
        %v1523 = vld [vmem:[%s236 + $0x28] sm:$0xff]
        %v1524 = vld [vmem:[%s236 + $0x30] sm:$0xff]
        %v1525 = vld [vmem:[%s236 + $0x38] sm:$0xff]
        %v1526 = vld [vmem:[%s236 + $0x40] sm:$0xff]
        %v1527 = vld [vmem:[%s236 + $0x48] sm:$0xff]
        %v1528 = vld [vmem:[%s236 + $0x50] sm:$0xff]
        %v1529 = vld [vmem:[%s236 + $0x58] sm:$0xff]
        %v1530 = vld [vmem:[%s236 + $0x60] sm:$0xff]
        %v1531 = vld [vmem:[%s236 + $0x68] sm:$0xff]
        %v1532 = vld [vmem:[%s236 + $0x70] sm:$0xff]
        %v1533 = vld [vmem:[%s236 + $0x78] sm:$0xff]
        %v1534 = vld [vmem:[%s236 + $0x80] sm:$0xff]
        %v1535 = vld [vmem:[%s236 + $0x88] sm:$0xff]
        %v1536 = vld [vmem:[%s236 + $0x90] sm:$0xff]
        %v1537 = vld [vmem:[%s236 + $0x98] sm:$0xff]
        %v1538 = vld [vmem:[%s236 + $0xa0] sm:$0xff]
        %v1539 = vld [vmem:[%s236 + $0xa8] sm:$0xff]
        %v1540 = vld [vmem:[%s236 + $0xb0] sm:$0xff]
        %v1541 = vld [vmem:[%s236 + $0xb8] sm:$0xff]
        %v1542 = vld [vmem:[%s236 + $0xc0] sm:$0xff]
        %v1543 = vld [vmem:[%s236 + $0xc8] sm:$0xff]
        %v1544 = vld [vmem:[%s236 + $0xd0] sm:$0xff]
        %v1545 = vld [vmem:[%s236 + $0xd8] sm:$0xff]
        %v1546 = vld [vmem:[%s236 + $0xe0] sm:$0xff]
        %v1547 = vld [vmem:[%s236 + $0xe8] sm:$0xff]
        %v1548 = vld [vmem:[%s236 + $0xf0] sm:$0xff]
        %v1549 = vld [vmem:[%s236 + $0xf8] sm:$0xff]
        %v1550 = vld [vmem:[%s236 + $0x100] sm:$0xff]
        %v1551 = vld [vmem:[%s236 + $0x108] sm:$0xff]
        %v1552 = vld [vmem:[%s236 + $0x110] sm:$0xff]
        %v1553 = vld [vmem:[%s236 + $0x118] sm:$0xff]
        %v1554 = vld [vmem:[%s236 + $0x120] sm:$0xff]
        %v1555 = vld [vmem:[%s236 + $0x128] sm:$0xff]
        %v1556 = vld [vmem:[%s236 + $0x130] sm:$0xff]
        %v1557 = vld [vmem:[%s236 + $0x138] sm:$0xff]
        %v1558 = vld [vmem:[%s236 + $0x140] sm:$0xff]
        %v1559 = vld [vmem:[%s236 + $0x148] sm:$0xff]
        %v1560 = vld [vmem:[%s236 + $0x150] sm:$0xff]
        %v1561 = vld [vmem:[%s236 + $0x158] sm:$0xff]
        %v1562 = vld [vmem:[%s236 + $0x160] sm:$0xff]
        %v1563 = vld [vmem:[%s236 + $0x168] sm:$0xff]
        %v1564 = vld [vmem:[%s236 + $0x170] sm:$0xff]
        %v1565 = vld [vmem:[%s236 + $0x178] sm:$0xff]
        %v1566 = vld [vmem:[%s236 + $0x180] sm:$0xff]
        %v1567 = vld [vmem:[%s236 + $0x188] sm:$0xff]
        %v1568 = vld [vmem:[%s236 + $0x190] sm:$0xff]
        %v1569 = vld [vmem:[%s236 + $0x198] sm:$0xff]
        %v1570 = vld [vmem:[%s236 + $0x1a0] sm:$0xff]
        %v1571 = vld [vmem:[%s236 + $0x1a8] sm:$0xff]
        %v1572 = vld [vmem:[%s236 + $0x1b0] sm:$0xff]
        %v1573 = vld [vmem:[%s236 + $0x1b8] sm:$0xff]
        %v1574 = vld [vmem:[%s236 + $0x1c0] sm:$0xff]
        %v1575 = vld [vmem:[%s236 + $0x1c8] sm:$0xff]
        %v1576 = vld [vmem:[%s236 + $0x1d0] sm:$0xff]
        %v1577 = vld [vmem:[%s236 + $0x1d8] sm:$0xff]
        %v1578 = vld [vmem:[%s236 + $0x1e0] sm:$0xff]
        %v1579 = vld [vmem:[%s236 + $0x1e8] sm:$0xff]
        %v1580 = vld [vmem:[%s236 + $0x1f0] sm:$0xff]
        %v1581 = vld [vmem:[%s236 + $0x1f8] sm:$0xff]
        %1582 = vmatprep.subr.mxu0 %v1579
        %1583 = vmatpush1.msra.mxu0 %v1578
        %1584 = vmatprep.subr.mxu0 %v1575
        %1585 = vmatpush1.msra.mxu0 %v1574
        %1586 = vmatprep.subr.mxu0 %v1571
        %1587 = vmatpush1.msra.mxu0 %v1570
        %1588 = vmatprep.subr.mxu0 %v1567
        %1589 = vmatpush1.msra.mxu0 %v1566
        %1590 = vmatprep.subr.mxu0 %v1563
        %1591 = vmatpush1.msra.mxu0 %v1562
        %1592 = vmatprep.subr.mxu0 %v1559
        %1593 = vmatpush1.msra.mxu0 %v1558
        %1594 = vmatprep.subr.mxu0 %v1555
        %1595 = vmatpush1.msra.mxu0 %v1554
        %1596 = vmatprep.subr.mxu0 %v1551
        %1597 = vmatpush1.msra.mxu0 %v1550
        %1598 = vmatprep.subr.mxu0 %v1547
        %1599 = vmatpush1.msra.mxu0 %v1546
        %1600 = vmatprep.subr.mxu0 %v1543
        %1601 = vmatpush1.msra.mxu0 %v1542
        %1602 = vmatprep.subr.mxu0 %v1539
        %1603 = vmatpush1.msra.mxu0 %v1538
        %1604 = vmatprep.subr.mxu0 %v1535
        %1605 = vmatpush1.msra.mxu0 %v1534
        %1606 = vmatprep.subr.mxu0 %v1531
        %1607 = vmatpush1.msra.mxu0 %v1530
        %1608 = vmatprep.subr.mxu0 %v1527
        %1609 = vmatpush1.msra.mxu0 %v1526
        %1610 = vmatprep.subr.mxu0 %v1523
        %1611 = vmatpush1.msra.mxu0 %v1522
        %1612 = vmatprep.subr.mxu0 %v1519
        %1613 = vmatpush1.msra.mxu0 %v1518
        %1614 = vmatprep.subr.mxu0 0.0
        %1615 = vmatpush2.msra.mxu0 0.0
        %1616 = vmatprep.subr.mxu0 0.0
        %1617 = vmatpush2.msra.mxu0 0.0
        %1618 = vmatprep.subr.mxu0 0.0
        %1619 = vmatpush2.msra.mxu0 0.0
        %1620 = vmatprep.subr.mxu0 0.0
        %1621 = vmatpush2.msra.mxu0 0.0
        %1622 = vmatprep.subr.mxu0 0.0
        %1623 = vmatpush2.msra.mxu0 0.0
        %1624 = vmatprep.subr.mxu0 0.0
        %1625 = vmatpush2.msra.mxu0 0.0
        %1626 = vmatprep.subr.mxu0 0.0
        %1627 = vmatpush2.msra.mxu0 0.0
        %1628 = vmatprep.subr.mxu0 0.0
        %1629 = vmatpush2.msra.mxu0 0.0
        %1630 = vmatprep.subr.mxu0 0.0
        %1631 = vmatpush2.msra.mxu0 0.0
        %1632 = vmatprep.subr.mxu0 0.0
        %1633 = vmatpush2.msra.mxu0 0.0
        %1634 = vmatprep.subr.mxu0 0.0
        %1635 = vmatpush2.msra.mxu0 0.0
        %1636 = vmatprep.subr.mxu0 0.0
        %1637 = vmatpush2.msra.mxu0 0.0
        %1638 = vmatprep.subr.mxu0 0.0
        %1639 = vmatpush2.msra.mxu0 0.0
        %1640 = vmatprep.subr.mxu0 0.0
        %1641 = vmatpush2.msra.mxu0 0.0
        %1642 = vmatprep.subr.mxu0 0.0
        %1643 = vmatpush2.msra.mxu0 0.0
        %1644 = vmatprep.subr.mxu0 0.0
        %1645 = vmatpush2.msra.mxu0 0.0
        %1646 = vmatprep.mubr.f32.mxu0 0.0
        %1647 = vmatmul.mubr.f32.gmra.mxu0 %v1517
        %v1648 = vpop.f32.mrf.mxu0
        %v1649 = vadd.f32 0.0, %v1648
        %v1650 = vpop.f32.mrf.mxu0
        %v1651 = vadd.f32 0.0, %v1650
        %1652 = vdwg.mxu0
        %1653 = vmatprep.subr.mxu0 %v1581
        %1654 = vmatpush1.msra.mxu0 %v1580
        %1655 = vmatprep.subr.mxu0 %v1577
        %1656 = vmatpush1.msra.mxu0 %v1576
        %1657 = vmatprep.subr.mxu0 %v1573
        %1658 = vmatpush1.msra.mxu0 %v1572
        %1659 = vmatprep.subr.mxu0 %v1569
        %1660 = vmatpush1.msra.mxu0 %v1568
        %1661 = vmatprep.subr.mxu0 %v1565
        %1662 = vmatpush1.msra.mxu0 %v1564
        %1663 = vmatprep.subr.mxu0 %v1561
        %1664 = vmatpush1.msra.mxu0 %v1560
        %1665 = vmatprep.subr.mxu0 %v1557
        %1666 = vmatpush1.msra.mxu0 %v1556
        %1667 = vmatprep.subr.mxu0 %v1553
        %1668 = vmatpush1.msra.mxu0 %v1552
        %1669 = vmatprep.subr.mxu0 %v1549
        %1670 = vmatpush1.msra.mxu0 %v1548
        %1671 = vmatprep.subr.mxu0 %v1545
        %1672 = vmatpush1.msra.mxu0 %v1544
        %1673 = vmatprep.subr.mxu0 %v1541
        %1674 = vmatpush1.msra.mxu0 %v1540
        %1675 = vmatprep.subr.mxu0 %v1537
        %1676 = vmatpush1.msra.mxu0 %v1536
        %1677 = vmatprep.subr.mxu0 %v1533
        %1678 = vmatpush1.msra.mxu0 %v1532
        %1679 = vmatprep.subr.mxu0 %v1529
        %1680 = vmatpush1.msra.mxu0 %v1528
        %1681 = vmatprep.subr.mxu0 %v1525
        %1682 = vmatpush1.msra.mxu0 %v1524
        %1683 = vmatprep.subr.mxu0 %v1521
        %1684 = vmatpush1.msra.mxu0 %v1520
        %1685 = vmatprep.subr.mxu0 0.0
        %1686 = vmatpush2.msra.mxu0 0.0
        %1687 = vmatprep.subr.mxu0 0.0
        %1688 = vmatpush2.msra.mxu0 0.0
        %1689 = vmatprep.subr.mxu0 0.0
        %1690 = vmatpush2.msra.mxu0 0.0
        %1691 = vmatprep.subr.mxu0 0.0
        %1692 = vmatpush2.msra.mxu0 0.0
        %1693 = vmatprep.subr.mxu0 0.0
        %1694 = vmatpush2.msra.mxu0 0.0
        %1695 = vmatprep.subr.mxu0 0.0
        %1696 = vmatpush2.msra.mxu0 0.0
        %1697 = vmatprep.subr.mxu0 0.0
        %1698 = vmatpush2.msra.mxu0 0.0
        %1699 = vmatprep.subr.mxu0 0.0
        %1700 = vmatpush2.msra.mxu0 0.0
        %1701 = vmatprep.subr.mxu0 0.0
        %1702 = vmatpush2.msra.mxu0 0.0
        %1703 = vmatprep.subr.mxu0 0.0
        %1704 = vmatpush2.msra.mxu0 0.0
        %1705 = vmatprep.subr.mxu0 0.0
        %1706 = vmatpush2.msra.mxu0 0.0
        %1707 = vmatprep.subr.mxu0 0.0
        %1708 = vmatpush2.msra.mxu0 0.0
        %1709 = vmatprep.subr.mxu0 0.0
        %1710 = vmatpush2.msra.mxu0 0.0
        %1711 = vmatprep.subr.mxu0 0.0
        %1712 = vmatpush2.msra.mxu0 0.0
        %1713 = vmatprep.subr.mxu0 0.0
        %1714 = vmatpush2.msra.mxu0 0.0
        %1715 = vmatprep.subr.mxu0 0.0
        %1716 = vmatpush2.msra.mxu0 0.0
        %1717 = vmatprep.mubr.f32.mxu0 0.0
        %1718 = vmatmul.mubr.f32.gmra.mxu0 %v1517
        %v1719 = vpop.f32.mrf.mxu0
        %v1720 = vadd.f32 0.0, %v1719
        %v1721 = vpop.f32.mrf.mxu0
        %v1722 = vadd.f32 0.0, %v1721
        %1723 = vdwg.mxu0
        %v1724 = vadd.f32 %v1513, %v1649
        %v1725 = vadd.f32 %v1514, %v1651
        %v1726 = vadd.f32 %v1515, %v1720
        %v1727 = vadd.f32 %v1516, %v1722
        %v1728 = vxor.u32 %v1724, 2147483648
        %v1729 = vmul.f32 %v1728, 1.442695
        %v1730 = vpow.pop %v1729
        %v1731 = vadd.f32 %v1730, 1.0
        %v1732 = vrcp.pop %v1731
        %v1733 = vmul.f32 1.0, %v1732
        %v1734 = vxor.u32 %v1725, 2147483648
        %v1735 = vmul.f32 %v1734, 1.442695
        %v1736 = vpow.pop %v1735
        %v1737 = vadd.f32 %v1736, 1.0
        %v1738 = vrcp.pop %v1737
        %v1739 = vmul.f32 1.0, %v1738
        %v1740 = vtanh.pop %v1726
        %v1741 = vxor.u32 %v1727, 2147483648
        %v1742 = vmul.f32 %v1741, 1.442695
        %v1743 = vpow.pop %v1742
        %v1744 = vadd.f32 %v1743, 1.0
        %v1745 = vrcp.pop %v1744
        %v1746 = vmul.f32 1.0, %v1745
        %v1747 = vld [vmem:[#allocation3] sm:$0xff]
        %v1748 = vmul.f32 %v1739, %v1747
        %v1749 = vmul.f32 %v1733, %v1740
        %v1750 = vadd.f32 %v1748, %v1749
        %v1751 = vtanh.pop %v1750
        %v1752 = vmul.f32 %v1746, %v1751
        %1753 = vst [vmem:[#allocation3] sm:$0xff] %v1750
        %1754 = vst [vmem:[#allocation2] sm:$0xff] %v1752
        %s1755 = smul.u32 %s1509, 8
        %s1756 = scalar_lea.vmem %s259, %s1755 [#allocation7]
        %1757 = vst [vmem:[%s1756] sm:$0xff] %v1752
        %s1758 = scalar_select %p263, 6, 1
        %s1759 = smul.u32 %s1758, 4
        %s1760 = smul.addr %s1759, 8
        %s1761 = scalar_lea.vmem %s228, %s1760 [#allocation4]
        %v1762 = vld [vmem:[%s1761] sm:$0xff]
        %v1763 = vld [vmem:[%s1761 + $0x8] sm:$0xff]
        %v1764 = vld [vmem:[%s1761 + $0x10] sm:$0xff]
        %v1765 = vld [vmem:[%s1761 + $0x18] sm:$0xff]
        %v1766 = vld [vmem:[#allocation2] sm:$0xff]
        %v1767 = vld [vmem:[%s236] sm:$0xff]
        %v1768 = vld [vmem:[%s236 + $0x8] sm:$0xff]
        %v1769 = vld [vmem:[%s236 + $0x10] sm:$0xff]
        %v1770 = vld [vmem:[%s236 + $0x18] sm:$0xff]
        %v1771 = vld [vmem:[%s236 + $0x20] sm:$0xff]
        %v1772 = vld [vmem:[%s236 + $0x28] sm:$0xff]
        %v1773 = vld [vmem:[%s236 + $0x30] sm:$0xff]
        %v1774 = vld [vmem:[%s236 + $0x38] sm:$0xff]
        %v1775 = vld [vmem:[%s236 + $0x40] sm:$0xff]
        %v1776 = vld [vmem:[%s236 + $0x48] sm:$0xff]
        %v1777 = vld [vmem:[%s236 + $0x50] sm:$0xff]
        %v1778 = vld [vmem:[%s236 + $0x58] sm:$0xff]
        %v1779 = vld [vmem:[%s236 + $0x60] sm:$0xff]
        %v1780 = vld [vmem:[%s236 + $0x68] sm:$0xff]
        %v1781 = vld [vmem:[%s236 + $0x70] sm:$0xff]
        %v1782 = vld [vmem:[%s236 + $0x78] sm:$0xff]
        %v1783 = vld [vmem:[%s236 + $0x80] sm:$0xff]
        %v1784 = vld [vmem:[%s236 + $0x88] sm:$0xff]
        %v1785 = vld [vmem:[%s236 + $0x90] sm:$0xff]
        %v1786 = vld [vmem:[%s236 + $0x98] sm:$0xff]
        %v1787 = vld [vmem:[%s236 + $0xa0] sm:$0xff]
        %v1788 = vld [vmem:[%s236 + $0xa8] sm:$0xff]
        %v1789 = vld [vmem:[%s236 + $0xb0] sm:$0xff]
        %v1790 = vld [vmem:[%s236 + $0xb8] sm:$0xff]
        %v1791 = vld [vmem:[%s236 + $0xc0] sm:$0xff]
        %v1792 = vld [vmem:[%s236 + $0xc8] sm:$0xff]
        %v1793 = vld [vmem:[%s236 + $0xd0] sm:$0xff]
        %v1794 = vld [vmem:[%s236 + $0xd8] sm:$0xff]
        %v1795 = vld [vmem:[%s236 + $0xe0] sm:$0xff]
        %v1796 = vld [vmem:[%s236 + $0xe8] sm:$0xff]
        %v1797 = vld [vmem:[%s236 + $0xf0] sm:$0xff]
        %v1798 = vld [vmem:[%s236 + $0xf8] sm:$0xff]
        %v1799 = vld [vmem:[%s236 + $0x100] sm:$0xff]
        %v1800 = vld [vmem:[%s236 + $0x108] sm:$0xff]
        %v1801 = vld [vmem:[%s236 + $0x110] sm:$0xff]
        %v1802 = vld [vmem:[%s236 + $0x118] sm:$0xff]
        %v1803 = vld [vmem:[%s236 + $0x120] sm:$0xff]
        %v1804 = vld [vmem:[%s236 + $0x128] sm:$0xff]
        %v1805 = vld [vmem:[%s236 + $0x130] sm:$0xff]
        %v1806 = vld [vmem:[%s236 + $0x138] sm:$0xff]
        %v1807 = vld [vmem:[%s236 + $0x140] sm:$0xff]
        %v1808 = vld [vmem:[%s236 + $0x148] sm:$0xff]
        %v1809 = vld [vmem:[%s236 + $0x150] sm:$0xff]
        %v1810 = vld [vmem:[%s236 + $0x158] sm:$0xff]
        %v1811 = vld [vmem:[%s236 + $0x160] sm:$0xff]
        %v1812 = vld [vmem:[%s236 + $0x168] sm:$0xff]
        %v1813 = vld [vmem:[%s236 + $0x170] sm:$0xff]
        %v1814 = vld [vmem:[%s236 + $0x178] sm:$0xff]
        %v1815 = vld [vmem:[%s236 + $0x180] sm:$0xff]
        %v1816 = vld [vmem:[%s236 + $0x188] sm:$0xff]
        %v1817 = vld [vmem:[%s236 + $0x190] sm:$0xff]
        %v1818 = vld [vmem:[%s236 + $0x198] sm:$0xff]
        %v1819 = vld [vmem:[%s236 + $0x1a0] sm:$0xff]
        %v1820 = vld [vmem:[%s236 + $0x1a8] sm:$0xff]
        %v1821 = vld [vmem:[%s236 + $0x1b0] sm:$0xff]
        %v1822 = vld [vmem:[%s236 + $0x1b8] sm:$0xff]
        %v1823 = vld [vmem:[%s236 + $0x1c0] sm:$0xff]
        %v1824 = vld [vmem:[%s236 + $0x1c8] sm:$0xff]
        %v1825 = vld [vmem:[%s236 + $0x1d0] sm:$0xff]
        %v1826 = vld [vmem:[%s236 + $0x1d8] sm:$0xff]
        %v1827 = vld [vmem:[%s236 + $0x1e0] sm:$0xff]
        %v1828 = vld [vmem:[%s236 + $0x1e8] sm:$0xff]
        %v1829 = vld [vmem:[%s236 + $0x1f0] sm:$0xff]
        %v1830 = vld [vmem:[%s236 + $0x1f8] sm:$0xff]
        %1831 = vmatprep.subr.mxu0 %v1828
        %1832 = vmatpush1.msra.mxu0 %v1827
        %1833 = vmatprep.subr.mxu0 %v1824
        %1834 = vmatpush1.msra.mxu0 %v1823
        %1835 = vmatprep.subr.mxu0 %v1820
        %1836 = vmatpush1.msra.mxu0 %v1819
        %1837 = vmatprep.subr.mxu0 %v1816
        %1838 = vmatpush1.msra.mxu0 %v1815
        %1839 = vmatprep.subr.mxu0 %v1812
        %1840 = vmatpush1.msra.mxu0 %v1811
        %1841 = vmatprep.subr.mxu0 %v1808
        %1842 = vmatpush1.msra.mxu0 %v1807
        %1843 = vmatprep.subr.mxu0 %v1804
        %1844 = vmatpush1.msra.mxu0 %v1803
        %1845 = vmatprep.subr.mxu0 %v1800
        %1846 = vmatpush1.msra.mxu0 %v1799
        %1847 = vmatprep.subr.mxu0 %v1796
        %1848 = vmatpush1.msra.mxu0 %v1795
        %1849 = vmatprep.subr.mxu0 %v1792
        %1850 = vmatpush1.msra.mxu0 %v1791
        %1851 = vmatprep.subr.mxu0 %v1788
        %1852 = vmatpush1.msra.mxu0 %v1787
        %1853 = vmatprep.subr.mxu0 %v1784
        %1854 = vmatpush1.msra.mxu0 %v1783
        %1855 = vmatprep.subr.mxu0 %v1780
        %1856 = vmatpush1.msra.mxu0 %v1779
        %1857 = vmatprep.subr.mxu0 %v1776
        %1858 = vmatpush1.msra.mxu0 %v1775
        %1859 = vmatprep.subr.mxu0 %v1772
        %1860 = vmatpush1.msra.mxu0 %v1771
        %1861 = vmatprep.subr.mxu0 %v1768
        %1862 = vmatpush1.msra.mxu0 %v1767
        %1863 = vmatprep.subr.mxu0 0.0
        %1864 = vmatpush2.msra.mxu0 0.0
        %1865 = vmatprep.subr.mxu0 0.0
        %1866 = vmatpush2.msra.mxu0 0.0
        %1867 = vmatprep.subr.mxu0 0.0
        %1868 = vmatpush2.msra.mxu0 0.0
        %1869 = vmatprep.subr.mxu0 0.0
        %1870 = vmatpush2.msra.mxu0 0.0
        %1871 = vmatprep.subr.mxu0 0.0
        %1872 = vmatpush2.msra.mxu0 0.0
        %1873 = vmatprep.subr.mxu0 0.0
        %1874 = vmatpush2.msra.mxu0 0.0
        %1875 = vmatprep.subr.mxu0 0.0
        %1876 = vmatpush2.msra.mxu0 0.0
        %1877 = vmatprep.subr.mxu0 0.0
        %1878 = vmatpush2.msra.mxu0 0.0
        %1879 = vmatprep.subr.mxu0 0.0
        %1880 = vmatpush2.msra.mxu0 0.0
        %1881 = vmatprep.subr.mxu0 0.0
        %1882 = vmatpush2.msra.mxu0 0.0
        %1883 = vmatprep.subr.mxu0 0.0
        %1884 = vmatpush2.msra.mxu0 0.0
        %1885 = vmatprep.subr.mxu0 0.0
        %1886 = vmatpush2.msra.mxu0 0.0
        %1887 = vmatprep.subr.mxu0 0.0
        %1888 = vmatpush2.msra.mxu0 0.0
        %1889 = vmatprep.subr.mxu0 0.0
        %1890 = vmatpush2.msra.mxu0 0.0
        %1891 = vmatprep.subr.mxu0 0.0
        %1892 = vmatpush2.msra.mxu0 0.0
        %1893 = vmatprep.subr.mxu0 0.0
        %1894 = vmatpush2.msra.mxu0 0.0
        %1895 = vmatprep.mubr.f32.mxu0 0.0
        %1896 = vmatmul.mubr.f32.gmra.mxu0 %v1766
        %v1897 = vpop.f32.mrf.mxu0
        %v1898 = vadd.f32 0.0, %v1897
        %v1899 = vpop.f32.mrf.mxu0
        %v1900 = vadd.f32 0.0, %v1899
        %1901 = vdwg.mxu0
        %1902 = vmatprep.subr.mxu0 %v1830
        %1903 = vmatpush1.msra.mxu0 %v1829
        %1904 = vmatprep.subr.mxu0 %v1826
        %1905 = vmatpush1.msra.mxu0 %v1825
        %1906 = vmatprep.subr.mxu0 %v1822
        %1907 = vmatpush1.msra.mxu0 %v1821
        %1908 = vmatprep.subr.mxu0 %v1818
        %1909 = vmatpush1.msra.mxu0 %v1817
        %1910 = vmatprep.subr.mxu0 %v1814
        %1911 = vmatpush1.msra.mxu0 %v1813
        %1912 = vmatprep.subr.mxu0 %v1810
        %1913 = vmatpush1.msra.mxu0 %v1809
        %1914 = vmatprep.subr.mxu0 %v1806
        %1915 = vmatpush1.msra.mxu0 %v1805
        %1916 = vmatprep.subr.mxu0 %v1802
        %1917 = vmatpush1.msra.mxu0 %v1801
        %1918 = vmatprep.subr.mxu0 %v1798
        %1919 = vmatpush1.msra.mxu0 %v1797
        %1920 = vmatprep.subr.mxu0 %v1794
        %1921 = vmatpush1.msra.mxu0 %v1793
        %1922 = vmatprep.subr.mxu0 %v1790
        %1923 = vmatpush1.msra.mxu0 %v1789
        %1924 = vmatprep.subr.mxu0 %v1786
        %1925 = vmatpush1.msra.mxu0 %v1785
        %1926 = vmatprep.subr.mxu0 %v1782
        %1927 = vmatpush1.msra.mxu0 %v1781
        %1928 = vmatprep.subr.mxu0 %v1778
        %1929 = vmatpush1.msra.mxu0 %v1777
        %1930 = vmatprep.subr.mxu0 %v1774
        %1931 = vmatpush1.msra.mxu0 %v1773
        %1932 = vmatprep.subr.mxu0 %v1770
        %1933 = vmatpush1.msra.mxu0 %v1769
        %1934 = vmatprep.subr.mxu0 0.0
        %1935 = vmatpush2.msra.mxu0 0.0
        %1936 = vmatprep.subr.mxu0 0.0
        %1937 = vmatpush2.msra.mxu0 0.0
        %1938 = vmatprep.subr.mxu0 0.0
        %1939 = vmatpush2.msra.mxu0 0.0
        %1940 = vmatprep.subr.mxu0 0.0
        %1941 = vmatpush2.msra.mxu0 0.0
        %1942 = vmatprep.subr.mxu0 0.0
        %1943 = vmatpush2.msra.mxu0 0.0
        %1944 = vmatprep.subr.mxu0 0.0
        %1945 = vmatpush2.msra.mxu0 0.0
        %1946 = vmatprep.subr.mxu0 0.0
        %1947 = vmatpush2.msra.mxu0 0.0
        %1948 = vmatprep.subr.mxu0 0.0
        %1949 = vmatpush2.msra.mxu0 0.0
        %1950 = vmatprep.subr.mxu0 0.0
        %1951 = vmatpush2.msra.mxu0 0.0
        %1952 = vmatprep.subr.mxu0 0.0
        %1953 = vmatpush2.msra.mxu0 0.0
        %1954 = vmatprep.subr.mxu0 0.0
        %1955 = vmatpush2.msra.mxu0 0.0
        %1956 = vmatprep.subr.mxu0 0.0
        %1957 = vmatpush2.msra.mxu0 0.0
        %1958 = vmatprep.subr.mxu0 0.0
        %1959 = vmatpush2.msra.mxu0 0.0
        %1960 = vmatprep.subr.mxu0 0.0
        %1961 = vmatpush2.msra.mxu0 0.0
        %1962 = vmatprep.subr.mxu0 0.0
        %1963 = vmatpush2.msra.mxu0 0.0
        %1964 = vmatprep.subr.mxu0 0.0
        %1965 = vmatpush2.msra.mxu0 0.0
        %1966 = vmatprep.mubr.f32.mxu0 0.0
        %1967 = vmatmul.mubr.f32.gmra.mxu0 %v1766
        %v1968 = vpop.f32.mrf.mxu0
        %v1969 = vadd.f32 0.0, %v1968
        %v1970 = vpop.f32.mrf.mxu0
        %v1971 = vadd.f32 0.0, %v1970
        %1972 = vdwg.mxu0
        %v1973 = vadd.f32 %v1762, %v1898
        %v1974 = vadd.f32 %v1763, %v1900
        %v1975 = vadd.f32 %v1764, %v1969
        %v1976 = vadd.f32 %v1765, %v1971
        %v1977 = vxor.u32 %v1973, 2147483648
        %v1978 = vmul.f32 %v1977, 1.442695
        %v1979 = vpow.pop %v1978
        %v1980 = vadd.f32 %v1979, 1.0
        %v1981 = vrcp.pop %v1980
        %v1982 = vmul.f32 1.0, %v1981
        %v1983 = vxor.u32 %v1974, 2147483648
        %v1984 = vmul.f32 %v1983, 1.442695
        %v1985 = vpow.pop %v1984
        %v1986 = vadd.f32 %v1985, 1.0
        %v1987 = vrcp.pop %v1986
        %v1988 = vmul.f32 1.0, %v1987
        %v1989 = vtanh.pop %v1975
        %v1990 = vxor.u32 %v1976, 2147483648
        %v1991 = vmul.f32 %v1990, 1.442695
        %v1992 = vpow.pop %v1991
        %v1993 = vadd.f32 %v1992, 1.0
        %v1994 = vrcp.pop %v1993
        %v1995 = vmul.f32 1.0, %v1994
        %v1996 = vld [vmem:[#allocation3] sm:$0xff]
        %v1997 = vmul.f32 %v1988, %v1996
        %v1998 = vmul.f32 %v1982, %v1989
        %v1999 = vadd.f32 %v1997, %v1998
        %v2000 = vtanh.pop %v1999
        %v2001 = vmul.f32 %v1995, %v2000
        %2002 = vst [vmem:[#allocation3] sm:$0xff] %v1999
        %2003 = vst [vmem:[#allocation2] sm:$0xff] %v2001
        %s2004 = smul.u32 %s1758, 8
        %s2005 = scalar_lea.vmem %s259, %s2004 [#allocation7]
        %2006 = vst [vmem:[%s2005] sm:$0xff] %v2001
        %s2007 = scalar_select %p263, 7, 0
        %s2008 = smul.u32 %s2007, 4
        %s2009 = smul.addr %s2008, 8
        %s2010 = scalar_lea.vmem %s228, %s2009 [#allocation4]
        %v2011 = vld [vmem:[%s2010] sm:$0xff]
        %v2012 = vld [vmem:[%s2010 + $0x8] sm:$0xff]
        %v2013 = vld [vmem:[%s2010 + $0x10] sm:$0xff]
        %v2014 = vld [vmem:[%s2010 + $0x18] sm:$0xff]
        %v2015 = vld [vmem:[#allocation2] sm:$0xff]
        %v2016 = vld [vmem:[%s236] sm:$0xff]
        %v2017 = vld [vmem:[%s236 + $0x8] sm:$0xff]
        %v2018 = vld [vmem:[%s236 + $0x10] sm:$0xff]
        %v2019 = vld [vmem:[%s236 + $0x18] sm:$0xff]
        %v2020 = vld [vmem:[%s236 + $0x20] sm:$0xff]
        %v2021 = vld [vmem:[%s236 + $0x28] sm:$0xff]
        %v2022 = vld [vmem:[%s236 + $0x30] sm:$0xff]
        %v2023 = vld [vmem:[%s236 + $0x38] sm:$0xff]
        %v2024 = vld [vmem:[%s236 + $0x40] sm:$0xff]
        %v2025 = vld [vmem:[%s236 + $0x48] sm:$0xff]
        %v2026 = vld [vmem:[%s236 + $0x50] sm:$0xff]
        %v2027 = vld [vmem:[%s236 + $0x58] sm:$0xff]
        %v2028 = vld [vmem:[%s236 + $0x60] sm:$0xff]
        %v2029 = vld [vmem:[%s236 + $0x68] sm:$0xff]
        %v2030 = vld [vmem:[%s236 + $0x70] sm:$0xff]
        %v2031 = vld [vmem:[%s236 + $0x78] sm:$0xff]
        %v2032 = vld [vmem:[%s236 + $0x80] sm:$0xff]
        %v2033 = vld [vmem:[%s236 + $0x88] sm:$0xff]
        %v2034 = vld [vmem:[%s236 + $0x90] sm:$0xff]
        %v2035 = vld [vmem:[%s236 + $0x98] sm:$0xff]
        %v2036 = vld [vmem:[%s236 + $0xa0] sm:$0xff]
        %v2037 = vld [vmem:[%s236 + $0xa8] sm:$0xff]
        %v2038 = vld [vmem:[%s236 + $0xb0] sm:$0xff]
        %v2039 = vld [vmem:[%s236 + $0xb8] sm:$0xff]
        %v2040 = vld [vmem:[%s236 + $0xc0] sm:$0xff]
        %v2041 = vld [vmem:[%s236 + $0xc8] sm:$0xff]
        %v2042 = vld [vmem:[%s236 + $0xd0] sm:$0xff]
        %v2043 = vld [vmem:[%s236 + $0xd8] sm:$0xff]
        %v2044 = vld [vmem:[%s236 + $0xe0] sm:$0xff]
        %v2045 = vld [vmem:[%s236 + $0xe8] sm:$0xff]
        %v2046 = vld [vmem:[%s236 + $0xf0] sm:$0xff]
        %v2047 = vld [vmem:[%s236 + $0xf8] sm:$0xff]
        %v2048 = vld [vmem:[%s236 + $0x100] sm:$0xff]
        %v2049 = vld [vmem:[%s236 + $0x108] sm:$0xff]
        %v2050 = vld [vmem:[%s236 + $0x110] sm:$0xff]
        %v2051 = vld [vmem:[%s236 + $0x118] sm:$0xff]
        %v2052 = vld [vmem:[%s236 + $0x120] sm:$0xff]
        %v2053 = vld [vmem:[%s236 + $0x128] sm:$0xff]
        %v2054 = vld [vmem:[%s236 + $0x130] sm:$0xff]
        %v2055 = vld [vmem:[%s236 + $0x138] sm:$0xff]
        %v2056 = vld [vmem:[%s236 + $0x140] sm:$0xff]
        %v2057 = vld [vmem:[%s236 + $0x148] sm:$0xff]
        %v2058 = vld [vmem:[%s236 + $0x150] sm:$0xff]
        %v2059 = vld [vmem:[%s236 + $0x158] sm:$0xff]
        %v2060 = vld [vmem:[%s236 + $0x160] sm:$0xff]
        %v2061 = vld [vmem:[%s236 + $0x168] sm:$0xff]
        %v2062 = vld [vmem:[%s236 + $0x170] sm:$0xff]
        %v2063 = vld [vmem:[%s236 + $0x178] sm:$0xff]
        %v2064 = vld [vmem:[%s236 + $0x180] sm:$0xff]
        %v2065 = vld [vmem:[%s236 + $0x188] sm:$0xff]
        %v2066 = vld [vmem:[%s236 + $0x190] sm:$0xff]
        %v2067 = vld [vmem:[%s236 + $0x198] sm:$0xff]
        %v2068 = vld [vmem:[%s236 + $0x1a0] sm:$0xff]
        %v2069 = vld [vmem:[%s236 + $0x1a8] sm:$0xff]
        %v2070 = vld [vmem:[%s236 + $0x1b0] sm:$0xff]
        %v2071 = vld [vmem:[%s236 + $0x1b8] sm:$0xff]
        %v2072 = vld [vmem:[%s236 + $0x1c0] sm:$0xff]
        %v2073 = vld [vmem:[%s236 + $0x1c8] sm:$0xff]
        %v2074 = vld [vmem:[%s236 + $0x1d0] sm:$0xff]
        %v2075 = vld [vmem:[%s236 + $0x1d8] sm:$0xff]
        %v2076 = vld [vmem:[%s236 + $0x1e0] sm:$0xff]
        %v2077 = vld [vmem:[%s236 + $0x1e8] sm:$0xff]
        %v2078 = vld [vmem:[%s236 + $0x1f0] sm:$0xff]
        %v2079 = vld [vmem:[%s236 + $0x1f8] sm:$0xff]
        %2080 = vmatprep.subr.mxu0 %v2077
        %2081 = vmatpush1.msra.mxu0 %v2076
        %2082 = vmatprep.subr.mxu0 %v2073
        %2083 = vmatpush1.msra.mxu0 %v2072
        %2084 = vmatprep.subr.mxu0 %v2069
        %2085 = vmatpush1.msra.mxu0 %v2068
        %2086 = vmatprep.subr.mxu0 %v2065
        %2087 = vmatpush1.msra.mxu0 %v2064
        %2088 = vmatprep.subr.mxu0 %v2061
        %2089 = vmatpush1.msra.mxu0 %v2060
        %2090 = vmatprep.subr.mxu0 %v2057
        %2091 = vmatpush1.msra.mxu0 %v2056
        %2092 = vmatprep.subr.mxu0 %v2053
        %2093 = vmatpush1.msra.mxu0 %v2052
        %2094 = vmatprep.subr.mxu0 %v2049
        %2095 = vmatpush1.msra.mxu0 %v2048
        %2096 = vmatprep.subr.mxu0 %v2045
        %2097 = vmatpush1.msra.mxu0 %v2044
        %2098 = vmatprep.subr.mxu0 %v2041
        %2099 = vmatpush1.msra.mxu0 %v2040
        %2100 = vmatprep.subr.mxu0 %v2037
        %2101 = vmatpush1.msra.mxu0 %v2036
        %2102 = vmatprep.subr.mxu0 %v2033
        %2103 = vmatpush1.msra.mxu0 %v2032
        %2104 = vmatprep.subr.mxu0 %v2029
        %2105 = vmatpush1.msra.mxu0 %v2028
        %2106 = vmatprep.subr.mxu0 %v2025
        %2107 = vmatpush1.msra.mxu0 %v2024
        %2108 = vmatprep.subr.mxu0 %v2021
        %2109 = vmatpush1.msra.mxu0 %v2020
        %2110 = vmatprep.subr.mxu0 %v2017
        %2111 = vmatpush1.msra.mxu0 %v2016
        %2112 = vmatprep.subr.mxu0 0.0
        %2113 = vmatpush2.msra.mxu0 0.0
        %2114 = vmatprep.subr.mxu0 0.0
        %2115 = vmatpush2.msra.mxu0 0.0
        %2116 = vmatprep.subr.mxu0 0.0
        %2117 = vmatpush2.msra.mxu0 0.0
        %2118 = vmatprep.subr.mxu0 0.0
        %2119 = vmatpush2.msra.mxu0 0.0
        %2120 = vmatprep.subr.mxu0 0.0
        %2121 = vmatpush2.msra.mxu0 0.0
        %2122 = vmatprep.subr.mxu0 0.0
        %2123 = vmatpush2.msra.mxu0 0.0
        %2124 = vmatprep.subr.mxu0 0.0
        %2125 = vmatpush2.msra.mxu0 0.0
        %2126 = vmatprep.subr.mxu0 0.0
        %2127 = vmatpush2.msra.mxu0 0.0
        %2128 = vmatprep.subr.mxu0 0.0
        %2129 = vmatpush2.msra.mxu0 0.0
        %2130 = vmatprep.subr.mxu0 0.0
        %2131 = vmatpush2.msra.mxu0 0.0
        %2132 = vmatprep.subr.mxu0 0.0
        %2133 = vmatpush2.msra.mxu0 0.0
        %2134 = vmatprep.subr.mxu0 0.0
        %2135 = vmatpush2.msra.mxu0 0.0
        %2136 = vmatprep.subr.mxu0 0.0
        %2137 = vmatpush2.msra.mxu0 0.0
        %2138 = vmatprep.subr.mxu0 0.0
        %2139 = vmatpush2.msra.mxu0 0.0
        %2140 = vmatprep.subr.mxu0 0.0
        %2141 = vmatpush2.msra.mxu0 0.0
        %2142 = vmatprep.subr.mxu0 0.0
        %2143 = vmatpush2.msra.mxu0 0.0
        %2144 = vmatprep.mubr.f32.mxu0 0.0
        %2145 = vmatmul.mubr.f32.gmra.mxu0 %v2015
        %v2146 = vpop.f32.mrf.mxu0
        %v2147 = vadd.f32 0.0, %v2146
        %v2148 = vpop.f32.mrf.mxu0
        %v2149 = vadd.f32 0.0, %v2148
        %2150 = vdwg.mxu0
        %2151 = vmatprep.subr.mxu0 %v2079
        %2152 = vmatpush1.msra.mxu0 %v2078
        %2153 = vmatprep.subr.mxu0 %v2075
        %2154 = vmatpush1.msra.mxu0 %v2074
        %2155 = vmatprep.subr.mxu0 %v2071
        %2156 = vmatpush1.msra.mxu0 %v2070
        %2157 = vmatprep.subr.mxu0 %v2067
        %2158 = vmatpush1.msra.mxu0 %v2066
        %2159 = vmatprep.subr.mxu0 %v2063
        %2160 = vmatpush1.msra.mxu0 %v2062
        %2161 = vmatprep.subr.mxu0 %v2059
        %2162 = vmatpush1.msra.mxu0 %v2058
        %2163 = vmatprep.subr.mxu0 %v2055
        %2164 = vmatpush1.msra.mxu0 %v2054
        %2165 = vmatprep.subr.mxu0 %v2051
        %2166 = vmatpush1.msra.mxu0 %v2050
        %2167 = vmatprep.subr.mxu0 %v2047
        %2168 = vmatpush1.msra.mxu0 %v2046
        %2169 = vmatprep.subr.mxu0 %v2043
        %2170 = vmatpush1.msra.mxu0 %v2042
        %2171 = vmatprep.subr.mxu0 %v2039
        %2172 = vmatpush1.msra.mxu0 %v2038
        %2173 = vmatprep.subr.mxu0 %v2035
        %2174 = vmatpush1.msra.mxu0 %v2034
        %2175 = vmatprep.subr.mxu0 %v2031
        %2176 = vmatpush1.msra.mxu0 %v2030
        %2177 = vmatprep.subr.mxu0 %v2027
        %2178 = vmatpush1.msra.mxu0 %v2026
        %2179 = vmatprep.subr.mxu0 %v2023
        %2180 = vmatpush1.msra.mxu0 %v2022
        %2181 = vmatprep.subr.mxu0 %v2019
        %2182 = vmatpush1.msra.mxu0 %v2018
        %2183 = vmatprep.subr.mxu0 0.0
        %2184 = vmatpush2.msra.mxu0 0.0
        %2185 = vmatprep.subr.mxu0 0.0
        %2186 = vmatpush2.msra.mxu0 0.0
        %2187 = vmatprep.subr.mxu0 0.0
        %2188 = vmatpush2.msra.mxu0 0.0
        %2189 = vmatprep.subr.mxu0 0.0
        %2190 = vmatpush2.msra.mxu0 0.0
        %2191 = vmatprep.subr.mxu0 0.0
        %2192 = vmatpush2.msra.mxu0 0.0
        %2193 = vmatprep.subr.mxu0 0.0
        %2194 = vmatpush2.msra.mxu0 0.0
        %2195 = vmatprep.subr.mxu0 0.0
        %2196 = vmatpush2.msra.mxu0 0.0
        %2197 = vmatprep.subr.mxu0 0.0
        %2198 = vmatpush2.msra.mxu0 0.0
        %2199 = vmatprep.subr.mxu0 0.0
        %2200 = vmatpush2.msra.mxu0 0.0
        %2201 = vmatprep.subr.mxu0 0.0
        %2202 = vmatpush2.msra.mxu0 0.0
        %2203 = vmatprep.subr.mxu0 0.0
        %2204 = vmatpush2.msra.mxu0 0.0
        %2205 = vmatprep.subr.mxu0 0.0
        %2206 = vmatpush2.msra.mxu0 0.0
        %2207 = vmatprep.subr.mxu0 0.0
        %2208 = vmatpush2.msra.mxu0 0.0
        %2209 = vmatprep.subr.mxu0 0.0
        %2210 = vmatpush2.msra.mxu0 0.0
        %2211 = vmatprep.subr.mxu0 0.0
        %2212 = vmatpush2.msra.mxu0 0.0
        %2213 = vmatprep.subr.mxu0 0.0
        %2214 = vmatpush2.msra.mxu0 0.0
        %2215 = vmatprep.mubr.f32.mxu0 0.0
        %2216 = vmatmul.mubr.f32.gmra.mxu0 %v2015
        %v2217 = vpop.f32.mrf.mxu0
        %v2218 = vadd.f32 0.0, %v2217
        %v2219 = vpop.f32.mrf.mxu0
        %v2220 = vadd.f32 0.0, %v2219
        %2221 = vdwg.mxu0
        %v2222 = vadd.f32 %v2011, %v2147
        %v2223 = vadd.f32 %v2012, %v2149
        %v2224 = vadd.f32 %v2013, %v2218
        %v2225 = vadd.f32 %v2014, %v2220
        %v2226 = vxor.u32 %v2222, 2147483648
        %v2227 = vmul.f32 %v2226, 1.442695
        %v2228 = vpow.pop %v2227
        %v2229 = vadd.f32 %v2228, 1.0
        %v2230 = vrcp.pop %v2229
        %v2231 = vmul.f32 1.0, %v2230
        %v2232 = vxor.u32 %v2223, 2147483648
        %v2233 = vmul.f32 %v2232, 1.442695
        %v2234 = vpow.pop %v2233
        %v2235 = vadd.f32 %v2234, 1.0
        %v2236 = vrcp.pop %v2235
        %v2237 = vmul.f32 1.0, %v2236
        %v2238 = vtanh.pop %v2224
        %v2239 = vxor.u32 %v2225, 2147483648
        %v2240 = vmul.f32 %v2239, 1.442695
        %v2241 = vpow.pop %v2240
        %v2242 = vadd.f32 %v2241, 1.0
        %v2243 = vrcp.pop %v2242
        %v2244 = vmul.f32 1.0, %v2243
        %v2245 = vld [vmem:[#allocation3] sm:$0xff]
        %v2246 = vmul.f32 %v2237, %v2245
        %v2247 = vmul.f32 %v2231, %v2238
        %v2248 = vadd.f32 %v2246, %v2247
        %v2249 = vtanh.pop %v2248
        %v2250 = vmul.f32 %v2244, %v2249
        %2251 = vst [vmem:[#allocation3] sm:$0xff] %v2248
        %2252 = vst [vmem:[#allocation2] sm:$0xff] %v2250
        %s2253 = smul.u32 %s2007, 8
        %s2254 = scalar_lea.vmem %s259, %s2253 [#allocation7]
        %2255 = vst [vmem:[%s2254] sm:$0xff] %v2250
        %s2256 = sand.u32 %s76, 1
        %s2257 = sand.u32 %s76, 1
        %s2258 = smul.addr %s2257, 64
        %s2259 = scalar_lea.vmem [#allocation7], %s2258
        // Predicated region
        $region56: #{bilstmcrf_forward.6} parent=46 // pred_check
          %p2260 = pneg %p86
        $region57: #{bilstmcrf_forward.6} parent=46 // pred_check_branch
          %2262 = sbr.rel (%p2260) target = $region59
        $region58: #{bilstmcrf_forward.6} parent=46 // pred_region
          %s2263 = smul.addr %s16, 8
          %s2264 = scalar_lea.vmem %s2, %s2263
          // Predicated region
          $region60: #{bilstmcrf_forward.6} parent=58 // pred_check
            _
          $region61: #{bilstmcrf_forward.6} parent=58 // pred_check_branch
            %2266 = sbr.rel (0) target = $region63
          $region62: #{bilstmcrf_forward.6} parent=58 // pred_region
            // Predicated region
            $region64: #{bilstmcrf_forward.6} parent=62 // pred_check
              _
            $region65: #{bilstmcrf_forward.6} parent=62 // pred_check_branch
              %2268 = sbr.rel (0) target = $region67
            $region66: #{bilstmcrf_forward.6} parent=62 // pred_region
              // Predicated region
              $region79: #{bilstmcrf_forward.6} parent=66 // pred_check
                _
              $region80: #{bilstmcrf_forward.6} parent=66 // pred_check_branch
                %2298 = sbr.rel (0) target = $region82
              $region81: #{bilstmcrf_forward.6} parent=66 // pred_region
                loop: start=0, step=1, limit=1
                $region83: #{bilstmcrf_forward.6} parent=81 // loop_pre_header
                  _
                $region84: #{bilstmcrf_forward.6} parent=81 // loop_header
                  %s2300 = sphi 0, %s2304
                  %p2301 = scmp.ge.s32.totalorder %s2300, 1
                  %s2305 = sphi %s2259, %s2259
                  %s2306 = sphi %s2264, %s2264
                $region85: #{bilstmcrf_forward.6} parent=81 // loop_header_branch
                  %2303 = sbr.rel (%p2301) target = $region89
                $region86: #{bilstmcrf_forward.6} parent=81 // loop_body
                  %v2307 = vld [vmem:[%s2305] sm:$0xff]
                  %2308 = vst [vmem:[%s2306] sm:$0xff] %v2307
                  %v2309 = vld [vmem:[%s2305 + $0x8] sm:$0xff]
                  %2310 = vst [vmem:[%s2306 + $0x10] sm:$0xff] %v2309
                  %v2311 = vld [vmem:[%s2305 + $0x10] sm:$0xff]
                  %2312 = vst [vmem:[%s2306 + $0x20] sm:$0xff] %v2311
                  %v2313 = vld [vmem:[%s2305 + $0x18] sm:$0xff]
                  %2314 = vst [vmem:[%s2306 + $0x30] sm:$0xff] %v2313
                  %v2315 = vld [vmem:[%s2305 + $0x20] sm:$0xff]
                  %2316 = vst [vmem:[%s2306 + $0x40] sm:$0xff] %v2315
                  %v2317 = vld [vmem:[%s2305 + $0x28] sm:$0xff]
                  %2318 = vst [vmem:[%s2306 + $0x50] sm:$0xff] %v2317
                  %v2319 = vld [vmem:[%s2305 + $0x30] sm:$0xff]
                  %2320 = vst [vmem:[%s2306 + $0x60] sm:$0xff] %v2319
                  %v2321 = vld [vmem:[%s2305 + $0x38] sm:$0xff]
                  %2322 = vst [vmem:[%s2306 + $0x70] sm:$0xff] %v2321
                $region87: #{bilstmcrf_forward.6} parent=81 // loop_footer
                  %s2304 = sadd.s32 1, %s2300
                $region88: #{bilstmcrf_forward.6} parent=81 // loop_footer_branch
                  %2299 = sbr.rel target = $region84
                $region89: #{bilstmcrf_forward.6} parent=81 // loop_exit
                  _
              $region82: #{bilstmcrf_forward.6} parent=66 // pred_fallthru
                _
              // Predicated region
              $region90: #{bilstmcrf_forward.6} parent=66 // pred_check
                _
              $region91: #{bilstmcrf_forward.6} parent=66 // pred_check_branch
                %2324 = sbr.rel target = $region93
              $region92: #{bilstmcrf_forward.6} parent=66 // pred_region
                _
              $region93: #{bilstmcrf_forward.6} parent=66 // pred_fallthru
                _
            $region67: #{bilstmcrf_forward.6} parent=62 // pred_fallthru
              _
            // Predicated region
            $region68: #{bilstmcrf_forward.6} parent=62 // pred_check
              _
            $region69: #{bilstmcrf_forward.6} parent=62 // pred_check_branch
              %2270 = sbr.rel target = $region71
            $region70: #{bilstmcrf_forward.6} parent=62 // pred_region
              %s2272 = ssub.s32 256, 1
              loop: start=0, step=1, limit=1
              $region72: #{bilstmcrf_forward.6} parent=70 // loop_pre_header
                _
              $region73: #{bilstmcrf_forward.6} parent=70 // loop_header
                %s2274 = sphi 0, %s2278
                %p2275 = scmp.ge.s32.totalorder %s2274, 1
                %s2279 = sphi %s2259, %s2259
                %s2280 = sphi %s2264, %s2264
              $region74: #{bilstmcrf_forward.6} parent=70 // loop_header_branch
                %2277 = sbr.rel (%p2275) target = $region78
              $region75: #{bilstmcrf_forward.6} parent=70 // loop_body
                %v2281 = vld [vmem:[%s2279] sm:%s2272]
                %2282 = vst [vmem:[%s2280] sm:%s2272] %v2281
                %v2283 = vld [vmem:[%s2279 + $0x8] sm:%s2272]
                %2284 = vst [vmem:[%s2280 + $0x10] sm:%s2272] %v2283
                %v2285 = vld [vmem:[%s2279 + $0x10] sm:%s2272]
                %2286 = vst [vmem:[%s2280 + $0x20] sm:%s2272] %v2285
                %v2287 = vld [vmem:[%s2279 + $0x18] sm:%s2272]
                %2288 = vst [vmem:[%s2280 + $0x30] sm:%s2272] %v2287
                %v2289 = vld [vmem:[%s2279 + $0x20] sm:%s2272]
                %2290 = vst [vmem:[%s2280 + $0x40] sm:%s2272] %v2289
                %v2291 = vld [vmem:[%s2279 + $0x28] sm:%s2272]
                %2292 = vst [vmem:[%s2280 + $0x50] sm:%s2272] %v2291
                %v2293 = vld [vmem:[%s2279 + $0x30] sm:%s2272]
                %2294 = vst [vmem:[%s2280 + $0x60] sm:%s2272] %v2293
                %v2295 = vld [vmem:[%s2279 + $0x38] sm:%s2272]
                %2296 = vst [vmem:[%s2280 + $0x70] sm:%s2272] %v2295
              $region76: #{bilstmcrf_forward.6} parent=70 // loop_footer
                %s2278 = sadd.s32 1, %s2274
              $region77: #{bilstmcrf_forward.6} parent=70 // loop_footer_branch
                %2273 = sbr.rel target = $region73
              $region78: #{bilstmcrf_forward.6} parent=70 // loop_exit
                _
            $region71: #{bilstmcrf_forward.6} parent=62 // pred_fallthru
              _
          $region63: #{bilstmcrf_forward.6} parent=58 // pred_fallthru
            _
          %2325 = vnop
        $region59: #{bilstmcrf_forward.6} parent=46 // pred_fallthru
          _
      $region47: #{bilstmcrf_forward.6} parent=5 // pred_fallthru
        _
      %p2326 = scmp.le.s32.totalorder 2, %s11
      // Predicated region
      $region94: #{bilstmcrf_forward.6} parent=5 // pred_check
        %p2327 = pneg %p2326
      $region95: #{bilstmcrf_forward.6} parent=5 // pred_check_branch
        %2329 = sbr.rel (%p2327) target = $region97
      $region96: #{bilstmcrf_forward.6} parent=5 // pred_region
        %s2330 = ssub.s32 %s11, 2
        // Predicated region
        $region98: #{bilstmcrf_forward.6} parent=96 // pred_check
          %p2331 = pneg %p92
        $region99: #{bilstmcrf_forward.6} parent=96 // pred_check_branch
          %2333 = sbr.rel (%p2331) target = $region101
        $region100: #{bilstmcrf_forward.6} parent=96 // pred_region
          %s2334 = sand.u32 %s77, 1
          %s2335 = sand.u32 %s77, 1
          %s2336 = smul.addr %s2335, 64
          %s2337 = scalar_lea.vmem [#allocation7], %s2336
        $region101: #{bilstmcrf_forward.6} parent=96 // pred_fallthru
          _
      $region97: #{bilstmcrf_forward.6} parent=5 // pred_fallthru
        _
    $region6: #{bilstmcrf_forward.6} parent=1 // loop_footer
      %s15 = sadd.s32 1, %s11
    $region7: #{bilstmcrf_forward.6} parent=1 // loop_footer_branch
      %10 = sbr.rel target = $region3
    $region8: #{bilstmcrf_forward.6} parent=1 // loop_exit
      _
    %2338 = vsyncpa [#allocation6], 1
    %s2339 = scalar_lea.sflag [#allocation6], 1
    %2340 = vsyncpa %s2339, 1

// kernel: bilstmcrf_forward.8
$region0: #{bilstmcrf_forward.8}
  #allocation0 [shape = 'u32[]', space=smem, size = 0x4, offset = 0x4, fixed_abs, tag = 'smem constant byte address 0x4 - core index']
  #allocation1 [shape = 'u32[144,128]{1,0:T(1,128)}', space=vmem, size = 0x12000, scoped, tag = 'internal scratch']
  #allocation2 [shape = 'f32[8,128]{1,0:T(8,128)}', space=vmem, size = 0x1000, scoped, tag = 'scratch operand']
  #allocation3 [shape = 'f32[8,128]{1,0:T(8,128)}', space=vmem, size = 0x1000, scoped, tag = 'scratch operand']
  %s0 = inlined_call_operand.vmem [shape: f32[8,8,1024], index: 0, kind: input, shape index: {}]
  %s1 = inlined_call_operand.vmem [shape: f32[2,128,512], index: 1, kind: input, shape index: {}]
  %s2 = inlined_call_operand.vmem [shape: f32[8,8,256], index: 2, kind: output, shape index: {}]
  %s3 = sld [smem:[#allocation0]]
  $region98: #{bilstmcrf_forward.8} parent=0
    _
  %s5 = ssub.s32 1, %s3
  %s6 = scalar_select 0, %s5, %s3
  $region1: #{bilstmcrf_forward.8} parent=0
    #allocation4 [shape = 'u8[262144]{0}', space=vmem, size = 0x40000, scoped, tag = 'input window, operand 0']
    #allocation5 [shape = 'u8[65536]{0}', space=vmem, size = 0x10000, scoped, tag = 'output window, operand 0']
    loop: start=0, step=1, limit=4
    $region2: #{bilstmcrf_forward.8} parent=1 // loop_pre_header
      _
    $region3: #{bilstmcrf_forward.8} parent=1 // loop_header
      %s8 = sphi 0, %s12
      %p9 = scmp.ge.s32.totalorder %s8, 4
      %s18 = sphi 0, %s20
      %s21 = sphi 0, %s18
      %s22 = sphi 0, %s21
      %s38 = sphi 0, %s22
      %s44 = sphi 0, %s46
      %s47 = sphi 0, %s44
      %s48 = sphi 0, %s47
      %s64 = sphi 0, %s48
      %s70 = sphi 0, %s72
      %s73 = sphi 0, %s70
      %s74 = sphi 0, %s73
      %s90 = sphi 0, %s74
    $region4: #{bilstmcrf_forward.8} parent=1 // loop_header_branch
      %11 = sbr.rel (%p9) target = $region8
    $region5: #{bilstmcrf_forward.8} parent=1 // loop_body
      %s13 = ssub.s32 %s8, 1
      %s14 = ssub.s32 %s8, 2
      %s15 = sadd.s32 %s8, 1
      %s16 = ssub.s32 %s8, %s15
      %p17 = scmp.eq.s32.totalorder %s16, 0
      %s19 = sadd.s32 %s18, 1
      %s20 = scalar_select %p17, %s18, %s19
      %p23 = pneg %p17
      %p24 = scmp.eq.s32.totalorder %s8, 1
      %p25 = por %p23, %p24
      %p26 = scmp.ne.s32.totalorder %s18, %s21
      %p27 = scmp.eq.s32.totalorder %s8, 0
      %p28 = por %p26, %p27
      %p29 = scmp.ne.s32.totalorder %s18, %s21
      %p30 = scmp.eq.s32.totalorder %s13, 1
      %p31 = por %p29, %p30
      %p32 = scmp.ne.s32.totalorder %s21, %s22
      %p33 = scmp.eq.s32.totalorder %s13, 0
      %p34 = por %p32, %p33
      %p35 = scmp.ne.s32.totalorder %s21, %s22
      %p36 = scmp.eq.s32.totalorder %s14, 1
      %p37 = por %p35, %p36
      %p39 = scmp.ne.s32.totalorder %s22, %s38
      %p40 = scmp.eq.s32.totalorder %s14, 0
      %p41 = por %p39, %p40
      %s42 = ssub.s32 %s8, %s15
      %p43 = scmp.eq.s32.totalorder %s42, 0
      %s45 = sadd.s32 %s44, 1
      %s46 = scalar_select %p43, %s44, %s45
      %p49 = pneg %p43
      %p50 = scmp.eq.s32.totalorder %s8, 1
      %p51 = por %p49, %p50
      %p52 = scmp.ne.s32.totalorder %s44, %s47
      %p53 = scmp.eq.s32.totalorder %s8, 0
      %p54 = por %p52, %p53
      %p55 = scmp.ne.s32.totalorder %s44, %s47
      %p56 = scmp.eq.s32.totalorder %s13, 1
      %p57 = por %p55, %p56
      %p58 = scmp.ne.s32.totalorder %s47, %s48
      %p59 = scmp.eq.s32.totalorder %s13, 0
      %p60 = por %p58, %p59
      %p61 = scmp.ne.s32.totalorder %s47, %s48
      %p62 = scmp.eq.s32.totalorder %s14, 1
      %p63 = por %p61, %p62
      %p65 = scmp.ne.s32.totalorder %s48, %s64
      %p66 = scmp.eq.s32.totalorder %s14, 0
      %p67 = por %p65, %p66
      %s68 = ssub.s32 %s8, %s15
      %p69 = scmp.eq.s32.totalorder %s68, 0
      %s71 = sadd.s32 %s70, 1
      %s72 = scalar_select %p69, %s70, %s71
      %p75 = pneg %p69
      %p76 = scmp.eq.s32.totalorder %s8, 1
      %p77 = por %p75, %p76
      %p78 = scmp.ne.s32.totalorder %s70, %s73
      %p79 = scmp.eq.s32.totalorder %s8, 0
      %p80 = por %p78, %p79
      %p81 = scmp.ne.s32.totalorder %s70, %s73
      %p82 = scmp.eq.s32.totalorder %s13, 1
      %p83 = por %p81, %p82
      %p84 = scmp.ne.s32.totalorder %s73, %s74
      %p85 = scmp.eq.s32.totalorder %s13, 0
      %p86 = por %p84, %p85
      %p87 = scmp.ne.s32.totalorder %s73, %s74
      %p88 = scmp.eq.s32.totalorder %s14, 1
      %p89 = por %p87, %p88
      %p91 = scmp.ne.s32.totalorder %s74, %s90
      %p92 = scmp.eq.s32.totalorder %s14, 0
      %p93 = por %p91, %p92
      %p94 = scmp.le.s32.totalorder 1, %s8
      %p95 = scmp.lt.s32.totalorder %s8, 3
      %p96 = pnand %p94, %p95
      %p97 = pneg %p96
      // Predicated region
      $region9: #{bilstmcrf_forward.8} parent=5 // pred_check
        _
      $region10: #{bilstmcrf_forward.8} parent=5 // pred_check_branch
        %99 = sbr.rel (%p96) target = $region12
      $region11: #{bilstmcrf_forward.8} parent=5 // pred_region
        %s100 = ssub.s32 %s8, 1
      $region12: #{bilstmcrf_forward.8} parent=5 // pred_fallthru
        _
      %p101 = scmp.lt.s32.totalorder %s8, 2
      // Predicated region
      $region13: #{bilstmcrf_forward.8} parent=5 // pred_check
        %p102 = pneg %p101
      $region14: #{bilstmcrf_forward.8} parent=5 // pred_check_branch
        %104 = sbr.rel (%p102) target = $region16
      $region15: #{bilstmcrf_forward.8} parent=5 // pred_region
        // Predicated region
        $region17: #{bilstmcrf_forward.8} parent=15 // pred_check
          %p105 = pneg %p28
        $region18: #{bilstmcrf_forward.8} parent=15 // pred_check_branch
          %107 = sbr.rel (%p105) target = $region20
        $region19: #{bilstmcrf_forward.8} parent=15 // pred_region
          %s108 = sand.u32 %s18, 1
          %s109 = sand.u32 %s18, 1
          %s110 = smul.addr %s109, 256
          %s111 = scalar_lea.vmem [#allocation4], %s110
          %s112 = smul.u32 4, %s8
          %s113 = smul.addr %s112, 8
          %s114 = scalar_lea.vmem %s0, %s113
          // Predicated region
          $region21: #{bilstmcrf_forward.8} parent=19 // pred_check
            _
          $region22: #{bilstmcrf_forward.8} parent=19 // pred_check_branch
            %116 = sbr.rel (0) target = $region24
          $region23: #{bilstmcrf_forward.8} parent=19 // pred_region
            // Predicated region
            $region25: #{bilstmcrf_forward.8} parent=23 // pred_check
              _
            $region26: #{bilstmcrf_forward.8} parent=23 // pred_check_branch
              %118 = sbr.rel (0) target = $region28
            $region27: #{bilstmcrf_forward.8} parent=23 // pred_region
              loop: start=0, step=1, limit=1
              $region29: #{bilstmcrf_forward.8} parent=27 // loop_pre_header
                _
              $region30: #{bilstmcrf_forward.8} parent=27 // loop_header
                %s120 = sphi 0, %s124
                %p121 = scmp.ge.s32.totalorder %s120, 1
                %s125 = sphi %s114, %s114
                %s126 = sphi %s111, %s111
              $region31: #{bilstmcrf_forward.8} parent=27 // loop_header_branch
                %123 = sbr.rel (%p121) target = $region35
              $region32: #{bilstmcrf_forward.8} parent=27 // loop_body
                %v127 = vld [vmem:[%s125] sm:$0xff]
                %128 = vst [vmem:[%s126] sm:$0xff] %v127
                %v129 = vld [vmem:[%s125 + $0x8] sm:$0xff]
                %130 = vst [vmem:[%s126 + $0x8] sm:$0xff] %v129
                %v131 = vld [vmem:[%s125 + $0x10] sm:$0xff]
                %132 = vst [vmem:[%s126 + $0x10] sm:$0xff] %v131
                %v133 = vld [vmem:[%s125 + $0x18] sm:$0xff]
                %134 = vst [vmem:[%s126 + $0x18] sm:$0xff] %v133
                %v135 = vld [vmem:[%s125 + $0x40] sm:$0xff]
                %136 = vst [vmem:[%s126 + $0x20] sm:$0xff] %v135
                %v137 = vld [vmem:[%s125 + $0x48] sm:$0xff]
                %138 = vst [vmem:[%s126 + $0x28] sm:$0xff] %v137
                %v139 = vld [vmem:[%s125 + $0x50] sm:$0xff]
                %140 = vst [vmem:[%s126 + $0x30] sm:$0xff] %v139
                %v141 = vld [vmem:[%s125 + $0x58] sm:$0xff]
                %142 = vst [vmem:[%s126 + $0x38] sm:$0xff] %v141
                %v143 = vld [vmem:[%s125 + $0x80] sm:$0xff]
                %144 = vst [vmem:[%s126 + $0x40] sm:$0xff] %v143
                %v145 = vld [vmem:[%s125 + $0x88] sm:$0xff]
                %146 = vst [vmem:[%s126 + $0x48] sm:$0xff] %v145
                %v147 = vld [vmem:[%s125 + $0x90] sm:$0xff]
                %148 = vst [vmem:[%s126 + $0x50] sm:$0xff] %v147
                %v149 = vld [vmem:[%s125 + $0x98] sm:$0xff]
                %150 = vst [vmem:[%s126 + $0x58] sm:$0xff] %v149
                %v151 = vld [vmem:[%s125 + $0xc0] sm:$0xff]
                %152 = vst [vmem:[%s126 + $0x60] sm:$0xff] %v151
                %v153 = vld [vmem:[%s125 + $0xc8] sm:$0xff]
                %154 = vst [vmem:[%s126 + $0x68] sm:$0xff] %v153
                %v155 = vld [vmem:[%s125 + $0xd0] sm:$0xff]
                %156 = vst [vmem:[%s126 + $0x70] sm:$0xff] %v155
                %v157 = vld [vmem:[%s125 + $0xd8] sm:$0xff]
                %158 = vst [vmem:[%s126 + $0x78] sm:$0xff] %v157
                %v159 = vld [vmem:[%s125 + $0x100] sm:$0xff]
                %160 = vst [vmem:[%s126 + $0x80] sm:$0xff] %v159
                %v161 = vld [vmem:[%s125 + $0x108] sm:$0xff]
                %162 = vst [vmem:[%s126 + $0x88] sm:$0xff] %v161
                %v163 = vld [vmem:[%s125 + $0x110] sm:$0xff]
                %164 = vst [vmem:[%s126 + $0x90] sm:$0xff] %v163
                %v165 = vld [vmem:[%s125 + $0x118] sm:$0xff]
                %166 = vst [vmem:[%s126 + $0x98] sm:$0xff] %v165
                %v167 = vld [vmem:[%s125 + $0x140] sm:$0xff]
                %168 = vst [vmem:[%s126 + $0xa0] sm:$0xff] %v167
                %v169 = vld [vmem:[%s125 + $0x148] sm:$0xff]
                %170 = vst [vmem:[%s126 + $0xa8] sm:$0xff] %v169
                %v171 = vld [vmem:[%s125 + $0x150] sm:$0xff]
                %172 = vst [vmem:[%s126 + $0xb0] sm:$0xff] %v171
                %v173 = vld [vmem:[%s125 + $0x158] sm:$0xff]
                %174 = vst [vmem:[%s126 + $0xb8] sm:$0xff] %v173
                %v175 = vld [vmem:[%s125 + $0x180] sm:$0xff]
                %176 = vst [vmem:[%s126 + $0xc0] sm:$0xff] %v175
                %v177 = vld [vmem:[%s125 + $0x188] sm:$0xff]
                %178 = vst [vmem:[%s126 + $0xc8] sm:$0xff] %v177
                %v179 = vld [vmem:[%s125 + $0x190] sm:$0xff]
                %180 = vst [vmem:[%s126 + $0xd0] sm:$0xff] %v179
                %v181 = vld [vmem:[%s125 + $0x198] sm:$0xff]
                %182 = vst [vmem:[%s126 + $0xd8] sm:$0xff] %v181
                %v183 = vld [vmem:[%s125 + $0x1c0] sm:$0xff]
                %184 = vst [vmem:[%s126 + $0xe0] sm:$0xff] %v183
                %v185 = vld [vmem:[%s125 + $0x1c8] sm:$0xff]
                %186 = vst [vmem:[%s126 + $0xe8] sm:$0xff] %v185
                %v187 = vld [vmem:[%s125 + $0x1d0] sm:$0xff]
                %188 = vst [vmem:[%s126 + $0xf0] sm:$0xff] %v187
                %v189 = vld [vmem:[%s125 + $0x1d8] sm:$0xff]
                %190 = vst [vmem:[%s126 + $0xf8] sm:$0xff] %v189
              $region33: #{bilstmcrf_forward.8} parent=27 // loop_footer
                %s124 = sadd.s32 1, %s120
              $region34: #{bilstmcrf_forward.8} parent=27 // loop_footer_branch
                %119 = sbr.rel target = $region30
              $region35: #{bilstmcrf_forward.8} parent=27 // loop_exit
                _
            $region28: #{bilstmcrf_forward.8} parent=23 // pred_fallthru
              _
            // Predicated region
            $region36: #{bilstmcrf_forward.8} parent=23 // pred_check
              _
            $region37: #{bilstmcrf_forward.8} parent=23 // pred_check_branch
              %192 = sbr.rel target = $region39
            $region38: #{bilstmcrf_forward.8} parent=23 // pred_region
              _
            $region39: #{bilstmcrf_forward.8} parent=23 // pred_fallthru
              _
          $region24: #{bilstmcrf_forward.8} parent=19 // pred_fallthru
            _
          %193 = vnop
        $region20: #{bilstmcrf_forward.8} parent=15 // pred_fallthru
          _
        // Predicated region
        $region40: #{bilstmcrf_forward.8} parent=15 // pred_check
          %p194 = pneg %p54
        $region41: #{bilstmcrf_forward.8} parent=15 // pred_check_branch
          %196 = sbr.rel (%p194) target = $region43
        $region42: #{bilstmcrf_forward.8} parent=15 // pred_region
          %p197 = scmp.lt.s32.totalorder %s8, 1
          %s198 = scalar_select %p197, %s8, 1
          %s199 = smul.addr %s198, 64
          %s200 = smul.addr %s199, 8
          %s201 = scalar_lea.vmem %s1, %s200
        $region43: #{bilstmcrf_forward.8} parent=15 // pred_fallthru
          _
      $region16: #{bilstmcrf_forward.8} parent=5 // pred_fallthru
        _
      %p202 = scmp.le.s32.totalorder 1, %s8
      %p203 = scmp.lt.s32.totalorder %s8, 3
      %p204 = pnand %p202, %p203
      %p205 = pneg %p204
      // Predicated region
      $region44: #{bilstmcrf_forward.8} parent=5 // pred_check
        _
      $region45: #{bilstmcrf_forward.8} parent=5 // pred_check_branch
        %207 = sbr.rel (%p204) target = $region47
      $region46: #{bilstmcrf_forward.8} parent=5 // pred_region
        %s208 = ssub.s32 %s8, 1
        %s209 = sand.u32 %s21, 1
        %s210 = sand.u32 %s21, 1
        %s211 = smul.addr %s210, 256
        %s212 = scalar_lea.vmem [#allocation4], %s211
        // Predicated region
        $region48: #{bilstmcrf_forward.8} parent=46 // pred_check
          %p213 = pneg %p34
        $region49: #{bilstmcrf_forward.8} parent=46 // pred_check_branch
          %215 = sbr.rel (%p213) target = $region51
        $region50: #{bilstmcrf_forward.8} parent=46 // pred_region
          _
        $region51: #{bilstmcrf_forward.8} parent=46 // pred_fallthru
          _
        %s216 = sand.u32 %s21, 1
        %s217 = sand.u32 %s21, 1
        %s218 = smul.addr %s217, 256
        %s219 = scalar_lea.vmem [#allocation4], %s218
        %p220 = pneg %p34
        %p221 = pneg %p31
        %p222 = scmp.lt.s32.totalorder %s13, 1
        %s223 = scalar_select %p222, %s13, 1
        %s224 = smul.addr %s223, 64
        %s225 = smul.addr %s224, 8
        %s226 = scalar_lea.vmem %s1, %s225
        %p227 = pneg %p60
        %p228 = pneg %p57
        %p229 = pneg %p86
        %p230 = pneg %p83
        %s231 = sand.u32 %s73, 1
        %s232 = sand.u32 %s73, 1
        %s233 = smul.addr %s232, 64
        %s234 = scalar_lea.vmem [#allocation5], %s233
        %s235 = smul.u32 4, %s13
        %p236 = scmp.lt.s32.totalorder %s13, 1
        %s237 = scalar_select %p236, %s13, 1
        %s238 = smul.addr %s237, 64
        %s239 = smul.addr %s238, 8
        %s240 = scalar_lea.vmem %s1, %s239
        %241 = vst [vmem:[#allocation2] sm:$0xff] 0.0
        %242 = vst [vmem:[#allocation3] sm:$0xff] 0.0
        %p243 = scmp.eq.s32.totalorder %s13, 0
        %s244 = scalar_select %p243, 0, 7
        %s245 = smul.u32 %s244, 4
        %s246 = smul.addr %s245, 8
        %s247 = scalar_lea.vmem %s212, %s246 [#allocation4]
        %v248 = vld [vmem:[%s247] sm:$0xff]
        %v249 = vld [vmem:[%s247 + $0x8] sm:$0xff]
        %v250 = vld [vmem:[%s247 + $0x10] sm:$0xff]
        %v251 = vld [vmem:[%s247 + $0x18] sm:$0xff]
        %v252 = vld [vmem:[#allocation2] sm:$0xff]
        %v253 = vld [vmem:[%s240] sm:$0xff]
        %v254 = vld [vmem:[%s240 + $0x8] sm:$0xff]
        %v255 = vld [vmem:[%s240 + $0x10] sm:$0xff]
        %v256 = vld [vmem:[%s240 + $0x18] sm:$0xff]
        %v257 = vld [vmem:[%s240 + $0x20] sm:$0xff]
        %v258 = vld [vmem:[%s240 + $0x28] sm:$0xff]
        %v259 = vld [vmem:[%s240 + $0x30] sm:$0xff]
        %v260 = vld [vmem:[%s240 + $0x38] sm:$0xff]
        %v261 = vld [vmem:[%s240 + $0x40] sm:$0xff]
        %v262 = vld [vmem:[%s240 + $0x48] sm:$0xff]
        %v263 = vld [vmem:[%s240 + $0x50] sm:$0xff]
        %v264 = vld [vmem:[%s240 + $0x58] sm:$0xff]
        %v265 = vld [vmem:[%s240 + $0x60] sm:$0xff]
        %v266 = vld [vmem:[%s240 + $0x68] sm:$0xff]
        %v267 = vld [vmem:[%s240 + $0x70] sm:$0xff]
        %v268 = vld [vmem:[%s240 + $0x78] sm:$0xff]
        %v269 = vld [vmem:[%s240 + $0x80] sm:$0xff]
        %v270 = vld [vmem:[%s240 + $0x88] sm:$0xff]
        %v271 = vld [vmem:[%s240 + $0x90] sm:$0xff]
        %v272 = vld [vmem:[%s240 + $0x98] sm:$0xff]
        %v273 = vld [vmem:[%s240 + $0xa0] sm:$0xff]
        %v274 = vld [vmem:[%s240 + $0xa8] sm:$0xff]
        %v275 = vld [vmem:[%s240 + $0xb0] sm:$0xff]
        %v276 = vld [vmem:[%s240 + $0xb8] sm:$0xff]
        %v277 = vld [vmem:[%s240 + $0xc0] sm:$0xff]
        %v278 = vld [vmem:[%s240 + $0xc8] sm:$0xff]
        %v279 = vld [vmem:[%s240 + $0xd0] sm:$0xff]
        %v280 = vld [vmem:[%s240 + $0xd8] sm:$0xff]
        %v281 = vld [vmem:[%s240 + $0xe0] sm:$0xff]
        %v282 = vld [vmem:[%s240 + $0xe8] sm:$0xff]
        %v283 = vld [vmem:[%s240 + $0xf0] sm:$0xff]
        %v284 = vld [vmem:[%s240 + $0xf8] sm:$0xff]
        %v285 = vld [vmem:[%s240 + $0x100] sm:$0xff]
        %v286 = vld [vmem:[%s240 + $0x108] sm:$0xff]
        %v287 = vld [vmem:[%s240 + $0x110] sm:$0xff]
        %v288 = vld [vmem:[%s240 + $0x118] sm:$0xff]
        %v289 = vld [vmem:[%s240 + $0x120] sm:$0xff]
        %v290 = vld [vmem:[%s240 + $0x128] sm:$0xff]
        %v291 = vld [vmem:[%s240 + $0x130] sm:$0xff]
        %v292 = vld [vmem:[%s240 + $0x138] sm:$0xff]
        %v293 = vld [vmem:[%s240 + $0x140] sm:$0xff]
        %v294 = vld [vmem:[%s240 + $0x148] sm:$0xff]
        %v295 = vld [vmem:[%s240 + $0x150] sm:$0xff]
        %v296 = vld [vmem:[%s240 + $0x158] sm:$0xff]
        %v297 = vld [vmem:[%s240 + $0x160] sm:$0xff]
        %v298 = vld [vmem:[%s240 + $0x168] sm:$0xff]
        %v299 = vld [vmem:[%s240 + $0x170] sm:$0xff]
        %v300 = vld [vmem:[%s240 + $0x178] sm:$0xff]
        %v301 = vld [vmem:[%s240 + $0x180] sm:$0xff]
        %v302 = vld [vmem:[%s240 + $0x188] sm:$0xff]
        %v303 = vld [vmem:[%s240 + $0x190] sm:$0xff]
        %v304 = vld [vmem:[%s240 + $0x198] sm:$0xff]
        %v305 = vld [vmem:[%s240 + $0x1a0] sm:$0xff]
        %v306 = vld [vmem:[%s240 + $0x1a8] sm:$0xff]
        %v307 = vld [vmem:[%s240 + $0x1b0] sm:$0xff]
        %v308 = vld [vmem:[%s240 + $0x1b8] sm:$0xff]
        %v309 = vld [vmem:[%s240 + $0x1c0] sm:$0xff]
        %v310 = vld [vmem:[%s240 + $0x1c8] sm:$0xff]
        %v311 = vld [vmem:[%s240 + $0x1d0] sm:$0xff]
        %v312 = vld [vmem:[%s240 + $0x1d8] sm:$0xff]
        %v313 = vld [vmem:[%s240 + $0x1e0] sm:$0xff]
        %v314 = vld [vmem:[%s240 + $0x1e8] sm:$0xff]
        %v315 = vld [vmem:[%s240 + $0x1f0] sm:$0xff]
        %v316 = vld [vmem:[%s240 + $0x1f8] sm:$0xff]
        %317 = vmatprep.subr.mxu0 %v314
        %318 = vmatpush1.msra.mxu0 %v313
        %319 = vmatprep.subr.mxu0 %v310
        %320 = vmatpush1.msra.mxu0 %v309
        %321 = vmatprep.subr.mxu0 %v306
        %322 = vmatpush1.msra.mxu0 %v305
        %323 = vmatprep.subr.mxu0 %v302
        %324 = vmatpush1.msra.mxu0 %v301
        %325 = vmatprep.subr.mxu0 %v298
        %326 = vmatpush1.msra.mxu0 %v297
        %327 = vmatprep.subr.mxu0 %v294
        %328 = vmatpush1.msra.mxu0 %v293
        %329 = vmatprep.subr.mxu0 %v290
        %330 = vmatpush1.msra.mxu0 %v289
        %331 = vmatprep.subr.mxu0 %v286
        %332 = vmatpush1.msra.mxu0 %v285
        %333 = vmatprep.subr.mxu0 %v282
        %334 = vmatpush1.msra.mxu0 %v281
        %335 = vmatprep.subr.mxu0 %v278
        %336 = vmatpush1.msra.mxu0 %v277
        %337 = vmatprep.subr.mxu0 %v274
        %338 = vmatpush1.msra.mxu0 %v273
        %339 = vmatprep.subr.mxu0 %v270
        %340 = vmatpush1.msra.mxu0 %v269
        %341 = vmatprep.subr.mxu0 %v266
        %342 = vmatpush1.msra.mxu0 %v265
        %343 = vmatprep.subr.mxu0 %v262
        %344 = vmatpush1.msra.mxu0 %v261
        %345 = vmatprep.subr.mxu0 %v258
        %346 = vmatpush1.msra.mxu0 %v257
        %347 = vmatprep.subr.mxu0 %v254
        %348 = vmatpush1.msra.mxu0 %v253
        %349 = vmatprep.subr.mxu0 0.0
        %350 = vmatpush2.msra.mxu0 0.0
        %351 = vmatprep.subr.mxu0 0.0
        %352 = vmatpush2.msra.mxu0 0.0
        %353 = vmatprep.subr.mxu0 0.0
        %354 = vmatpush2.msra.mxu0 0.0
        %355 = vmatprep.subr.mxu0 0.0
        %356 = vmatpush2.msra.mxu0 0.0
        %357 = vmatprep.subr.mxu0 0.0
        %358 = vmatpush2.msra.mxu0 0.0
        %359 = vmatprep.subr.mxu0 0.0
        %360 = vmatpush2.msra.mxu0 0.0
        %361 = vmatprep.subr.mxu0 0.0
        %362 = vmatpush2.msra.mxu0 0.0
        %363 = vmatprep.subr.mxu0 0.0
        %364 = vmatpush2.msra.mxu0 0.0
        %365 = vmatprep.subr.mxu0 0.0
        %366 = vmatpush2.msra.mxu0 0.0
        %367 = vmatprep.subr.mxu0 0.0
        %368 = vmatpush2.msra.mxu0 0.0
        %369 = vmatprep.subr.mxu0 0.0
        %370 = vmatpush2.msra.mxu0 0.0
        %371 = vmatprep.subr.mxu0 0.0
        %372 = vmatpush2.msra.mxu0 0.0
        %373 = vmatprep.subr.mxu0 0.0
        %374 = vmatpush2.msra.mxu0 0.0
        %375 = vmatprep.subr.mxu0 0.0
        %376 = vmatpush2.msra.mxu0 0.0
        %377 = vmatprep.subr.mxu0 0.0
        %378 = vmatpush2.msra.mxu0 0.0
        %379 = vmatprep.subr.mxu0 0.0
        %380 = vmatpush2.msra.mxu0 0.0
        %381 = vmatprep.mubr.f32.mxu0 0.0
        %382 = vmatmul.mubr.f32.gmra.mxu0 %v252
        %v383 = vpop.f32.mrf.mxu0
        %v384 = vadd.f32 0.0, %v383
        %v385 = vpop.f32.mrf.mxu0
        %v386 = vadd.f32 0.0, %v385
        %387 = vdwg.mxu0
        %388 = vmatprep.subr.mxu0 %v316
        %389 = vmatpush1.msra.mxu0 %v315
        %390 = vmatprep.subr.mxu0 %v312
        %391 = vmatpush1.msra.mxu0 %v311
        %392 = vmatprep.subr.mxu0 %v308
        %393 = vmatpush1.msra.mxu0 %v307
        %394 = vmatprep.subr.mxu0 %v304
        %395 = vmatpush1.msra.mxu0 %v303
        %396 = vmatprep.subr.mxu0 %v300
        %397 = vmatpush1.msra.mxu0 %v299
        %398 = vmatprep.subr.mxu0 %v296
        %399 = vmatpush1.msra.mxu0 %v295
        %400 = vmatprep.subr.mxu0 %v292
        %401 = vmatpush1.msra.mxu0 %v291
        %402 = vmatprep.subr.mxu0 %v288
        %403 = vmatpush1.msra.mxu0 %v287
        %404 = vmatprep.subr.mxu0 %v284
        %405 = vmatpush1.msra.mxu0 %v283
        %406 = vmatprep.subr.mxu0 %v280
        %407 = vmatpush1.msra.mxu0 %v279
        %408 = vmatprep.subr.mxu0 %v276
        %409 = vmatpush1.msra.mxu0 %v275
        %410 = vmatprep.subr.mxu0 %v272
        %411 = vmatpush1.msra.mxu0 %v271
        %412 = vmatprep.subr.mxu0 %v268
        %413 = vmatpush1.msra.mxu0 %v267
        %414 = vmatprep.subr.mxu0 %v264
        %415 = vmatpush1.msra.mxu0 %v263
        %416 = vmatprep.subr.mxu0 %v260
        %417 = vmatpush1.msra.mxu0 %v259
        %418 = vmatprep.subr.mxu0 %v256
        %419 = vmatpush1.msra.mxu0 %v255
        %420 = vmatprep.subr.mxu0 0.0
        %421 = vmatpush2.msra.mxu0 0.0
        %422 = vmatprep.subr.mxu0 0.0
        %423 = vmatpush2.msra.mxu0 0.0
        %424 = vmatprep.subr.mxu0 0.0
        %425 = vmatpush2.msra.mxu0 0.0
        %426 = vmatprep.subr.mxu0 0.0
        %427 = vmatpush2.msra.mxu0 0.0
        %428 = vmatprep.subr.mxu0 0.0
        %429 = vmatpush2.msra.mxu0 0.0
        %430 = vmatprep.subr.mxu0 0.0
        %431 = vmatpush2.msra.mxu0 0.0
        %432 = vmatprep.subr.mxu0 0.0
        %433 = vmatpush2.msra.mxu0 0.0
        %434 = vmatprep.subr.mxu0 0.0
        %435 = vmatpush2.msra.mxu0 0.0
        %436 = vmatprep.subr.mxu0 0.0
        %437 = vmatpush2.msra.mxu0 0.0
        %438 = vmatprep.subr.mxu0 0.0
        %439 = vmatpush2.msra.mxu0 0.0
        %440 = vmatprep.subr.mxu0 0.0
        %441 = vmatpush2.msra.mxu0 0.0
        %442 = vmatprep.subr.mxu0 0.0
        %443 = vmatpush2.msra.mxu0 0.0
        %444 = vmatprep.subr.mxu0 0.0
        %445 = vmatpush2.msra.mxu0 0.0
        %446 = vmatprep.subr.mxu0 0.0
        %447 = vmatpush2.msra.mxu0 0.0
        %448 = vmatprep.subr.mxu0 0.0
        %449 = vmatpush2.msra.mxu0 0.0
        %450 = vmatprep.subr.mxu0 0.0
        %451 = vmatpush2.msra.mxu0 0.0
        %452 = vmatprep.mubr.f32.mxu0 0.0
        %453 = vmatmul.mubr.f32.gmra.mxu0 %v252
        %v454 = vpop.f32.mrf.mxu0
        %v455 = vadd.f32 0.0, %v454
        %v456 = vpop.f32.mrf.mxu0
        %v457 = vadd.f32 0.0, %v456
        %458 = vdwg.mxu0
        %v459 = vadd.f32 %v248, %v384
        %v460 = vadd.f32 %v249, %v386
        %v461 = vadd.f32 %v250, %v455
        %v462 = vadd.f32 %v251, %v457
        %v463 = vxor.u32 %v459, 2147483648
        %v464 = vmul.f32 %v463, 1.442695
        %v465 = vpow.pop %v464
        %v466 = vadd.f32 %v465, 1.0
        %v467 = vrcp.pop %v466
        %v468 = vmul.f32 1.0, %v467
        %v469 = vxor.u32 %v460, 2147483648
        %v470 = vmul.f32 %v469, 1.442695
        %v471 = vpow.pop %v470
        %v472 = vadd.f32 %v471, 1.0
        %v473 = vrcp.pop %v472
        %v474 = vmul.f32 1.0, %v473
        %v475 = vtanh.pop %v461
        %v476 = vxor.u32 %v462, 2147483648
        %v477 = vmul.f32 %v476, 1.442695
        %v478 = vpow.pop %v477
        %v479 = vadd.f32 %v478, 1.0
        %v480 = vrcp.pop %v479
        %v481 = vmul.f32 1.0, %v480
        %v482 = vld [vmem:[#allocation3] sm:$0xff]
        %v483 = vmul.f32 %v474, %v482
        %v484 = vmul.f32 %v468, %v475
        %v485 = vadd.f32 %v483, %v484
        %v486 = vtanh.pop %v485
        %v487 = vmul.f32 %v481, %v486
        %488 = vst [vmem:[#allocation3] sm:$0xff] %v485
        %489 = vst [vmem:[#allocation2] sm:$0xff] %v487
        %s490 = smul.u32 %s244, 8
        %s491 = scalar_lea.vmem %s234, %s490 [#allocation5]
        %492 = vst [vmem:[%s491] sm:$0xff] %v487
        %s493 = scalar_select %p243, 1, 6
        %s494 = smul.u32 %s493, 4
        %s495 = smul.addr %s494, 8
        %s496 = scalar_lea.vmem %s212, %s495 [#allocation4]
        %v497 = vld [vmem:[%s496] sm:$0xff]
        %v498 = vld [vmem:[%s496 + $0x8] sm:$0xff]
        %v499 = vld [vmem:[%s496 + $0x10] sm:$0xff]
        %v500 = vld [vmem:[%s496 + $0x18] sm:$0xff]
        %v501 = vld [vmem:[#allocation2] sm:$0xff]
        %v502 = vld [vmem:[%s240] sm:$0xff]
        %v503 = vld [vmem:[%s240 + $0x8] sm:$0xff]
        %v504 = vld [vmem:[%s240 + $0x10] sm:$0xff]
        %v505 = vld [vmem:[%s240 + $0x18] sm:$0xff]
        %v506 = vld [vmem:[%s240 + $0x20] sm:$0xff]
        %v507 = vld [vmem:[%s240 + $0x28] sm:$0xff]
        %v508 = vld [vmem:[%s240 + $0x30] sm:$0xff]
        %v509 = vld [vmem:[%s240 + $0x38] sm:$0xff]
        %v510 = vld [vmem:[%s240 + $0x40] sm:$0xff]
        %v511 = vld [vmem:[%s240 + $0x48] sm:$0xff]
        %v512 = vld [vmem:[%s240 + $0x50] sm:$0xff]
        %v513 = vld [vmem:[%s240 + $0x58] sm:$0xff]
        %v514 = vld [vmem:[%s240 + $0x60] sm:$0xff]
        %v515 = vld [vmem:[%s240 + $0x68] sm:$0xff]
        %v516 = vld [vmem:[%s240 + $0x70] sm:$0xff]
        %v517 = vld [vmem:[%s240 + $0x78] sm:$0xff]
        %v518 = vld [vmem:[%s240 + $0x80] sm:$0xff]
        %v519 = vld [vmem:[%s240 + $0x88] sm:$0xff]
        %v520 = vld [vmem:[%s240 + $0x90] sm:$0xff]
        %v521 = vld [vmem:[%s240 + $0x98] sm:$0xff]
        %v522 = vld [vmem:[%s240 + $0xa0] sm:$0xff]
        %v523 = vld [vmem:[%s240 + $0xa8] sm:$0xff]
        %v524 = vld [vmem:[%s240 + $0xb0] sm:$0xff]
        %v525 = vld [vmem:[%s240 + $0xb8] sm:$0xff]
        %v526 = vld [vmem:[%s240 + $0xc0] sm:$0xff]
        %v527 = vld [vmem:[%s240 + $0xc8] sm:$0xff]
        %v528 = vld [vmem:[%s240 + $0xd0] sm:$0xff]
        %v529 = vld [vmem:[%s240 + $0xd8] sm:$0xff]
        %v530 = vld [vmem:[%s240 + $0xe0] sm:$0xff]
        %v531 = vld [vmem:[%s240 + $0xe8] sm:$0xff]
        %v532 = vld [vmem:[%s240 + $0xf0] sm:$0xff]
        %v533 = vld [vmem:[%s240 + $0xf8] sm:$0xff]
        %v534 = vld [vmem:[%s240 + $0x100] sm:$0xff]
        %v535 = vld [vmem:[%s240 + $0x108] sm:$0xff]
        %v536 = vld [vmem:[%s240 + $0x110] sm:$0xff]
        %v537 = vld [vmem:[%s240 + $0x118] sm:$0xff]
        %v538 = vld [vmem:[%s240 + $0x120] sm:$0xff]
        %v539 = vld [vmem:[%s240 + $0x128] sm:$0xff]
        %v540 = vld [vmem:[%s240 + $0x130] sm:$0xff]
        %v541 = vld [vmem:[%s240 + $0x138] sm:$0xff]
        %v542 = vld [vmem:[%s240 + $0x140] sm:$0xff]
        %v543 = vld [vmem:[%s240 + $0x148] sm:$0xff]
        %v544 = vld [vmem:[%s240 + $0x150] sm:$0xff]
        %v545 = vld [vmem:[%s240 + $0x158] sm:$0xff]
        %v546 = vld [vmem:[%s240 + $0x160] sm:$0xff]
        %v547 = vld [vmem:[%s240 + $0x168] sm:$0xff]
        %v548 = vld [vmem:[%s240 + $0x170] sm:$0xff]
        %v549 = vld [vmem:[%s240 + $0x178] sm:$0xff]
        %v550 = vld [vmem:[%s240 + $0x180] sm:$0xff]
        %v551 = vld [vmem:[%s240 + $0x188] sm:$0xff]
        %v552 = vld [vmem:[%s240 + $0x190] sm:$0xff]
        %v553 = vld [vmem:[%s240 + $0x198] sm:$0xff]
        %v554 = vld [vmem:[%s240 + $0x1a0] sm:$0xff]
        %v555 = vld [vmem:[%s240 + $0x1a8] sm:$0xff]
        %v556 = vld [vmem:[%s240 + $0x1b0] sm:$0xff]
        %v557 = vld [vmem:[%s240 + $0x1b8] sm:$0xff]
        %v558 = vld [vmem:[%s240 + $0x1c0] sm:$0xff]
        %v559 = vld [vmem:[%s240 + $0x1c8] sm:$0xff]
        %v560 = vld [vmem:[%s240 + $0x1d0] sm:$0xff]
        %v561 = vld [vmem:[%s240 + $0x1d8] sm:$0xff]
        %v562 = vld [vmem:[%s240 + $0x1e0] sm:$0xff]
        %v563 = vld [vmem:[%s240 + $0x1e8] sm:$0xff]
        %v564 = vld [vmem:[%s240 + $0x1f0] sm:$0xff]
        %v565 = vld [vmem:[%s240 + $0x1f8] sm:$0xff]
        %566 = vmatprep.subr.mxu0 %v563
        %567 = vmatpush1.msra.mxu0 %v562
        %568 = vmatprep.subr.mxu0 %v559
        %569 = vmatpush1.msra.mxu0 %v558
        %570 = vmatprep.subr.mxu0 %v555
        %571 = vmatpush1.msra.mxu0 %v554
        %572 = vmatprep.subr.mxu0 %v551
        %573 = vmatpush1.msra.mxu0 %v550
        %574 = vmatprep.subr.mxu0 %v547
        %575 = vmatpush1.msra.mxu0 %v546
        %576 = vmatprep.subr.mxu0 %v543
        %577 = vmatpush1.msra.mxu0 %v542
        %578 = vmatprep.subr.mxu0 %v539
        %579 = vmatpush1.msra.mxu0 %v538
        %580 = vmatprep.subr.mxu0 %v535
        %581 = vmatpush1.msra.mxu0 %v534
        %582 = vmatprep.subr.mxu0 %v531
        %583 = vmatpush1.msra.mxu0 %v530
        %584 = vmatprep.subr.mxu0 %v527
        %585 = vmatpush1.msra.mxu0 %v526
        %586 = vmatprep.subr.mxu0 %v523
        %587 = vmatpush1.msra.mxu0 %v522
        %588 = vmatprep.subr.mxu0 %v519
        %589 = vmatpush1.msra.mxu0 %v518
        %590 = vmatprep.subr.mxu0 %v515
        %591 = vmatpush1.msra.mxu0 %v514
        %592 = vmatprep.subr.mxu0 %v511
        %593 = vmatpush1.msra.mxu0 %v510
        %594 = vmatprep.subr.mxu0 %v507
        %595 = vmatpush1.msra.mxu0 %v506
        %596 = vmatprep.subr.mxu0 %v503
        %597 = vmatpush1.msra.mxu0 %v502
        %598 = vmatprep.subr.mxu0 0.0
        %599 = vmatpush2.msra.mxu0 0.0
        %600 = vmatprep.subr.mxu0 0.0
        %601 = vmatpush2.msra.mxu0 0.0
        %602 = vmatprep.subr.mxu0 0.0
        %603 = vmatpush2.msra.mxu0 0.0
        %604 = vmatprep.subr.mxu0 0.0
        %605 = vmatpush2.msra.mxu0 0.0
        %606 = vmatprep.subr.mxu0 0.0
        %607 = vmatpush2.msra.mxu0 0.0
        %608 = vmatprep.subr.mxu0 0.0
        %609 = vmatpush2.msra.mxu0 0.0
        %610 = vmatprep.subr.mxu0 0.0
        %611 = vmatpush2.msra.mxu0 0.0
        %612 = vmatprep.subr.mxu0 0.0
        %613 = vmatpush2.msra.mxu0 0.0
        %614 = vmatprep.subr.mxu0 0.0
        %615 = vmatpush2.msra.mxu0 0.0
        %616 = vmatprep.subr.mxu0 0.0
        %617 = vmatpush2.msra.mxu0 0.0
        %618 = vmatprep.subr.mxu0 0.0
        %619 = vmatpush2.msra.mxu0 0.0
        %620 = vmatprep.subr.mxu0 0.0
        %621 = vmatpush2.msra.mxu0 0.0
        %622 = vmatprep.subr.mxu0 0.0
        %623 = vmatpush2.msra.mxu0 0.0
        %624 = vmatprep.subr.mxu0 0.0
        %625 = vmatpush2.msra.mxu0 0.0
        %626 = vmatprep.subr.mxu0 0.0
        %627 = vmatpush2.msra.mxu0 0.0
        %628 = vmatprep.subr.mxu0 0.0
        %629 = vmatpush2.msra.mxu0 0.0
        %630 = vmatprep.mubr.f32.mxu0 0.0
        %631 = vmatmul.mubr.f32.gmra.mxu0 %v501
        %v632 = vpop.f32.mrf.mxu0
        %v633 = vadd.f32 0.0, %v632
        %v634 = vpop.f32.mrf.mxu0
        %v635 = vadd.f32 0.0, %v634
        %636 = vdwg.mxu0
        %637 = vmatprep.subr.mxu0 %v565
        %638 = vmatpush1.msra.mxu0 %v564
        %639 = vmatprep.subr.mxu0 %v561
        %640 = vmatpush1.msra.mxu0 %v560
        %641 = vmatprep.subr.mxu0 %v557
        %642 = vmatpush1.msra.mxu0 %v556
        %643 = vmatprep.subr.mxu0 %v553
        %644 = vmatpush1.msra.mxu0 %v552
        %645 = vmatprep.subr.mxu0 %v549
        %646 = vmatpush1.msra.mxu0 %v548
        %647 = vmatprep.subr.mxu0 %v545
        %648 = vmatpush1.msra.mxu0 %v544
        %649 = vmatprep.subr.mxu0 %v541
        %650 = vmatpush1.msra.mxu0 %v540
        %651 = vmatprep.subr.mxu0 %v537
        %652 = vmatpush1.msra.mxu0 %v536
        %653 = vmatprep.subr.mxu0 %v533
        %654 = vmatpush1.msra.mxu0 %v532
        %655 = vmatprep.subr.mxu0 %v529
        %656 = vmatpush1.msra.mxu0 %v528
        %657 = vmatprep.subr.mxu0 %v525
        %658 = vmatpush1.msra.mxu0 %v524
        %659 = vmatprep.subr.mxu0 %v521
        %660 = vmatpush1.msra.mxu0 %v520
        %661 = vmatprep.subr.mxu0 %v517
        %662 = vmatpush1.msra.mxu0 %v516
        %663 = vmatprep.subr.mxu0 %v513
        %664 = vmatpush1.msra.mxu0 %v512
        %665 = vmatprep.subr.mxu0 %v509
        %666 = vmatpush1.msra.mxu0 %v508
        %667 = vmatprep.subr.mxu0 %v505
        %668 = vmatpush1.msra.mxu0 %v504
        %669 = vmatprep.subr.mxu0 0.0
        %670 = vmatpush2.msra.mxu0 0.0
        %671 = vmatprep.subr.mxu0 0.0
        %672 = vmatpush2.msra.mxu0 0.0
        %673 = vmatprep.subr.mxu0 0.0
        %674 = vmatpush2.msra.mxu0 0.0
        %675 = vmatprep.subr.mxu0 0.0
        %676 = vmatpush2.msra.mxu0 0.0
        %677 = vmatprep.subr.mxu0 0.0
        %678 = vmatpush2.msra.mxu0 0.0
        %679 = vmatprep.subr.mxu0 0.0
        %680 = vmatpush2.msra.mxu0 0.0
        %681 = vmatprep.subr.mxu0 0.0
        %682 = vmatpush2.msra.mxu0 0.0
        %683 = vmatprep.subr.mxu0 0.0
        %684 = vmatpush2.msra.mxu0 0.0
        %685 = vmatprep.subr.mxu0 0.0
        %686 = vmatpush2.msra.mxu0 0.0
        %687 = vmatprep.subr.mxu0 0.0
        %688 = vmatpush2.msra.mxu0 0.0
        %689 = vmatprep.subr.mxu0 0.0
        %690 = vmatpush2.msra.mxu0 0.0
        %691 = vmatprep.subr.mxu0 0.0
        %692 = vmatpush2.msra.mxu0 0.0
        %693 = vmatprep.subr.mxu0 0.0
        %694 = vmatpush2.msra.mxu0 0.0
        %695 = vmatprep.subr.mxu0 0.0
        %696 = vmatpush2.msra.mxu0 0.0
        %697 = vmatprep.subr.mxu0 0.0
        %698 = vmatpush2.msra.mxu0 0.0
        %699 = vmatprep.subr.mxu0 0.0
        %700 = vmatpush2.msra.mxu0 0.0
        %701 = vmatprep.mubr.f32.mxu0 0.0
        %702 = vmatmul.mubr.f32.gmra.mxu0 %v501
        %v703 = vpop.f32.mrf.mxu0
        %v704 = vadd.f32 0.0, %v703
        %v705 = vpop.f32.mrf.mxu0
        %v706 = vadd.f32 0.0, %v705
        %707 = vdwg.mxu0
        %v708 = vadd.f32 %v497, %v633
        %v709 = vadd.f32 %v498, %v635
        %v710 = vadd.f32 %v499, %v704
        %v711 = vadd.f32 %v500, %v706
        %v712 = vxor.u32 %v708, 2147483648
        %v713 = vmul.f32 %v712, 1.442695
        %v714 = vpow.pop %v713
        %v715 = vadd.f32 %v714, 1.0
        %v716 = vrcp.pop %v715
        %v717 = vmul.f32 1.0, %v716
        %v718 = vxor.u32 %v709, 2147483648
        %v719 = vmul.f32 %v718, 1.442695
        %v720 = vpow.pop %v719
        %v721 = vadd.f32 %v720, 1.0
        %v722 = vrcp.pop %v721
        %v723 = vmul.f32 1.0, %v722
        %v724 = vtanh.pop %v710
        %v725 = vxor.u32 %v711, 2147483648
        %v726 = vmul.f32 %v725, 1.442695
        %v727 = vpow.pop %v726
        %v728 = vadd.f32 %v727, 1.0
        %v729 = vrcp.pop %v728
        %v730 = vmul.f32 1.0, %v729
        %v731 = vld [vmem:[#allocation3] sm:$0xff]
        %v732 = vmul.f32 %v723, %v731
        %v733 = vmul.f32 %v717, %v724
        %v734 = vadd.f32 %v732, %v733
        %v735 = vtanh.pop %v734
        %v736 = vmul.f32 %v730, %v735
        %737 = vst [vmem:[#allocation3] sm:$0xff] %v734
        %738 = vst [vmem:[#allocation2] sm:$0xff] %v736
        %s739 = smul.u32 %s493, 8
        %s740 = scalar_lea.vmem %s234, %s739 [#allocation5]
        %741 = vst [vmem:[%s740] sm:$0xff] %v736
        %s742 = scalar_select %p243, 2, 5
        %s743 = smul.u32 %s742, 4
        %s744 = smul.addr %s743, 8
        %s745 = scalar_lea.vmem %s212, %s744 [#allocation4]
        %v746 = vld [vmem:[%s745] sm:$0xff]
        %v747 = vld [vmem:[%s745 + $0x8] sm:$0xff]
        %v748 = vld [vmem:[%s745 + $0x10] sm:$0xff]
        %v749 = vld [vmem:[%s745 + $0x18] sm:$0xff]
        %v750 = vld [vmem:[#allocation2] sm:$0xff]
        %v751 = vld [vmem:[%s240] sm:$0xff]
        %v752 = vld [vmem:[%s240 + $0x8] sm:$0xff]
        %v753 = vld [vmem:[%s240 + $0x10] sm:$0xff]
        %v754 = vld [vmem:[%s240 + $0x18] sm:$0xff]
        %v755 = vld [vmem:[%s240 + $0x20] sm:$0xff]
        %v756 = vld [vmem:[%s240 + $0x28] sm:$0xff]
        %v757 = vld [vmem:[%s240 + $0x30] sm:$0xff]
        %v758 = vld [vmem:[%s240 + $0x38] sm:$0xff]
        %v759 = vld [vmem:[%s240 + $0x40] sm:$0xff]
        %v760 = vld [vmem:[%s240 + $0x48] sm:$0xff]
        %v761 = vld [vmem:[%s240 + $0x50] sm:$0xff]
        %v762 = vld [vmem:[%s240 + $0x58] sm:$0xff]
        %v763 = vld [vmem:[%s240 + $0x60] sm:$0xff]
        %v764 = vld [vmem:[%s240 + $0x68] sm:$0xff]
        %v765 = vld [vmem:[%s240 + $0x70] sm:$0xff]
        %v766 = vld [vmem:[%s240 + $0x78] sm:$0xff]
        %v767 = vld [vmem:[%s240 + $0x80] sm:$0xff]
        %v768 = vld [vmem:[%s240 + $0x88] sm:$0xff]
        %v769 = vld [vmem:[%s240 + $0x90] sm:$0xff]
        %v770 = vld [vmem:[%s240 + $0x98] sm:$0xff]
        %v771 = vld [vmem:[%s240 + $0xa0] sm:$0xff]
        %v772 = vld [vmem:[%s240 + $0xa8] sm:$0xff]
        %v773 = vld [vmem:[%s240 + $0xb0] sm:$0xff]
        %v774 = vld [vmem:[%s240 + $0xb8] sm:$0xff]
        %v775 = vld [vmem:[%s240 + $0xc0] sm:$0xff]
        %v776 = vld [vmem:[%s240 + $0xc8] sm:$0xff]
        %v777 = vld [vmem:[%s240 + $0xd0] sm:$0xff]
        %v778 = vld [vmem:[%s240 + $0xd8] sm:$0xff]
        %v779 = vld [vmem:[%s240 + $0xe0] sm:$0xff]
        %v780 = vld [vmem:[%s240 + $0xe8] sm:$0xff]
        %v781 = vld [vmem:[%s240 + $0xf0] sm:$0xff]
        %v782 = vld [vmem:[%s240 + $0xf8] sm:$0xff]
        %v783 = vld [vmem:[%s240 + $0x100] sm:$0xff]
        %v784 = vld [vmem:[%s240 + $0x108] sm:$0xff]
        %v785 = vld [vmem:[%s240 + $0x110] sm:$0xff]
        %v786 = vld [vmem:[%s240 + $0x118] sm:$0xff]
        %v787 = vld [vmem:[%s240 + $0x120] sm:$0xff]
        %v788 = vld [vmem:[%s240 + $0x128] sm:$0xff]
        %v789 = vld [vmem:[%s240 + $0x130] sm:$0xff]
        %v790 = vld [vmem:[%s240 + $0x138] sm:$0xff]
        %v791 = vld [vmem:[%s240 + $0x140] sm:$0xff]
        %v792 = vld [vmem:[%s240 + $0x148] sm:$0xff]
        %v793 = vld [vmem:[%s240 + $0x150] sm:$0xff]
        %v794 = vld [vmem:[%s240 + $0x158] sm:$0xff]
        %v795 = vld [vmem:[%s240 + $0x160] sm:$0xff]
        %v796 = vld [vmem:[%s240 + $0x168] sm:$0xff]
        %v797 = vld [vmem:[%s240 + $0x170] sm:$0xff]
        %v798 = vld [vmem:[%s240 + $0x178] sm:$0xff]
        %v799 = vld [vmem:[%s240 + $0x180] sm:$0xff]
        %v800 = vld [vmem:[%s240 + $0x188] sm:$0xff]
        %v801 = vld [vmem:[%s240 + $0x190] sm:$0xff]
        %v802 = vld [vmem:[%s240 + $0x198] sm:$0xff]
        %v803 = vld [vmem:[%s240 + $0x1a0] sm:$0xff]
        %v804 = vld [vmem:[%s240 + $0x1a8] sm:$0xff]
        %v805 = vld [vmem:[%s240 + $0x1b0] sm:$0xff]
        %v806 = vld [vmem:[%s240 + $0x1b8] sm:$0xff]
        %v807 = vld [vmem:[%s240 + $0x1c0] sm:$0xff]
        %v808 = vld [vmem:[%s240 + $0x1c8] sm:$0xff]
        %v809 = vld [vmem:[%s240 + $0x1d0] sm:$0xff]
        %v810 = vld [vmem:[%s240 + $0x1d8] sm:$0xff]
        %v811 = vld [vmem:[%s240 + $0x1e0] sm:$0xff]
        %v812 = vld [vmem:[%s240 + $0x1e8] sm:$0xff]
        %v813 = vld [vmem:[%s240 + $0x1f0] sm:$0xff]
        %v814 = vld [vmem:[%s240 + $0x1f8] sm:$0xff]
        %815 = vmatprep.subr.mxu0 %v812
        %816 = vmatpush1.msra.mxu0 %v811
        %817 = vmatprep.subr.mxu0 %v808
        %818 = vmatpush1.msra.mxu0 %v807
        %819 = vmatprep.subr.mxu0 %v804
        %820 = vmatpush1.msra.mxu0 %v803
        %821 = vmatprep.subr.mxu0 %v800
        %822 = vmatpush1.msra.mxu0 %v799
        %823 = vmatprep.subr.mxu0 %v796
        %824 = vmatpush1.msra.mxu0 %v795
        %825 = vmatprep.subr.mxu0 %v792
        %826 = vmatpush1.msra.mxu0 %v791
        %827 = vmatprep.subr.mxu0 %v788
        %828 = vmatpush1.msra.mxu0 %v787
        %829 = vmatprep.subr.mxu0 %v784
        %830 = vmatpush1.msra.mxu0 %v783
        %831 = vmatprep.subr.mxu0 %v780
        %832 = vmatpush1.msra.mxu0 %v779
        %833 = vmatprep.subr.mxu0 %v776
        %834 = vmatpush1.msra.mxu0 %v775
        %835 = vmatprep.subr.mxu0 %v772
        %836 = vmatpush1.msra.mxu0 %v771
        %837 = vmatprep.subr.mxu0 %v768
        %838 = vmatpush1.msra.mxu0 %v767
        %839 = vmatprep.subr.mxu0 %v764
        %840 = vmatpush1.msra.mxu0 %v763
        %841 = vmatprep.subr.mxu0 %v760
        %842 = vmatpush1.msra.mxu0 %v759
        %843 = vmatprep.subr.mxu0 %v756
        %844 = vmatpush1.msra.mxu0 %v755
        %845 = vmatprep.subr.mxu0 %v752
        %846 = vmatpush1.msra.mxu0 %v751
        %847 = vmatprep.subr.mxu0 0.0
        %848 = vmatpush2.msra.mxu0 0.0
        %849 = vmatprep.subr.mxu0 0.0
        %850 = vmatpush2.msra.mxu0 0.0
        %851 = vmatprep.subr.mxu0 0.0
        %852 = vmatpush2.msra.mxu0 0.0
        %853 = vmatprep.subr.mxu0 0.0
        %854 = vmatpush2.msra.mxu0 0.0
        %855 = vmatprep.subr.mxu0 0.0
        %856 = vmatpush2.msra.mxu0 0.0
        %857 = vmatprep.subr.mxu0 0.0
        %858 = vmatpush2.msra.mxu0 0.0
        %859 = vmatprep.subr.mxu0 0.0
        %860 = vmatpush2.msra.mxu0 0.0
        %861 = vmatprep.subr.mxu0 0.0
        %862 = vmatpush2.msra.mxu0 0.0
        %863 = vmatprep.subr.mxu0 0.0
        %864 = vmatpush2.msra.mxu0 0.0
        %865 = vmatprep.subr.mxu0 0.0
        %866 = vmatpush2.msra.mxu0 0.0
        %867 = vmatprep.subr.mxu0 0.0
        %868 = vmatpush2.msra.mxu0 0.0
        %869 = vmatprep.subr.mxu0 0.0
        %870 = vmatpush2.msra.mxu0 0.0
        %871 = vmatprep.subr.mxu0 0.0
        %872 = vmatpush2.msra.mxu0 0.0
        %873 = vmatprep.subr.mxu0 0.0
        %874 = vmatpush2.msra.mxu0 0.0
        %875 = vmatprep.subr.mxu0 0.0
        %876 = vmatpush2.msra.mxu0 0.0
        %877 = vmatprep.subr.mxu0 0.0
        %878 = vmatpush2.msra.mxu0 0.0
        %879 = vmatprep.mubr.f32.mxu0 0.0
        %880 = vmatmul.mubr.f32.gmra.mxu0 %v750
        %v881 = vpop.f32.mrf.mxu0
        %v882 = vadd.f32 0.0, %v881
        %v883 = vpop.f32.mrf.mxu0
        %v884 = vadd.f32 0.0, %v883
        %885 = vdwg.mxu0
        %886 = vmatprep.subr.mxu0 %v814
        %887 = vmatpush1.msra.mxu0 %v813
        %888 = vmatprep.subr.mxu0 %v810
        %889 = vmatpush1.msra.mxu0 %v809
        %890 = vmatprep.subr.mxu0 %v806
        %891 = vmatpush1.msra.mxu0 %v805
        %892 = vmatprep.subr.mxu0 %v802
        %893 = vmatpush1.msra.mxu0 %v801
        %894 = vmatprep.subr.mxu0 %v798
        %895 = vmatpush1.msra.mxu0 %v797
        %896 = vmatprep.subr.mxu0 %v794
        %897 = vmatpush1.msra.mxu0 %v793
        %898 = vmatprep.subr.mxu0 %v790
        %899 = vmatpush1.msra.mxu0 %v789
        %900 = vmatprep.subr.mxu0 %v786
        %901 = vmatpush1.msra.mxu0 %v785
        %902 = vmatprep.subr.mxu0 %v782
        %903 = vmatpush1.msra.mxu0 %v781
        %904 = vmatprep.subr.mxu0 %v778
        %905 = vmatpush1.msra.mxu0 %v777
        %906 = vmatprep.subr.mxu0 %v774
        %907 = vmatpush1.msra.mxu0 %v773
        %908 = vmatprep.subr.mxu0 %v770
        %909 = vmatpush1.msra.mxu0 %v769
        %910 = vmatprep.subr.mxu0 %v766
        %911 = vmatpush1.msra.mxu0 %v765
        %912 = vmatprep.subr.mxu0 %v762
        %913 = vmatpush1.msra.mxu0 %v761
        %914 = vmatprep.subr.mxu0 %v758
        %915 = vmatpush1.msra.mxu0 %v757
        %916 = vmatprep.subr.mxu0 %v754
        %917 = vmatpush1.msra.mxu0 %v753
        %918 = vmatprep.subr.mxu0 0.0
        %919 = vmatpush2.msra.mxu0 0.0
        %920 = vmatprep.subr.mxu0 0.0
        %921 = vmatpush2.msra.mxu0 0.0
        %922 = vmatprep.subr.mxu0 0.0
        %923 = vmatpush2.msra.mxu0 0.0
        %924 = vmatprep.subr.mxu0 0.0
        %925 = vmatpush2.msra.mxu0 0.0
        %926 = vmatprep.subr.mxu0 0.0
        %927 = vmatpush2.msra.mxu0 0.0
        %928 = vmatprep.subr.mxu0 0.0
        %929 = vmatpush2.msra.mxu0 0.0
        %930 = vmatprep.subr.mxu0 0.0
        %931 = vmatpush2.msra.mxu0 0.0
        %932 = vmatprep.subr.mxu0 0.0
        %933 = vmatpush2.msra.mxu0 0.0
        %934 = vmatprep.subr.mxu0 0.0
        %935 = vmatpush2.msra.mxu0 0.0
        %936 = vmatprep.subr.mxu0 0.0
        %937 = vmatpush2.msra.mxu0 0.0
        %938 = vmatprep.subr.mxu0 0.0
        %939 = vmatpush2.msra.mxu0 0.0
        %940 = vmatprep.subr.mxu0 0.0
        %941 = vmatpush2.msra.mxu0 0.0
        %942 = vmatprep.subr.mxu0 0.0
        %943 = vmatpush2.msra.mxu0 0.0
        %944 = vmatprep.subr.mxu0 0.0
        %945 = vmatpush2.msra.mxu0 0.0
        %946 = vmatprep.subr.mxu0 0.0
        %947 = vmatpush2.msra.mxu0 0.0
        %948 = vmatprep.subr.mxu0 0.0
        %949 = vmatpush2.msra.mxu0 0.0
        %950 = vmatprep.mubr.f32.mxu0 0.0
        %951 = vmatmul.mubr.f32.gmra.mxu0 %v750
        %v952 = vpop.f32.mrf.mxu0
        %v953 = vadd.f32 0.0, %v952
        %v954 = vpop.f32.mrf.mxu0
        %v955 = vadd.f32 0.0, %v954
        %956 = vdwg.mxu0
        %v957 = vadd.f32 %v746, %v882
        %v958 = vadd.f32 %v747, %v884
        %v959 = vadd.f32 %v748, %v953
        %v960 = vadd.f32 %v749, %v955
        %v961 = vxor.u32 %v957, 2147483648
        %v962 = vmul.f32 %v961, 1.442695
        %v963 = vpow.pop %v962
        %v964 = vadd.f32 %v963, 1.0
        %v965 = vrcp.pop %v964
        %v966 = vmul.f32 1.0, %v965
        %v967 = vxor.u32 %v958, 2147483648
        %v968 = vmul.f32 %v967, 1.442695
        %v969 = vpow.pop %v968
        %v970 = vadd.f32 %v969, 1.0
        %v971 = vrcp.pop %v970
        %v972 = vmul.f32 1.0, %v971
        %v973 = vtanh.pop %v959
        %v974 = vxor.u32 %v960, 2147483648
        %v975 = vmul.f32 %v974, 1.442695
        %v976 = vpow.pop %v975
        %v977 = vadd.f32 %v976, 1.0
        %v978 = vrcp.pop %v977
        %v979 = vmul.f32 1.0, %v978
        %v980 = vld [vmem:[#allocation3] sm:$0xff]
        %v981 = vmul.f32 %v972, %v980
        %v982 = vmul.f32 %v966, %v973
        %v983 = vadd.f32 %v981, %v982
        %v984 = vtanh.pop %v983
        %v985 = vmul.f32 %v979, %v984
        %986 = vst [vmem:[#allocation3] sm:$0xff] %v983
        %987 = vst [vmem:[#allocation2] sm:$0xff] %v985
        %s988 = smul.u32 %s742, 8
        %s989 = scalar_lea.vmem %s234, %s988 [#allocation5]
        %990 = vst [vmem:[%s989] sm:$0xff] %v985
        %s991 = scalar_select %p243, 3, 4
        %s992 = smul.u32 %s991, 4
        %s993 = smul.addr %s992, 8
        %s994 = scalar_lea.vmem %s212, %s993 [#allocation4]
        %v995 = vld [vmem:[%s994] sm:$0xff]
        %v996 = vld [vmem:[%s994 + $0x8] sm:$0xff]
        %v997 = vld [vmem:[%s994 + $0x10] sm:$0xff]
        %v998 = vld [vmem:[%s994 + $0x18] sm:$0xff]
        %v999 = vld [vmem:[#allocation2] sm:$0xff]
        %v1000 = vld [vmem:[%s240] sm:$0xff]
        %v1001 = vld [vmem:[%s240 + $0x8] sm:$0xff]
        %v1002 = vld [vmem:[%s240 + $0x10] sm:$0xff]
        %v1003 = vld [vmem:[%s240 + $0x18] sm:$0xff]
        %v1004 = vld [vmem:[%s240 + $0x20] sm:$0xff]
        %v1005 = vld [vmem:[%s240 + $0x28] sm:$0xff]
        %v1006 = vld [vmem:[%s240 + $0x30] sm:$0xff]
        %v1007 = vld [vmem:[%s240 + $0x38] sm:$0xff]
        %v1008 = vld [vmem:[%s240 + $0x40] sm:$0xff]
        %v1009 = vld [vmem:[%s240 + $0x48] sm:$0xff]
        %v1010 = vld [vmem:[%s240 + $0x50] sm:$0xff]
        %v1011 = vld [vmem:[%s240 + $0x58] sm:$0xff]
        %v1012 = vld [vmem:[%s240 + $0x60] sm:$0xff]
        %v1013 = vld [vmem:[%s240 + $0x68] sm:$0xff]
        %v1014 = vld [vmem:[%s240 + $0x70] sm:$0xff]
        %v1015 = vld [vmem:[%s240 + $0x78] sm:$0xff]
        %v1016 = vld [vmem:[%s240 + $0x80] sm:$0xff]
        %v1017 = vld [vmem:[%s240 + $0x88] sm:$0xff]
        %v1018 = vld [vmem:[%s240 + $0x90] sm:$0xff]
        %v1019 = vld [vmem:[%s240 + $0x98] sm:$0xff]
        %v1020 = vld [vmem:[%s240 + $0xa0] sm:$0xff]
        %v1021 = vld [vmem:[%s240 + $0xa8] sm:$0xff]
        %v1022 = vld [vmem:[%s240 + $0xb0] sm:$0xff]
        %v1023 = vld [vmem:[%s240 + $0xb8] sm:$0xff]
        %v1024 = vld [vmem:[%s240 + $0xc0] sm:$0xff]
        %v1025 = vld [vmem:[%s240 + $0xc8] sm:$0xff]
        %v1026 = vld [vmem:[%s240 + $0xd0] sm:$0xff]
        %v1027 = vld [vmem:[%s240 + $0xd8] sm:$0xff]
        %v1028 = vld [vmem:[%s240 + $0xe0] sm:$0xff]
        %v1029 = vld [vmem:[%s240 + $0xe8] sm:$0xff]
        %v1030 = vld [vmem:[%s240 + $0xf0] sm:$0xff]
        %v1031 = vld [vmem:[%s240 + $0xf8] sm:$0xff]
        %v1032 = vld [vmem:[%s240 + $0x100] sm:$0xff]
        %v1033 = vld [vmem:[%s240 + $0x108] sm:$0xff]
        %v1034 = vld [vmem:[%s240 + $0x110] sm:$0xff]
        %v1035 = vld [vmem:[%s240 + $0x118] sm:$0xff]
        %v1036 = vld [vmem:[%s240 + $0x120] sm:$0xff]
        %v1037 = vld [vmem:[%s240 + $0x128] sm:$0xff]
        %v1038 = vld [vmem:[%s240 + $0x130] sm:$0xff]
        %v1039 = vld [vmem:[%s240 + $0x138] sm:$0xff]
        %v1040 = vld [vmem:[%s240 + $0x140] sm:$0xff]
        %v1041 = vld [vmem:[%s240 + $0x148] sm:$0xff]
        %v1042 = vld [vmem:[%s240 + $0x150] sm:$0xff]
        %v1043 = vld [vmem:[%s240 + $0x158] sm:$0xff]
        %v1044 = vld [vmem:[%s240 + $0x160] sm:$0xff]
        %v1045 = vld [vmem:[%s240 + $0x168] sm:$0xff]
        %v1046 = vld [vmem:[%s240 + $0x170] sm:$0xff]
        %v1047 = vld [vmem:[%s240 + $0x178] sm:$0xff]
        %v1048 = vld [vmem:[%s240 + $0x180] sm:$0xff]
        %v1049 = vld [vmem:[%s240 + $0x188] sm:$0xff]
        %v1050 = vld [vmem:[%s240 + $0x190] sm:$0xff]
        %v1051 = vld [vmem:[%s240 + $0x198] sm:$0xff]
        %v1052 = vld [vmem:[%s240 + $0x1a0] sm:$0xff]
        %v1053 = vld [vmem:[%s240 + $0x1a8] sm:$0xff]
        %v1054 = vld [vmem:[%s240 + $0x1b0] sm:$0xff]
        %v1055 = vld [vmem:[%s240 + $0x1b8] sm:$0xff]
        %v1056 = vld [vmem:[%s240 + $0x1c0] sm:$0xff]
        %v1057 = vld [vmem:[%s240 + $0x1c8] sm:$0xff]
        %v1058 = vld [vmem:[%s240 + $0x1d0] sm:$0xff]
        %v1059 = vld [vmem:[%s240 + $0x1d8] sm:$0xff]
        %v1060 = vld [vmem:[%s240 + $0x1e0] sm:$0xff]
        %v1061 = vld [vmem:[%s240 + $0x1e8] sm:$0xff]
        %v1062 = vld [vmem:[%s240 + $0x1f0] sm:$0xff]
        %v1063 = vld [vmem:[%s240 + $0x1f8] sm:$0xff]
        %1064 = vmatprep.subr.mxu0 %v1061
        %1065 = vmatpush1.msra.mxu0 %v1060
        %1066 = vmatprep.subr.mxu0 %v1057
        %1067 = vmatpush1.msra.mxu0 %v1056
        %1068 = vmatprep.subr.mxu0 %v1053
        %1069 = vmatpush1.msra.mxu0 %v1052
        %1070 = vmatprep.subr.mxu0 %v1049
        %1071 = vmatpush1.msra.mxu0 %v1048
        %1072 = vmatprep.subr.mxu0 %v1045
        %1073 = vmatpush1.msra.mxu0 %v1044
        %1074 = vmatprep.subr.mxu0 %v1041
        %1075 = vmatpush1.msra.mxu0 %v1040
        %1076 = vmatprep.subr.mxu0 %v1037
        %1077 = vmatpush1.msra.mxu0 %v1036
        %1078 = vmatprep.subr.mxu0 %v1033
        %1079 = vmatpush1.msra.mxu0 %v1032
        %1080 = vmatprep.subr.mxu0 %v1029
        %1081 = vmatpush1.msra.mxu0 %v1028
        %1082 = vmatprep.subr.mxu0 %v1025
        %1083 = vmatpush1.msra.mxu0 %v1024
        %1084 = vmatprep.subr.mxu0 %v1021
        %1085 = vmatpush1.msra.mxu0 %v1020
        %1086 = vmatprep.subr.mxu0 %v1017
        %1087 = vmatpush1.msra.mxu0 %v1016
        %1088 = vmatprep.subr.mxu0 %v1013
        %1089 = vmatpush1.msra.mxu0 %v1012
        %1090 = vmatprep.subr.mxu0 %v1009
        %1091 = vmatpush1.msra.mxu0 %v1008
        %1092 = vmatprep.subr.mxu0 %v1005
        %1093 = vmatpush1.msra.mxu0 %v1004
        %1094 = vmatprep.subr.mxu0 %v1001
        %1095 = vmatpush1.msra.mxu0 %v1000
        %1096 = vmatprep.subr.mxu0 0.0
        %1097 = vmatpush2.msra.mxu0 0.0
        %1098 = vmatprep.subr.mxu0 0.0
        %1099 = vmatpush2.msra.mxu0 0.0
        %1100 = vmatprep.subr.mxu0 0.0
        %1101 = vmatpush2.msra.mxu0 0.0
        %1102 = vmatprep.subr.mxu0 0.0
        %1103 = vmatpush2.msra.mxu0 0.0
        %1104 = vmatprep.subr.mxu0 0.0
        %1105 = vmatpush2.msra.mxu0 0.0
        %1106 = vmatprep.subr.mxu0 0.0
        %1107 = vmatpush2.msra.mxu0 0.0
        %1108 = vmatprep.subr.mxu0 0.0
        %1109 = vmatpush2.msra.mxu0 0.0
        %1110 = vmatprep.subr.mxu0 0.0
        %1111 = vmatpush2.msra.mxu0 0.0
        %1112 = vmatprep.subr.mxu0 0.0
        %1113 = vmatpush2.msra.mxu0 0.0
        %1114 = vmatprep.subr.mxu0 0.0
        %1115 = vmatpush2.msra.mxu0 0.0
        %1116 = vmatprep.subr.mxu0 0.0
        %1117 = vmatpush2.msra.mxu0 0.0
        %1118 = vmatprep.subr.mxu0 0.0
        %1119 = vmatpush2.msra.mxu0 0.0
        %1120 = vmatprep.subr.mxu0 0.0
        %1121 = vmatpush2.msra.mxu0 0.0
        %1122 = vmatprep.subr.mxu0 0.0
        %1123 = vmatpush2.msra.mxu0 0.0
        %1124 = vmatprep.subr.mxu0 0.0
        %1125 = vmatpush2.msra.mxu0 0.0
        %1126 = vmatprep.subr.mxu0 0.0
        %1127 = vmatpush2.msra.mxu0 0.0
        %1128 = vmatprep.mubr.f32.mxu0 0.0
        %1129 = vmatmul.mubr.f32.gmra.mxu0 %v999
        %v1130 = vpop.f32.mrf.mxu0
        %v1131 = vadd.f32 0.0, %v1130
        %v1132 = vpop.f32.mrf.mxu0
        %v1133 = vadd.f32 0.0, %v1132
        %1134 = vdwg.mxu0
        %1135 = vmatprep.subr.mxu0 %v1063
        %1136 = vmatpush1.msra.mxu0 %v1062
        %1137 = vmatprep.subr.mxu0 %v1059
        %1138 = vmatpush1.msra.mxu0 %v1058
        %1139 = vmatprep.subr.mxu0 %v1055
        %1140 = vmatpush1.msra.mxu0 %v1054
        %1141 = vmatprep.subr.mxu0 %v1051
        %1142 = vmatpush1.msra.mxu0 %v1050
        %1143 = vmatprep.subr.mxu0 %v1047
        %1144 = vmatpush1.msra.mxu0 %v1046
        %1145 = vmatprep.subr.mxu0 %v1043
        %1146 = vmatpush1.msra.mxu0 %v1042
        %1147 = vmatprep.subr.mxu0 %v1039
        %1148 = vmatpush1.msra.mxu0 %v1038
        %1149 = vmatprep.subr.mxu0 %v1035
        %1150 = vmatpush1.msra.mxu0 %v1034
        %1151 = vmatprep.subr.mxu0 %v1031
        %1152 = vmatpush1.msra.mxu0 %v1030
        %1153 = vmatprep.subr.mxu0 %v1027
        %1154 = vmatpush1.msra.mxu0 %v1026
        %1155 = vmatprep.subr.mxu0 %v1023
        %1156 = vmatpush1.msra.mxu0 %v1022
        %1157 = vmatprep.subr.mxu0 %v1019
        %1158 = vmatpush1.msra.mxu0 %v1018
        %1159 = vmatprep.subr.mxu0 %v1015
        %1160 = vmatpush1.msra.mxu0 %v1014
        %1161 = vmatprep.subr.mxu0 %v1011
        %1162 = vmatpush1.msra.mxu0 %v1010
        %1163 = vmatprep.subr.mxu0 %v1007
        %1164 = vmatpush1.msra.mxu0 %v1006
        %1165 = vmatprep.subr.mxu0 %v1003
        %1166 = vmatpush1.msra.mxu0 %v1002
        %1167 = vmatprep.subr.mxu0 0.0
        %1168 = vmatpush2.msra.mxu0 0.0
        %1169 = vmatprep.subr.mxu0 0.0
        %1170 = vmatpush2.msra.mxu0 0.0
        %1171 = vmatprep.subr.mxu0 0.0
        %1172 = vmatpush2.msra.mxu0 0.0
        %1173 = vmatprep.subr.mxu0 0.0
        %1174 = vmatpush2.msra.mxu0 0.0
        %1175 = vmatprep.subr.mxu0 0.0
        %1176 = vmatpush2.msra.mxu0 0.0
        %1177 = vmatprep.subr.mxu0 0.0
        %1178 = vmatpush2.msra.mxu0 0.0
        %1179 = vmatprep.subr.mxu0 0.0
        %1180 = vmatpush2.msra.mxu0 0.0
        %1181 = vmatprep.subr.mxu0 0.0
        %1182 = vmatpush2.msra.mxu0 0.0
        %1183 = vmatprep.subr.mxu0 0.0
        %1184 = vmatpush2.msra.mxu0 0.0
        %1185 = vmatprep.subr.mxu0 0.0
        %1186 = vmatpush2.msra.mxu0 0.0
        %1187 = vmatprep.subr.mxu0 0.0
        %1188 = vmatpush2.msra.mxu0 0.0
        %1189 = vmatprep.subr.mxu0 0.0
        %1190 = vmatpush2.msra.mxu0 0.0
        %1191 = vmatprep.subr.mxu0 0.0
        %1192 = vmatpush2.msra.mxu0 0.0
        %1193 = vmatprep.subr.mxu0 0.0
        %1194 = vmatpush2.msra.mxu0 0.0
        %1195 = vmatprep.subr.mxu0 0.0
        %1196 = vmatpush2.msra.mxu0 0.0
        %1197 = vmatprep.subr.mxu0 0.0
        %1198 = vmatpush2.msra.mxu0 0.0
        %1199 = vmatprep.mubr.f32.mxu0 0.0
        %1200 = vmatmul.mubr.f32.gmra.mxu0 %v999
        %v1201 = vpop.f32.mrf.mxu0
        %v1202 = vadd.f32 0.0, %v1201
        %v1203 = vpop.f32.mrf.mxu0
        %v1204 = vadd.f32 0.0, %v1203
        %1205 = vdwg.mxu0
        %v1206 = vadd.f32 %v995, %v1131
        %v1207 = vadd.f32 %v996, %v1133
        %v1208 = vadd.f32 %v997, %v1202
        %v1209 = vadd.f32 %v998, %v1204
        %v1210 = vxor.u32 %v1206, 2147483648
        %v1211 = vmul.f32 %v1210, 1.442695
        %v1212 = vpow.pop %v1211
        %v1213 = vadd.f32 %v1212, 1.0
        %v1214 = vrcp.pop %v1213
        %v1215 = vmul.f32 1.0, %v1214
        %v1216 = vxor.u32 %v1207, 2147483648
        %v1217 = vmul.f32 %v1216, 1.442695
        %v1218 = vpow.pop %v1217
        %v1219 = vadd.f32 %v1218, 1.0
        %v1220 = vrcp.pop %v1219
        %v1221 = vmul.f32 1.0, %v1220
        %v1222 = vtanh.pop %v1208
        %v1223 = vxor.u32 %v1209, 2147483648
        %v1224 = vmul.f32 %v1223, 1.442695
        %v1225 = vpow.pop %v1224
        %v1226 = vadd.f32 %v1225, 1.0
        %v1227 = vrcp.pop %v1226
        %v1228 = vmul.f32 1.0, %v1227
        %v1229 = vld [vmem:[#allocation3] sm:$0xff]
        %v1230 = vmul.f32 %v1221, %v1229
        %v1231 = vmul.f32 %v1215, %v1222
        %v1232 = vadd.f32 %v1230, %v1231
        %v1233 = vtanh.pop %v1232
        %v1234 = vmul.f32 %v1228, %v1233
        %1235 = vst [vmem:[#allocation3] sm:$0xff] %v1232
        %1236 = vst [vmem:[#allocation2] sm:$0xff] %v1234
        %s1237 = smul.u32 %s991, 8
        %s1238 = scalar_lea.vmem %s234, %s1237 [#allocation5]
        %1239 = vst [vmem:[%s1238] sm:$0xff] %v1234
        %s1240 = scalar_select %p243, 4, 3
        %s1241 = smul.u32 %s1240, 4
        %s1242 = smul.addr %s1241, 8
        %s1243 = scalar_lea.vmem %s212, %s1242 [#allocation4]
        %v1244 = vld [vmem:[%s1243] sm:$0xff]
        %v1245 = vld [vmem:[%s1243 + $0x8] sm:$0xff]
        %v1246 = vld [vmem:[%s1243 + $0x10] sm:$0xff]
        %v1247 = vld [vmem:[%s1243 + $0x18] sm:$0xff]
        %v1248 = vld [vmem:[#allocation2] sm:$0xff]
        %v1249 = vld [vmem:[%s240] sm:$0xff]
        %v1250 = vld [vmem:[%s240 + $0x8] sm:$0xff]
        %v1251 = vld [vmem:[%s240 + $0x10] sm:$0xff]
        %v1252 = vld [vmem:[%s240 + $0x18] sm:$0xff]
        %v1253 = vld [vmem:[%s240 + $0x20] sm:$0xff]
        %v1254 = vld [vmem:[%s240 + $0x28] sm:$0xff]
        %v1255 = vld [vmem:[%s240 + $0x30] sm:$0xff]
        %v1256 = vld [vmem:[%s240 + $0x38] sm:$0xff]
        %v1257 = vld [vmem:[%s240 + $0x40] sm:$0xff]
        %v1258 = vld [vmem:[%s240 + $0x48] sm:$0xff]
        %v1259 = vld [vmem:[%s240 + $0x50] sm:$0xff]
        %v1260 = vld [vmem:[%s240 + $0x58] sm:$0xff]
        %v1261 = vld [vmem:[%s240 + $0x60] sm:$0xff]
        %v1262 = vld [vmem:[%s240 + $0x68] sm:$0xff]
        %v1263 = vld [vmem:[%s240 + $0x70] sm:$0xff]
        %v1264 = vld [vmem:[%s240 + $0x78] sm:$0xff]
        %v1265 = vld [vmem:[%s240 + $0x80] sm:$0xff]
        %v1266 = vld [vmem:[%s240 + $0x88] sm:$0xff]
        %v1267 = vld [vmem:[%s240 + $0x90] sm:$0xff]
        %v1268 = vld [vmem:[%s240 + $0x98] sm:$0xff]
        %v1269 = vld [vmem:[%s240 + $0xa0] sm:$0xff]
        %v1270 = vld [vmem:[%s240 + $0xa8] sm:$0xff]
        %v1271 = vld [vmem:[%s240 + $0xb0] sm:$0xff]
        %v1272 = vld [vmem:[%s240 + $0xb8] sm:$0xff]
        %v1273 = vld [vmem:[%s240 + $0xc0] sm:$0xff]
        %v1274 = vld [vmem:[%s240 + $0xc8] sm:$0xff]
        %v1275 = vld [vmem:[%s240 + $0xd0] sm:$0xff]
        %v1276 = vld [vmem:[%s240 + $0xd8] sm:$0xff]
        %v1277 = vld [vmem:[%s240 + $0xe0] sm:$0xff]
        %v1278 = vld [vmem:[%s240 + $0xe8] sm:$0xff]
        %v1279 = vld [vmem:[%s240 + $0xf0] sm:$0xff]
        %v1280 = vld [vmem:[%s240 + $0xf8] sm:$0xff]
        %v1281 = vld [vmem:[%s240 + $0x100] sm:$0xff]
        %v1282 = vld [vmem:[%s240 + $0x108] sm:$0xff]
        %v1283 = vld [vmem:[%s240 + $0x110] sm:$0xff]
        %v1284 = vld [vmem:[%s240 + $0x118] sm:$0xff]
        %v1285 = vld [vmem:[%s240 + $0x120] sm:$0xff]
        %v1286 = vld [vmem:[%s240 + $0x128] sm:$0xff]
        %v1287 = vld [vmem:[%s240 + $0x130] sm:$0xff]
        %v1288 = vld [vmem:[%s240 + $0x138] sm:$0xff]
        %v1289 = vld [vmem:[%s240 + $0x140] sm:$0xff]
        %v1290 = vld [vmem:[%s240 + $0x148] sm:$0xff]
        %v1291 = vld [vmem:[%s240 + $0x150] sm:$0xff]
        %v1292 = vld [vmem:[%s240 + $0x158] sm:$0xff]
        %v1293 = vld [vmem:[%s240 + $0x160] sm:$0xff]
        %v1294 = vld [vmem:[%s240 + $0x168] sm:$0xff]
        %v1295 = vld [vmem:[%s240 + $0x170] sm:$0xff]
        %v1296 = vld [vmem:[%s240 + $0x178] sm:$0xff]
        %v1297 = vld [vmem:[%s240 + $0x180] sm:$0xff]
        %v1298 = vld [vmem:[%s240 + $0x188] sm:$0xff]
        %v1299 = vld [vmem:[%s240 + $0x190] sm:$0xff]
        %v1300 = vld [vmem:[%s240 + $0x198] sm:$0xff]
        %v1301 = vld [vmem:[%s240 + $0x1a0] sm:$0xff]
        %v1302 = vld [vmem:[%s240 + $0x1a8] sm:$0xff]
        %v1303 = vld [vmem:[%s240 + $0x1b0] sm:$0xff]
        %v1304 = vld [vmem:[%s240 + $0x1b8] sm:$0xff]
        %v1305 = vld [vmem:[%s240 + $0x1c0] sm:$0xff]
        %v1306 = vld [vmem:[%s240 + $0x1c8] sm:$0xff]
        %v1307 = vld [vmem:[%s240 + $0x1d0] sm:$0xff]
        %v1308 = vld [vmem:[%s240 + $0x1d8] sm:$0xff]
        %v1309 = vld [vmem:[%s240 + $0x1e0] sm:$0xff]
        %v1310 = vld [vmem:[%s240 + $0x1e8] sm:$0xff]
        %v1311 = vld [vmem:[%s240 + $0x1f0] sm:$0xff]
        %v1312 = vld [vmem:[%s240 + $0x1f8] sm:$0xff]
        %1313 = vmatprep.subr.mxu0 %v1310
        %1314 = vmatpush1.msra.mxu0 %v1309
        %1315 = vmatprep.subr.mxu0 %v1306
        %1316 = vmatpush1.msra.mxu0 %v1305
        %1317 = vmatprep.subr.mxu0 %v1302
        %1318 = vmatpush1.msra.mxu0 %v1301
        %1319 = vmatprep.subr.mxu0 %v1298
        %1320 = vmatpush1.msra.mxu0 %v1297
        %1321 = vmatprep.subr.mxu0 %v1294
        %1322 = vmatpush1.msra.mxu0 %v1293
        %1323 = vmatprep.subr.mxu0 %v1290
        %1324 = vmatpush1.msra.mxu0 %v1289
        %1325 = vmatprep.subr.mxu0 %v1286
        %1326 = vmatpush1.msra.mxu0 %v1285
        %1327 = vmatprep.subr.mxu0 %v1282
        %1328 = vmatpush1.msra.mxu0 %v1281
        %1329 = vmatprep.subr.mxu0 %v1278
        %1330 = vmatpush1.msra.mxu0 %v1277
        %1331 = vmatprep.subr.mxu0 %v1274
        %1332 = vmatpush1.msra.mxu0 %v1273
        %1333 = vmatprep.subr.mxu0 %v1270
        %1334 = vmatpush1.msra.mxu0 %v1269
        %1335 = vmatprep.subr.mxu0 %v1266
        %1336 = vmatpush1.msra.mxu0 %v1265
        %1337 = vmatprep.subr.mxu0 %v1262
        %1338 = vmatpush1.msra.mxu0 %v1261
        %1339 = vmatprep.subr.mxu0 %v1258
        %1340 = vmatpush1.msra.mxu0 %v1257
        %1341 = vmatprep.subr.mxu0 %v1254
        %1342 = vmatpush1.msra.mxu0 %v1253
        %1343 = vmatprep.subr.mxu0 %v1250
        %1344 = vmatpush1.msra.mxu0 %v1249
        %1345 = vmatprep.subr.mxu0 0.0
        %1346 = vmatpush2.msra.mxu0 0.0
        %1347 = vmatprep.subr.mxu0 0.0
        %1348 = vmatpush2.msra.mxu0 0.0
        %1349 = vmatprep.subr.mxu0 0.0
        %1350 = vmatpush2.msra.mxu0 0.0
        %1351 = vmatprep.subr.mxu0 0.0
        %1352 = vmatpush2.msra.mxu0 0.0
        %1353 = vmatprep.subr.mxu0 0.0
        %1354 = vmatpush2.msra.mxu0 0.0
        %1355 = vmatprep.subr.mxu0 0.0
        %1356 = vmatpush2.msra.mxu0 0.0
        %1357 = vmatprep.subr.mxu0 0.0
        %1358 = vmatpush2.msra.mxu0 0.0
        %1359 = vmatprep.subr.mxu0 0.0
        %1360 = vmatpush2.msra.mxu0 0.0
        %1361 = vmatprep.subr.mxu0 0.0
        %1362 = vmatpush2.msra.mxu0 0.0
        %1363 = vmatprep.subr.mxu0 0.0
        %1364 = vmatpush2.msra.mxu0 0.0
        %1365 = vmatprep.subr.mxu0 0.0
        %1366 = vmatpush2.msra.mxu0 0.0
        %1367 = vmatprep.subr.mxu0 0.0
        %1368 = vmatpush2.msra.mxu0 0.0
        %1369 = vmatprep.subr.mxu0 0.0
        %1370 = vmatpush2.msra.mxu0 0.0
        %1371 = vmatprep.subr.mxu0 0.0
        %1372 = vmatpush2.msra.mxu0 0.0
        %1373 = vmatprep.subr.mxu0 0.0
        %1374 = vmatpush2.msra.mxu0 0.0
        %1375 = vmatprep.subr.mxu0 0.0
        %1376 = vmatpush2.msra.mxu0 0.0
        %1377 = vmatprep.mubr.f32.mxu0 0.0
        %1378 = vmatmul.mubr.f32.gmra.mxu0 %v1248
        %v1379 = vpop.f32.mrf.mxu0
        %v1380 = vadd.f32 0.0, %v1379
        %v1381 = vpop.f32.mrf.mxu0
        %v1382 = vadd.f32 0.0, %v1381
        %1383 = vdwg.mxu0
        %1384 = vmatprep.subr.mxu0 %v1312
        %1385 = vmatpush1.msra.mxu0 %v1311
        %1386 = vmatprep.subr.mxu0 %v1308
        %1387 = vmatpush1.msra.mxu0 %v1307
        %1388 = vmatprep.subr.mxu0 %v1304
        %1389 = vmatpush1.msra.mxu0 %v1303
        %1390 = vmatprep.subr.mxu0 %v1300
        %1391 = vmatpush1.msra.mxu0 %v1299
        %1392 = vmatprep.subr.mxu0 %v1296
        %1393 = vmatpush1.msra.mxu0 %v1295
        %1394 = vmatprep.subr.mxu0 %v1292
        %1395 = vmatpush1.msra.mxu0 %v1291
        %1396 = vmatprep.subr.mxu0 %v1288
        %1397 = vmatpush1.msra.mxu0 %v1287
        %1398 = vmatprep.subr.mxu0 %v1284
        %1399 = vmatpush1.msra.mxu0 %v1283
        %1400 = vmatprep.subr.mxu0 %v1280
        %1401 = vmatpush1.msra.mxu0 %v1279
        %1402 = vmatprep.subr.mxu0 %v1276
        %1403 = vmatpush1.msra.mxu0 %v1275
        %1404 = vmatprep.subr.mxu0 %v1272
        %1405 = vmatpush1.msra.mxu0 %v1271
        %1406 = vmatprep.subr.mxu0 %v1268
        %1407 = vmatpush1.msra.mxu0 %v1267
        %1408 = vmatprep.subr.mxu0 %v1264
        %1409 = vmatpush1.msra.mxu0 %v1263
        %1410 = vmatprep.subr.mxu0 %v1260
        %1411 = vmatpush1.msra.mxu0 %v1259
        %1412 = vmatprep.subr.mxu0 %v1256
        %1413 = vmatpush1.msra.mxu0 %v1255
        %1414 = vmatprep.subr.mxu0 %v1252
        %1415 = vmatpush1.msra.mxu0 %v1251
        %1416 = vmatprep.subr.mxu0 0.0
        %1417 = vmatpush2.msra.mxu0 0.0
        %1418 = vmatprep.subr.mxu0 0.0
        %1419 = vmatpush2.msra.mxu0 0.0
        %1420 = vmatprep.subr.mxu0 0.0
        %1421 = vmatpush2.msra.mxu0 0.0
        %1422 = vmatprep.subr.mxu0 0.0
        %1423 = vmatpush2.msra.mxu0 0.0
        %1424 = vmatprep.subr.mxu0 0.0
        %1425 = vmatpush2.msra.mxu0 0.0
        %1426 = vmatprep.subr.mxu0 0.0
        %1427 = vmatpush2.msra.mxu0 0.0
        %1428 = vmatprep.subr.mxu0 0.0
        %1429 = vmatpush2.msra.mxu0 0.0
        %1430 = vmatprep.subr.mxu0 0.0
        %1431 = vmatpush2.msra.mxu0 0.0
        %1432 = vmatprep.subr.mxu0 0.0
        %1433 = vmatpush2.msra.mxu0 0.0
        %1434 = vmatprep.subr.mxu0 0.0
        %1435 = vmatpush2.msra.mxu0 0.0
        %1436 = vmatprep.subr.mxu0 0.0
        %1437 = vmatpush2.msra.mxu0 0.0
        %1438 = vmatprep.subr.mxu0 0.0
        %1439 = vmatpush2.msra.mxu0 0.0
        %1440 = vmatprep.subr.mxu0 0.0
        %1441 = vmatpush2.msra.mxu0 0.0
        %1442 = vmatprep.subr.mxu0 0.0
        %1443 = vmatpush2.msra.mxu0 0.0
        %1444 = vmatprep.subr.mxu0 0.0
        %1445 = vmatpush2.msra.mxu0 0.0
        %1446 = vmatprep.subr.mxu0 0.0
        %1447 = vmatpush2.msra.mxu0 0.0
        %1448 = vmatprep.mubr.f32.mxu0 0.0
        %1449 = vmatmul.mubr.f32.gmra.mxu0 %v1248
        %v1450 = vpop.f32.mrf.mxu0
        %v1451 = vadd.f32 0.0, %v1450
        %v1452 = vpop.f32.mrf.mxu0
        %v1453 = vadd.f32 0.0, %v1452
        %1454 = vdwg.mxu0
        %v1455 = vadd.f32 %v1244, %v1380
        %v1456 = vadd.f32 %v1245, %v1382
        %v1457 = vadd.f32 %v1246, %v1451
        %v1458 = vadd.f32 %v1247, %v1453
        %v1459 = vxor.u32 %v1455, 2147483648
        %v1460 = vmul.f32 %v1459, 1.442695
        %v1461 = vpow.pop %v1460
        %v1462 = vadd.f32 %v1461, 1.0
        %v1463 = vrcp.pop %v1462
        %v1464 = vmul.f32 1.0, %v1463
        %v1465 = vxor.u32 %v1456, 2147483648
        %v1466 = vmul.f32 %v1465, 1.442695
        %v1467 = vpow.pop %v1466
        %v1468 = vadd.f32 %v1467, 1.0
        %v1469 = vrcp.pop %v1468
        %v1470 = vmul.f32 1.0, %v1469
        %v1471 = vtanh.pop %v1457
        %v1472 = vxor.u32 %v1458, 2147483648
        %v1473 = vmul.f32 %v1472, 1.442695
        %v1474 = vpow.pop %v1473
        %v1475 = vadd.f32 %v1474, 1.0
        %v1476 = vrcp.pop %v1475
        %v1477 = vmul.f32 1.0, %v1476
        %v1478 = vld [vmem:[#allocation3] sm:$0xff]
        %v1479 = vmul.f32 %v1470, %v1478
        %v1480 = vmul.f32 %v1464, %v1471
        %v1481 = vadd.f32 %v1479, %v1480
        %v1482 = vtanh.pop %v1481
        %v1483 = vmul.f32 %v1477, %v1482
        %1484 = vst [vmem:[#allocation3] sm:$0xff] %v1481
        %1485 = vst [vmem:[#allocation2] sm:$0xff] %v1483
        %s1486 = smul.u32 %s1240, 8
        %s1487 = scalar_lea.vmem %s234, %s1486 [#allocation5]
        %1488 = vst [vmem:[%s1487] sm:$0xff] %v1483
        %s1489 = scalar_select %p243, 5, 2
        %s1490 = smul.u32 %s1489, 4
        %s1491 = smul.addr %s1490, 8
        %s1492 = scalar_lea.vmem %s212, %s1491 [#allocation4]
        %v1493 = vld [vmem:[%s1492] sm:$0xff]
        %v1494 = vld [vmem:[%s1492 + $0x8] sm:$0xff]
        %v1495 = vld [vmem:[%s1492 + $0x10] sm:$0xff]
        %v1496 = vld [vmem:[%s1492 + $0x18] sm:$0xff]
        %v1497 = vld [vmem:[#allocation2] sm:$0xff]
        %v1498 = vld [vmem:[%s240] sm:$0xff]
        %v1499 = vld [vmem:[%s240 + $0x8] sm:$0xff]
        %v1500 = vld [vmem:[%s240 + $0x10] sm:$0xff]
        %v1501 = vld [vmem:[%s240 + $0x18] sm:$0xff]
        %v1502 = vld [vmem:[%s240 + $0x20] sm:$0xff]
        %v1503 = vld [vmem:[%s240 + $0x28] sm:$0xff]
        %v1504 = vld [vmem:[%s240 + $0x30] sm:$0xff]
        %v1505 = vld [vmem:[%s240 + $0x38] sm:$0xff]
        %v1506 = vld [vmem:[%s240 + $0x40] sm:$0xff]
        %v1507 = vld [vmem:[%s240 + $0x48] sm:$0xff]
        %v1508 = vld [vmem:[%s240 + $0x50] sm:$0xff]
        %v1509 = vld [vmem:[%s240 + $0x58] sm:$0xff]
        %v1510 = vld [vmem:[%s240 + $0x60] sm:$0xff]
        %v1511 = vld [vmem:[%s240 + $0x68] sm:$0xff]
        %v1512 = vld [vmem:[%s240 + $0x70] sm:$0xff]
        %v1513 = vld [vmem:[%s240 + $0x78] sm:$0xff]
        %v1514 = vld [vmem:[%s240 + $0x80] sm:$0xff]
        %v1515 = vld [vmem:[%s240 + $0x88] sm:$0xff]
        %v1516 = vld [vmem:[%s240 + $0x90] sm:$0xff]
        %v1517 = vld [vmem:[%s240 + $0x98] sm:$0xff]
        %v1518 = vld [vmem:[%s240 + $0xa0] sm:$0xff]
        %v1519 = vld [vmem:[%s240 + $0xa8] sm:$0xff]
        %v1520 = vld [vmem:[%s240 + $0xb0] sm:$0xff]
        %v1521 = vld [vmem:[%s240 + $0xb8] sm:$0xff]
        %v1522 = vld [vmem:[%s240 + $0xc0] sm:$0xff]
        %v1523 = vld [vmem:[%s240 + $0xc8] sm:$0xff]
        %v1524 = vld [vmem:[%s240 + $0xd0] sm:$0xff]
        %v1525 = vld [vmem:[%s240 + $0xd8] sm:$0xff]
        %v1526 = vld [vmem:[%s240 + $0xe0] sm:$0xff]
        %v1527 = vld [vmem:[%s240 + $0xe8] sm:$0xff]
        %v1528 = vld [vmem:[%s240 + $0xf0] sm:$0xff]
        %v1529 = vld [vmem:[%s240 + $0xf8] sm:$0xff]
        %v1530 = vld [vmem:[%s240 + $0x100] sm:$0xff]
        %v1531 = vld [vmem:[%s240 + $0x108] sm:$0xff]
        %v1532 = vld [vmem:[%s240 + $0x110] sm:$0xff]
        %v1533 = vld [vmem:[%s240 + $0x118] sm:$0xff]
        %v1534 = vld [vmem:[%s240 + $0x120] sm:$0xff]
        %v1535 = vld [vmem:[%s240 + $0x128] sm:$0xff]
        %v1536 = vld [vmem:[%s240 + $0x130] sm:$0xff]
        %v1537 = vld [vmem:[%s240 + $0x138] sm:$0xff]
        %v1538 = vld [vmem:[%s240 + $0x140] sm:$0xff]
        %v1539 = vld [vmem:[%s240 + $0x148] sm:$0xff]
        %v1540 = vld [vmem:[%s240 + $0x150] sm:$0xff]
        %v1541 = vld [vmem:[%s240 + $0x158] sm:$0xff]
        %v1542 = vld [vmem:[%s240 + $0x160] sm:$0xff]
        %v1543 = vld [vmem:[%s240 + $0x168] sm:$0xff]
        %v1544 = vld [vmem:[%s240 + $0x170] sm:$0xff]
        %v1545 = vld [vmem:[%s240 + $0x178] sm:$0xff]
        %v1546 = vld [vmem:[%s240 + $0x180] sm:$0xff]
        %v1547 = vld [vmem:[%s240 + $0x188] sm:$0xff]
        %v1548 = vld [vmem:[%s240 + $0x190] sm:$0xff]
        %v1549 = vld [vmem:[%s240 + $0x198] sm:$0xff]
        %v1550 = vld [vmem:[%s240 + $0x1a0] sm:$0xff]
        %v1551 = vld [vmem:[%s240 + $0x1a8] sm:$0xff]
        %v1552 = vld [vmem:[%s240 + $0x1b0] sm:$0xff]
        %v1553 = vld [vmem:[%s240 + $0x1b8] sm:$0xff]
        %v1554 = vld [vmem:[%s240 + $0x1c0] sm:$0xff]
        %v1555 = vld [vmem:[%s240 + $0x1c8] sm:$0xff]
        %v1556 = vld [vmem:[%s240 + $0x1d0] sm:$0xff]
        %v1557 = vld [vmem:[%s240 + $0x1d8] sm:$0xff]
        %v1558 = vld [vmem:[%s240 + $0x1e0] sm:$0xff]
        %v1559 = vld [vmem:[%s240 + $0x1e8] sm:$0xff]
        %v1560 = vld [vmem:[%s240 + $0x1f0] sm:$0xff]
        %v1561 = vld [vmem:[%s240 + $0x1f8] sm:$0xff]
        %1562 = vmatprep.subr.mxu0 %v1559
        %1563 = vmatpush1.msra.mxu0 %v1558
        %1564 = vmatprep.subr.mxu0 %v1555
        %1565 = vmatpush1.msra.mxu0 %v1554
        %1566 = vmatprep.subr.mxu0 %v1551
        %1567 = vmatpush1.msra.mxu0 %v1550
        %1568 = vmatprep.subr.mxu0 %v1547
        %1569 = vmatpush1.msra.mxu0 %v1546
        %1570 = vmatprep.subr.mxu0 %v1543
        %1571 = vmatpush1.msra.mxu0 %v1542
        %1572 = vmatprep.subr.mxu0 %v1539
        %1573 = vmatpush1.msra.mxu0 %v1538
        %1574 = vmatprep.subr.mxu0 %v1535
        %1575 = vmatpush1.msra.mxu0 %v1534
        %1576 = vmatprep.subr.mxu0 %v1531
        %1577 = vmatpush1.msra.mxu0 %v1530
        %1578 = vmatprep.subr.mxu0 %v1527
        %1579 = vmatpush1.msra.mxu0 %v1526
        %1580 = vmatprep.subr.mxu0 %v1523
        %1581 = vmatpush1.msra.mxu0 %v1522
        %1582 = vmatprep.subr.mxu0 %v1519
        %1583 = vmatpush1.msra.mxu0 %v1518
        %1584 = vmatprep.subr.mxu0 %v1515
        %1585 = vmatpush1.msra.mxu0 %v1514
        %1586 = vmatprep.subr.mxu0 %v1511
        %1587 = vmatpush1.msra.mxu0 %v1510
        %1588 = vmatprep.subr.mxu0 %v1507
        %1589 = vmatpush1.msra.mxu0 %v1506
        %1590 = vmatprep.subr.mxu0 %v1503
        %1591 = vmatpush1.msra.mxu0 %v1502
        %1592 = vmatprep.subr.mxu0 %v1499
        %1593 = vmatpush1.msra.mxu0 %v1498
        %1594 = vmatprep.subr.mxu0 0.0
        %1595 = vmatpush2.msra.mxu0 0.0
        %1596 = vmatprep.subr.mxu0 0.0
        %1597 = vmatpush2.msra.mxu0 0.0
        %1598 = vmatprep.subr.mxu0 0.0
        %1599 = vmatpush2.msra.mxu0 0.0
        %1600 = vmatprep.subr.mxu0 0.0
        %1601 = vmatpush2.msra.mxu0 0.0
        %1602 = vmatprep.subr.mxu0 0.0
        %1603 = vmatpush2.msra.mxu0 0.0
        %1604 = vmatprep.subr.mxu0 0.0
        %1605 = vmatpush2.msra.mxu0 0.0
        %1606 = vmatprep.subr.mxu0 0.0
        %1607 = vmatpush2.msra.mxu0 0.0
        %1608 = vmatprep.subr.mxu0 0.0
        %1609 = vmatpush2.msra.mxu0 0.0
        %1610 = vmatprep.subr.mxu0 0.0
        %1611 = vmatpush2.msra.mxu0 0.0
        %1612 = vmatprep.subr.mxu0 0.0
        %1613 = vmatpush2.msra.mxu0 0.0
        %1614 = vmatprep.subr.mxu0 0.0
        %1615 = vmatpush2.msra.mxu0 0.0
        %1616 = vmatprep.subr.mxu0 0.0
        %1617 = vmatpush2.msra.mxu0 0.0
        %1618 = vmatprep.subr.mxu0 0.0
        %1619 = vmatpush2.msra.mxu0 0.0
        %1620 = vmatprep.subr.mxu0 0.0
        %1621 = vmatpush2.msra.mxu0 0.0
        %1622 = vmatprep.subr.mxu0 0.0
        %1623 = vmatpush2.msra.mxu0 0.0
        %1624 = vmatprep.subr.mxu0 0.0
        %1625 = vmatpush2.msra.mxu0 0.0
        %1626 = vmatprep.mubr.f32.mxu0 0.0
        %1627 = vmatmul.mubr.f32.gmra.mxu0 %v1497
        %v1628 = vpop.f32.mrf.mxu0
        %v1629 = vadd.f32 0.0, %v1628
        %v1630 = vpop.f32.mrf.mxu0
        %v1631 = vadd.f32 0.0, %v1630
        %1632 = vdwg.mxu0
        %1633 = vmatprep.subr.mxu0 %v1561
        %1634 = vmatpush1.msra.mxu0 %v1560
        %1635 = vmatprep.subr.mxu0 %v1557
        %1636 = vmatpush1.msra.mxu0 %v1556
        %1637 = vmatprep.subr.mxu0 %v1553
        %1638 = vmatpush1.msra.mxu0 %v1552
        %1639 = vmatprep.subr.mxu0 %v1549
        %1640 = vmatpush1.msra.mxu0 %v1548
        %1641 = vmatprep.subr.mxu0 %v1545
        %1642 = vmatpush1.msra.mxu0 %v1544
        %1643 = vmatprep.subr.mxu0 %v1541
        %1644 = vmatpush1.msra.mxu0 %v1540
        %1645 = vmatprep.subr.mxu0 %v1537
        %1646 = vmatpush1.msra.mxu0 %v1536
        %1647 = vmatprep.subr.mxu0 %v1533
        %1648 = vmatpush1.msra.mxu0 %v1532
        %1649 = vmatprep.subr.mxu0 %v1529
        %1650 = vmatpush1.msra.mxu0 %v1528
        %1651 = vmatprep.subr.mxu0 %v1525
        %1652 = vmatpush1.msra.mxu0 %v1524
        %1653 = vmatprep.subr.mxu0 %v1521
        %1654 = vmatpush1.msra.mxu0 %v1520
        %1655 = vmatprep.subr.mxu0 %v1517
        %1656 = vmatpush1.msra.mxu0 %v1516
        %1657 = vmatprep.subr.mxu0 %v1513
        %1658 = vmatpush1.msra.mxu0 %v1512
        %1659 = vmatprep.subr.mxu0 %v1509
        %1660 = vmatpush1.msra.mxu0 %v1508
        %1661 = vmatprep.subr.mxu0 %v1505
        %1662 = vmatpush1.msra.mxu0 %v1504
        %1663 = vmatprep.subr.mxu0 %v1501
        %1664 = vmatpush1.msra.mxu0 %v1500
        %1665 = vmatprep.subr.mxu0 0.0
        %1666 = vmatpush2.msra.mxu0 0.0
        %1667 = vmatprep.subr.mxu0 0.0
        %1668 = vmatpush2.msra.mxu0 0.0
        %1669 = vmatprep.subr.mxu0 0.0
        %1670 = vmatpush2.msra.mxu0 0.0
        %1671 = vmatprep.subr.mxu0 0.0
        %1672 = vmatpush2.msra.mxu0 0.0
        %1673 = vmatprep.subr.mxu0 0.0
        %1674 = vmatpush2.msra.mxu0 0.0
        %1675 = vmatprep.subr.mxu0 0.0
        %1676 = vmatpush2.msra.mxu0 0.0
        %1677 = vmatprep.subr.mxu0 0.0
        %1678 = vmatpush2.msra.mxu0 0.0
        %1679 = vmatprep.subr.mxu0 0.0
        %1680 = vmatpush2.msra.mxu0 0.0
        %1681 = vmatprep.subr.mxu0 0.0
        %1682 = vmatpush2.msra.mxu0 0.0
        %1683 = vmatprep.subr.mxu0 0.0
        %1684 = vmatpush2.msra.mxu0 0.0
        %1685 = vmatprep.subr.mxu0 0.0
        %1686 = vmatpush2.msra.mxu0 0.0
        %1687 = vmatprep.subr.mxu0 0.0
        %1688 = vmatpush2.msra.mxu0 0.0
        %1689 = vmatprep.subr.mxu0 0.0
        %1690 = vmatpush2.msra.mxu0 0.0
        %1691 = vmatprep.subr.mxu0 0.0
        %1692 = vmatpush2.msra.mxu0 0.0
        %1693 = vmatprep.subr.mxu0 0.0
        %1694 = vmatpush2.msra.mxu0 0.0
        %1695 = vmatprep.subr.mxu0 0.0
        %1696 = vmatpush2.msra.mxu0 0.0
        %1697 = vmatprep.mubr.f32.mxu0 0.0
        %1698 = vmatmul.mubr.f32.gmra.mxu0 %v1497
        %v1699 = vpop.f32.mrf.mxu0
        %v1700 = vadd.f32 0.0, %v1699
        %v1701 = vpop.f32.mrf.mxu0
        %v1702 = vadd.f32 0.0, %v1701
        %1703 = vdwg.mxu0
        %v1704 = vadd.f32 %v1493, %v1629
        %v1705 = vadd.f32 %v1494, %v1631
        %v1706 = vadd.f32 %v1495, %v1700
        %v1707 = vadd.f32 %v1496, %v1702
        %v1708 = vxor.u32 %v1704, 2147483648
        %v1709 = vmul.f32 %v1708, 1.442695
        %v1710 = vpow.pop %v1709
        %v1711 = vadd.f32 %v1710, 1.0
        %v1712 = vrcp.pop %v1711
        %v1713 = vmul.f32 1.0, %v1712
        %v1714 = vxor.u32 %v1705, 2147483648
        %v1715 = vmul.f32 %v1714, 1.442695
        %v1716 = vpow.pop %v1715
        %v1717 = vadd.f32 %v1716, 1.0
        %v1718 = vrcp.pop %v1717
        %v1719 = vmul.f32 1.0, %v1718
        %v1720 = vtanh.pop %v1706
        %v1721 = vxor.u32 %v1707, 2147483648
        %v1722 = vmul.f32 %v1721, 1.442695
        %v1723 = vpow.pop %v1722
        %v1724 = vadd.f32 %v1723, 1.0
        %v1725 = vrcp.pop %v1724
        %v1726 = vmul.f32 1.0, %v1725
        %v1727 = vld [vmem:[#allocation3] sm:$0xff]
        %v1728 = vmul.f32 %v1719, %v1727
        %v1729 = vmul.f32 %v1713, %v1720
        %v1730 = vadd.f32 %v1728, %v1729
        %v1731 = vtanh.pop %v1730
        %v1732 = vmul.f32 %v1726, %v1731
        %1733 = vst [vmem:[#allocation3] sm:$0xff] %v1730
        %1734 = vst [vmem:[#allocation2] sm:$0xff] %v1732
        %s1735 = smul.u32 %s1489, 8
        %s1736 = scalar_lea.vmem %s234, %s1735 [#allocation5]
        %1737 = vst [vmem:[%s1736] sm:$0xff] %v1732
        %s1738 = scalar_select %p243, 6, 1
        %s1739 = smul.u32 %s1738, 4
        %s1740 = smul.addr %s1739, 8
        %s1741 = scalar_lea.vmem %s212, %s1740 [#allocation4]
        %v1742 = vld [vmem:[%s1741] sm:$0xff]
        %v1743 = vld [vmem:[%s1741 + $0x8] sm:$0xff]
        %v1744 = vld [vmem:[%s1741 + $0x10] sm:$0xff]
        %v1745 = vld [vmem:[%s1741 + $0x18] sm:$0xff]
        %v1746 = vld [vmem:[#allocation2] sm:$0xff]
        %v1747 = vld [vmem:[%s240] sm:$0xff]
        %v1748 = vld [vmem:[%s240 + $0x8] sm:$0xff]
        %v1749 = vld [vmem:[%s240 + $0x10] sm:$0xff]
        %v1750 = vld [vmem:[%s240 + $0x18] sm:$0xff]
        %v1751 = vld [vmem:[%s240 + $0x20] sm:$0xff]
        %v1752 = vld [vmem:[%s240 + $0x28] sm:$0xff]
        %v1753 = vld [vmem:[%s240 + $0x30] sm:$0xff]
        %v1754 = vld [vmem:[%s240 + $0x38] sm:$0xff]
        %v1755 = vld [vmem:[%s240 + $0x40] sm:$0xff]
        %v1756 = vld [vmem:[%s240 + $0x48] sm:$0xff]
        %v1757 = vld [vmem:[%s240 + $0x50] sm:$0xff]
        %v1758 = vld [vmem:[%s240 + $0x58] sm:$0xff]
        %v1759 = vld [vmem:[%s240 + $0x60] sm:$0xff]
        %v1760 = vld [vmem:[%s240 + $0x68] sm:$0xff]
        %v1761 = vld [vmem:[%s240 + $0x70] sm:$0xff]
        %v1762 = vld [vmem:[%s240 + $0x78] sm:$0xff]
        %v1763 = vld [vmem:[%s240 + $0x80] sm:$0xff]
        %v1764 = vld [vmem:[%s240 + $0x88] sm:$0xff]
        %v1765 = vld [vmem:[%s240 + $0x90] sm:$0xff]
        %v1766 = vld [vmem:[%s240 + $0x98] sm:$0xff]
        %v1767 = vld [vmem:[%s240 + $0xa0] sm:$0xff]
        %v1768 = vld [vmem:[%s240 + $0xa8] sm:$0xff]
        %v1769 = vld [vmem:[%s240 + $0xb0] sm:$0xff]
        %v1770 = vld [vmem:[%s240 + $0xb8] sm:$0xff]
        %v1771 = vld [vmem:[%s240 + $0xc0] sm:$0xff]
        %v1772 = vld [vmem:[%s240 + $0xc8] sm:$0xff]
        %v1773 = vld [vmem:[%s240 + $0xd0] sm:$0xff]
        %v1774 = vld [vmem:[%s240 + $0xd8] sm:$0xff]
        %v1775 = vld [vmem:[%s240 + $0xe0] sm:$0xff]
        %v1776 = vld [vmem:[%s240 + $0xe8] sm:$0xff]
        %v1777 = vld [vmem:[%s240 + $0xf0] sm:$0xff]
        %v1778 = vld [vmem:[%s240 + $0xf8] sm:$0xff]
        %v1779 = vld [vmem:[%s240 + $0x100] sm:$0xff]
        %v1780 = vld [vmem:[%s240 + $0x108] sm:$0xff]
        %v1781 = vld [vmem:[%s240 + $0x110] sm:$0xff]
        %v1782 = vld [vmem:[%s240 + $0x118] sm:$0xff]
        %v1783 = vld [vmem:[%s240 + $0x120] sm:$0xff]
        %v1784 = vld [vmem:[%s240 + $0x128] sm:$0xff]
        %v1785 = vld [vmem:[%s240 + $0x130] sm:$0xff]
        %v1786 = vld [vmem:[%s240 + $0x138] sm:$0xff]
        %v1787 = vld [vmem:[%s240 + $0x140] sm:$0xff]
        %v1788 = vld [vmem:[%s240 + $0x148] sm:$0xff]
        %v1789 = vld [vmem:[%s240 + $0x150] sm:$0xff]
        %v1790 = vld [vmem:[%s240 + $0x158] sm:$0xff]
        %v1791 = vld [vmem:[%s240 + $0x160] sm:$0xff]
        %v1792 = vld [vmem:[%s240 + $0x168] sm:$0xff]
        %v1793 = vld [vmem:[%s240 + $0x170] sm:$0xff]
        %v1794 = vld [vmem:[%s240 + $0x178] sm:$0xff]
        %v1795 = vld [vmem:[%s240 + $0x180] sm:$0xff]
        %v1796 = vld [vmem:[%s240 + $0x188] sm:$0xff]
        %v1797 = vld [vmem:[%s240 + $0x190] sm:$0xff]
        %v1798 = vld [vmem:[%s240 + $0x198] sm:$0xff]
        %v1799 = vld [vmem:[%s240 + $0x1a0] sm:$0xff]
        %v1800 = vld [vmem:[%s240 + $0x1a8] sm:$0xff]
        %v1801 = vld [vmem:[%s240 + $0x1b0] sm:$0xff]
        %v1802 = vld [vmem:[%s240 + $0x1b8] sm:$0xff]
        %v1803 = vld [vmem:[%s240 + $0x1c0] sm:$0xff]
        %v1804 = vld [vmem:[%s240 + $0x1c8] sm:$0xff]
        %v1805 = vld [vmem:[%s240 + $0x1d0] sm:$0xff]
        %v1806 = vld [vmem:[%s240 + $0x1d8] sm:$0xff]
        %v1807 = vld [vmem:[%s240 + $0x1e0] sm:$0xff]
        %v1808 = vld [vmem:[%s240 + $0x1e8] sm:$0xff]
        %v1809 = vld [vmem:[%s240 + $0x1f0] sm:$0xff]
        %v1810 = vld [vmem:[%s240 + $0x1f8] sm:$0xff]
        %1811 = vmatprep.subr.mxu0 %v1808
        %1812 = vmatpush1.msra.mxu0 %v1807
        %1813 = vmatprep.subr.mxu0 %v1804
        %1814 = vmatpush1.msra.mxu0 %v1803
        %1815 = vmatprep.subr.mxu0 %v1800
        %1816 = vmatpush1.msra.mxu0 %v1799
        %1817 = vmatprep.subr.mxu0 %v1796
        %1818 = vmatpush1.msra.mxu0 %v1795
        %1819 = vmatprep.subr.mxu0 %v1792
        %1820 = vmatpush1.msra.mxu0 %v1791
        %1821 = vmatprep.subr.mxu0 %v1788
        %1822 = vmatpush1.msra.mxu0 %v1787
        %1823 = vmatprep.subr.mxu0 %v1784
        %1824 = vmatpush1.msra.mxu0 %v1783
        %1825 = vmatprep.subr.mxu0 %v1780
        %1826 = vmatpush1.msra.mxu0 %v1779
        %1827 = vmatprep.subr.mxu0 %v1776
        %1828 = vmatpush1.msra.mxu0 %v1775
        %1829 = vmatprep.subr.mxu0 %v1772
        %1830 = vmatpush1.msra.mxu0 %v1771
        %1831 = vmatprep.subr.mxu0 %v1768
        %1832 = vmatpush1.msra.mxu0 %v1767
        %1833 = vmatprep.subr.mxu0 %v1764
        %1834 = vmatpush1.msra.mxu0 %v1763
        %1835 = vmatprep.subr.mxu0 %v1760
        %1836 = vmatpush1.msra.mxu0 %v1759
        %1837 = vmatprep.subr.mxu0 %v1756
        %1838 = vmatpush1.msra.mxu0 %v1755
        %1839 = vmatprep.subr.mxu0 %v1752
        %1840 = vmatpush1.msra.mxu0 %v1751
        %1841 = vmatprep.subr.mxu0 %v1748
        %1842 = vmatpush1.msra.mxu0 %v1747
        %1843 = vmatprep.subr.mxu0 0.0
        %1844 = vmatpush2.msra.mxu0 0.0
        %1845 = vmatprep.subr.mxu0 0.0
        %1846 = vmatpush2.msra.mxu0 0.0
        %1847 = vmatprep.subr.mxu0 0.0
        %1848 = vmatpush2.msra.mxu0 0.0
        %1849 = vmatprep.subr.mxu0 0.0
        %1850 = vmatpush2.msra.mxu0 0.0
        %1851 = vmatprep.subr.mxu0 0.0
        %1852 = vmatpush2.msra.mxu0 0.0
        %1853 = vmatprep.subr.mxu0 0.0
        %1854 = vmatpush2.msra.mxu0 0.0
        %1855 = vmatprep.subr.mxu0 0.0
        %1856 = vmatpush2.msra.mxu0 0.0
        %1857 = vmatprep.subr.mxu0 0.0
        %1858 = vmatpush2.msra.mxu0 0.0
        %1859 = vmatprep.subr.mxu0 0.0
        %1860 = vmatpush2.msra.mxu0 0.0
        %1861 = vmatprep.subr.mxu0 0.0
        %1862 = vmatpush2.msra.mxu0 0.0
        %1863 = vmatprep.subr.mxu0 0.0
        %1864 = vmatpush2.msra.mxu0 0.0
        %1865 = vmatprep.subr.mxu0 0.0
        %1866 = vmatpush2.msra.mxu0 0.0
        %1867 = vmatprep.subr.mxu0 0.0
        %1868 = vmatpush2.msra.mxu0 0.0
        %1869 = vmatprep.subr.mxu0 0.0
        %1870 = vmatpush2.msra.mxu0 0.0
        %1871 = vmatprep.subr.mxu0 0.0
        %1872 = vmatpush2.msra.mxu0 0.0
        %1873 = vmatprep.subr.mxu0 0.0
        %1874 = vmatpush2.msra.mxu0 0.0
        %1875 = vmatprep.mubr.f32.mxu0 0.0
        %1876 = vmatmul.mubr.f32.gmra.mxu0 %v1746
        %v1877 = vpop.f32.mrf.mxu0
        %v1878 = vadd.f32 0.0, %v1877
        %v1879 = vpop.f32.mrf.mxu0
        %v1880 = vadd.f32 0.0, %v1879
        %1881 = vdwg.mxu0
        %1882 = vmatprep.subr.mxu0 %v1810
        %1883 = vmatpush1.msra.mxu0 %v1809
        %1884 = vmatprep.subr.mxu0 %v1806
        %1885 = vmatpush1.msra.mxu0 %v1805
        %1886 = vmatprep.subr.mxu0 %v1802
        %1887 = vmatpush1.msra.mxu0 %v1801
        %1888 = vmatprep.subr.mxu0 %v1798
        %1889 = vmatpush1.msra.mxu0 %v1797
        %1890 = vmatprep.subr.mxu0 %v1794
        %1891 = vmatpush1.msra.mxu0 %v1793
        %1892 = vmatprep.subr.mxu0 %v1790
        %1893 = vmatpush1.msra.mxu0 %v1789
        %1894 = vmatprep.subr.mxu0 %v1786
        %1895 = vmatpush1.msra.mxu0 %v1785
        %1896 = vmatprep.subr.mxu0 %v1782
        %1897 = vmatpush1.msra.mxu0 %v1781
        %1898 = vmatprep.subr.mxu0 %v1778
        %1899 = vmatpush1.msra.mxu0 %v1777
        %1900 = vmatprep.subr.mxu0 %v1774
        %1901 = vmatpush1.msra.mxu0 %v1773
        %1902 = vmatprep.subr.mxu0 %v1770
        %1903 = vmatpush1.msra.mxu0 %v1769
        %1904 = vmatprep.subr.mxu0 %v1766
        %1905 = vmatpush1.msra.mxu0 %v1765
        %1906 = vmatprep.subr.mxu0 %v1762
        %1907 = vmatpush1.msra.mxu0 %v1761
        %1908 = vmatprep.subr.mxu0 %v1758
        %1909 = vmatpush1.msra.mxu0 %v1757
        %1910 = vmatprep.subr.mxu0 %v1754
        %1911 = vmatpush1.msra.mxu0 %v1753
        %1912 = vmatprep.subr.mxu0 %v1750
        %1913 = vmatpush1.msra.mxu0 %v1749
        %1914 = vmatprep.subr.mxu0 0.0
        %1915 = vmatpush2.msra.mxu0 0.0
        %1916 = vmatprep.subr.mxu0 0.0
        %1917 = vmatpush2.msra.mxu0 0.0
        %1918 = vmatprep.subr.mxu0 0.0
        %1919 = vmatpush2.msra.mxu0 0.0
        %1920 = vmatprep.subr.mxu0 0.0
        %1921 = vmatpush2.msra.mxu0 0.0
        %1922 = vmatprep.subr.mxu0 0.0
        %1923 = vmatpush2.msra.mxu0 0.0
        %1924 = vmatprep.subr.mxu0 0.0
        %1925 = vmatpush2.msra.mxu0 0.0
        %1926 = vmatprep.subr.mxu0 0.0
        %1927 = vmatpush2.msra.mxu0 0.0
        %1928 = vmatprep.subr.mxu0 0.0
        %1929 = vmatpush2.msra.mxu0 0.0
        %1930 = vmatprep.subr.mxu0 0.0
        %1931 = vmatpush2.msra.mxu0 0.0
        %1932 = vmatprep.subr.mxu0 0.0
        %1933 = vmatpush2.msra.mxu0 0.0
        %1934 = vmatprep.subr.mxu0 0.0
        %1935 = vmatpush2.msra.mxu0 0.0
        %1936 = vmatprep.subr.mxu0 0.0
        %1937 = vmatpush2.msra.mxu0 0.0
        %1938 = vmatprep.subr.mxu0 0.0
        %1939 = vmatpush2.msra.mxu0 0.0
        %1940 = vmatprep.subr.mxu0 0.0
        %1941 = vmatpush2.msra.mxu0 0.0
        %1942 = vmatprep.subr.mxu0 0.0
        %1943 = vmatpush2.msra.mxu0 0.0
        %1944 = vmatprep.subr.mxu0 0.0
        %1945 = vmatpush2.msra.mxu0 0.0
        %1946 = vmatprep.mubr.f32.mxu0 0.0
        %1947 = vmatmul.mubr.f32.gmra.mxu0 %v1746
        %v1948 = vpop.f32.mrf.mxu0
        %v1949 = vadd.f32 0.0, %v1948
        %v1950 = vpop.f32.mrf.mxu0
        %v1951 = vadd.f32 0.0, %v1950
        %1952 = vdwg.mxu0
        %v1953 = vadd.f32 %v1742, %v1878
        %v1954 = vadd.f32 %v1743, %v1880
        %v1955 = vadd.f32 %v1744, %v1949
        %v1956 = vadd.f32 %v1745, %v1951
        %v1957 = vxor.u32 %v1953, 2147483648
        %v1958 = vmul.f32 %v1957, 1.442695
        %v1959 = vpow.pop %v1958
        %v1960 = vadd.f32 %v1959, 1.0
        %v1961 = vrcp.pop %v1960
        %v1962 = vmul.f32 1.0, %v1961
        %v1963 = vxor.u32 %v1954, 2147483648
        %v1964 = vmul.f32 %v1963, 1.442695
        %v1965 = vpow.pop %v1964
        %v1966 = vadd.f32 %v1965, 1.0
        %v1967 = vrcp.pop %v1966
        %v1968 = vmul.f32 1.0, %v1967
        %v1969 = vtanh.pop %v1955
        %v1970 = vxor.u32 %v1956, 2147483648
        %v1971 = vmul.f32 %v1970, 1.442695
        %v1972 = vpow.pop %v1971
        %v1973 = vadd.f32 %v1972, 1.0
        %v1974 = vrcp.pop %v1973
        %v1975 = vmul.f32 1.0, %v1974
        %v1976 = vld [vmem:[#allocation3] sm:$0xff]
        %v1977 = vmul.f32 %v1968, %v1976
        %v1978 = vmul.f32 %v1962, %v1969
        %v1979 = vadd.f32 %v1977, %v1978
        %v1980 = vtanh.pop %v1979
        %v1981 = vmul.f32 %v1975, %v1980
        %1982 = vst [vmem:[#allocation3] sm:$0xff] %v1979
        %1983 = vst [vmem:[#allocation2] sm:$0xff] %v1981
        %s1984 = smul.u32 %s1738, 8
        %s1985 = scalar_lea.vmem %s234, %s1984 [#allocation5]
        %1986 = vst [vmem:[%s1985] sm:$0xff] %v1981
        %s1987 = scalar_select %p243, 7, 0
        %s1988 = smul.u32 %s1987, 4
        %s1989 = smul.addr %s1988, 8
        %s1990 = scalar_lea.vmem %s212, %s1989 [#allocation4]
        %v1991 = vld [vmem:[%s1990] sm:$0xff]
        %v1992 = vld [vmem:[%s1990 + $0x8] sm:$0xff]
        %v1993 = vld [vmem:[%s1990 + $0x10] sm:$0xff]
        %v1994 = vld [vmem:[%s1990 + $0x18] sm:$0xff]
        %v1995 = vld [vmem:[#allocation2] sm:$0xff]
        %v1996 = vld [vmem:[%s240] sm:$0xff]
        %v1997 = vld [vmem:[%s240 + $0x8] sm:$0xff]
        %v1998 = vld [vmem:[%s240 + $0x10] sm:$0xff]
        %v1999 = vld [vmem:[%s240 + $0x18] sm:$0xff]
        %v2000 = vld [vmem:[%s240 + $0x20] sm:$0xff]
        %v2001 = vld [vmem:[%s240 + $0x28] sm:$0xff]
        %v2002 = vld [vmem:[%s240 + $0x30] sm:$0xff]
        %v2003 = vld [vmem:[%s240 + $0x38] sm:$0xff]
        %v2004 = vld [vmem:[%s240 + $0x40] sm:$0xff]
        %v2005 = vld [vmem:[%s240 + $0x48] sm:$0xff]
        %v2006 = vld [vmem:[%s240 + $0x50] sm:$0xff]
        %v2007 = vld [vmem:[%s240 + $0x58] sm:$0xff]
        %v2008 = vld [vmem:[%s240 + $0x60] sm:$0xff]
        %v2009 = vld [vmem:[%s240 + $0x68] sm:$0xff]
        %v2010 = vld [vmem:[%s240 + $0x70] sm:$0xff]
        %v2011 = vld [vmem:[%s240 + $0x78] sm:$0xff]
        %v2012 = vld [vmem:[%s240 + $0x80] sm:$0xff]
        %v2013 = vld [vmem:[%s240 + $0x88] sm:$0xff]
        %v2014 = vld [vmem:[%s240 + $0x90] sm:$0xff]
        %v2015 = vld [vmem:[%s240 + $0x98] sm:$0xff]
        %v2016 = vld [vmem:[%s240 + $0xa0] sm:$0xff]
        %v2017 = vld [vmem:[%s240 + $0xa8] sm:$0xff]
        %v2018 = vld [vmem:[%s240 + $0xb0] sm:$0xff]
        %v2019 = vld [vmem:[%s240 + $0xb8] sm:$0xff]
        %v2020 = vld [vmem:[%s240 + $0xc0] sm:$0xff]
        %v2021 = vld [vmem:[%s240 + $0xc8] sm:$0xff]
        %v2022 = vld [vmem:[%s240 + $0xd0] sm:$0xff]
        %v2023 = vld [vmem:[%s240 + $0xd8] sm:$0xff]
        %v2024 = vld [vmem:[%s240 + $0xe0] sm:$0xff]
        %v2025 = vld [vmem:[%s240 + $0xe8] sm:$0xff]
        %v2026 = vld [vmem:[%s240 + $0xf0] sm:$0xff]
        %v2027 = vld [vmem:[%s240 + $0xf8] sm:$0xff]
        %v2028 = vld [vmem:[%s240 + $0x100] sm:$0xff]
        %v2029 = vld [vmem:[%s240 + $0x108] sm:$0xff]
        %v2030 = vld [vmem:[%s240 + $0x110] sm:$0xff]
        %v2031 = vld [vmem:[%s240 + $0x118] sm:$0xff]
        %v2032 = vld [vmem:[%s240 + $0x120] sm:$0xff]
        %v2033 = vld [vmem:[%s240 + $0x128] sm:$0xff]
        %v2034 = vld [vmem:[%s240 + $0x130] sm:$0xff]
        %v2035 = vld [vmem:[%s240 + $0x138] sm:$0xff]
        %v2036 = vld [vmem:[%s240 + $0x140] sm:$0xff]
        %v2037 = vld [vmem:[%s240 + $0x148] sm:$0xff]
        %v2038 = vld [vmem:[%s240 + $0x150] sm:$0xff]
        %v2039 = vld [vmem:[%s240 + $0x158] sm:$0xff]
        %v2040 = vld [vmem:[%s240 + $0x160] sm:$0xff]
        %v2041 = vld [vmem:[%s240 + $0x168] sm:$0xff]
        %v2042 = vld [vmem:[%s240 + $0x170] sm:$0xff]
        %v2043 = vld [vmem:[%s240 + $0x178] sm:$0xff]
        %v2044 = vld [vmem:[%s240 + $0x180] sm:$0xff]
        %v2045 = vld [vmem:[%s240 + $0x188] sm:$0xff]
        %v2046 = vld [vmem:[%s240 + $0x190] sm:$0xff]
        %v2047 = vld [vmem:[%s240 + $0x198] sm:$0xff]
        %v2048 = vld [vmem:[%s240 + $0x1a0] sm:$0xff]
        %v2049 = vld [vmem:[%s240 + $0x1a8] sm:$0xff]
        %v2050 = vld [vmem:[%s240 + $0x1b0] sm:$0xff]
        %v2051 = vld [vmem:[%s240 + $0x1b8] sm:$0xff]
        %v2052 = vld [vmem:[%s240 + $0x1c0] sm:$0xff]
        %v2053 = vld [vmem:[%s240 + $0x1c8] sm:$0xff]
        %v2054 = vld [vmem:[%s240 + $0x1d0] sm:$0xff]
        %v2055 = vld [vmem:[%s240 + $0x1d8] sm:$0xff]
        %v2056 = vld [vmem:[%s240 + $0x1e0] sm:$0xff]
        %v2057 = vld [vmem:[%s240 + $0x1e8] sm:$0xff]
        %v2058 = vld [vmem:[%s240 + $0x1f0] sm:$0xff]
        %v2059 = vld [vmem:[%s240 + $0x1f8] sm:$0xff]
        %2060 = vmatprep.subr.mxu0 %v2057
        %2061 = vmatpush1.msra.mxu0 %v2056
        %2062 = vmatprep.subr.mxu0 %v2053
        %2063 = vmatpush1.msra.mxu0 %v2052
        %2064 = vmatprep.subr.mxu0 %v2049
        %2065 = vmatpush1.msra.mxu0 %v2048
        %2066 = vmatprep.subr.mxu0 %v2045
        %2067 = vmatpush1.msra.mxu0 %v2044
        %2068 = vmatprep.subr.mxu0 %v2041
        %2069 = vmatpush1.msra.mxu0 %v2040
        %2070 = vmatprep.subr.mxu0 %v2037
        %2071 = vmatpush1.msra.mxu0 %v2036
        %2072 = vmatprep.subr.mxu0 %v2033
        %2073 = vmatpush1.msra.mxu0 %v2032
        %2074 = vmatprep.subr.mxu0 %v2029
        %2075 = vmatpush1.msra.mxu0 %v2028
        %2076 = vmatprep.subr.mxu0 %v2025
        %2077 = vmatpush1.msra.mxu0 %v2024
        %2078 = vmatprep.subr.mxu0 %v2021
        %2079 = vmatpush1.msra.mxu0 %v2020
        %2080 = vmatprep.subr.mxu0 %v2017
        %2081 = vmatpush1.msra.mxu0 %v2016
        %2082 = vmatprep.subr.mxu0 %v2013
        %2083 = vmatpush1.msra.mxu0 %v2012
        %2084 = vmatprep.subr.mxu0 %v2009
        %2085 = vmatpush1.msra.mxu0 %v2008
        %2086 = vmatprep.subr.mxu0 %v2005
        %2087 = vmatpush1.msra.mxu0 %v2004
        %2088 = vmatprep.subr.mxu0 %v2001
        %2089 = vmatpush1.msra.mxu0 %v2000
        %2090 = vmatprep.subr.mxu0 %v1997
        %2091 = vmatpush1.msra.mxu0 %v1996
        %2092 = vmatprep.subr.mxu0 0.0
        %2093 = vmatpush2.msra.mxu0 0.0
        %2094 = vmatprep.subr.mxu0 0.0
        %2095 = vmatpush2.msra.mxu0 0.0
        %2096 = vmatprep.subr.mxu0 0.0
        %2097 = vmatpush2.msra.mxu0 0.0
        %2098 = vmatprep.subr.mxu0 0.0
        %2099 = vmatpush2.msra.mxu0 0.0
        %2100 = vmatprep.subr.mxu0 0.0
        %2101 = vmatpush2.msra.mxu0 0.0
        %2102 = vmatprep.subr.mxu0 0.0
        %2103 = vmatpush2.msra.mxu0 0.0
        %2104 = vmatprep.subr.mxu0 0.0
        %2105 = vmatpush2.msra.mxu0 0.0
        %2106 = vmatprep.subr.mxu0 0.0
        %2107 = vmatpush2.msra.mxu0 0.0
        %2108 = vmatprep.subr.mxu0 0.0
        %2109 = vmatpush2.msra.mxu0 0.0
        %2110 = vmatprep.subr.mxu0 0.0
        %2111 = vmatpush2.msra.mxu0 0.0
        %2112 = vmatprep.subr.mxu0 0.0
        %2113 = vmatpush2.msra.mxu0 0.0
        %2114 = vmatprep.subr.mxu0 0.0
        %2115 = vmatpush2.msra.mxu0 0.0
        %2116 = vmatprep.subr.mxu0 0.0
        %2117 = vmatpush2.msra.mxu0 0.0
        %2118 = vmatprep.subr.mxu0 0.0
        %2119 = vmatpush2.msra.mxu0 0.0
        %2120 = vmatprep.subr.mxu0 0.0
        %2121 = vmatpush2.msra.mxu0 0.0
        %2122 = vmatprep.subr.mxu0 0.0
        %2123 = vmatpush2.msra.mxu0 0.0
        %2124 = vmatprep.mubr.f32.mxu0 0.0
        %2125 = vmatmul.mubr.f32.gmra.mxu0 %v1995
        %v2126 = vpop.f32.mrf.mxu0
        %v2127 = vadd.f32 0.0, %v2126
        %v2128 = vpop.f32.mrf.mxu0
        %v2129 = vadd.f32 0.0, %v2128
        %2130 = vdwg.mxu0
        %2131 = vmatprep.subr.mxu0 %v2059
        %2132 = vmatpush1.msra.mxu0 %v2058
        %2133 = vmatprep.subr.mxu0 %v2055
        %2134 = vmatpush1.msra.mxu0 %v2054
        %2135 = vmatprep.subr.mxu0 %v2051
        %2136 = vmatpush1.msra.mxu0 %v2050
        %2137 = vmatprep.subr.mxu0 %v2047
        %2138 = vmatpush1.msra.mxu0 %v2046
        %2139 = vmatprep.subr.mxu0 %v2043
        %2140 = vmatpush1.msra.mxu0 %v2042
        %2141 = vmatprep.subr.mxu0 %v2039
        %2142 = vmatpush1.msra.mxu0 %v2038
        %2143 = vmatprep.subr.mxu0 %v2035
        %2144 = vmatpush1.msra.mxu0 %v2034
        %2145 = vmatprep.subr.mxu0 %v2031
        %2146 = vmatpush1.msra.mxu0 %v2030
        %2147 = vmatprep.subr.mxu0 %v2027
        %2148 = vmatpush1.msra.mxu0 %v2026
        %2149 = vmatprep.subr.mxu0 %v2023
        %2150 = vmatpush1.msra.mxu0 %v2022
        %2151 = vmatprep.subr.mxu0 %v2019
        %2152 = vmatpush1.msra.mxu0 %v2018
        %2153 = vmatprep.subr.mxu0 %v2015
        %2154 = vmatpush1.msra.mxu0 %v2014
        %2155 = vmatprep.subr.mxu0 %v2011
        %2156 = vmatpush1.msra.mxu0 %v2010
        %2157 = vmatprep.subr.mxu0 %v2007
        %2158 = vmatpush1.msra.mxu0 %v2006
        %2159 = vmatprep.subr.mxu0 %v2003
        %2160 = vmatpush1.msra.mxu0 %v2002
        %2161 = vmatprep.subr.mxu0 %v1999
        %2162 = vmatpush1.msra.mxu0 %v1998
        %2163 = vmatprep.subr.mxu0 0.0
        %2164 = vmatpush2.msra.mxu0 0.0
        %2165 = vmatprep.subr.mxu0 0.0
        %2166 = vmatpush2.msra.mxu0 0.0
        %2167 = vmatprep.subr.mxu0 0.0
        %2168 = vmatpush2.msra.mxu0 0.0
        %2169 = vmatprep.subr.mxu0 0.0
        %2170 = vmatpush2.msra.mxu0 0.0
        %2171 = vmatprep.subr.mxu0 0.0
        %2172 = vmatpush2.msra.mxu0 0.0
        %2173 = vmatprep.subr.mxu0 0.0
        %2174 = vmatpush2.msra.mxu0 0.0
        %2175 = vmatprep.subr.mxu0 0.0
        %2176 = vmatpush2.msra.mxu0 0.0
        %2177 = vmatprep.subr.mxu0 0.0
        %2178 = vmatpush2.msra.mxu0 0.0
        %2179 = vmatprep.subr.mxu0 0.0
        %2180 = vmatpush2.msra.mxu0 0.0
        %2181 = vmatprep.subr.mxu0 0.0
        %2182 = vmatpush2.msra.mxu0 0.0
        %2183 = vmatprep.subr.mxu0 0.0
        %2184 = vmatpush2.msra.mxu0 0.0
        %2185 = vmatprep.subr.mxu0 0.0
        %2186 = vmatpush2.msra.mxu0 0.0
        %2187 = vmatprep.subr.mxu0 0.0
        %2188 = vmatpush2.msra.mxu0 0.0
        %2189 = vmatprep.subr.mxu0 0.0
        %2190 = vmatpush2.msra.mxu0 0.0
        %2191 = vmatprep.subr.mxu0 0.0
        %2192 = vmatpush2.msra.mxu0 0.0
        %2193 = vmatprep.subr.mxu0 0.0
        %2194 = vmatpush2.msra.mxu0 0.0
        %2195 = vmatprep.mubr.f32.mxu0 0.0
        %2196 = vmatmul.mubr.f32.gmra.mxu0 %v1995
        %v2197 = vpop.f32.mrf.mxu0
        %v2198 = vadd.f32 0.0, %v2197
        %v2199 = vpop.f32.mrf.mxu0
        %v2200 = vadd.f32 0.0, %v2199
        %2201 = vdwg.mxu0
        %v2202 = vadd.f32 %v1991, %v2127
        %v2203 = vadd.f32 %v1992, %v2129
        %v2204 = vadd.f32 %v1993, %v2198
        %v2205 = vadd.f32 %v1994, %v2200
        %v2206 = vxor.u32 %v2202, 2147483648
        %v2207 = vmul.f32 %v2206, 1.442695
        %v2208 = vpow.pop %v2207
        %v2209 = vadd.f32 %v2208, 1.0
        %v2210 = vrcp.pop %v2209
        %v2211 = vmul.f32 1.0, %v2210
        %v2212 = vxor.u32 %v2203, 2147483648
        %v2213 = vmul.f32 %v2212, 1.442695
        %v2214 = vpow.pop %v2213
        %v2215 = vadd.f32 %v2214, 1.0
        %v2216 = vrcp.pop %v2215
        %v2217 = vmul.f32 1.0, %v2216
        %v2218 = vtanh.pop %v2204
        %v2219 = vxor.u32 %v2205, 2147483648
        %v2220 = vmul.f32 %v2219, 1.442695
        %v2221 = vpow.pop %v2220
        %v2222 = vadd.f32 %v2221, 1.0
        %v2223 = vrcp.pop %v2222
        %v2224 = vmul.f32 1.0, %v2223
        %v2225 = vld [vmem:[#allocation3] sm:$0xff]
        %v2226 = vmul.f32 %v2217, %v2225
        %v2227 = vmul.f32 %v2211, %v2218
        %v2228 = vadd.f32 %v2226, %v2227
        %v2229 = vtanh.pop %v2228
        %v2230 = vmul.f32 %v2224, %v2229
        %2231 = vst [vmem:[#allocation3] sm:$0xff] %v2228
        %2232 = vst [vmem:[#allocation2] sm:$0xff] %v2230
        %s2233 = smul.u32 %s1987, 8
        %s2234 = scalar_lea.vmem %s234, %s2233 [#allocation5]
        %2235 = vst [vmem:[%s2234] sm:$0xff] %v2230
        %s2236 = sand.u32 %s73, 1
        %s2237 = sand.u32 %s73, 1
        %s2238 = smul.addr %s2237, 64
        %s2239 = scalar_lea.vmem [#allocation5], %s2238
        // Predicated region
        $region52: #{bilstmcrf_forward.8} parent=46 // pred_check
          %p2240 = pneg %p83
        $region53: #{bilstmcrf_forward.8} parent=46 // pred_check_branch
          %2242 = sbr.rel (%p2240) target = $region55
        $region54: #{bilstmcrf_forward.8} parent=46 // pred_region
          %s2243 = smul.addr %s13, 8
          %s2244 = scalar_lea.vmem %s2, %s2243
          // Predicated region
          $region56: #{bilstmcrf_forward.8} parent=54 // pred_check
            _
          $region57: #{bilstmcrf_forward.8} parent=54 // pred_check_branch
            %2246 = sbr.rel (0) target = $region59
          $region58: #{bilstmcrf_forward.8} parent=54 // pred_region
            // Predicated region
            $region60: #{bilstmcrf_forward.8} parent=58 // pred_check
              _
            $region61: #{bilstmcrf_forward.8} parent=58 // pred_check_branch
              %2248 = sbr.rel (0) target = $region63
            $region62: #{bilstmcrf_forward.8} parent=58 // pred_region
              // Predicated region
              $region75: #{bilstmcrf_forward.8} parent=62 // pred_check
                _
              $region76: #{bilstmcrf_forward.8} parent=62 // pred_check_branch
                %2278 = sbr.rel (0) target = $region78
              $region77: #{bilstmcrf_forward.8} parent=62 // pred_region
                loop: start=0, step=1, limit=1
                $region79: #{bilstmcrf_forward.8} parent=77 // loop_pre_header
                  _
                $region80: #{bilstmcrf_forward.8} parent=77 // loop_header
                  %s2280 = sphi 0, %s2284
                  %p2281 = scmp.ge.s32.totalorder %s2280, 1
                  %s2285 = sphi %s2239, %s2239
                  %s2286 = sphi %s2244, %s2244
                $region81: #{bilstmcrf_forward.8} parent=77 // loop_header_branch
                  %2283 = sbr.rel (%p2281) target = $region85
                $region82: #{bilstmcrf_forward.8} parent=77 // loop_body
                  %v2287 = vld [vmem:[%s2285] sm:$0xff]
                  %2288 = vst [vmem:[%s2286] sm:$0xff] %v2287
                  %v2289 = vld [vmem:[%s2285 + $0x8] sm:$0xff]
                  %2290 = vst [vmem:[%s2286 + $0x10] sm:$0xff] %v2289
                  %v2291 = vld [vmem:[%s2285 + $0x10] sm:$0xff]
                  %2292 = vst [vmem:[%s2286 + $0x20] sm:$0xff] %v2291
                  %v2293 = vld [vmem:[%s2285 + $0x18] sm:$0xff]
                  %2294 = vst [vmem:[%s2286 + $0x30] sm:$0xff] %v2293
                  %v2295 = vld [vmem:[%s2285 + $0x20] sm:$0xff]
                  %2296 = vst [vmem:[%s2286 + $0x40] sm:$0xff] %v2295
                  %v2297 = vld [vmem:[%s2285 + $0x28] sm:$0xff]
                  %2298 = vst [vmem:[%s2286 + $0x50] sm:$0xff] %v2297
                  %v2299 = vld [vmem:[%s2285 + $0x30] sm:$0xff]
                  %2300 = vst [vmem:[%s2286 + $0x60] sm:$0xff] %v2299
                  %v2301 = vld [vmem:[%s2285 + $0x38] sm:$0xff]
                  %2302 = vst [vmem:[%s2286 + $0x70] sm:$0xff] %v2301
                $region83: #{bilstmcrf_forward.8} parent=77 // loop_footer
                  %s2284 = sadd.s32 1, %s2280
                $region84: #{bilstmcrf_forward.8} parent=77 // loop_footer_branch
                  %2279 = sbr.rel target = $region80
                $region85: #{bilstmcrf_forward.8} parent=77 // loop_exit
                  _
              $region78: #{bilstmcrf_forward.8} parent=62 // pred_fallthru
                _
              // Predicated region
              $region86: #{bilstmcrf_forward.8} parent=62 // pred_check
                _
              $region87: #{bilstmcrf_forward.8} parent=62 // pred_check_branch
                %2304 = sbr.rel target = $region89
              $region88: #{bilstmcrf_forward.8} parent=62 // pred_region
                _
              $region89: #{bilstmcrf_forward.8} parent=62 // pred_fallthru
                _
            $region63: #{bilstmcrf_forward.8} parent=58 // pred_fallthru
              _
            // Predicated region
            $region64: #{bilstmcrf_forward.8} parent=58 // pred_check
              _
            $region65: #{bilstmcrf_forward.8} parent=58 // pred_check_branch
              %2250 = sbr.rel target = $region67
            $region66: #{bilstmcrf_forward.8} parent=58 // pred_region
              %s2252 = ssub.s32 256, 1
              loop: start=0, step=1, limit=1
              $region68: #{bilstmcrf_forward.8} parent=66 // loop_pre_header
                _
              $region69: #{bilstmcrf_forward.8} parent=66 // loop_header
                %s2254 = sphi 0, %s2258
                %p2255 = scmp.ge.s32.totalorder %s2254, 1
                %s2259 = sphi %s2239, %s2239
                %s2260 = sphi %s2244, %s2244
              $region70: #{bilstmcrf_forward.8} parent=66 // loop_header_branch
                %2257 = sbr.rel (%p2255) target = $region74
              $region71: #{bilstmcrf_forward.8} parent=66 // loop_body
                %v2261 = vld [vmem:[%s2259] sm:%s2252]
                %2262 = vst [vmem:[%s2260] sm:%s2252] %v2261
                %v2263 = vld [vmem:[%s2259 + $0x8] sm:%s2252]
                %2264 = vst [vmem:[%s2260 + $0x10] sm:%s2252] %v2263
                %v2265 = vld [vmem:[%s2259 + $0x10] sm:%s2252]
                %2266 = vst [vmem:[%s2260 + $0x20] sm:%s2252] %v2265
                %v2267 = vld [vmem:[%s2259 + $0x18] sm:%s2252]
                %2268 = vst [vmem:[%s2260 + $0x30] sm:%s2252] %v2267
                %v2269 = vld [vmem:[%s2259 + $0x20] sm:%s2252]
                %2270 = vst [vmem:[%s2260 + $0x40] sm:%s2252] %v2269
                %v2271 = vld [vmem:[%s2259 + $0x28] sm:%s2252]
                %2272 = vst [vmem:[%s2260 + $0x50] sm:%s2252] %v2271
                %v2273 = vld [vmem:[%s2259 + $0x30] sm:%s2252]
                %2274 = vst [vmem:[%s2260 + $0x60] sm:%s2252] %v2273
                %v2275 = vld [vmem:[%s2259 + $0x38] sm:%s2252]
                %2276 = vst [vmem:[%s2260 + $0x70] sm:%s2252] %v2275
              $region72: #{bilstmcrf_forward.8} parent=66 // loop_footer
                %s2258 = sadd.s32 1, %s2254
              $region73: #{bilstmcrf_forward.8} parent=66 // loop_footer_branch
                %2253 = sbr.rel target = $region69
              $region74: #{bilstmcrf_forward.8} parent=66 // loop_exit
                _
            $region67: #{bilstmcrf_forward.8} parent=58 // pred_fallthru
              _
          $region59: #{bilstmcrf_forward.8} parent=54 // pred_fallthru
            _
          %2305 = vnop
        $region55: #{bilstmcrf_forward.8} parent=46 // pred_fallthru
          _
      $region47: #{bilstmcrf_forward.8} parent=5 // pred_fallthru
        _
      %p2306 = scmp.le.s32.totalorder 2, %s8
      // Predicated region
      $region90: #{bilstmcrf_forward.8} parent=5 // pred_check
        %p2307 = pneg %p2306
      $region91: #{bilstmcrf_forward.8} parent=5 // pred_check_branch
        %2309 = sbr.rel (%p2307) target = $region93
      $region92: #{bilstmcrf_forward.8} parent=5 // pred_region
        %s2310 = ssub.s32 %s8, 2
        // Predicated region
        $region94: #{bilstmcrf_forward.8} parent=92 // pred_check
          %p2311 = pneg %p89
        $region95: #{bilstmcrf_forward.8} parent=92 // pred_check_branch
          %2313 = sbr.rel (%p2311) target = $region97
        $region96: #{bilstmcrf_forward.8} parent=92 // pred_region
          %s2314 = sand.u32 %s74, 1
          %s2315 = sand.u32 %s74, 1
          %s2316 = smul.addr %s2315, 64
          %s2317 = scalar_lea.vmem [#allocation5], %s2316
        $region97: #{bilstmcrf_forward.8} parent=92 // pred_fallthru
          _
      $region93: #{bilstmcrf_forward.8} parent=5 // pred_fallthru
        _
    $region6: #{bilstmcrf_forward.8} parent=1 // loop_footer
      %s12 = sadd.s32 1, %s8
    $region7: #{bilstmcrf_forward.8} parent=1 // loop_footer_branch
      %7 = sbr.rel target = $region3
    $region8: #{bilstmcrf_forward.8} parent=1 // loop_exit
      _

</llo_original>
